<compile_context>
chip_gen: v7x
topology: tpu7x:2x2x1
jax: 0.10.0
libtpu: 0.0.40
codegen_flags: <defaults>
</compile_context>

<pallas_src>
import jax
import jax.numpy as jnp
from jax.experimental import pallas as pl
from jax.experimental.pallas import tpu as pltpu


# --------------------------------- kernel ------------------------------------

def _make_decoder_kernel(in_starts, band_k, block_n):
    """Build the batched-MLP kernel; layer-5 banding metadata is static."""

    def kernel(x_ref,
               a1_ref, b1_ref, a2_ref, b2_ref, a3_ref, b3_ref,
               a4_ref, b4_ref, a5_ref, b5_ref,
               o_ref):
        # Layers 1-4: bf16 MXU dots with f32 accumulate, bias+ReLU on VPU (f32),
        # then cast back to bf16 for the next dot.
        y = x_ref[...].astype(jnp.bfloat16)
        for a_ref, b_ref in ((a1_ref, b1_ref), (a2_ref, b2_ref),
                             (a3_ref, b3_ref), (a4_ref, b4_ref)):
            y = jnp.dot(y, a_ref[...],
                        preferred_element_type=jnp.float32) + b_ref[...]
            y = jnp.maximum(y, 0.0).astype(jnp.bfloat16)

        # Layer 5 (BN4 + 5x5 conv folded), banded by output image rows:
        # each block consumes a static input band and writes a lane-dense
        # (TB, block_n) column slice of the output.
        for i, s in enumerate(in_starts):
            band = y[:, s:s + band_k]                       # bf16, static slice
            ob = jnp.dot(band, a5_ref[i],
                         preferred_element_type=jnp.float32) + b5_ref[i]
            o_ref[:, i * block_n:(i + 1) * block_n] = ob.astype(o_ref.dtype)

    return kernel


# ------------------------------- JAX wrapper ----------------------------------

def _round_up(n, m):
    return ((n + m - 1) // m) * m


def cnn_decoder_forward(x, kparams, conv_starts, *, K, N, D, n_param,
                        n_channels, tb=256, out_dtype=jnp.bfloat16):
    S, M, _ = x.shape
    img = int(N ** 0.5)
    Dp = D * n_param
    out_w = img * img * Dp
    B = S * M

    # Batch tile: multiple of 8 sublanes; default 256 matches the 256-wide MXU
    # on v6e/v7x (sweep to 512 for very large B).  Force >= 2 grid steps so the
    # "parallel" batch axis can shard across v7x's two TensorCores.
    TB = max(8, min(tb, _round_up(B, 8)))
    B_pad = _round_up(B, TB)
    if B_pad // TB < 2:
        TB = max(8, _round_up(pl.cdiv(B, 2), 8))
        B_pad = 2 * TB

    xb = x.reshape(B, K).astype(jnp.float32)
    if B_pad != B:
        xb = jnp.pad(xb, ((0, B_pad - B), (0, 0)))

    band_k = kparams[8].shape[1]
    block_n = kparams[8].shape[2]
    kernel = _make_decoder_kernel(tuple(conv_starts), band_k, block_n)

    # Advisory cost estimate so XLA can schedule neighbors around the call.
    widths = [kparams[0].shape[1], kparams[2].shape[1],
              kparams[4].shape[1], kparams[6].shape[1]]
    flops = 2 * B_pad * (K * widths[0] + widths[0] * widths[1]
                         + widths[1] * widths[2] + widths[2] * widths[3]
                         + len(conv_starts) * band_k * block_n)
    weight_bytes = sum(int(p.size) * p.dtype.itemsize for p in kparams)
    out_itemsize = jnp.zeros((), out_dtype).dtype.itemsize
    bytes_accessed = (weight_bytes + B_pad * K * 4
                      + B_pad * out_w * out_itemsize)
    cost = pl.CostEstimate(flops=int(flops), transcendentals=0,
                           bytes_accessed=int(bytes_accessed))

    def run(single_buffer_consts):
        def const_spec(a):
            nd = a.ndim
            idx = lambda b, _nd=nd: (0,) * _nd
            if single_buffer_consts:
                # Grid-invariant weights: single-buffer to save VMEM (v7x).
                return pl.BlockSpec(a.shape, idx, pipeline_mode=pl.Buffered(1))
            return pl.BlockSpec(a.shape, idx)

        in_specs = [pl.BlockSpec((TB, K), lambda b: (b, 0))]
        in_specs += [const_spec(p) for p in kparams]
        out_spec = pl.BlockSpec((TB, out_w), lambda b: (b, 0))

        return pl.pallas_call(
            kernel,
            out_shape=jax.ShapeDtypeStruct((B_pad, out_w), out_dtype),
            grid_spec=pltpu.PrefetchScalarGridSpec(
                num_scalar_prefetch=0,
                grid=(B_pad // TB,),
                in_specs=in_specs,
                out_specs=out_spec),
            compiler_params=pltpu.CompilerParams(
                dimension_semantics=("parallel",),   # shard batch over TCs
                vmem_limit_bytes=32 * 1024 * 1024),  # keep <= ~48 MiB on v7x
            cost_estimate=cost,
        )(xb, *kparams)

    try:
        out = run(True)
    except Exception:
        # TODO(synk): pl.Buffered(1) single-buffering of grid-invariant weights
        # unsupported on this JAX build; fall back to default double buffering
        # (only ~1.7 MiB extra VMEM with bf16 weights).
        out = run(False)

    if B_pad != B:
        out = out[:B]
    # '(s m) (d npar) h w -> s m (h w) d npar' — memory order already matches.
    return out.reshape(S, M, img * img, D, n_param)


# ------------------ parameter folding (done once, x-independent) --------------

def _choose_rows_per_block(img, Dp):
    """Output-image rows per banded block of the folded 5x5 conv.

    Prefers a block width >= 256 lanes (v6e/v7x MXU); falls back to 128 (v5e),
    or None (dense) when no aligned banding exists.
    """
    best = None
    for rpb in range(1, img):
        if img % rpb or rpb + 4 > img:
            continue
        n_blk = rpb * img * Dp
        if n_blk % 128:
            continue
        if n_blk >= 256:
            return rpb
        best = rpb
    return best


def fold_params(raw, *, K, N, D, n_param, n_channels):
    img = int(N ** 0.5)
    h = img // 16
    nc = n_channels
    Dp = D * n_param
    eps = 1e-5

    def flat_hwc(z):                                   # (B, C, H, W) -> (B, H*W*C)
        return z.transpose(0, 2, 3, 1).reshape(z.shape[0], -1)

    def deconv_matrix(w, H, W):                        # w: (Cin, Cout, 2, 2)
        Cin = w.shape[0]
        n = H * W * Cin
        basis = jnp.eye(n, dtype=jnp.float32).reshape(n, H, W, Cin).transpose(0, 3, 1, 2)
        out = jnp.einsum("bchw,cdij->bdhiwj", basis, w).reshape(n, w.shape[1], 2 * H, 2 * W)
        return flat_hwc(out)                           # (H*W*Cin, 4*H*W*Cout)

    def conv5_matrix(w, H, W):                         # w: (Cout, Cin, 5, 5)
        Cout, Cin = w.shape[0], w.shape[1]
        n = H * W * Cin
        basis = jnp.eye(n, dtype=jnp.float32).reshape(n, H, W, Cin).transpose(0, 3, 1, 2)
        zp = jnp.pad(basis, ((0, 0), (0, 0), (2, 2), (2, 2)))
        out = jnp.zeros((n, Cout, H, W), jnp.float32)
        for dy in range(5):
            for dx in range(5):
                out = out + jnp.einsum("bchw,dc->bdhw",
                                       zp[:, :, dy:dy + H, dx:dx + W],
                                       w[:, :, dy, dx])
        return flat_hwc(out)                           # (H*W*Cin, H*W*Cout)

    # Linear, re-ordered so its output is HWC-flat over the (h, h, 8*nc) map.
    n_feat = h * h * 8 * nc
    L = raw["w_lin"].reshape(8 * nc, h, h, K).transpose(1, 2, 0, 3).reshape(n_feat, K).T
    lb = raw["b_lin"].reshape(8 * nc, h, h).transpose(1, 2, 0).reshape(n_feat)

    Hs = [h, 2 * h, 4 * h, 8 * h]                      # input spatial size per deconv
    params = []

    # Layer 1: fold the Linear into deconv1 (no nonlinearity between them).
    D1 = deconv_matrix(raw["ct0_w"], Hs[0], Hs[0])
    c1 = jnp.tile(raw["ct0_b"], (2 * Hs[0]) ** 2)
    params += [L @ D1, (lb @ D1 + c1).reshape(1, -1)]

    # Layers 2-4: fold BN_{l-1} (inference affine) into deconv_l.
    for l in range(1, 4):
        Hin = Hs[l]
        scale = raw[f"bn{l - 1}_g"] / jnp.sqrt(raw[f"bn{l - 1}_v"] + eps)
        shift = raw[f"bn{l - 1}_b"] - raw[f"bn{l - 1}_m"] * scale
        s_flat = jnp.tile(scale, Hin * Hin)
        t_flat = jnp.tile(shift, Hin * Hin)
        Dl = deconv_matrix(raw[f"ct{l}_w"], Hin, Hin)
        cl = jnp.tile(raw[f"ct{l}_b"], (2 * Hin) ** 2)
        params += [s_flat[:, None] * Dl, (t_flat @ Dl + cl).reshape(1, -1)]

    # Final layer: fold BN4 into the 5x5 same-pad conv, then band it by output
    # rows (the folded matrix is ~90% zeros with a +/-2-row band structure).
    scale = raw["bn3_g"] / jnp.sqrt(raw["bn3_v"] + eps)
    shift = raw["bn3_b"] - raw["bn3_m"] * scale
    s_flat = jnp.tile(scale, img * img)
    t_flat = jnp.tile(shift, img * img)
    C5 = conv5_matrix(raw["conv_w"], img, img)
    c5 = jnp.tile(raw["conv_b"], img * img)
    A5 = s_flat[:, None] * C5                          # (img^2*nc, img^2*Dp)
    bias5 = t_flat @ C5 + c5                           # (img^2*Dp,)

    rpb = _choose_rows_per_block(img, Dp)
    if rpb is None or img // rpb < 2:
        a5_blocks = A5[None]
        b5_blocks = bias5[None, None, :]
        in_starts = (0,)
    else:
        nb = img // rpb
        band_rows = rpb + 4
        band_k = band_rows * img * nc
        block_n = rpb * img * Dp
        starts, As, Bs = [], [], []
        for i in range(nb):
            r0 = min(max(i * rpb - 2, 0), img - band_rows)
            s = r0 * img * nc
            starts.append(s)
            As.append(A5[s:s + band_k, i * block_n:(i + 1) * block_n])
            Bs.append(bias5[i * block_n:(i + 1) * block_n])
        a5_blocks = jnp.stack(As)                      # (nb, band_k, block_n)
        b5_blocks = jnp.stack(Bs)[:, None, :]          # (nb, 1, block_n)
        in_starts = tuple(starts)
    params += [a5_blocks, b5_blocks]

    # Weights in bf16 (MXU-native), biases in f32 (added to f32 accumulator).
    kparams = [p.astype(jnp.bfloat16 if i % 2 == 0 else jnp.float32)
               for i, p in enumerate(params)]
    return kparams, in_starts


# -------------------------- deterministic parameters --------------------------

def init_raw_params(key, K, N, D, n_param, n_channels):
    img = int(N ** 0.5)
    h = img // 16
    nc = n_channels
    n_feat = h * h * 8 * nc
    Dp = D * n_param
    keys = jax.random.split(key, 32)
    it = iter(keys)

    def rnd(shape, scale=0.1):
        return (scale * jax.random.normal(next(it), shape)).astype(jnp.float32)

    raw = {}
    raw["w_lin"] = rnd((n_feat, K))                    # nn.Linear weight (out, in)
    raw["b_lin"] = rnd((n_feat,))
    cins = [8 * nc, 4 * nc, 2 * nc, nc]
    couts = [4 * nc, 2 * nc, nc, nc]
    for l, (ci, co) in enumerate(zip(cins, couts)):
        raw[f"ct{l}_w"] = rnd((ci, co, 2, 2))          # ConvTranspose2d (Cin,Cout,kH,kW)
        raw[f"ct{l}_b"] = rnd((co,))
        raw[f"bn{l}_g"] = 1.0 + rnd((co,))
        raw[f"bn{l}_b"] = rnd((co,))
        raw[f"bn{l}_m"] = rnd((co,))
        raw[f"bn{l}_v"] = 1.0 + 0.5 * jnp.abs(rnd((co,)))
    raw["conv_w"] = rnd((Dp, nc, 5, 5))                # Conv2d (Cout,Cin,kH,kW)
    raw["conv_b"] = rnd((Dp,))
    return raw


# ------------------------ pure-JAX NCHW reference (check) ---------------------

def reference_forward(x, raw, *, K, N, D, n_param, n_channels):
    S, M, _ = x.shape
    img = int(N ** 0.5)
    h = img // 16
    nc = n_channels
    eps = 1e-5
    feat = x @ raw["w_lin"].T + raw["b_lin"]           # (S, M, n_feat)
    z = feat.reshape(S * M, 8 * nc, h, h)
    for l in range(4):
        w, b = raw[f"ct{l}_w"], raw[f"ct{l}_b"]
        z = jnp.einsum("bchw,cdij->bdhiwj", z, w)
        Bz, Cout, Hh, _, Ww, _ = z.shape
        z = z.reshape(Bz, Cout, 2 * Hh, 2 * Ww) + b[None, :, None, None]
        z = jnp.maximum(z, 0.0)
        g, be = raw[f"bn{l}_g"], raw[f"bn{l}_b"]
        m, v = raw[f"bn{l}_m"], raw[f"bn{l}_v"]
        z = ((z - m[None, :, None, None]) / jnp.sqrt(v + eps)[None, :, None, None]
             * g[None, :, None, None] + be[None, :, None, None])
    wc, bc = raw["conv_w"], raw["conv_b"]
    Bz, Cin, H, W = z.shape
    zp = jnp.pad(z, ((0, 0), (0, 0), (2, 2), (2, 2)))
    out = jnp.zeros((Bz, wc.shape[0], H, W), jnp.float32) + bc[None, :, None, None]
    for dy in range(5):
        for dx in range(5):
            out = out + jnp.einsum("bchw,dc->bdhw",
                                   zp[:, :, dy:dy + H, dx:dx + W], wc[:, :, dy, dx])
    Dp = D * n_param
    out = out.reshape(S, M, Dp, H * W).transpose(0, 1, 3, 2)
    return out.reshape(S, M, H * W, D, n_param)


# ----------------------------------- main -------------------------------------

if __name__ == "__main__":
    K, n_channels = 8, 4
    D, n_param = 2, 2
    N = 256                    # img_size = 16 -> 1x1x(8*nc) feature map after Linear
    S, M = 2, 3

    key = jax.random.PRNGKey(0)
    kx, kp = jax.random.split(key)
    x = jax.random.normal(kx, (S, M, K), dtype=jnp.float32)

    raw = init_raw_params(kp, K, N, D, n_param, n_channels)
    kparams, conv_starts = fold_params(raw, K=K, N=N, D=D, n_param=n_param,
                                       n_channels=n_channels)

    out = cnn_decoder_forward(x, kparams, conv_starts, K=K, N=N, D=D,
                              n_param=n_param, n_channels=n_channels)
    out = jax.block_until_ready(out)
    assert out.shape == (S, M, N, D, n_param), out.shape

    ref = reference_forward(x, raw, K=K, N=N, D=D,
                            n_param=n_param, n_channels=n_channels)
    out_f32 = out.astype(jnp.float32)
    # bf16 MXU path: tolerance re-validated for the dtype change.
    err = float(jnp.max(jnp.abs(out_f32 - ref)))
    assert jnp.allclose(out_f32, ref, atol=3e-2, rtol=3e-2), err

    print("KERNEL_OK")
</pallas_src>

<mosaic_0001>
module attributes {stable_mosaic.version = 11 : i64} {
  func.func @kernel(%arg0: i32, %arg1: memref<8x8xf32, #tpu.memory_space<vmem>>, %arg2: memref<8x64xbf16, #tpu.memory_space<vmem>>, %arg3: memref<1x64xf32, #tpu.memory_space<vmem>>, %arg4: memref<64x128xbf16, #tpu.memory_space<vmem>>, %arg5: memref<1x128xf32, #tpu.memory_space<vmem>>, %arg6: memref<128x256xbf16, #tpu.memory_space<vmem>>, %arg7: memref<1x256xf32, #tpu.memory_space<vmem>>, %arg8: memref<256x1024xbf16, #tpu.memory_space<vmem>>, %arg9: memref<1x1024xf32, #tpu.memory_space<vmem>>, %arg10: memref<4x512x256xbf16, #tpu.memory_space<vmem>>, %arg11: memref<4x1x256xf32, #tpu.memory_space<vmem>>, %arg12: memref<8x1024xbf16, #tpu.memory_space<vmem>>) attributes {dimension_semantics = [#tpu.dimension_semantics<parallel>], iteration_bounds = array<i64: 2>, scalar_prefetch = 0 : i64, scratch_operands = 0 : i64, tpu.core_type = #tpu.core_type<tc>, window_params = [{transform_indices = @transform_0, window_bounds = array<i64: 8, 8>}, {pipeline_mode = #tpu.pipeline_mode<synchronous>, transform_indices = @transform_1, window_bounds = array<i64: 8, 64>}, {pipeline_mode = #tpu.pipeline_mode<synchronous>, transform_indices = @transform_2, window_bounds = array<i64: 1, 64>}, {pipeline_mode = #tpu.pipeline_mode<synchronous>, transform_indices = @transform_3, window_bounds = array<i64: 64, 128>}, {pipeline_mode = #tpu.pipeline_mode<synchronous>, transform_indices = @transform_4, window_bounds = array<i64: 1, 128>}, {pipeline_mode = #tpu.pipeline_mode<synchronous>, transform_indices = @transform_5, window_bounds = array<i64: 128, 256>}, {pipeline_mode = #tpu.pipeline_mode<synchronous>, transform_indices = @transform_6, window_bounds = array<i64: 1, 256>}, {pipeline_mode = #tpu.pipeline_mode<synchronous>, transform_indices = @transform_7, window_bounds = array<i64: 256, 1024>}, {pipeline_mode = #tpu.pipeline_mode<synchronous>, transform_indices = @transform_8, window_bounds = array<i64: 1, 1024>}, {pipeline_mode = #tpu.pipeline_mode<synchronous>, transform_indices = @transform_9, window_bounds = array<i64: 4, 512, 256>}, {pipeline_mode = #tpu.pipeline_mode<synchronous>, transform_indices = @transform_10, window_bounds = array<i64: 4, 1, 256>}, {transform_indices = @transform_11, window_bounds = array<i64: 8, 1024>}]} {
    %c0 = arith.constant 0 : index
    %c0_0 = arith.constant 0 : index
    %0 = vector.load %arg1[%c0, %c0_0] : memref<8x8xf32, #tpu.memory_space<vmem>>, vector<8x8xf32>
    %1 = arith.truncf %0 : vector<8x8xf32> to vector<8x8xbf16>
    %c0_1 = arith.constant 0 : index
    %c0_2 = arith.constant 0 : index
    %2 = vector.load %arg2[%c0_1, %c0_2] : memref<8x64xbf16, #tpu.memory_space<vmem>>, vector<8x64xbf16>
    %cst = arith.constant dense<0.000000e+00> : vector<8x64xf32>
    %3 = tpu.matmul %1, %2, %cst {dimension_numbers = #tpu.dot_dimension_numbers<[1], [0], [0], [1], [0, 0, 1, 1], [], []>} : vector<8x8xbf16>, vector<8x64xbf16>, vector<8x64xf32> -> vector<8x64xf32>
    %c0_3 = arith.constant 0 : index
    %c0_4 = arith.constant 0 : index
    %4 = vector.load %arg3[%c0_3, %c0_4] : memref<1x64xf32, #tpu.memory_space<vmem>>, vector<1x64xf32>
    %5 = vector.broadcast %4 : vector<1x64xf32> to vector<8x64xf32>
    %6 = arith.addf %3, %5 : vector<8x64xf32>
    %cst_5 = arith.constant 0.000000e+00 : f32
    %7 = vector.broadcast %cst_5 : f32 to vector<8x64xf32>
    %8 = arith.maximumf %6, %7 : vector<8x64xf32>
    %9 = arith.truncf %8 : vector<8x64xf32> to vector<8x64xbf16>
    %c0_6 = arith.constant 0 : index
    %c0_7 = arith.constant 0 : index
    %10 = vector.load %arg4[%c0_6, %c0_7] : memref<64x128xbf16, #tpu.memory_space<vmem>>, vector<64x128xbf16>
    %cst_8 = arith.constant dense<0.000000e+00> : vector<8x128xf32>
    %11 = tpu.matmul %9, %10, %cst_8 {dimension_numbers = #tpu.dot_dimension_numbers<[1], [0], [0], [1], [0, 0, 1, 1], [], []>} : vector<8x64xbf16>, vector<64x128xbf16>, vector<8x128xf32> -> vector<8x128xf32>
    %c0_9 = arith.constant 0 : index
    %c0_10 = arith.constant 0 : index
    %12 = vector.load %arg5[%c0_9, %c0_10] : memref<1x128xf32, #tpu.memory_space<vmem>>, vector<1x128xf32>
    %13 = vector.broadcast %12 : vector<1x128xf32> to vector<8x128xf32>
    %14 = arith.addf %11, %13 : vector<8x128xf32>
    %cst_11 = arith.constant 0.000000e+00 : f32
    %15 = vector.broadcast %cst_11 : f32 to vector<8x128xf32>
    %16 = arith.maximumf %14, %15 : vector<8x128xf32>
    %17 = arith.truncf %16 : vector<8x128xf32> to vector<8x128xbf16>
    %c0_12 = arith.constant 0 : index
    %c0_13 = arith.constant 0 : index
    %18 = vector.load %arg6[%c0_12, %c0_13] : memref<128x256xbf16, #tpu.memory_space<vmem>>, vector<128x256xbf16>
    %cst_14 = arith.constant dense<0.000000e+00> : vector<8x256xf32>
    %19 = tpu.matmul %17, %18, %cst_14 {dimension_numbers = #tpu.dot_dimension_numbers<[1], [0], [0], [1], [0, 0, 1, 1], [], []>} : vector<8x128xbf16>, vector<128x256xbf16>, vector<8x256xf32> -> vector<8x256xf32>
    %c0_15 = arith.constant 0 : index
    %c0_16 = arith.constant 0 : index
    %20 = vector.load %arg7[%c0_15, %c0_16] : memref<1x256xf32, #tpu.memory_space<vmem>>, vector<1x256xf32>
    %21 = vector.broadcast %20 : vector<1x256xf32> to vector<8x256xf32>
    %22 = arith.addf %19, %21 : vector<8x256xf32>
    %cst_17 = arith.constant 0.000000e+00 : f32
    %23 = vector.broadcast %cst_17 : f32 to vector<8x256xf32>
    %24 = arith.maximumf %22, %23 : vector<8x256xf32>
    %25 = arith.truncf %24 : vector<8x256xf32> to vector<8x256xbf16>
    %c0_18 = arith.constant 0 : index
    %c0_19 = arith.constant 0 : index
    %26 = vector.load %arg8[%c0_18, %c0_19] : memref<256x1024xbf16, #tpu.memory_space<vmem>>, vector<256x1024xbf16>
    %cst_20 = arith.constant dense<0.000000e+00> : vector<8x1024xf32>
    %27 = tpu.matmul %25, %26, %cst_20 {dimension_numbers = #tpu.dot_dimension_numbers<[1], [0], [0], [1], [0, 0, 1, 1], [], []>} : vector<8x256xbf16>, vector<256x1024xbf16>, vector<8x1024xf32> -> vector<8x1024xf32>
    %c0_21 = arith.constant 0 : index
    %c0_22 = arith.constant 0 : index
    %28 = vector.load %arg9[%c0_21, %c0_22] : memref<1x1024xf32, #tpu.memory_space<vmem>>, vector<1x1024xf32>
    %29 = vector.broadcast %28 : vector<1x1024xf32> to vector<8x1024xf32>
    %30 = arith.addf %27, %29 : vector<8x1024xf32>
    %cst_23 = arith.constant 0.000000e+00 : f32
    %31 = vector.broadcast %cst_23 : f32 to vector<8x1024xf32>
    %32 = arith.maximumf %30, %31 : vector<8x1024xf32>
    %33 = arith.truncf %32 : vector<8x1024xf32> to vector<8x1024xbf16>
    %34 = vector.extract_strided_slice %33 {offsets = [0, 0], sizes = [8, 512], strides = [1, 1]} : vector<8x1024xbf16> to vector<8x512xbf16>
    %c0_24 = arith.constant 0 : index
    %c0_25 = arith.constant 0 : index
    %c0_26 = arith.constant 0 : index
    %35 = vector.load %arg10[%c0_24, %c0_25, %c0_26] : memref<4x512x256xbf16, #tpu.memory_space<vmem>>, vector<1x512x256xbf16>
    %36 = vector.shape_cast %35 : vector<1x512x256xbf16> to vector<512x256xbf16>
    %cst_27 = arith.constant dense<0.000000e+00> : vector<8x256xf32>
    %37 = tpu.matmul %34, %36, %cst_27 {dimension_numbers = #tpu.dot_dimension_numbers<[1], [0], [0], [1], [0, 0, 1, 1], [], []>} : vector<8x512xbf16>, vector<512x256xbf16>, vector<8x256xf32> -> vector<8x256xf32>
    %c0_28 = arith.constant 0 : index
    %c0_29 = arith.constant 0 : index
    %c0_30 = arith.constant 0 : index
    %38 = vector.load %arg11[%c0_28, %c0_29, %c0_30] : memref<4x1x256xf32, #tpu.memory_space<vmem>>, vector<1x1x256xf32>
    %39 = vector.shape_cast %38 : vector<1x1x256xf32> to vector<1x256xf32>
    %40 = vector.broadcast %39 : vector<1x256xf32> to vector<8x256xf32>
    %41 = arith.addf %37, %40 : vector<8x256xf32>
    %42 = arith.truncf %41 : vector<8x256xf32> to vector<8x256xbf16>
    %c0_31 = arith.constant 0 : index
    %c0_32 = arith.constant 0 : index
    %43 = vector.load %arg12[%c0_31, %c0_32] : memref<8x1024xbf16, #tpu.memory_space<vmem>>, vector<8x256xbf16>
    tpu.vector_store %arg12[%c0_31, %c0_32], %42 {strides = array<i32>} : memref<8x1024xbf16, #tpu.memory_space<vmem>>, vector<8x256xbf16>,
    %44 = vector.extract_strided_slice %33 {offsets = [0, 128], sizes = [8, 512], strides = [1, 1]} : vector<8x1024xbf16> to vector<8x512xbf16>
    %c1 = arith.constant 1 : index
    %c0_33 = arith.constant 0 : index
    %c0_34 = arith.constant 0 : index
    %45 = vector.load %arg10[%c1, %c0_33, %c0_34] : memref<4x512x256xbf16, #tpu.memory_space<vmem>>, vector<1x512x256xbf16>
    %46 = vector.shape_cast %45 : vector<1x512x256xbf16> to vector<512x256xbf16>
    %cst_35 = arith.constant dense<0.000000e+00> : vector<8x256xf32>
    %47 = tpu.matmul %44, %46, %cst_35 {dimension_numbers = #tpu.dot_dimension_numbers<[1], [0], [0], [1], [0, 0, 1, 1], [], []>} : vector<8x512xbf16>, vector<512x256xbf16>, vector<8x256xf32> -> vector<8x256xf32>
    %c1_36 = arith.constant 1 : index
    %c0_37 = arith.constant 0 : index
    %c0_38 = arith.constant 0 : index
    %48 = vector.load %arg11[%c1_36, %c0_37, %c0_38] : memref<4x1x256xf32, #tpu.memory_space<vmem>>, vector<1x1x256xf32>
    %49 = vector.shape_cast %48 : vector<1x1x256xf32> to vector<1x256xf32>
    %50 = vector.broadcast %49 : vector<1x256xf32> to vector<8x256xf32>
    %51 = arith.addf %47, %50 : vector<8x256xf32>
    %52 = arith.truncf %51 : vector<8x256xf32> to vector<8x256xbf16>
    %c0_39 = arith.constant 0 : index
    %c256 = arith.constant 256 : index
    %53 = vector.load %arg12[%c0_39, %c256] : memref<8x1024xbf16, #tpu.memory_space<vmem>>, vector<8x256xbf16>
    tpu.vector_store %arg12[%c0_39, %c256], %52 {strides = array<i32>} : memref<8x1024xbf16, #tpu.memory_space<vmem>>, vector<8x256xbf16>,
    %54 = vector.extract_strided_slice %33 {offsets = [0, 384], sizes = [8, 512], strides = [1, 1]} : vector<8x1024xbf16> to vector<8x512xbf16>
    %c2 = arith.constant 2 : index
    %c0_40 = arith.constant 0 : index
    %c0_41 = arith.constant 0 : index
    %55 = vector.load %arg10[%c2, %c0_40, %c0_41] : memref<4x512x256xbf16, #tpu.memory_space<vmem>>, vector<1x512x256xbf16>
    %56 = vector.shape_cast %55 : vector<1x512x256xbf16> to vector<512x256xbf16>
    %cst_42 = arith.constant dense<0.000000e+00> : vector<8x256xf32>
    %57 = tpu.matmul %54, %56, %cst_42 {dimension_numbers = #tpu.dot_dimension_numbers<[1], [0], [0], [1], [0, 0, 1, 1], [], []>} : vector<8x512xbf16>, vector<512x256xbf16>, vector<8x256xf32> -> vector<8x256xf32>
    %c2_43 = arith.constant 2 : index
    %c0_44 = arith.constant 0 : index
    %c0_45 = arith.constant 0 : index
    %58 = vector.load %arg11[%c2_43, %c0_44, %c0_45] : memref<4x1x256xf32, #tpu.memory_space<vmem>>, vector<1x1x256xf32>
    %59 = vector.shape_cast %58 : vector<1x1x256xf32> to vector<1x256xf32>
    %60 = vector.broadcast %59 : vector<1x256xf32> to vector<8x256xf32>
    %61 = arith.addf %57, %60 : vector<8x256xf32>
    %62 = arith.truncf %61 : vector<8x256xf32> to vector<8x256xbf16>
    %c0_46 = arith.constant 0 : index
    %c512 = arith.constant 512 : index
    %63 = vector.load %arg12[%c0_46, %c512] : memref<8x1024xbf16, #tpu.memory_space<vmem>>, vector<8x256xbf16>
    tpu.vector_store %arg12[%c0_46, %c512], %62 {strides = array<i32>} : memref<8x1024xbf16, #tpu.memory_space<vmem>>, vector<8x256xbf16>,
    %64 = vector.extract_strided_slice %33 {offsets = [0, 512], sizes = [8, 512], strides = [1, 1]} : vector<8x1024xbf16> to vector<8x512xbf16>
    %c3 = arith.constant 3 : index
    %c0_47 = arith.constant 0 : index
    %c0_48 = arith.constant 0 : index
    %65 = vector.load %arg10[%c3, %c0_47, %c0_48] : memref<4x512x256xbf16, #tpu.memory_space<vmem>>, vector<1x512x256xbf16>
    %66 = vector.shape_cast %65 : vector<1x512x256xbf16> to vector<512x256xbf16>
    %cst_49 = arith.constant dense<0.000000e+00> : vector<8x256xf32>
    %67 = tpu.matmul %64, %66, %cst_49 {dimension_numbers = #tpu.dot_dimension_numbers<[1], [0], [0], [1], [0, 0, 1, 1], [], []>} : vector<8x512xbf16>, vector<512x256xbf16>, vector<8x256xf32> -> vector<8x256xf32>
    %c3_50 = arith.constant 3 : index
    %c0_51 = arith.constant 0 : index
    %c0_52 = arith.constant 0 : index
    %68 = vector.load %arg11[%c3_50, %c0_51, %c0_52] : memref<4x1x256xf32, #tpu.memory_space<vmem>>, vector<1x1x256xf32>
    %69 = vector.shape_cast %68 : vector<1x1x256xf32> to vector<1x256xf32>
    %70 = vector.broadcast %69 : vector<1x256xf32> to vector<8x256xf32>
    %71 = arith.addf %67, %70 : vector<8x256xf32>
    %72 = arith.truncf %71 : vector<8x256xf32> to vector<8x256xbf16>
    %c0_53 = arith.constant 0 : index
    %c768 = arith.constant 768 : index
    %73 = vector.load %arg12[%c0_53, %c768] : memref<8x1024xbf16, #tpu.memory_space<vmem>>, vector<8x256xbf16>
    tpu.vector_store %arg12[%c0_53, %c768], %72 {strides = array<i32>} : memref<8x1024xbf16, #tpu.memory_space<vmem>>, vector<8x256xbf16>,
    return
  }
  func.func @transform_0(%arg0: i32) -> (i32, i32) {
    %c0_i32 = arith.constant 0 : i32
    %c0_i32_0 = arith.constant 0 : i32
    return %arg0, %c0_i32 : i32, i32
  }
  func.func @transform_1(%arg0: i32) -> (i32, i32) {
    %c0_i32 = arith.constant 0 : i32
    %c0_i32_0 = arith.constant 0 : i32
    %c0_i32_1 = arith.constant 0 : i32
    return %c0_i32, %c0_i32_0 : i32, i32
  }
  func.func @transform_2(%arg0: i32) -> (i32, i32) {
    %c0_i32 = arith.constant 0 : i32
    %c0_i32_0 = arith.constant 0 : i32
    %c0_i32_1 = arith.constant 0 : i32
    return %c0_i32, %c0_i32_0 : i32, i32
  }
  func.func @transform_3(%arg0: i32) -> (i32, i32) {
    %c0_i32 = arith.constant 0 : i32
    %c0_i32_0 = arith.constant 0 : i32
    %c0_i32_1 = arith.constant 0 : i32
    return %c0_i32, %c0_i32_0 : i32, i32
  }
  func.func @transform_4(%arg0: i32) -> (i32, i32) {
    %c0_i32 = arith.constant 0 : i32
    %c0_i32_0 = arith.constant 0 : i32
    %c0_i32_1 = arith.constant 0 : i32
    return %c0_i32, %c0_i32_0 : i32, i32
  }
  func.func @transform_5(%arg0: i32) -> (i32, i32) {
    %c0_i32 = arith.constant 0 : i32
    %c0_i32_0 = arith.constant 0 : i32
    %c0_i32_1 = arith.constant 0 : i32
    return %c0_i32, %c0_i32_0 : i32, i32
  }
  func.func @transform_6(%arg0: i32) -> (i32, i32) {
    %c0_i32 = arith.constant 0 : i32
    %c0_i32_0 = arith.constant 0 : i32
    %c0_i32_1 = arith.constant 0 : i32
    return %c0_i32, %c0_i32_0 : i32, i32
  }
  func.func @transform_7(%arg0: i32) -> (i32, i32) {
    %c0_i32 = arith.constant 0 : i32
    %c0_i32_0 = arith.constant 0 : i32
    %c0_i32_1 = arith.constant 0 : i32
    return %c0_i32, %c0_i32_0 : i32, i32
  }
  func.func @transform_8(%arg0: i32) -> (i32, i32) {
    %c0_i32 = arith.constant 0 : i32
    %c0_i32_0 = arith.constant 0 : i32
    %c0_i32_1 = arith.constant 0 : i32
    return %c0_i32, %c0_i32_0 : i32, i32
  }
  func.func @transform_9(%arg0: i32) -> (i32, i32, i32) {
    %c0_i32 = arith.constant 0 : i32
    %c0_i32_0 = arith.constant 0 : i32
    %c0_i32_1 = arith.constant 0 : i32
    %c0_i32_2 = arith.constant 0 : i32
    return %c0_i32, %c0_i32_0, %c0_i32_1 : i32, i32, i32
  }
  func.func @transform_10(%arg0: i32) -> (i32, i32, i32) {
    %c0_i32 = arith.constant 0 : i32
    %c0_i32_0 = arith.constant 0 : i32
    %c0_i32_1 = arith.constant 0 : i32
    %c0_i32_2 = arith.constant 0 : i32
    return %c0_i32, %c0_i32_0, %c0_i32_1 : i32, i32, i32
  }
  func.func @transform_11(%arg0: i32) -> (i32, i32) {
    %c0_i32 = arith.constant 0 : i32
    %c0_i32_0 = arith.constant 0 : i32
    return %arg0, %c0_i32 : i32, i32
  }
}

module attributes {stable_mosaic.version = 11 : i64} {
  func.func @kernel(%arg0: i32, %arg1: memref<8x8xf32, #tpu.memory_space<vmem>>, %arg2: memref<8x64xbf16, #tpu.memory_space<vmem>>, %arg3: memref<1x64xf32, #tpu.memory_space<vmem>>, %arg4: memref<64x128xbf16, #tpu.memory_space<vmem>>, %arg5: memref<1x128xf32, #tpu.memory_space<vmem>>, %arg6: memref<128x256xbf16, #tpu.memory_space<vmem>>, %arg7: memref<1x256xf32, #tpu.memory_space<vmem>>, %arg8: memref<256x1024xbf16, #tpu.memory_space<vmem>>, %arg9: memref<1x1024xf32, #tpu.memory_space<vmem>>, %arg10: memref<4x512x256xbf16, #tpu.memory_space<vmem>>, %arg11: memref<4x1x256xf32, #tpu.memory_space<vmem>>, %arg12: memref<8x1024xbf16, #tpu.memory_space<vmem>>) attributes {dimension_semantics = [#tpu.dimension_semantics<parallel>], iteration_bounds = array<i64: 2>, scalar_prefetch = 0 : i64, scratch_operands = 0 : i64, tpu.core_type = #tpu.core_type<tc>, window_params = [{transform_indices = @transform_0, window_bounds = array<i64: 8, 8>}, {pipeline_mode = #tpu.pipeline_mode<synchronous>, transform_indices = @transform_1, window_bounds = array<i64: 8, 64>}, {pipeline_mode = #tpu.pipeline_mode<synchronous>, transform_indices = @transform_2, window_bounds = array<i64: 1, 64>}, {pipeline_mode = #tpu.pipeline_mode<synchronous>, transform_indices = @transform_3, window_bounds = array<i64: 64, 128>}, {pipeline_mode = #tpu.pipeline_mode<synchronous>, transform_indices = @transform_4, window_bounds = array<i64: 1, 128>}, {pipeline_mode = #tpu.pipeline_mode<synchronous>, transform_indices = @transform_5, window_bounds = array<i64: 128, 256>}, {pipeline_mode = #tpu.pipeline_mode<synchronous>, transform_indices = @transform_6, window_bounds = array<i64: 1, 256>}, {pipeline_mode = #tpu.pipeline_mode<synchronous>, transform_indices = @transform_7, window_bounds = array<i64: 256, 1024>}, {pipeline_mode = #tpu.pipeline_mode<synchronous>, transform_indices = @transform_8, window_bounds = array<i64: 1, 1024>}, {pipeline_mode = #tpu.pipeline_mode<synchronous>, transform_indices = @transform_9, window_bounds = array<i64: 4, 512, 256>}, {pipeline_mode = #tpu.pipeline_mode<synchronous>, transform_indices = @transform_10, window_bounds = array<i64: 4, 1, 256>}, {transform_indices = @transform_11, window_bounds = array<i64: 8, 1024>}]} {
    %c0 = arith.constant 0 : index
    %c0_0 = arith.constant 0 : index
    %0 = vector.load %arg1[%c0, %c0_0] : memref<8x8xf32, #tpu.memory_space<vmem>>, vector<8x8xf32>
    %1 = arith.truncf %0 : vector<8x8xf32> to vector<8x8xbf16>
    %c0_1 = arith.constant 0 : index
    %c0_2 = arith.constant 0 : index
    %2 = vector.load %arg2[%c0_1, %c0_2] : memref<8x64xbf16, #tpu.memory_space<vmem>>, vector<8x64xbf16>
    %cst = arith.constant dense<0.000000e+00> : vector<8x64xf32>
    %3 = tpu.matmul %1, %2, %cst {dimension_numbers = #tpu.dot_dimension_numbers<[1], [0], [0], [1], [0, 0, 1, 1], [], []>} : vector<8x8xbf16>, vector<8x64xbf16>, vector<8x64xf32> -> vector<8x64xf32>
    %c0_3 = arith.constant 0 : index
    %c0_4 = arith.constant 0 : index
    %4 = vector.load %arg3[%c0_3, %c0_4] : memref<1x64xf32, #tpu.memory_space<vmem>>, vector<1x64xf32>
    %5 = vector.broadcast %4 : vector<1x64xf32> to vector<8x64xf32>
    %6 = arith.addf %3, %5 : vector<8x64xf32>
    %cst_5 = arith.constant 0.000000e+00 : f32
    %7 = vector.broadcast %cst_5 : f32 to vector<8x64xf32>
    %8 = arith.maximumf %6, %7 : vector<8x64xf32>
    %9 = arith.truncf %8 : vector<8x64xf32> to vector<8x64xbf16>
    %c0_6 = arith.constant 0 : index
    %c0_7 = arith.constant 0 : index
    %10 = vector.load %arg4[%c0_6, %c0_7] : memref<64x128xbf16, #tpu.memory_space<vmem>>, vector<64x128xbf16>
    %cst_8 = arith.constant dense<0.000000e+00> : vector<8x128xf32>
    %11 = tpu.matmul %9, %10, %cst_8 {dimension_numbers = #tpu.dot_dimension_numbers<[1], [0], [0], [1], [0, 0, 1, 1], [], []>} : vector<8x64xbf16>, vector<64x128xbf16>, vector<8x128xf32> -> vector<8x128xf32>
    %c0_9 = arith.constant 0 : index
    %c0_10 = arith.constant 0 : index
    %12 = vector.load %arg5[%c0_9, %c0_10] : memref<1x128xf32, #tpu.memory_space<vmem>>, vector<1x128xf32>
    %13 = vector.broadcast %12 : vector<1x128xf32> to vector<8x128xf32>
    %14 = arith.addf %11, %13 : vector<8x128xf32>
    %cst_11 = arith.constant 0.000000e+00 : f32
    %15 = vector.broadcast %cst_11 : f32 to vector<8x128xf32>
    %16 = arith.maximumf %14, %15 : vector<8x128xf32>
    %17 = arith.truncf %16 : vector<8x128xf32> to vector<8x128xbf16>
    %c0_12 = arith.constant 0 : index
    %c0_13 = arith.constant 0 : index
    %18 = vector.load %arg6[%c0_12, %c0_13] : memref<128x256xbf16, #tpu.memory_space<vmem>>, vector<128x256xbf16>
    %cst_14 = arith.constant dense<0.000000e+00> : vector<8x256xf32>
    %19 = tpu.matmul %17, %18, %cst_14 {dimension_numbers = #tpu.dot_dimension_numbers<[1], [0], [0], [1], [0, 0, 1, 1], [], []>} : vector<8x128xbf16>, vector<128x256xbf16>, vector<8x256xf32> -> vector<8x256xf32>
    %c0_15 = arith.constant 0 : index
    %c0_16 = arith.constant 0 : index
    %20 = vector.load %arg7[%c0_15, %c0_16] : memref<1x256xf32, #tpu.memory_space<vmem>>, vector<1x256xf32>
    %21 = vector.broadcast %20 : vector<1x256xf32> to vector<8x256xf32>
    %22 = arith.addf %19, %21 : vector<8x256xf32>
    %cst_17 = arith.constant 0.000000e+00 : f32
    %23 = vector.broadcast %cst_17 : f32 to vector<8x256xf32>
    %24 = arith.maximumf %22, %23 : vector<8x256xf32>
    %25 = arith.truncf %24 : vector<8x256xf32> to vector<8x256xbf16>
    %c0_18 = arith.constant 0 : index
    %c0_19 = arith.constant 0 : index
    %26 = vector.load %arg8[%c0_18, %c0_19] : memref<256x1024xbf16, #tpu.memory_space<vmem>>, vector<256x1024xbf16>
    %cst_20 = arith.constant dense<0.000000e+00> : vector<8x1024xf32>
    %27 = tpu.matmul %25, %26, %cst_20 {dimension_numbers = #tpu.dot_dimension_numbers<[1], [0], [0], [1], [0, 0, 1, 1], [], []>} : vector<8x256xbf16>, vector<256x1024xbf16>, vector<8x1024xf32> -> vector<8x1024xf32>
    %c0_21 = arith.constant 0 : index
    %c0_22 = arith.constant 0 : index
    %28 = vector.load %arg9[%c0_21, %c0_22] : memref<1x1024xf32, #tpu.memory_space<vmem>>, vector<1x1024xf32>
    %29 = vector.broadcast %28 : vector<1x1024xf32> to vector<8x1024xf32>
    %30 = arith.addf %27, %29 : vector<8x1024xf32>
    %cst_23 = arith.constant 0.000000e+00 : f32
    %31 = vector.broadcast %cst_23 : f32 to vector<8x1024xf32>
    %32 = arith.maximumf %30, %31 : vector<8x1024xf32>
    %33 = arith.truncf %32 : vector<8x1024xf32> to vector<8x1024xbf16>
    %34 = vector.extract_strided_slice %33 {offsets = [0, 0], sizes = [8, 512], strides = [1, 1]} : vector<8x1024xbf16> to vector<8x512xbf16>
    %c0_24 = arith.constant 0 : index
    %c0_25 = arith.constant 0 : index
    %c0_26 = arith.constant 0 : index
    %35 = vector.load %arg10[%c0_24, %c0_25, %c0_26] : memref<4x512x256xbf16, #tpu.memory_space<vmem>>, vector<1x512x256xbf16>
    %36 = vector.shape_cast %35 : vector<1x512x256xbf16> to vector<512x256xbf16>
    %cst_27 = arith.constant dense<0.000000e+00> : vector<8x256xf32>
    %37 = tpu.matmul %34, %36, %cst_27 {dimension_numbers = #tpu.dot_dimension_numbers<[1], [0], [0], [1], [0, 0, 1, 1], [], []>} : vector<8x512xbf16>, vector<512x256xbf16>, vector<8x256xf32> -> vector<8x256xf32>
    %c0_28 = arith.constant 0 : index
    %c0_29 = arith.constant 0 : index
    %c0_30 = arith.constant 0 : index
    %38 = vector.load %arg11[%c0_28, %c0_29, %c0_30] : memref<4x1x256xf32, #tpu.memory_space<vmem>>, vector<1x1x256xf32>
    %39 = vector.shape_cast %38 : vector<1x1x256xf32> to vector<1x256xf32>
    %40 = vector.broadcast %39 : vector<1x256xf32> to vector<8x256xf32>
    %41 = arith.addf %37, %40 : vector<8x256xf32>
    %42 = arith.truncf %41 : vector<8x256xf32> to vector<8x256xbf16>
    %c0_31 = arith.constant 0 : index
    %c0_32 = arith.constant 0 : index
    %43 = vector.load %arg12[%c0_31, %c0_32] : memref<8x1024xbf16, #tpu.memory_space<vmem>>, vector<8x256xbf16>
    tpu.vector_store %arg12[%c0_31, %c0_32], %42 {strides = array<i32>} : memref<8x1024xbf16, #tpu.memory_space<vmem>>, vector<8x256xbf16>,
    %44 = vector.extract_strided_slice %33 {offsets = [0, 128], sizes = [8, 512], strides = [1, 1]} : vector<8x1024xbf16> to vector<8x512xbf16>
    %c1 = arith.constant 1 : index
    %c0_33 = arith.constant 0 : index
    %c0_34 = arith.constant 0 : index
    %45 = vector.load %arg10[%c1, %c0_33, %c0_34] : memref<4x512x256xbf16, #tpu.memory_space<vmem>>, vector<1x512x256xbf16>
    %46 = vector.shape_cast %45 : vector<1x512x256xbf16> to vector<512x256xbf16>
    %cst_35 = arith.constant dense<0.000000e+00> : vector<8x256xf32>
    %47 = tpu.matmul %44, %46, %cst_35 {dimension_numbers = #tpu.dot_dimension_numbers<[1], [0], [0], [1], [0, 0, 1, 1], [], []>} : vector<8x512xbf16>, vector<512x256xbf16>, vector<8x256xf32> -> vector<8x256xf32>
    %c1_36 = arith.constant 1 : index
    %c0_37 = arith.constant 0 : index
    %c0_38 = arith.constant 0 : index
    %48 = vector.load %arg11[%c1_36, %c0_37, %c0_38] : memref<4x1x256xf32, #tpu.memory_space<vmem>>, vector<1x1x256xf32>
    %49 = vector.shape_cast %48 : vector<1x1x256xf32> to vector<1x256xf32>
    %50 = vector.broadcast %49 : vector<1x256xf32> to vector<8x256xf32>
    %51 = arith.addf %47, %50 : vector<8x256xf32>
    %52 = arith.truncf %51 : vector<8x256xf32> to vector<8x256xbf16>
    %c0_39 = arith.constant 0 : index
    %c256 = arith.constant 256 : index
    %53 = vector.load %arg12[%c0_39, %c256] : memref<8x1024xbf16, #tpu.memory_space<vmem>>, vector<8x256xbf16>
    tpu.vector_store %arg12[%c0_39, %c256], %52 {strides = array<i32>} : memref<8x1024xbf16, #tpu.memory_space<vmem>>, vector<8x256xbf16>,
    %54 = vector.extract_strided_slice %33 {offsets = [0, 384], sizes = [8, 512], strides = [1, 1]} : vector<8x1024xbf16> to vector<8x512xbf16>
    %c2 = arith.constant 2 : index
    %c0_40 = arith.constant 0 : index
    %c0_41 = arith.constant 0 : index
    %55 = vector.load %arg10[%c2, %c0_40, %c0_41] : memref<4x512x256xbf16, #tpu.memory_space<vmem>>, vector<1x512x256xbf16>
    %56 = vector.shape_cast %55 : vector<1x512x256xbf16> to vector<512x256xbf16>
    %cst_42 = arith.constant dense<0.000000e+00> : vector<8x256xf32>
    %57 = tpu.matmul %54, %56, %cst_42 {dimension_numbers = #tpu.dot_dimension_numbers<[1], [0], [0], [1], [0, 0, 1, 1], [], []>} : vector<8x512xbf16>, vector<512x256xbf16>, vector<8x256xf32> -> vector<8x256xf32>
    %c2_43 = arith.constant 2 : index
    %c0_44 = arith.constant 0 : index
    %c0_45 = arith.constant 0 : index
    %58 = vector.load %arg11[%c2_43, %c0_44, %c0_45] : memref<4x1x256xf32, #tpu.memory_space<vmem>>, vector<1x1x256xf32>
    %59 = vector.shape_cast %58 : vector<1x1x256xf32> to vector<1x256xf32>
    %60 = vector.broadcast %59 : vector<1x256xf32> to vector<8x256xf32>
    %61 = arith.addf %57, %60 : vector<8x256xf32>
    %62 = arith.truncf %61 : vector<8x256xf32> to vector<8x256xbf16>
    %c0_46 = arith.constant 0 : index
    %c512 = arith.constant 512 : index
    %63 = vector.load %arg12[%c0_46, %c512] : memref<8x1024xbf16, #tpu.memory_space<vmem>>, vector<8x256xbf16>
    tpu.vector_store %arg12[%c0_46, %c512], %62 {strides = array<i32>} : memref<8x1024xbf16, #tpu.memory_space<vmem>>, vector<8x256xbf16>,
    %64 = vector.extract_strided_slice %33 {offsets = [0, 512], sizes = [8, 512], strides = [1, 1]} : vector<8x1024xbf16> to vector<8x512xbf16>
    %c3 = arith.constant 3 : index
    %c0_47 = arith.constant 0 : index
    %c0_48 = arith.constant 0 : index
    %65 = vector.load %arg10[%c3, %c0_47, %c0_48] : memref<4x512x256xbf16, #tpu.memory_space<vmem>>, vector<1x512x256xbf16>
    %66 = vector.shape_cast %65 : vector<1x512x256xbf16> to vector<512x256xbf16>
    %cst_49 = arith.constant dense<0.000000e+00> : vector<8x256xf32>
    %67 = tpu.matmul %64, %66, %cst_49 {dimension_numbers = #tpu.dot_dimension_numbers<[1], [0], [0], [1], [0, 0, 1, 1], [], []>} : vector<8x512xbf16>, vector<512x256xbf16>, vector<8x256xf32> -> vector<8x256xf32>
    %c3_50 = arith.constant 3 : index
    %c0_51 = arith.constant 0 : index
    %c0_52 = arith.constant 0 : index
    %68 = vector.load %arg11[%c3_50, %c0_51, %c0_52] : memref<4x1x256xf32, #tpu.memory_space<vmem>>, vector<1x1x256xf32>
    %69 = vector.shape_cast %68 : vector<1x1x256xf32> to vector<1x256xf32>
    %70 = vector.broadcast %69 : vector<1x256xf32> to vector<8x256xf32>
    %71 = arith.addf %67, %70 : vector<8x256xf32>
    %72 = arith.truncf %71 : vector<8x256xf32> to vector<8x256xbf16>
    %c0_53 = arith.constant 0 : index
    %c768 = arith.constant 768 : index
    %73 = vector.load %arg12[%c0_53, %c768] : memref<8x1024xbf16, #tpu.memory_space<vmem>>, vector<8x256xbf16>
    tpu.vector_store %arg12[%c0_53, %c768], %72 {strides = array<i32>} : memref<8x1024xbf16, #tpu.memory_space<vmem>>, vector<8x256xbf16>,
    return
  }
  func.func @transform_0(%arg0: i32) -> (i32, i32) {
    %c0_i32 = arith.constant 0 : i32
    %c0_i32_0 = arith.constant 0 : i32
    return %arg0, %c0_i32 : i32, i32
  }
  func.func @transform_1(%arg0: i32) -> (i32, i32) {
    %c0_i32 = arith.constant 0 : i32
    %c0_i32_0 = arith.constant 0 : i32
    %c0_i32_1 = arith.constant 0 : i32
    return %c0_i32, %c0_i32_0 : i32, i32
  }
  func.func @transform_2(%arg0: i32) -> (i32, i32) {
    %c0_i32 = arith.constant 0 : i32
    %c0_i32_0 = arith.constant 0 : i32
    %c0_i32_1 = arith.constant 0 : i32
    return %c0_i32, %c0_i32_0 : i32, i32
  }
  func.func @transform_3(%arg0: i32) -> (i32, i32) {
    %c0_i32 = arith.constant 0 : i32
    %c0_i32_0 = arith.constant 0 : i32
    %c0_i32_1 = arith.constant 0 : i32
    return %c0_i32, %c0_i32_0 : i32, i32
  }
  func.func @transform_4(%arg0: i32) -> (i32, i32) {
    %c0_i32 = arith.constant 0 : i32
    %c0_i32_0 = arith.constant 0 : i32
    %c0_i32_1 = arith.constant 0 : i32
    return %c0_i32, %c0_i32_0 : i32, i32
  }
  func.func @transform_5(%arg0: i32) -> (i32, i32) {
    %c0_i32 = arith.constant 0 : i32
    %c0_i32_0 = arith.constant 0 : i32
    %c0_i32_1 = arith.constant 0 : i32
    return %c0_i32, %c0_i32_0 : i32, i32
  }
  func.func @transform_6(%arg0: i32) -> (i32, i32) {
    %c0_i32 = arith.constant 0 : i32
    %c0_i32_0 = arith.constant 0 : i32
    %c0_i32_1 = arith.constant 0 : i32
    return %c0_i32, %c0_i32_0 : i32, i32
  }
  func.func @transform_7(%arg0: i32) -> (i32, i32) {
    %c0_i32 = arith.constant 0 : i32
    %c0_i32_0 = arith.constant 0 : i32
    %c0_i32_1 = arith.constant 0 : i32
    return %c0_i32, %c0_i32_0 : i32, i32
  }
  func.func @transform_8(%arg0: i32) -> (i32, i32) {
    %c0_i32 = arith.constant 0 : i32
    %c0_i32_0 = arith.constant 0 : i32
    %c0_i32_1 = arith.constant 0 : i32
    return %c0_i32, %c0_i32_0 : i32, i32
  }
  func.func @transform_9(%arg0: i32) -> (i32, i32, i32) {
    %c0_i32 = arith.constant 0 : i32
    %c0_i32_0 = arith.constant 0 : i32
    %c0_i32_1 = arith.constant 0 : i32
    %c0_i32_2 = arith.constant 0 : i32
    return %c0_i32, %c0_i32_0, %c0_i32_1 : i32, i32, i32
  }
  func.func @transform_10(%arg0: i32) -> (i32, i32, i32) {
    %c0_i32 = arith.constant 0 : i32
    %c0_i32_0 = arith.constant 0 : i32
    %c0_i32_1 = arith.constant 0 : i32
    %c0_i32_2 = arith.constant 0 : i32
    return %c0_i32, %c0_i32_0, %c0_i32_1 : i32, i32, i32
  }
  func.func @transform_11(%arg0: i32) -> (i32, i32) {
    %c0_i32 = arith.constant 0 : i32
    %c0_i32_0 = arith.constant 0 : i32
    return %arg0, %c0_i32 : i32, i32
  }
}

</mosaic_0001>

<llo_original>
// kernel: tpu_custom_call.1
$region0: #{tpu_custom_call.1}
  #allocation0 [shape = 'u32[]', space=smem, size = 0x4, offset = 0x4, fixed_abs, tag = 'smem constant byte address 0x4 - core index']
  #allocation1 [shape = 'u32[144,128]{1,0:T(1,128)}', space=vmem, size = 0x12000, scoped, tag = 'internal scratch']
  %s0 = inlined_call_operand.vmem [shape: f32[16,8], index: 0, kind: input, shape index: {}]
  %s1 = inlined_call_operand.hbm [shape: bf16[8,64], index: 1, kind: input, shape index: {}]
  %s2 = inlined_call_operand.hbm [shape: f32[1,64], index: 2, kind: input, shape index: {}]
  %s3 = inlined_call_operand.vmem [shape: bf16[64,128], index: 3, kind: input, shape index: {}]
  %s4 = inlined_call_operand.hbm [shape: f32[1,128], index: 4, kind: input, shape index: {}]
  %s5 = inlined_call_operand.hbm [shape: bf16[128,256], index: 5, kind: input, shape index: {}]
  %s6 = inlined_call_operand.vmem [shape: f32[1,256], index: 6, kind: input, shape index: {}]
  %s7 = inlined_call_operand.hbm [shape: bf16[256,1024], index: 7, kind: input, shape index: {}]
  %s8 = inlined_call_operand.vmem [shape: f32[1,1024], index: 8, kind: input, shape index: {}]
  %s9 = inlined_call_operand.hbm [shape: bf16[4,512,256], index: 9, kind: input, shape index: {}]
  %s10 = inlined_call_operand.vmem [shape: f32[4,1,256], index: 10, kind: input, shape index: {}]
  %s11 = inlined_call_operand.hbm [shape: bf16[16,1024], index: 11, kind: output, shape index: {}]
  %s12 = sld [smem:[#allocation0]]
  $region101: #{tpu_custom_call.1} parent=0
    _
  %s14 = ssub.s32 1, %s12
  %s15 = scalar_select 0, %s14, %s12
  $region1: #{tpu_custom_call.1} parent=0
    #allocation2 [shape = 'u8[2048]{0}', space=vmem, size = 0x800, scoped, tag = 'input window, operand 1, single buffered']
    #allocation3 [shape = 's32[2]{0}', space=sflag, size = 0x8, scoped, tag = 'scoped memory for tpu_custom_call.1']
    #allocation4 [shape = 's32[2]{0}', space=sflag, size = 0x8, scoped, tag = 'scoped memory for tpu_custom_call.1']
    #allocation5 [shape = 'u8[512]{0}', space=vmem, size = 0x400, scoped, tag = 'input window, operand 2, single buffered']
    #allocation6 [shape = 's32[1]{0}', space=sflag, size = 0x4, scoped, tag = 'scoped memory for tpu_custom_call.1']
    #allocation7 [shape = 'u8[512]{0}', space=vmem, size = 0x400, scoped, tag = 'input window, operand 4, single buffered']
    #allocation8 [shape = 'u8[65536]{0}', space=vmem, size = 0x10000, scoped, tag = 'input window, operand 5, single buffered']
    #allocation9 [shape = 's32[1]{0}', space=sflag, size = 0x4, scoped, tag = 'scoped memory for tpu_custom_call.1']
    #allocation10 [shape = 'u8[524288]{0}', space=vmem, size = 0x80000, scoped, tag = 'input window, operand 7, single buffered']
    #allocation11 [shape = 'u8[1048576]{0}', space=vmem, size = 0x100000, scoped, tag = 'input window, operand 9, single buffered']
    #allocation12 [shape = 's32[1]{0}', space=sflag, size = 0x4, scoped, tag = 'scoped memory for tpu_custom_call.1']
    #allocation13 [shape = 'u8[32768]{0}', space=vmem, size = 0x8000, scoped, tag = 'output window, operand 0']
    %16 = vsyncpa [#allocation3], 0
    %17 = vsyncpa [#allocation6], 0
    %18 = vsyncpa [#allocation9], 0
    %19 = vsyncpa [#allocation12], 0
    %20 = vsyncpa [#allocation4], 0
    %s21 = scalar_lea.sflag [#allocation4], 1
    %22 = vsyncpa %s21, 0
    loop: start=0, step=1, limit=4
    $region2: #{tpu_custom_call.1} parent=1 // loop_pre_header
      _
    $region3: #{tpu_custom_call.1} parent=1 // loop_header
      %s24 = sphi 0, %s28
      %p25 = scmp.ge.s32.totalorder %s24, 4
      %s34 = sphi 0, %s36
      %s37 = sphi 0, %s34
      %s38 = sphi 0, %s37
      %s54 = sphi 0, %s38
      %s58 = sphi 0, %s58
      %s60 = sphi 0, %s58
      %s61 = sphi 0, %s60
      %s75 = sphi 0, %s61
      %s79 = sphi 0, %s79
      %s81 = sphi 0, %s79
      %s82 = sphi 0, %s81
      %s96 = sphi 0, %s82
      %s100 = sphi 0, %s100
      %s102 = sphi 0, %s100
      %s103 = sphi 0, %s102
      %s117 = sphi 0, %s103
      %s121 = sphi 0, %s121
      %s123 = sphi 0, %s121
      %s124 = sphi 0, %s123
      %s138 = sphi 0, %s124
      %s142 = sphi 0, %s142
      %s144 = sphi 0, %s142
      %s145 = sphi 0, %s144
      %s159 = sphi 0, %s145
      %s163 = sphi 0, %s163
      %s165 = sphi 0, %s163
      %s166 = sphi 0, %s165
      %s180 = sphi 0, %s166
      %s184 = sphi 0, %s184
      %s186 = sphi 0, %s184
      %s187 = sphi 0, %s186
      %s201 = sphi 0, %s187
      %s205 = sphi 0, %s205
      %s207 = sphi 0, %s205
      %s208 = sphi 0, %s207
      %s222 = sphi 0, %s208
      %s226 = sphi 0, %s226
      %s228 = sphi 0, %s226
      %s229 = sphi 0, %s228
      %s243 = sphi 0, %s229
      %s247 = sphi 0, %s247
      %s249 = sphi 0, %s247
      %s250 = sphi 0, %s249
      %s264 = sphi 0, %s250
      %s270 = sphi 0, %s272
      %s273 = sphi 0, %s270
      %s274 = sphi 0, %s273
      %s290 = sphi 0, %s274
    $region4: #{tpu_custom_call.1} parent=1 // loop_header_branch
      %27 = sbr.rel (%p25) target = $region8
    $region5: #{tpu_custom_call.1} parent=1 // loop_body
      %s29 = ssub.s32 %s24, 1
      %s30 = ssub.s32 %s24, 2
      %s31 = sadd.s32 %s24, 1
      %s32 = ssub.s32 %s24, %s31
      %p33 = scmp.eq.s32.totalorder %s32, 0
      %s35 = sadd.s32 %s34, 1
      %s36 = scalar_select %p33, %s34, %s35
      %p39 = pneg %p33
      %p40 = scmp.eq.s32.totalorder %s24, 1
      %p41 = por %p39, %p40
      %p42 = scmp.ne.s32.totalorder %s34, %s37
      %p43 = scmp.eq.s32.totalorder %s24, 0
      %p44 = por %p42, %p43
      %p45 = scmp.ne.s32.totalorder %s34, %s37
      %p46 = scmp.eq.s32.totalorder %s29, 1
      %p47 = por %p45, %p46
      %p48 = scmp.ne.s32.totalorder %s37, %s38
      %p49 = scmp.eq.s32.totalorder %s29, 0
      %p50 = por %p48, %p49
      %p51 = scmp.ne.s32.totalorder %s37, %s38
      %p52 = scmp.eq.s32.totalorder %s30, 1
      %p53 = por %p51, %p52
      %p55 = scmp.ne.s32.totalorder %s38, %s54
      %p56 = scmp.eq.s32.totalorder %s30, 0
      %p57 = por %p55, %p56
      %s59 = sadd.s32 %s58, 1
      %p62 = scmp.eq.s32.totalorder %s24, 1
      %p63 = scmp.ne.s32.totalorder %s58, %s60
      %p64 = scmp.eq.s32.totalorder %s24, 0
      %p65 = por %p63, %p64
      %p66 = scmp.ne.s32.totalorder %s58, %s60
      %p67 = scmp.eq.s32.totalorder %s29, 1
      %p68 = por %p66, %p67
      %p69 = scmp.ne.s32.totalorder %s60, %s61
      %p70 = scmp.eq.s32.totalorder %s29, 0
      %p71 = por %p69, %p70
      %p72 = scmp.ne.s32.totalorder %s60, %s61
      %p73 = scmp.eq.s32.totalorder %s30, 1
      %p74 = por %p72, %p73
      %p76 = scmp.ne.s32.totalorder %s61, %s75
      %p77 = scmp.eq.s32.totalorder %s30, 0
      %p78 = por %p76, %p77
      %s80 = sadd.s32 %s79, 1
      %p83 = scmp.eq.s32.totalorder %s24, 1
      %p84 = scmp.ne.s32.totalorder %s79, %s81
      %p85 = scmp.eq.s32.totalorder %s24, 0
      %p86 = por %p84, %p85
      %p87 = scmp.ne.s32.totalorder %s79, %s81
      %p88 = scmp.eq.s32.totalorder %s29, 1
      %p89 = por %p87, %p88
      %p90 = scmp.ne.s32.totalorder %s81, %s82
      %p91 = scmp.eq.s32.totalorder %s29, 0
      %p92 = por %p90, %p91
      %p93 = scmp.ne.s32.totalorder %s81, %s82
      %p94 = scmp.eq.s32.totalorder %s30, 1
      %p95 = por %p93, %p94
      %p97 = scmp.ne.s32.totalorder %s82, %s96
      %p98 = scmp.eq.s32.totalorder %s30, 0
      %p99 = por %p97, %p98
      %s101 = sadd.s32 %s100, 1
      %p104 = scmp.eq.s32.totalorder %s24, 1
      %p105 = scmp.ne.s32.totalorder %s100, %s102
      %p106 = scmp.eq.s32.totalorder %s24, 0
      %p107 = por %p105, %p106
      %p108 = scmp.ne.s32.totalorder %s100, %s102
      %p109 = scmp.eq.s32.totalorder %s29, 1
      %p110 = por %p108, %p109
      %p111 = scmp.ne.s32.totalorder %s102, %s103
      %p112 = scmp.eq.s32.totalorder %s29, 0
      %p113 = por %p111, %p112
      %p114 = scmp.ne.s32.totalorder %s102, %s103
      %p115 = scmp.eq.s32.totalorder %s30, 1
      %p116 = por %p114, %p115
      %p118 = scmp.ne.s32.totalorder %s103, %s117
      %p119 = scmp.eq.s32.totalorder %s30, 0
      %p120 = por %p118, %p119
      %s122 = sadd.s32 %s121, 1
      %p125 = scmp.eq.s32.totalorder %s24, 1
      %p126 = scmp.ne.s32.totalorder %s121, %s123
      %p127 = scmp.eq.s32.totalorder %s24, 0
      %p128 = por %p126, %p127
      %p129 = scmp.ne.s32.totalorder %s121, %s123
      %p130 = scmp.eq.s32.totalorder %s29, 1
      %p131 = por %p129, %p130
      %p132 = scmp.ne.s32.totalorder %s123, %s124
      %p133 = scmp.eq.s32.totalorder %s29, 0
      %p134 = por %p132, %p133
      %p135 = scmp.ne.s32.totalorder %s123, %s124
      %p136 = scmp.eq.s32.totalorder %s30, 1
      %p137 = por %p135, %p136
      %p139 = scmp.ne.s32.totalorder %s124, %s138
      %p140 = scmp.eq.s32.totalorder %s30, 0
      %p141 = por %p139, %p140
      %s143 = sadd.s32 %s142, 1
      %p146 = scmp.eq.s32.totalorder %s24, 1
      %p147 = scmp.ne.s32.totalorder %s142, %s144
      %p148 = scmp.eq.s32.totalorder %s24, 0
      %p149 = por %p147, %p148
      %p150 = scmp.ne.s32.totalorder %s142, %s144
      %p151 = scmp.eq.s32.totalorder %s29, 1
      %p152 = por %p150, %p151
      %p153 = scmp.ne.s32.totalorder %s144, %s145
      %p154 = scmp.eq.s32.totalorder %s29, 0
      %p155 = por %p153, %p154
      %p156 = scmp.ne.s32.totalorder %s144, %s145
      %p157 = scmp.eq.s32.totalorder %s30, 1
      %p158 = por %p156, %p157
      %p160 = scmp.ne.s32.totalorder %s145, %s159
      %p161 = scmp.eq.s32.totalorder %s30, 0
      %p162 = por %p160, %p161
      %s164 = sadd.s32 %s163, 1
      %p167 = scmp.eq.s32.totalorder %s24, 1
      %p168 = scmp.ne.s32.totalorder %s163, %s165
      %p169 = scmp.eq.s32.totalorder %s24, 0
      %p170 = por %p168, %p169
      %p171 = scmp.ne.s32.totalorder %s163, %s165
      %p172 = scmp.eq.s32.totalorder %s29, 1
      %p173 = por %p171, %p172
      %p174 = scmp.ne.s32.totalorder %s165, %s166
      %p175 = scmp.eq.s32.totalorder %s29, 0
      %p176 = por %p174, %p175
      %p177 = scmp.ne.s32.totalorder %s165, %s166
      %p178 = scmp.eq.s32.totalorder %s30, 1
      %p179 = por %p177, %p178
      %p181 = scmp.ne.s32.totalorder %s166, %s180
      %p182 = scmp.eq.s32.totalorder %s30, 0
      %p183 = por %p181, %p182
      %s185 = sadd.s32 %s184, 1
      %p188 = scmp.eq.s32.totalorder %s24, 1
      %p189 = scmp.ne.s32.totalorder %s184, %s186
      %p190 = scmp.eq.s32.totalorder %s24, 0
      %p191 = por %p189, %p190
      %p192 = scmp.ne.s32.totalorder %s184, %s186
      %p193 = scmp.eq.s32.totalorder %s29, 1
      %p194 = por %p192, %p193
      %p195 = scmp.ne.s32.totalorder %s186, %s187
      %p196 = scmp.eq.s32.totalorder %s29, 0
      %p197 = por %p195, %p196
      %p198 = scmp.ne.s32.totalorder %s186, %s187
      %p199 = scmp.eq.s32.totalorder %s30, 1
      %p200 = por %p198, %p199
      %p202 = scmp.ne.s32.totalorder %s187, %s201
      %p203 = scmp.eq.s32.totalorder %s30, 0
      %p204 = por %p202, %p203
      %s206 = sadd.s32 %s205, 1
      %p209 = scmp.eq.s32.totalorder %s24, 1
      %p210 = scmp.ne.s32.totalorder %s205, %s207
      %p211 = scmp.eq.s32.totalorder %s24, 0
      %p212 = por %p210, %p211
      %p213 = scmp.ne.s32.totalorder %s205, %s207
      %p214 = scmp.eq.s32.totalorder %s29, 1
      %p215 = por %p213, %p214
      %p216 = scmp.ne.s32.totalorder %s207, %s208
      %p217 = scmp.eq.s32.totalorder %s29, 0
      %p218 = por %p216, %p217
      %p219 = scmp.ne.s32.totalorder %s207, %s208
      %p220 = scmp.eq.s32.totalorder %s30, 1
      %p221 = por %p219, %p220
      %p223 = scmp.ne.s32.totalorder %s208, %s222
      %p224 = scmp.eq.s32.totalorder %s30, 0
      %p225 = por %p223, %p224
      %s227 = sadd.s32 %s226, 1
      %p230 = scmp.eq.s32.totalorder %s24, 1
      %p231 = scmp.ne.s32.totalorder %s226, %s228
      %p232 = scmp.eq.s32.totalorder %s24, 0
      %p233 = por %p231, %p232
      %p234 = scmp.ne.s32.totalorder %s226, %s228
      %p235 = scmp.eq.s32.totalorder %s29, 1
      %p236 = por %p234, %p235
      %p237 = scmp.ne.s32.totalorder %s228, %s229
      %p238 = scmp.eq.s32.totalorder %s29, 0
      %p239 = por %p237, %p238
      %p240 = scmp.ne.s32.totalorder %s228, %s229
      %p241 = scmp.eq.s32.totalorder %s30, 1
      %p242 = por %p240, %p241
      %p244 = scmp.ne.s32.totalorder %s229, %s243
      %p245 = scmp.eq.s32.totalorder %s30, 0
      %p246 = por %p244, %p245
      %s248 = sadd.s32 %s247, 1
      %p251 = scmp.eq.s32.totalorder %s24, 1
      %p252 = scmp.ne.s32.totalorder %s247, %s249
      %p253 = scmp.eq.s32.totalorder %s24, 0
      %p254 = por %p252, %p253
      %p255 = scmp.ne.s32.totalorder %s247, %s249
      %p256 = scmp.eq.s32.totalorder %s29, 1
      %p257 = por %p255, %p256
      %p258 = scmp.ne.s32.totalorder %s249, %s250
      %p259 = scmp.eq.s32.totalorder %s29, 0
      %p260 = por %p258, %p259
      %p261 = scmp.ne.s32.totalorder %s249, %s250
      %p262 = scmp.eq.s32.totalorder %s30, 1
      %p263 = por %p261, %p262
      %p265 = scmp.ne.s32.totalorder %s250, %s264
      %p266 = scmp.eq.s32.totalorder %s30, 0
      %p267 = por %p265, %p266
      %s268 = ssub.s32 %s24, %s31
      %p269 = scmp.eq.s32.totalorder %s268, 0
      %s271 = sadd.s32 %s270, 1
      %s272 = scalar_select %p269, %s270, %s271
      %p275 = pneg %p269
      %p276 = scmp.eq.s32.totalorder %s24, 1
      %p277 = por %p275, %p276
      %p278 = scmp.ne.s32.totalorder %s270, %s273
      %p279 = scmp.eq.s32.totalorder %s24, 0
      %p280 = por %p278, %p279
      %p281 = scmp.ne.s32.totalorder %s270, %s273
      %p282 = scmp.eq.s32.totalorder %s29, 1
      %p283 = por %p281, %p282
      %p284 = scmp.ne.s32.totalorder %s273, %s274
      %p285 = scmp.eq.s32.totalorder %s29, 0
      %p286 = por %p284, %p285
      %p287 = scmp.ne.s32.totalorder %s273, %s274
      %p288 = scmp.eq.s32.totalorder %s30, 1
      %p289 = por %p287, %p288
      %p291 = scmp.ne.s32.totalorder %s274, %s290
      %p292 = scmp.eq.s32.totalorder %s30, 0
      %p293 = por %p291, %p292
      %p294 = scmp.le.s32.totalorder 1, %s24
      %p295 = scmp.lt.s32.totalorder %s24, 3
      %p296 = pnand %p294, %p295
      %p297 = pneg %p296
      // Predicated region
      $region9: #{tpu_custom_call.1} parent=5 // pred_check
        _
      $region10: #{tpu_custom_call.1} parent=5 // pred_check_branch
        %299 = sbr.rel (%p296) target = $region12
      $region11: #{tpu_custom_call.1} parent=5 // pred_region
        %s300 = ssub.s32 %s24, 1
        // Predicated region
        $region13: #{tpu_custom_call.1} parent=11 // pred_check
          %p301 = pneg %p71
        $region14: #{tpu_custom_call.1} parent=11 // pred_check_branch
          %303 = sbr.rel (%p301) target = $region16
        $region15: #{tpu_custom_call.1} parent=11 // pred_region
          %s305 = ssub.s32 64, 64
          %306 = vsyncadd [#allocation3], %s305
          %s308 = sshll.u32 [#allocation2], 4
          %s309 = int_to_ptr.vmem [resolvable:$true] %s308
          %311 = dma.hbm_to_vmem [thread:$0]  %s1, 64, %s309, [#allocation3]
        $region16: #{tpu_custom_call.1} parent=11 // pred_fallthru
          _
        // Predicated region
        $region17: #{tpu_custom_call.1} parent=11 // pred_check
          %p312 = pneg %p92
        $region18: #{tpu_custom_call.1} parent=11 // pred_check_branch
          %314 = sbr.rel (%p312) target = $region20
        $region19: #{tpu_custom_call.1} parent=11 // pred_region
          %s316 = ssub.s32 16, 16
          %317 = vsyncadd [#allocation6], %s316
          %s319 = sshll.u32 [#allocation5], 4
          %s320 = int_to_ptr.vmem [resolvable:$true] %s319
          %322 = dma.hbm_to_vmem [thread:$0]  %s2, 16, %s320, [#allocation6]
        $region20: #{tpu_custom_call.1} parent=11 // pred_fallthru
          _
        // Predicated region
        $region21: #{tpu_custom_call.1} parent=11 // pred_check
          %p323 = pneg %p113
        $region22: #{tpu_custom_call.1} parent=11 // pred_check_branch
          %325 = sbr.rel (%p323) target = $region24
        $region23: #{tpu_custom_call.1} parent=11 // pred_region
          _
        $region24: #{tpu_custom_call.1} parent=11 // pred_fallthru
          _
        // Predicated region
        $region25: #{tpu_custom_call.1} parent=11 // pred_check
          %p326 = pneg %p134
        $region26: #{tpu_custom_call.1} parent=11 // pred_check_branch
          %328 = sbr.rel (%p326) target = $region28
        $region27: #{tpu_custom_call.1} parent=11 // pred_region
          %s330 = ssub.s32 16, 16
          %331 = vsyncadd [#allocation6], %s330
          %s333 = sshll.u32 [#allocation7], 4
          %s334 = int_to_ptr.vmem [resolvable:$true] %s333
          %336 = dma.hbm_to_vmem [thread:$0]  %s4, 16, %s334, [#allocation6]
        $region28: #{tpu_custom_call.1} parent=11 // pred_fallthru
          _
        // Predicated region
        $region29: #{tpu_custom_call.1} parent=11 // pred_check
          %p337 = pneg %p155
        $region30: #{tpu_custom_call.1} parent=11 // pred_check_branch
          %339 = sbr.rel (%p337) target = $region32
        $region31: #{tpu_custom_call.1} parent=11 // pred_region
          %s341 = ssub.s32 2048, 2048
          %342 = vsyncadd [#allocation9], %s341
          %s343 = sshll.u32 [#allocation8], 4
          %s344 = int_to_ptr.vmem [resolvable:$true] %s343
          %349 = dma.hbm_to_vmem [thread:$0]  %s5, 2048, %s344, [#allocation9], 128, 128, 8
        $region32: #{tpu_custom_call.1} parent=11 // pred_fallthru
          _
        // Predicated region
        $region33: #{tpu_custom_call.1} parent=11 // pred_check
          %p350 = pneg %p176
        $region34: #{tpu_custom_call.1} parent=11 // pred_check_branch
          %352 = sbr.rel (%p350) target = $region36
        $region35: #{tpu_custom_call.1} parent=11 // pred_region
          _
        $region36: #{tpu_custom_call.1} parent=11 // pred_fallthru
          _
        // Predicated region
        $region37: #{tpu_custom_call.1} parent=11 // pred_check
          %p353 = pneg %p197
        $region38: #{tpu_custom_call.1} parent=11 // pred_check_branch
          %355 = sbr.rel (%p353) target = $region40
        $region39: #{tpu_custom_call.1} parent=11 // pred_region
          %s357 = ssub.s32 16384, 16384
          %358 = vsyncadd [#allocation9], %s357
          %s359 = sshll.u32 [#allocation10], 4
          %s360 = int_to_ptr.vmem [resolvable:$true] %s359
          %365 = dma.hbm_to_vmem [thread:$0]  %s7, 16384, %s360, [#allocation9], 512, 512, 32
        $region40: #{tpu_custom_call.1} parent=11 // pred_fallthru
          _
        // Predicated region
        $region41: #{tpu_custom_call.1} parent=11 // pred_check
          %p366 = pneg %p218
        $region42: #{tpu_custom_call.1} parent=11 // pred_check_branch
          %368 = sbr.rel (%p366) target = $region44
        $region43: #{tpu_custom_call.1} parent=11 // pred_region
          _
        $region44: #{tpu_custom_call.1} parent=11 // pred_fallthru
          _
        // Predicated region
        $region45: #{tpu_custom_call.1} parent=11 // pred_check
          %p369 = pneg %p239
        $region46: #{tpu_custom_call.1} parent=11 // pred_check_branch
          %371 = sbr.rel (%p369) target = $region48
        $region47: #{tpu_custom_call.1} parent=11 // pred_region
          %s373 = ssub.s32 32768, 32768
          %374 = vsyncadd [#allocation12], %s373
          %s375 = sshll.u32 [#allocation11], 4
          %s376 = int_to_ptr.vmem [resolvable:$true] %s375
          %381 = dma.hbm_to_vmem [thread:$0]  %s9, 32768, %s376, [#allocation12], 128, 128, 8
        $region48: #{tpu_custom_call.1} parent=11 // pred_fallthru
          _
        // Predicated region
        $region49: #{tpu_custom_call.1} parent=11 // pred_check
          %p382 = pneg %p260
        $region50: #{tpu_custom_call.1} parent=11 // pred_check_branch
          %384 = sbr.rel (%p382) target = $region52
        $region51: #{tpu_custom_call.1} parent=11 // pred_region
          _
        $region52: #{tpu_custom_call.1} parent=11 // pred_fallthru
          _
      $region12: #{tpu_custom_call.1} parent=5 // pred_fallthru
        _
      %p385 = scmp.lt.s32.totalorder %s24, 2
      // Predicated region
      $region53: #{tpu_custom_call.1} parent=5 // pred_check
        %p386 = pneg %p385
      $region54: #{tpu_custom_call.1} parent=5 // pred_check_branch
        %388 = sbr.rel (%p386) target = $region56
      $region55: #{tpu_custom_call.1} parent=5 // pred_region
        // Predicated region
        $region57: #{tpu_custom_call.1} parent=55 // pred_check
          %p389 = pneg %p44
        $region58: #{tpu_custom_call.1} parent=55 // pred_check_branch
          %391 = sbr.rel (%p389) target = $region60
        $region59: #{tpu_custom_call.1} parent=55 // pred_region
          %p392 = scmp.lt.s32.totalorder %s24, 1
          %s393 = scalar_select %p392, %s24, 1
          %s394 = smul.addr %s393, 8
          %s395 = scalar_lea.vmem %s0, %s394
        $region60: #{tpu_custom_call.1} parent=55 // pred_fallthru
          _
      $region56: #{tpu_custom_call.1} parent=5 // pred_fallthru
        _
      %p396 = scmp.le.s32.totalorder 1, %s24
      %p397 = scmp.lt.s32.totalorder %s24, 3
      %p398 = pnand %p396, %p397
      %p399 = pneg %p398
      // Predicated region
      $region61: #{tpu_custom_call.1} parent=5 // pred_check
        _
      $region62: #{tpu_custom_call.1} parent=5 // pred_check_branch
        %401 = sbr.rel (%p398) target = $region64
      $region63: #{tpu_custom_call.1} parent=5 // pred_region
        %s402 = ssub.s32 %s24, 1
        // Predicated region
        $region65: #{tpu_custom_call.1} parent=63 // pred_check
          %p403 = pneg %p71
        $region66: #{tpu_custom_call.1} parent=63 // pred_check_branch
          %405 = sbr.rel (%p403) target = $region68
        $region67: #{tpu_custom_call.1} parent=63 // pred_region
          %406 = dma.done [#allocation3], 64
        $region68: #{tpu_custom_call.1} parent=63 // pred_fallthru
          _
        // Predicated region
        $region69: #{tpu_custom_call.1} parent=63 // pred_check
          %p407 = pneg %p92
        $region70: #{tpu_custom_call.1} parent=63 // pred_check_branch
          %409 = sbr.rel (%p407) target = $region72
        $region71: #{tpu_custom_call.1} parent=63 // pred_region
          %410 = dma.done [#allocation6], 16
        $region72: #{tpu_custom_call.1} parent=63 // pred_fallthru
          _
        // Predicated region
        $region73: #{tpu_custom_call.1} parent=63 // pred_check
          %p411 = pneg %p134
        $region74: #{tpu_custom_call.1} parent=63 // pred_check_branch
          %413 = sbr.rel (%p411) target = $region76
        $region75: #{tpu_custom_call.1} parent=63 // pred_region
          %414 = dma.done [#allocation6], 16
        $region76: #{tpu_custom_call.1} parent=63 // pred_fallthru
          _
        // Predicated region
        $region77: #{tpu_custom_call.1} parent=63 // pred_check
          %p415 = pneg %p155
        $region78: #{tpu_custom_call.1} parent=63 // pred_check_branch
          %417 = sbr.rel (%p415) target = $region80
        $region79: #{tpu_custom_call.1} parent=63 // pred_region
          %418 = dma.done [#allocation9], 2048
        $region80: #{tpu_custom_call.1} parent=63 // pred_fallthru
          _
        // Predicated region
        $region81: #{tpu_custom_call.1} parent=63 // pred_check
          %p419 = pneg %p197
        $region82: #{tpu_custom_call.1} parent=63 // pred_check_branch
          %421 = sbr.rel (%p419) target = $region84
        $region83: #{tpu_custom_call.1} parent=63 // pred_region
          %422 = dma.done [#allocation9], 16384
        $region84: #{tpu_custom_call.1} parent=63 // pred_fallthru
          _
        // Predicated region
        $region85: #{tpu_custom_call.1} parent=63 // pred_check
          %p423 = pneg %p239
        $region86: #{tpu_custom_call.1} parent=63 // pred_check_branch
          %425 = sbr.rel (%p423) target = $region88
        $region87: #{tpu_custom_call.1} parent=63 // pred_region
          %426 = dma.done [#allocation12], 32768
        $region88: #{tpu_custom_call.1} parent=63 // pred_fallthru
          _
        %p427 = scmp.lt.s32.totalorder %s29, 1
        %s428 = scalar_select %p427, %s29, 1
        %s429 = smul.addr %s428, 8
        %s430 = scalar_lea.vmem %s0, %s429
        %p431 = pneg %p50
        %p432 = pneg %p47
        %p433 = pneg %p71
        %p434 = pneg %p68
        %p435 = pneg %p92
        %p436 = pneg %p89
        %p437 = pneg %p113
        %p438 = pneg %p110
        %p439 = pneg %p134
        %p440 = pneg %p131
        %p441 = pneg %p155
        %p442 = pneg %p152
        %p443 = pneg %p176
        %p444 = pneg %p173
        %p445 = pneg %p197
        %p446 = pneg %p194
        %p447 = pneg %p218
        %p448 = pneg %p215
        %p449 = pneg %p239
        %p450 = pneg %p236
        %p451 = pneg %p260
        %p452 = pneg %p257
        %p453 = pneg %p286
        %p454 = pneg %p283
        %s455 = sand.u32 %s273, 1
        %s456 = scalar_lea.sflag [#allocation4], %s455
        %s457 = sand.u32 %s273, 1
        %s458 = smul.addr %s457, 32
        %s459 = scalar_lea.vmem [#allocation13], %s458
        %p460 = scmp.lt.s32.totalorder %s29, 1
        %s461 = scalar_select %p460, %s29, 1
        %s462 = smul.addr %s461, 8
        %s463 = scalar_lea.vmem %s0, %s462
        %v465 = vld [vmem:[%s463] sm:$0xff]
        %v466 = vpack.c.bf16 %v465, %v465
        %v467 = vld [vmem:[#allocation2] sm:$0xf]
        %v468 = vld [vmem:[#allocation5] sm:$0x1]
        %v470 = vlaneseq
        %v471 = vshrl.u32 %v470, 7
        %v472 = vsub.s32 0, %v471
        %v473 = vrot.slane %v468, %v472
        %vm475 = vcmask 64512
        %v477 = vsel %vm475, %v466, 0
        %vm479 = vcmask 1043456
        %v481 = vsel %vm479, %v467, 0
        %483 = vmatprep.subr.bf16.mxu0 0
        %484 = vmatpush1.bf16.msra.mxu0 %v481
        %485 = vmatprep.subr.bf16.mxu0 0
        %486 = vmatpush1.bf16.msra.mxu0 0
        %487 = vmatprep.subr.bf16.mxu0 0
        %488 = vmatpush1.bf16.msra.mxu0 0
        %489 = vmatprep.subr.bf16.mxu0 0
        %490 = vmatpush1.bf16.msra.mxu0 0
        %491 = vmatprep.subr.bf16.mxu0 0
        %492 = vmatpush1.bf16.msra.mxu0 0
        %493 = vmatprep.subr.bf16.mxu0 0
        %494 = vmatpush1.bf16.msra.mxu0 0
        %495 = vmatprep.subr.bf16.mxu0 0
        %496 = vmatpush1.bf16.msra.mxu0 0
        %497 = vmatprep.subr.bf16.mxu0 0
        %498 = vmatpush1.bf16.msra.mxu0 0
        %499 = vmatprep.subr.bf16.mxu0 0
        %500 = vmatpush1.bf16.msra.mxu0 0
        %501 = vmatprep.subr.bf16.mxu0 0
        %502 = vmatpush1.bf16.msra.mxu0 0
        %503 = vmatprep.subr.bf16.mxu0 0
        %504 = vmatpush1.bf16.msra.mxu0 0
        %505 = vmatprep.subr.bf16.mxu0 0
        %506 = vmatpush1.bf16.msra.mxu0 0
        %507 = vmatprep.subr.bf16.mxu0 0
        %508 = vmatpush1.bf16.msra.mxu0 0
        %509 = vmatprep.subr.bf16.mxu0 0
        %510 = vmatpush1.bf16.msra.mxu0 0
        %511 = vmatprep.subr.bf16.mxu0 0
        %512 = vmatpush1.bf16.msra.mxu0 0
        %513 = vmatprep.subr.bf16.mxu0 0
        %514 = vmatpush1.bf16.msra.mxu0 0
        %515 = vmatprep.mubr.bf16.mxu0 0
        %516 = vmatmul.mubr.bf16.gmra.mrb[0].mxu0 %v477
        %v517 = vpop.f32.mrb[0].mxu0
        %v518 = vadd.f32 %v473, %v517
        %v519 = vpop.f32.mrb[0].mxu0
        %v520 = vpop.f32.mrb[0].mxu0
        %v521 = vpop.f32.mrb[0].mxu0
        %522 = vdwg.mxu0
        %v523 = vmax.f32 %v518, 0.0
        %v524 = vpack.c.bf16 %v523, %v523
        %v525 = vld [vmem:[%s3] sm:$0xf]
        %v526 = vld [vmem:[%s3 + $0x4] sm:$0xf]
        %v527 = vld [vmem:[%s3 + $0x8] sm:$0xf]
        %v528 = vld [vmem:[%s3 + $0xc] sm:$0xf]
        %v529 = vld [vmem:[%s3 + $0x10] sm:$0xf]
        %v530 = vld [vmem:[%s3 + $0x14] sm:$0xf]
        %v531 = vld [vmem:[%s3 + $0x18] sm:$0xf]
        %v532 = vld [vmem:[%s3 + $0x1c] sm:$0xf]
        %v533 = vld [vmem:[#allocation7] sm:$0x1]
        %v535 = vlaneseq
        %v536 = vshrl.u32 %v535, 7
        %v537 = vsub.s32 0, %v536
        %v538 = vrot.slane %v533, %v537
        %v548 = vunpack.c.l.b16 %v525
        %v549 = vunpack.c.l.b16 %v526
        %v550 = vunpack.c.l.b16 %v527
        %v551 = vunpack.c.l.b16 %v528
        %v552 = vunpack.c.l.b16 %v529
        %v553 = vunpack.c.l.b16 %v530
        %v554 = vunpack.c.l.b16 %v531
        %v555 = vunpack.c.l.b16 %v532
        %v556 = vpack.c.b16 %v549, %v548
        %v557 = vpack.c.b16 %v551, %v550
        %v558 = vpack.c.b16 %v553, %v552
        %v559 = vpack.c.b16 %v555, %v554
        %vm564 = vcmask 523264
        %v566 = vsel %vm564, %v524, 0
        %568 = vmatprep.subr.bf16.mxu0 0
        %569 = vmatpush1.bf16.msra.mxu0 %v556
        %570 = vmatprep.subr.bf16.mxu0 0
        %571 = vmatpush1.bf16.msra.mxu0 %v557
        %572 = vmatprep.subr.bf16.mxu0 0
        %573 = vmatpush1.bf16.msra.mxu0 %v558
        %574 = vmatprep.subr.bf16.mxu0 0
        %575 = vmatpush1.bf16.msra.mxu0 %v559
        %576 = vmatprep.subr.bf16.mxu0 0
        %577 = vmatpush1.bf16.msra.mxu0 0
        %578 = vmatprep.subr.bf16.mxu0 0
        %579 = vmatpush1.bf16.msra.mxu0 0
        %580 = vmatprep.subr.bf16.mxu0 0
        %581 = vmatpush1.bf16.msra.mxu0 0
        %582 = vmatprep.subr.bf16.mxu0 0
        %583 = vmatpush1.bf16.msra.mxu0 0
        %584 = vmatprep.subr.bf16.mxu0 0
        %585 = vmatpush1.bf16.msra.mxu0 0
        %586 = vmatprep.subr.bf16.mxu0 0
        %587 = vmatpush1.bf16.msra.mxu0 0
        %588 = vmatprep.subr.bf16.mxu0 0
        %589 = vmatpush1.bf16.msra.mxu0 0
        %590 = vmatprep.subr.bf16.mxu0 0
        %591 = vmatpush1.bf16.msra.mxu0 0
        %592 = vmatprep.subr.bf16.mxu0 0
        %593 = vmatpush1.bf16.msra.mxu0 0
        %594 = vmatprep.subr.bf16.mxu0 0
        %595 = vmatpush1.bf16.msra.mxu0 0
        %596 = vmatprep.subr.bf16.mxu0 0
        %597 = vmatpush1.bf16.msra.mxu0 0
        %598 = vmatprep.subr.bf16.mxu0 0
        %599 = vmatpush1.bf16.msra.mxu0 0
        %600 = vmatprep.mubr.bf16.mxu0 0
        %601 = vmatmul.mubr.bf16.gmra.mrb[0].mxu0 %v566
        %v602 = vpop.f32.mrb[0].mxu0
        %v603 = vadd.f32 %v538, %v602
        %v604 = vpop.f32.mrb[0].mxu0
        %v605 = vpop.f32.mrb[0].mxu0
        %v606 = vpop.f32.mrb[0].mxu0
        %607 = vdwg.mxu0
        %v608 = vmax.f32 %v603, 0.0
        %v609 = vpack.c.bf16 %v608, %v608
        %v610 = vld [vmem:[#allocation8] sm:$0xff]
        %v611 = vld [vmem:[#allocation8 + $0x8] sm:$0xff]
        %v612 = vld [vmem:[#allocation8 + $0x10] sm:$0xff]
        %v613 = vld [vmem:[#allocation8 + $0x18] sm:$0xff]
        %v614 = vld [vmem:[#allocation8 + $0x20] sm:$0xff]
        %v615 = vld [vmem:[#allocation8 + $0x28] sm:$0xff]
        %v616 = vld [vmem:[#allocation8 + $0x30] sm:$0xff]
        %v617 = vld [vmem:[#allocation8 + $0x38] sm:$0xff]
        %v618 = vld [vmem:[#allocation8 + $0x40] sm:$0xff]
        %v619 = vld [vmem:[#allocation8 + $0x48] sm:$0xff]
        %v620 = vld [vmem:[#allocation8 + $0x50] sm:$0xff]
        %v621 = vld [vmem:[#allocation8 + $0x58] sm:$0xff]
        %v622 = vld [vmem:[#allocation8 + $0x60] sm:$0xff]
        %v623 = vld [vmem:[#allocation8 + $0x68] sm:$0xff]
        %v624 = vld [vmem:[#allocation8 + $0x70] sm:$0xff]
        %v625 = vld [vmem:[#allocation8 + $0x78] sm:$0xff]
        %v626 = vld [vmem:[%s6] sm:$0x3]
        %v628 = vlaneseq
        %v629 = vshrl.u32 %v628, 7
        %v630 = vsub.s32 0, %v629
        %v631 = vrot.slane %v626, %v630
        %v632 = vlaneseq
        %v633 = vshrl.u32 %v632, 7
        %v634 = vsub.s32 1, %v633
        %v635 = vrot.slane %v626, %v634
        %v654 = vunpack.c.l.b16 %v610
        %v655 = vunpack.c.h.b16 %v610
        %v656 = vunpack.c.l.b16 %v611
        %v657 = vunpack.c.h.b16 %v611
        %v658 = vunpack.c.l.b16 %v612
        %v659 = vunpack.c.h.b16 %v612
        %v660 = vunpack.c.l.b16 %v613
        %v661 = vunpack.c.h.b16 %v613
        %v662 = vunpack.c.l.b16 %v614
        %v663 = vunpack.c.h.b16 %v614
        %v664 = vunpack.c.l.b16 %v615
        %v665 = vunpack.c.h.b16 %v615
        %v666 = vunpack.c.l.b16 %v616
        %v667 = vunpack.c.h.b16 %v616
        %v668 = vunpack.c.l.b16 %v617
        %v669 = vunpack.c.h.b16 %v617
        %v670 = vunpack.c.l.b16 %v618
        %v671 = vunpack.c.h.b16 %v618
        %v672 = vunpack.c.l.b16 %v619
        %v673 = vunpack.c.h.b16 %v619
        %v674 = vunpack.c.l.b16 %v620
        %v675 = vunpack.c.h.b16 %v620
        %v676 = vunpack.c.l.b16 %v621
        %v677 = vunpack.c.h.b16 %v621
        %v678 = vunpack.c.l.b16 %v622
        %v679 = vunpack.c.h.b16 %v622
        %v680 = vunpack.c.l.b16 %v623
        %v681 = vunpack.c.h.b16 %v623
        %v682 = vunpack.c.l.b16 %v624
        %v683 = vunpack.c.h.b16 %v624
        %v684 = vunpack.c.l.b16 %v625
        %v685 = vunpack.c.h.b16 %v625
        %v686 = vpack.c.b16 %v656, %v654
        %v687 = vpack.c.b16 %v657, %v655
        %v688 = vpack.c.b16 %v660, %v658
        %v689 = vpack.c.b16 %v661, %v659
        %v690 = vpack.c.b16 %v664, %v662
        %v691 = vpack.c.b16 %v665, %v663
        %v692 = vpack.c.b16 %v668, %v666
        %v693 = vpack.c.b16 %v669, %v667
        %v694 = vpack.c.b16 %v672, %v670
        %v695 = vpack.c.b16 %v673, %v671
        %v696 = vpack.c.b16 %v676, %v674
        %v697 = vpack.c.b16 %v677, %v675
        %v698 = vpack.c.b16 %v680, %v678
        %v699 = vpack.c.b16 %v681, %v679
        %v700 = vpack.c.b16 %v684, %v682
        %v701 = vpack.c.b16 %v685, %v683
        %718 = vmatprep.subr.bf16.mxu0 %v687
        %719 = vmatpush1.bf16.msra.mxu0 %v686
        %720 = vmatprep.subr.bf16.mxu0 %v689
        %721 = vmatpush1.bf16.msra.mxu0 %v688
        %722 = vmatprep.subr.bf16.mxu0 %v691
        %723 = vmatpush1.bf16.msra.mxu0 %v690
        %724 = vmatprep.subr.bf16.mxu0 %v693
        %725 = vmatpush1.bf16.msra.mxu0 %v692
        %726 = vmatprep.subr.bf16.mxu0 %v695
        %727 = vmatpush1.bf16.msra.mxu0 %v694
        %728 = vmatprep.subr.bf16.mxu0 %v697
        %729 = vmatpush1.bf16.msra.mxu0 %v696
        %730 = vmatprep.subr.bf16.mxu0 %v699
        %731 = vmatpush1.bf16.msra.mxu0 %v698
        %732 = vmatprep.subr.bf16.mxu0 %v701
        %733 = vmatpush1.bf16.msra.mxu0 %v700
        %734 = vmatprep.subr.bf16.mxu0 0
        %735 = vmatpush1.bf16.msra.mxu0 0
        %736 = vmatprep.subr.bf16.mxu0 0
        %737 = vmatpush1.bf16.msra.mxu0 0
        %738 = vmatprep.subr.bf16.mxu0 0
        %739 = vmatpush1.bf16.msra.mxu0 0
        %740 = vmatprep.subr.bf16.mxu0 0
        %741 = vmatpush1.bf16.msra.mxu0 0
        %742 = vmatprep.subr.bf16.mxu0 0
        %743 = vmatpush1.bf16.msra.mxu0 0
        %744 = vmatprep.subr.bf16.mxu0 0
        %745 = vmatpush1.bf16.msra.mxu0 0
        %746 = vmatprep.subr.bf16.mxu0 0
        %747 = vmatpush1.bf16.msra.mxu0 0
        %748 = vmatprep.subr.bf16.mxu0 0
        %749 = vmatpush1.bf16.msra.mxu0 0
        %750 = vmatprep.mubr.bf16.mxu0 0
        %751 = vmatmul.mubr.bf16.gmra.mrb[0].mxu0 %v609
        %v752 = vpop.f32.mrb[0].mxu0
        %v753 = vadd.f32 %v631, %v752
        %v754 = vpop.f32.mrb[0].mxu0
        %v755 = vadd.f32 %v635, %v754
        %v756 = vpop.f32.mrb[0].mxu0
        %v757 = vpop.f32.mrb[0].mxu0
        %758 = vdwg.mxu0
        %v759 = vmax.f32 %v753, 0.0
        %v760 = vmax.f32 %v755, 0.0
        %v761 = vpack.c.bf16 %v759, %v759
        %v762 = vpack.c.bf16 %v760, %v760
        %v763 = vld [vmem:[#allocation10] sm:$0xff]
        %v764 = vld [vmem:[#allocation10 + $0x8] sm:$0xff]
        %v765 = vld [vmem:[#allocation10 + $0x10] sm:$0xff]
        %v766 = vld [vmem:[#allocation10 + $0x18] sm:$0xff]
        %v767 = vld [vmem:[#allocation10 + $0x20] sm:$0xff]
        %v768 = vld [vmem:[#allocation10 + $0x28] sm:$0xff]
        %v769 = vld [vmem:[#allocation10 + $0x30] sm:$0xff]
        %v770 = vld [vmem:[#allocation10 + $0x38] sm:$0xff]
        %v771 = vld [vmem:[#allocation10 + $0x40] sm:$0xff]
        %v772 = vld [vmem:[#allocation10 + $0x48] sm:$0xff]
        %v773 = vld [vmem:[#allocation10 + $0x50] sm:$0xff]
        %v774 = vld [vmem:[#allocation10 + $0x58] sm:$0xff]
        %v775 = vld [vmem:[#allocation10 + $0x60] sm:$0xff]
        %v776 = vld [vmem:[#allocation10 + $0x68] sm:$0xff]
        %v777 = vld [vmem:[#allocation10 + $0x70] sm:$0xff]
        %v778 = vld [vmem:[#allocation10 + $0x78] sm:$0xff]
        %v779 = vld [vmem:[#allocation10 + $0x80] sm:$0xff]
        %v780 = vld [vmem:[#allocation10 + $0x88] sm:$0xff]
        %v781 = vld [vmem:[#allocation10 + $0x90] sm:$0xff]
        %v782 = vld [vmem:[#allocation10 + $0x98] sm:$0xff]
        %v783 = vld [vmem:[#allocation10 + $0xa0] sm:$0xff]
        %v784 = vld [vmem:[#allocation10 + $0xa8] sm:$0xff]
        %v785 = vld [vmem:[#allocation10 + $0xb0] sm:$0xff]
        %v786 = vld [vmem:[#allocation10 + $0xb8] sm:$0xff]
        %v787 = vld [vmem:[#allocation10 + $0xc0] sm:$0xff]
        %v788 = vld [vmem:[#allocation10 + $0xc8] sm:$0xff]
        %v789 = vld [vmem:[#allocation10 + $0xd0] sm:$0xff]
        %v790 = vld [vmem:[#allocation10 + $0xd8] sm:$0xff]
        %v791 = vld [vmem:[#allocation10 + $0xe0] sm:$0xff]
        %v792 = vld [vmem:[#allocation10 + $0xe8] sm:$0xff]
        %v793 = vld [vmem:[#allocation10 + $0xf0] sm:$0xff]
        %v794 = vld [vmem:[#allocation10 + $0xf8] sm:$0xff]
        %v795 = vld [vmem:[#allocation10 + $0x100] sm:$0xff]
        %v796 = vld [vmem:[#allocation10 + $0x108] sm:$0xff]
        %v797 = vld [vmem:[#allocation10 + $0x110] sm:$0xff]
        %v798 = vld [vmem:[#allocation10 + $0x118] sm:$0xff]
        %v799 = vld [vmem:[#allocation10 + $0x120] sm:$0xff]
        %v800 = vld [vmem:[#allocation10 + $0x128] sm:$0xff]
        %v801 = vld [vmem:[#allocation10 + $0x130] sm:$0xff]
        %v802 = vld [vmem:[#allocation10 + $0x138] sm:$0xff]
        %v803 = vld [vmem:[#allocation10 + $0x140] sm:$0xff]
        %v804 = vld [vmem:[#allocation10 + $0x148] sm:$0xff]
        %v805 = vld [vmem:[#allocation10 + $0x150] sm:$0xff]
        %v806 = vld [vmem:[#allocation10 + $0x158] sm:$0xff]
        %v807 = vld [vmem:[#allocation10 + $0x160] sm:$0xff]
        %v808 = vld [vmem:[#allocation10 + $0x168] sm:$0xff]
        %v809 = vld [vmem:[#allocation10 + $0x170] sm:$0xff]
        %v810 = vld [vmem:[#allocation10 + $0x178] sm:$0xff]
        %v811 = vld [vmem:[#allocation10 + $0x180] sm:$0xff]
        %v812 = vld [vmem:[#allocation10 + $0x188] sm:$0xff]
        %v813 = vld [vmem:[#allocation10 + $0x190] sm:$0xff]
        %v814 = vld [vmem:[#allocation10 + $0x198] sm:$0xff]
        %v815 = vld [vmem:[#allocation10 + $0x1a0] sm:$0xff]
        %v816 = vld [vmem:[#allocation10 + $0x1a8] sm:$0xff]
        %v817 = vld [vmem:[#allocation10 + $0x1b0] sm:$0xff]
        %v818 = vld [vmem:[#allocation10 + $0x1b8] sm:$0xff]
        %v819 = vld [vmem:[#allocation10 + $0x1c0] sm:$0xff]
        %v820 = vld [vmem:[#allocation10 + $0x1c8] sm:$0xff]
        %v821 = vld [vmem:[#allocation10 + $0x1d0] sm:$0xff]
        %v822 = vld [vmem:[#allocation10 + $0x1d8] sm:$0xff]
        %v823 = vld [vmem:[#allocation10 + $0x1e0] sm:$0xff]
        %v824 = vld [vmem:[#allocation10 + $0x1e8] sm:$0xff]
        %v825 = vld [vmem:[#allocation10 + $0x1f0] sm:$0xff]
        %v826 = vld [vmem:[#allocation10 + $0x1f8] sm:$0xff]
        %v827 = vld [vmem:[#allocation10 + $0x200] sm:$0xff]
        %v828 = vld [vmem:[#allocation10 + $0x208] sm:$0xff]
        %v829 = vld [vmem:[#allocation10 + $0x210] sm:$0xff]
        %v830 = vld [vmem:[#allocation10 + $0x218] sm:$0xff]
        %v831 = vld [vmem:[#allocation10 + $0x220] sm:$0xff]
        %v832 = vld [vmem:[#allocation10 + $0x228] sm:$0xff]
        %v833 = vld [vmem:[#allocation10 + $0x230] sm:$0xff]
        %v834 = vld [vmem:[#allocation10 + $0x238] sm:$0xff]
        %v835 = vld [vmem:[#allocation10 + $0x240] sm:$0xff]
        %v836 = vld [vmem:[#allocation10 + $0x248] sm:$0xff]
        %v837 = vld [vmem:[#allocation10 + $0x250] sm:$0xff]
        %v838 = vld [vmem:[#allocation10 + $0x258] sm:$0xff]
        %v839 = vld [vmem:[#allocation10 + $0x260] sm:$0xff]
        %v840 = vld [vmem:[#allocation10 + $0x268] sm:$0xff]
        %v841 = vld [vmem:[#allocation10 + $0x270] sm:$0xff]
        %v842 = vld [vmem:[#allocation10 + $0x278] sm:$0xff]
        %v843 = vld [vmem:[#allocation10 + $0x280] sm:$0xff]
        %v844 = vld [vmem:[#allocation10 + $0x288] sm:$0xff]
        %v845 = vld [vmem:[#allocation10 + $0x290] sm:$0xff]
        %v846 = vld [vmem:[#allocation10 + $0x298] sm:$0xff]
        %v847 = vld [vmem:[#allocation10 + $0x2a0] sm:$0xff]
        %v848 = vld [vmem:[#allocation10 + $0x2a8] sm:$0xff]
        %v849 = vld [vmem:[#allocation10 + $0x2b0] sm:$0xff]
        %v850 = vld [vmem:[#allocation10 + $0x2b8] sm:$0xff]
        %v851 = vld [vmem:[#allocation10 + $0x2c0] sm:$0xff]
        %v852 = vld [vmem:[#allocation10 + $0x2c8] sm:$0xff]
        %v853 = vld [vmem:[#allocation10 + $0x2d0] sm:$0xff]
        %v854 = vld [vmem:[#allocation10 + $0x2d8] sm:$0xff]
        %v855 = vld [vmem:[#allocation10 + $0x2e0] sm:$0xff]
        %v856 = vld [vmem:[#allocation10 + $0x2e8] sm:$0xff]
        %v857 = vld [vmem:[#allocation10 + $0x2f0] sm:$0xff]
        %v858 = vld [vmem:[#allocation10 + $0x2f8] sm:$0xff]
        %v859 = vld [vmem:[#allocation10 + $0x300] sm:$0xff]
        %v860 = vld [vmem:[#allocation10 + $0x308] sm:$0xff]
        %v861 = vld [vmem:[#allocation10 + $0x310] sm:$0xff]
        %v862 = vld [vmem:[#allocation10 + $0x318] sm:$0xff]
        %v863 = vld [vmem:[#allocation10 + $0x320] sm:$0xff]
        %v864 = vld [vmem:[#allocation10 + $0x328] sm:$0xff]
        %v865 = vld [vmem:[#allocation10 + $0x330] sm:$0xff]
        %v866 = vld [vmem:[#allocation10 + $0x338] sm:$0xff]
        %v867 = vld [vmem:[#allocation10 + $0x340] sm:$0xff]
        %v868 = vld [vmem:[#allocation10 + $0x348] sm:$0xff]
        %v869 = vld [vmem:[#allocation10 + $0x350] sm:$0xff]
        %v870 = vld [vmem:[#allocation10 + $0x358] sm:$0xff]
        %v871 = vld [vmem:[#allocation10 + $0x360] sm:$0xff]
        %v872 = vld [vmem:[#allocation10 + $0x368] sm:$0xff]
        %v873 = vld [vmem:[#allocation10 + $0x370] sm:$0xff]
        %v874 = vld [vmem:[#allocation10 + $0x378] sm:$0xff]
        %v875 = vld [vmem:[#allocation10 + $0x380] sm:$0xff]
        %v876 = vld [vmem:[#allocation10 + $0x388] sm:$0xff]
        %v877 = vld [vmem:[#allocation10 + $0x390] sm:$0xff]
        %v878 = vld [vmem:[#allocation10 + $0x398] sm:$0xff]
        %v879 = vld [vmem:[#allocation10 + $0x3a0] sm:$0xff]
        %v880 = vld [vmem:[#allocation10 + $0x3a8] sm:$0xff]
        %v881 = vld [vmem:[#allocation10 + $0x3b0] sm:$0xff]
        %v882 = vld [vmem:[#allocation10 + $0x3b8] sm:$0xff]
        %v883 = vld [vmem:[#allocation10 + $0x3c0] sm:$0xff]
        %v884 = vld [vmem:[#allocation10 + $0x3c8] sm:$0xff]
        %v885 = vld [vmem:[#allocation10 + $0x3d0] sm:$0xff]
        %v886 = vld [vmem:[#allocation10 + $0x3d8] sm:$0xff]
        %v887 = vld [vmem:[#allocation10 + $0x3e0] sm:$0xff]
        %v888 = vld [vmem:[#allocation10 + $0x3e8] sm:$0xff]
        %v889 = vld [vmem:[#allocation10 + $0x3f0] sm:$0xff]
        %v890 = vld [vmem:[#allocation10 + $0x3f8] sm:$0xff]
        %v891 = vld [vmem:[%s8] sm:$0xff]
        %v893 = vlaneseq
        %v894 = vshrl.u32 %v893, 7
        %v895 = vsub.s32 0, %v894
        %v896 = vrot.slane %v891, %v895
        %v897 = vlaneseq
        %v898 = vshrl.u32 %v897, 7
        %v899 = vsub.s32 1, %v898
        %v900 = vrot.slane %v891, %v899
        %v901 = vlaneseq
        %v902 = vshrl.u32 %v901, 7
        %v903 = vsub.s32 2, %v902
        %v904 = vrot.slane %v891, %v903
        %v905 = vlaneseq
        %v906 = vshrl.u32 %v905, 7
        %v907 = vsub.s32 3, %v906
        %v908 = vrot.slane %v891, %v907
        %v909 = vlaneseq
        %v910 = vshrl.u32 %v909, 7
        %v911 = vsub.s32 4, %v910
        %v912 = vrot.slane %v891, %v911
        %v913 = vlaneseq
        %v914 = vshrl.u32 %v913, 7
        %v915 = vsub.s32 5, %v914
        %v916 = vrot.slane %v891, %v915
        %v917 = vlaneseq
        %v918 = vshrl.u32 %v917, 7
        %v919 = vsub.s32 6, %v918
        %v920 = vrot.slane %v891, %v919
        %v921 = vlaneseq
        %v922 = vshrl.u32 %v921, 7
        %v923 = vsub.s32 7, %v922
        %v924 = vrot.slane %v891, %v923
        %v1061 = vunpack.c.l.b16 %v763
        %v1062 = vunpack.c.h.b16 %v763
        %v1063 = vunpack.c.l.b16 %v764
        %v1064 = vunpack.c.h.b16 %v764
        %v1065 = vunpack.c.l.b16 %v765
        %v1066 = vunpack.c.h.b16 %v765
        %v1067 = vunpack.c.l.b16 %v766
        %v1068 = vunpack.c.h.b16 %v766
        %v1069 = vunpack.c.l.b16 %v767
        %v1070 = vunpack.c.h.b16 %v767
        %v1071 = vunpack.c.l.b16 %v768
        %v1072 = vunpack.c.h.b16 %v768
        %v1073 = vunpack.c.l.b16 %v769
        %v1074 = vunpack.c.h.b16 %v769
        %v1075 = vunpack.c.l.b16 %v770
        %v1076 = vunpack.c.h.b16 %v770
        %v1077 = vunpack.c.l.b16 %v771
        %v1078 = vunpack.c.h.b16 %v771
        %v1079 = vunpack.c.l.b16 %v772
        %v1080 = vunpack.c.h.b16 %v772
        %v1081 = vunpack.c.l.b16 %v773
        %v1082 = vunpack.c.h.b16 %v773
        %v1083 = vunpack.c.l.b16 %v774
        %v1084 = vunpack.c.h.b16 %v774
        %v1085 = vunpack.c.l.b16 %v775
        %v1086 = vunpack.c.h.b16 %v775
        %v1087 = vunpack.c.l.b16 %v776
        %v1088 = vunpack.c.h.b16 %v776
        %v1089 = vunpack.c.l.b16 %v777
        %v1090 = vunpack.c.h.b16 %v777
        %v1091 = vunpack.c.l.b16 %v778
        %v1092 = vunpack.c.h.b16 %v778
        %v1093 = vunpack.c.l.b16 %v779
        %v1094 = vunpack.c.h.b16 %v779
        %v1095 = vunpack.c.l.b16 %v780
        %v1096 = vunpack.c.h.b16 %v780
        %v1097 = vunpack.c.l.b16 %v781
        %v1098 = vunpack.c.h.b16 %v781
        %v1099 = vunpack.c.l.b16 %v782
        %v1100 = vunpack.c.h.b16 %v782
        %v1101 = vunpack.c.l.b16 %v783
        %v1102 = vunpack.c.h.b16 %v783
        %v1103 = vunpack.c.l.b16 %v784
        %v1104 = vunpack.c.h.b16 %v784
        %v1105 = vunpack.c.l.b16 %v785
        %v1106 = vunpack.c.h.b16 %v785
        %v1107 = vunpack.c.l.b16 %v786
        %v1108 = vunpack.c.h.b16 %v786
        %v1109 = vunpack.c.l.b16 %v787
        %v1110 = vunpack.c.h.b16 %v787
        %v1111 = vunpack.c.l.b16 %v788
        %v1112 = vunpack.c.h.b16 %v788
        %v1113 = vunpack.c.l.b16 %v789
        %v1114 = vunpack.c.h.b16 %v789
        %v1115 = vunpack.c.l.b16 %v790
        %v1116 = vunpack.c.h.b16 %v790
        %v1117 = vunpack.c.l.b16 %v791
        %v1118 = vunpack.c.h.b16 %v791
        %v1119 = vunpack.c.l.b16 %v792
        %v1120 = vunpack.c.h.b16 %v792
        %v1121 = vunpack.c.l.b16 %v793
        %v1122 = vunpack.c.h.b16 %v793
        %v1123 = vunpack.c.l.b16 %v794
        %v1124 = vunpack.c.h.b16 %v794
        %v1125 = vunpack.c.l.b16 %v795
        %v1126 = vunpack.c.h.b16 %v795
        %v1127 = vunpack.c.l.b16 %v796
        %v1128 = vunpack.c.h.b16 %v796
        %v1129 = vunpack.c.l.b16 %v797
        %v1130 = vunpack.c.h.b16 %v797
        %v1131 = vunpack.c.l.b16 %v798
        %v1132 = vunpack.c.h.b16 %v798
        %v1133 = vunpack.c.l.b16 %v799
        %v1134 = vunpack.c.h.b16 %v799
        %v1135 = vunpack.c.l.b16 %v800
        %v1136 = vunpack.c.h.b16 %v800
        %v1137 = vunpack.c.l.b16 %v801
        %v1138 = vunpack.c.h.b16 %v801
        %v1139 = vunpack.c.l.b16 %v802
        %v1140 = vunpack.c.h.b16 %v802
        %v1141 = vunpack.c.l.b16 %v803
        %v1142 = vunpack.c.h.b16 %v803
        %v1143 = vunpack.c.l.b16 %v804
        %v1144 = vunpack.c.h.b16 %v804
        %v1145 = vunpack.c.l.b16 %v805
        %v1146 = vunpack.c.h.b16 %v805
        %v1147 = vunpack.c.l.b16 %v806
        %v1148 = vunpack.c.h.b16 %v806
        %v1149 = vunpack.c.l.b16 %v807
        %v1150 = vunpack.c.h.b16 %v807
        %v1151 = vunpack.c.l.b16 %v808
        %v1152 = vunpack.c.h.b16 %v808
        %v1153 = vunpack.c.l.b16 %v809
        %v1154 = vunpack.c.h.b16 %v809
        %v1155 = vunpack.c.l.b16 %v810
        %v1156 = vunpack.c.h.b16 %v810
        %v1157 = vunpack.c.l.b16 %v811
        %v1158 = vunpack.c.h.b16 %v811
        %v1159 = vunpack.c.l.b16 %v812
        %v1160 = vunpack.c.h.b16 %v812
        %v1161 = vunpack.c.l.b16 %v813
        %v1162 = vunpack.c.h.b16 %v813
        %v1163 = vunpack.c.l.b16 %v814
        %v1164 = vunpack.c.h.b16 %v814
        %v1165 = vunpack.c.l.b16 %v815
        %v1166 = vunpack.c.h.b16 %v815
        %v1167 = vunpack.c.l.b16 %v816
        %v1168 = vunpack.c.h.b16 %v816
        %v1169 = vunpack.c.l.b16 %v817
        %v1170 = vunpack.c.h.b16 %v817
        %v1171 = vunpack.c.l.b16 %v818
        %v1172 = vunpack.c.h.b16 %v818
        %v1173 = vunpack.c.l.b16 %v819
        %v1174 = vunpack.c.h.b16 %v819
        %v1175 = vunpack.c.l.b16 %v820
        %v1176 = vunpack.c.h.b16 %v820
        %v1177 = vunpack.c.l.b16 %v821
        %v1178 = vunpack.c.h.b16 %v821
        %v1179 = vunpack.c.l.b16 %v822
        %v1180 = vunpack.c.h.b16 %v822
        %v1181 = vunpack.c.l.b16 %v823
        %v1182 = vunpack.c.h.b16 %v823
        %v1183 = vunpack.c.l.b16 %v824
        %v1184 = vunpack.c.h.b16 %v824
        %v1185 = vunpack.c.l.b16 %v825
        %v1186 = vunpack.c.h.b16 %v825
        %v1187 = vunpack.c.l.b16 %v826
        %v1188 = vunpack.c.h.b16 %v826
        %v1189 = vunpack.c.l.b16 %v827
        %v1190 = vunpack.c.h.b16 %v827
        %v1191 = vunpack.c.l.b16 %v828
        %v1192 = vunpack.c.h.b16 %v828
        %v1193 = vunpack.c.l.b16 %v829
        %v1194 = vunpack.c.h.b16 %v829
        %v1195 = vunpack.c.l.b16 %v830
        %v1196 = vunpack.c.h.b16 %v830
        %v1197 = vunpack.c.l.b16 %v831
        %v1198 = vunpack.c.h.b16 %v831
        %v1199 = vunpack.c.l.b16 %v832
        %v1200 = vunpack.c.h.b16 %v832
        %v1201 = vunpack.c.l.b16 %v833
        %v1202 = vunpack.c.h.b16 %v833
        %v1203 = vunpack.c.l.b16 %v834
        %v1204 = vunpack.c.h.b16 %v834
        %v1205 = vunpack.c.l.b16 %v835
        %v1206 = vunpack.c.h.b16 %v835
        %v1207 = vunpack.c.l.b16 %v836
        %v1208 = vunpack.c.h.b16 %v836
        %v1209 = vunpack.c.l.b16 %v837
        %v1210 = vunpack.c.h.b16 %v837
        %v1211 = vunpack.c.l.b16 %v838
        %v1212 = vunpack.c.h.b16 %v838
        %v1213 = vunpack.c.l.b16 %v839
        %v1214 = vunpack.c.h.b16 %v839
        %v1215 = vunpack.c.l.b16 %v840
        %v1216 = vunpack.c.h.b16 %v840
        %v1217 = vunpack.c.l.b16 %v841
        %v1218 = vunpack.c.h.b16 %v841
        %v1219 = vunpack.c.l.b16 %v842
        %v1220 = vunpack.c.h.b16 %v842
        %v1221 = vunpack.c.l.b16 %v843
        %v1222 = vunpack.c.h.b16 %v843
        %v1223 = vunpack.c.l.b16 %v844
        %v1224 = vunpack.c.h.b16 %v844
        %v1225 = vunpack.c.l.b16 %v845
        %v1226 = vunpack.c.h.b16 %v845
        %v1227 = vunpack.c.l.b16 %v846
        %v1228 = vunpack.c.h.b16 %v846
        %v1229 = vunpack.c.l.b16 %v847
        %v1230 = vunpack.c.h.b16 %v847
        %v1231 = vunpack.c.l.b16 %v848
        %v1232 = vunpack.c.h.b16 %v848
        %v1233 = vunpack.c.l.b16 %v849
        %v1234 = vunpack.c.h.b16 %v849
        %v1235 = vunpack.c.l.b16 %v850
        %v1236 = vunpack.c.h.b16 %v850
        %v1237 = vunpack.c.l.b16 %v851
        %v1238 = vunpack.c.h.b16 %v851
        %v1239 = vunpack.c.l.b16 %v852
        %v1240 = vunpack.c.h.b16 %v852
        %v1241 = vunpack.c.l.b16 %v853
        %v1242 = vunpack.c.h.b16 %v853
        %v1243 = vunpack.c.l.b16 %v854
        %v1244 = vunpack.c.h.b16 %v854
        %v1245 = vunpack.c.l.b16 %v855
        %v1246 = vunpack.c.h.b16 %v855
        %v1247 = vunpack.c.l.b16 %v856
        %v1248 = vunpack.c.h.b16 %v856
        %v1249 = vunpack.c.l.b16 %v857
        %v1250 = vunpack.c.h.b16 %v857
        %v1251 = vunpack.c.l.b16 %v858
        %v1252 = vunpack.c.h.b16 %v858
        %v1253 = vunpack.c.l.b16 %v859
        %v1254 = vunpack.c.h.b16 %v859
        %v1255 = vunpack.c.l.b16 %v860
        %v1256 = vunpack.c.h.b16 %v860
        %v1257 = vunpack.c.l.b16 %v861
        %v1258 = vunpack.c.h.b16 %v861
        %v1259 = vunpack.c.l.b16 %v862
        %v1260 = vunpack.c.h.b16 %v862
        %v1261 = vunpack.c.l.b16 %v863
        %v1262 = vunpack.c.h.b16 %v863
        %v1263 = vunpack.c.l.b16 %v864
        %v1264 = vunpack.c.h.b16 %v864
        %v1265 = vunpack.c.l.b16 %v865
        %v1266 = vunpack.c.h.b16 %v865
        %v1267 = vunpack.c.l.b16 %v866
        %v1268 = vunpack.c.h.b16 %v866
        %v1269 = vunpack.c.l.b16 %v867
        %v1270 = vunpack.c.h.b16 %v867
        %v1271 = vunpack.c.l.b16 %v868
        %v1272 = vunpack.c.h.b16 %v868
        %v1273 = vunpack.c.l.b16 %v869
        %v1274 = vunpack.c.h.b16 %v869
        %v1275 = vunpack.c.l.b16 %v870
        %v1276 = vunpack.c.h.b16 %v870
        %v1277 = vunpack.c.l.b16 %v871
        %v1278 = vunpack.c.h.b16 %v871
        %v1279 = vunpack.c.l.b16 %v872
        %v1280 = vunpack.c.h.b16 %v872
        %v1281 = vunpack.c.l.b16 %v873
        %v1282 = vunpack.c.h.b16 %v873
        %v1283 = vunpack.c.l.b16 %v874
        %v1284 = vunpack.c.h.b16 %v874
        %v1285 = vunpack.c.l.b16 %v875
        %v1286 = vunpack.c.h.b16 %v875
        %v1287 = vunpack.c.l.b16 %v876
        %v1288 = vunpack.c.h.b16 %v876
        %v1289 = vunpack.c.l.b16 %v877
        %v1290 = vunpack.c.h.b16 %v877
        %v1291 = vunpack.c.l.b16 %v878
        %v1292 = vunpack.c.h.b16 %v878
        %v1293 = vunpack.c.l.b16 %v879
        %v1294 = vunpack.c.h.b16 %v879
        %v1295 = vunpack.c.l.b16 %v880
        %v1296 = vunpack.c.h.b16 %v880
        %v1297 = vunpack.c.l.b16 %v881
        %v1298 = vunpack.c.h.b16 %v881
        %v1299 = vunpack.c.l.b16 %v882
        %v1300 = vunpack.c.h.b16 %v882
        %v1301 = vunpack.c.l.b16 %v883
        %v1302 = vunpack.c.h.b16 %v883
        %v1303 = vunpack.c.l.b16 %v884
        %v1304 = vunpack.c.h.b16 %v884
        %v1305 = vunpack.c.l.b16 %v885
        %v1306 = vunpack.c.h.b16 %v885
        %v1307 = vunpack.c.l.b16 %v886
        %v1308 = vunpack.c.h.b16 %v886
        %v1309 = vunpack.c.l.b16 %v887
        %v1310 = vunpack.c.h.b16 %v887
        %v1311 = vunpack.c.l.b16 %v888
        %v1312 = vunpack.c.h.b16 %v888
        %v1313 = vunpack.c.l.b16 %v889
        %v1314 = vunpack.c.h.b16 %v889
        %v1315 = vunpack.c.l.b16 %v890
        %v1316 = vunpack.c.h.b16 %v890
        %v1317 = vpack.c.b16 %v1069, %v1061
        %v1318 = vpack.c.b16 %v1070, %v1062
        %v1319 = vpack.c.b16 %v1071, %v1063
        %v1320 = vpack.c.b16 %v1072, %v1064
        %v1321 = vpack.c.b16 %v1073, %v1065
        %v1322 = vpack.c.b16 %v1074, %v1066
        %v1323 = vpack.c.b16 %v1075, %v1067
        %v1324 = vpack.c.b16 %v1076, %v1068
        %v1325 = vpack.c.b16 %v1085, %v1077
        %v1326 = vpack.c.b16 %v1086, %v1078
        %v1327 = vpack.c.b16 %v1087, %v1079
        %v1328 = vpack.c.b16 %v1088, %v1080
        %v1329 = vpack.c.b16 %v1089, %v1081
        %v1330 = vpack.c.b16 %v1090, %v1082
        %v1331 = vpack.c.b16 %v1091, %v1083
        %v1332 = vpack.c.b16 %v1092, %v1084
        %v1333 = vpack.c.b16 %v1101, %v1093
        %v1334 = vpack.c.b16 %v1102, %v1094
        %v1335 = vpack.c.b16 %v1103, %v1095
        %v1336 = vpack.c.b16 %v1104, %v1096
        %v1337 = vpack.c.b16 %v1105, %v1097
        %v1338 = vpack.c.b16 %v1106, %v1098
        %v1339 = vpack.c.b16 %v1107, %v1099
        %v1340 = vpack.c.b16 %v1108, %v1100
        %v1341 = vpack.c.b16 %v1117, %v1109
        %v1342 = vpack.c.b16 %v1118, %v1110
        %v1343 = vpack.c.b16 %v1119, %v1111
        %v1344 = vpack.c.b16 %v1120, %v1112
        %v1345 = vpack.c.b16 %v1121, %v1113
        %v1346 = vpack.c.b16 %v1122, %v1114
        %v1347 = vpack.c.b16 %v1123, %v1115
        %v1348 = vpack.c.b16 %v1124, %v1116
        %v1349 = vpack.c.b16 %v1133, %v1125
        %v1350 = vpack.c.b16 %v1134, %v1126
        %v1351 = vpack.c.b16 %v1135, %v1127
        %v1352 = vpack.c.b16 %v1136, %v1128
        %v1353 = vpack.c.b16 %v1137, %v1129
        %v1354 = vpack.c.b16 %v1138, %v1130
        %v1355 = vpack.c.b16 %v1139, %v1131
        %v1356 = vpack.c.b16 %v1140, %v1132
        %v1357 = vpack.c.b16 %v1149, %v1141
        %v1358 = vpack.c.b16 %v1150, %v1142
        %v1359 = vpack.c.b16 %v1151, %v1143
        %v1360 = vpack.c.b16 %v1152, %v1144
        %v1361 = vpack.c.b16 %v1153, %v1145
        %v1362 = vpack.c.b16 %v1154, %v1146
        %v1363 = vpack.c.b16 %v1155, %v1147
        %v1364 = vpack.c.b16 %v1156, %v1148
        %v1365 = vpack.c.b16 %v1165, %v1157
        %v1366 = vpack.c.b16 %v1166, %v1158
        %v1367 = vpack.c.b16 %v1167, %v1159
        %v1368 = vpack.c.b16 %v1168, %v1160
        %v1369 = vpack.c.b16 %v1169, %v1161
        %v1370 = vpack.c.b16 %v1170, %v1162
        %v1371 = vpack.c.b16 %v1171, %v1163
        %v1372 = vpack.c.b16 %v1172, %v1164
        %v1373 = vpack.c.b16 %v1181, %v1173
        %v1374 = vpack.c.b16 %v1182, %v1174
        %v1375 = vpack.c.b16 %v1183, %v1175
        %v1376 = vpack.c.b16 %v1184, %v1176
        %v1377 = vpack.c.b16 %v1185, %v1177
        %v1378 = vpack.c.b16 %v1186, %v1178
        %v1379 = vpack.c.b16 %v1187, %v1179
        %v1380 = vpack.c.b16 %v1188, %v1180
        %v1381 = vpack.c.b16 %v1197, %v1189
        %v1382 = vpack.c.b16 %v1198, %v1190
        %v1383 = vpack.c.b16 %v1199, %v1191
        %v1384 = vpack.c.b16 %v1200, %v1192
        %v1385 = vpack.c.b16 %v1201, %v1193
        %v1386 = vpack.c.b16 %v1202, %v1194
        %v1387 = vpack.c.b16 %v1203, %v1195
        %v1388 = vpack.c.b16 %v1204, %v1196
        %v1389 = vpack.c.b16 %v1213, %v1205
        %v1390 = vpack.c.b16 %v1214, %v1206
        %v1391 = vpack.c.b16 %v1215, %v1207
        %v1392 = vpack.c.b16 %v1216, %v1208
        %v1393 = vpack.c.b16 %v1217, %v1209
        %v1394 = vpack.c.b16 %v1218, %v1210
        %v1395 = vpack.c.b16 %v1219, %v1211
        %v1396 = vpack.c.b16 %v1220, %v1212
        %v1397 = vpack.c.b16 %v1229, %v1221
        %v1398 = vpack.c.b16 %v1230, %v1222
        %v1399 = vpack.c.b16 %v1231, %v1223
        %v1400 = vpack.c.b16 %v1232, %v1224
        %v1401 = vpack.c.b16 %v1233, %v1225
        %v1402 = vpack.c.b16 %v1234, %v1226
        %v1403 = vpack.c.b16 %v1235, %v1227
        %v1404 = vpack.c.b16 %v1236, %v1228
        %v1405 = vpack.c.b16 %v1245, %v1237
        %v1406 = vpack.c.b16 %v1246, %v1238
        %v1407 = vpack.c.b16 %v1247, %v1239
        %v1408 = vpack.c.b16 %v1248, %v1240
        %v1409 = vpack.c.b16 %v1249, %v1241
        %v1410 = vpack.c.b16 %v1250, %v1242
        %v1411 = vpack.c.b16 %v1251, %v1243
        %v1412 = vpack.c.b16 %v1252, %v1244
        %v1413 = vpack.c.b16 %v1261, %v1253
        %v1414 = vpack.c.b16 %v1262, %v1254
        %v1415 = vpack.c.b16 %v1263, %v1255
        %v1416 = vpack.c.b16 %v1264, %v1256
        %v1417 = vpack.c.b16 %v1265, %v1257
        %v1418 = vpack.c.b16 %v1266, %v1258
        %v1419 = vpack.c.b16 %v1267, %v1259
        %v1420 = vpack.c.b16 %v1268, %v1260
        %v1421 = vpack.c.b16 %v1277, %v1269
        %v1422 = vpack.c.b16 %v1278, %v1270
        %v1423 = vpack.c.b16 %v1279, %v1271
        %v1424 = vpack.c.b16 %v1280, %v1272
        %v1425 = vpack.c.b16 %v1281, %v1273
        %v1426 = vpack.c.b16 %v1282, %v1274
        %v1427 = vpack.c.b16 %v1283, %v1275
        %v1428 = vpack.c.b16 %v1284, %v1276
        %v1429 = vpack.c.b16 %v1293, %v1285
        %v1430 = vpack.c.b16 %v1294, %v1286
        %v1431 = vpack.c.b16 %v1295, %v1287
        %v1432 = vpack.c.b16 %v1296, %v1288
        %v1433 = vpack.c.b16 %v1297, %v1289
        %v1434 = vpack.c.b16 %v1298, %v1290
        %v1435 = vpack.c.b16 %v1299, %v1291
        %v1436 = vpack.c.b16 %v1300, %v1292
        %v1437 = vpack.c.b16 %v1309, %v1301
        %v1438 = vpack.c.b16 %v1310, %v1302
        %v1439 = vpack.c.b16 %v1311, %v1303
        %v1440 = vpack.c.b16 %v1312, %v1304
        %v1441 = vpack.c.b16 %v1313, %v1305
        %v1442 = vpack.c.b16 %v1314, %v1306
        %v1443 = vpack.c.b16 %v1315, %v1307
        %v1444 = vpack.c.b16 %v1316, %v1308
        %1573 = vmatprep.subr.bf16.mxu0 %v1318
        %1574 = vmatpush1.bf16.msra.mxu0 %v1317
        %1575 = vmatprep.subr.bf16.mxu0 %v1326
        %1576 = vmatpush1.bf16.msra.mxu0 %v1325
        %1577 = vmatprep.subr.bf16.mxu0 %v1334
        %1578 = vmatpush1.bf16.msra.mxu0 %v1333
        %1579 = vmatprep.subr.bf16.mxu0 %v1342
        %1580 = vmatpush1.bf16.msra.mxu0 %v1341
        %1581 = vmatprep.subr.bf16.mxu0 %v1350
        %1582 = vmatpush1.bf16.msra.mxu0 %v1349
        %1583 = vmatprep.subr.bf16.mxu0 %v1358
        %1584 = vmatpush1.bf16.msra.mxu0 %v1357
        %1585 = vmatprep.subr.bf16.mxu0 %v1366
        %1586 = vmatpush1.bf16.msra.mxu0 %v1365
        %1587 = vmatprep.subr.bf16.mxu0 %v1374
        %1588 = vmatpush1.bf16.msra.mxu0 %v1373
        %1589 = vmatprep.subr.bf16.mxu0 %v1382
        %1590 = vmatpush1.bf16.msra.mxu0 %v1381
        %1591 = vmatprep.subr.bf16.mxu0 %v1390
        %1592 = vmatpush1.bf16.msra.mxu0 %v1389
        %1593 = vmatprep.subr.bf16.mxu0 %v1398
        %1594 = vmatpush1.bf16.msra.mxu0 %v1397
        %1595 = vmatprep.subr.bf16.mxu0 %v1406
        %1596 = vmatpush1.bf16.msra.mxu0 %v1405
        %1597 = vmatprep.subr.bf16.mxu0 %v1414
        %1598 = vmatpush1.bf16.msra.mxu0 %v1413
        %1599 = vmatprep.subr.bf16.mxu0 %v1422
        %1600 = vmatpush1.bf16.msra.mxu0 %v1421
        %1601 = vmatprep.subr.bf16.mxu0 %v1430
        %1602 = vmatpush1.bf16.msra.mxu0 %v1429
        %1603 = vmatprep.subr.bf16.mxu0 %v1438
        %1604 = vmatpush1.bf16.msra.mxu0 %v1437
        %1605 = vmatprep.mubr.bf16.mxu0 %v762
        %1606 = vmatmul.mubr.bf16.gmra.mrb[0].mxu0 %v761
        %v1607 = vpop.f32.mrb[0].mxu0
        %v1608 = vadd.f32 %v896, %v1607
        %v1609 = vpop.f32.mrb[0].mxu0
        %v1610 = vadd.f32 %v900, %v1609
        %v1611 = vpop.f32.mrb[0].mxu0
        %v1612 = vpop.f32.mrb[0].mxu0
        %1613 = vdwg.mxu0
        %1614 = vmatprep.subr.bf16.mxu0 %v1320
        %1615 = vmatpush1.bf16.msra.mxu0 %v1319
        %1616 = vmatprep.subr.bf16.mxu0 %v1328
        %1617 = vmatpush1.bf16.msra.mxu0 %v1327
        %1618 = vmatprep.subr.bf16.mxu0 %v1336
        %1619 = vmatpush1.bf16.msra.mxu0 %v1335
        %1620 = vmatprep.subr.bf16.mxu0 %v1344
        %1621 = vmatpush1.bf16.msra.mxu0 %v1343
        %1622 = vmatprep.subr.bf16.mxu0 %v1352
        %1623 = vmatpush1.bf16.msra.mxu0 %v1351
        %1624 = vmatprep.subr.bf16.mxu0 %v1360
        %1625 = vmatpush1.bf16.msra.mxu0 %v1359
        %1626 = vmatprep.subr.bf16.mxu0 %v1368
        %1627 = vmatpush1.bf16.msra.mxu0 %v1367
        %1628 = vmatprep.subr.bf16.mxu0 %v1376
        %1629 = vmatpush1.bf16.msra.mxu0 %v1375
        %1630 = vmatprep.subr.bf16.mxu0 %v1384
        %1631 = vmatpush1.bf16.msra.mxu0 %v1383
        %1632 = vmatprep.subr.bf16.mxu0 %v1392
        %1633 = vmatpush1.bf16.msra.mxu0 %v1391
        %1634 = vmatprep.subr.bf16.mxu0 %v1400
        %1635 = vmatpush1.bf16.msra.mxu0 %v1399
        %1636 = vmatprep.subr.bf16.mxu0 %v1408
        %1637 = vmatpush1.bf16.msra.mxu0 %v1407
        %1638 = vmatprep.subr.bf16.mxu0 %v1416
        %1639 = vmatpush1.bf16.msra.mxu0 %v1415
        %1640 = vmatprep.subr.bf16.mxu0 %v1424
        %1641 = vmatpush1.bf16.msra.mxu0 %v1423
        %1642 = vmatprep.subr.bf16.mxu0 %v1432
        %1643 = vmatpush1.bf16.msra.mxu0 %v1431
        %1644 = vmatprep.subr.bf16.mxu0 %v1440
        %1645 = vmatpush1.bf16.msra.mxu0 %v1439
        %1646 = vmatprep.mubr.bf16.mxu0 %v762
        %1647 = vmatmul.mubr.bf16.gmra.mrb[0].mxu0 %v761
        %v1648 = vpop.f32.mrb[0].mxu0
        %v1649 = vadd.f32 %v904, %v1648
        %v1650 = vpop.f32.mrb[0].mxu0
        %v1651 = vadd.f32 %v908, %v1650
        %v1652 = vpop.f32.mrb[0].mxu0
        %v1653 = vpop.f32.mrb[0].mxu0
        %1654 = vdwg.mxu0
        %1655 = vmatprep.subr.bf16.mxu0 %v1322
        %1656 = vmatpush1.bf16.msra.mxu0 %v1321
        %1657 = vmatprep.subr.bf16.mxu0 %v1330
        %1658 = vmatpush1.bf16.msra.mxu0 %v1329
        %1659 = vmatprep.subr.bf16.mxu0 %v1338
        %1660 = vmatpush1.bf16.msra.mxu0 %v1337
        %1661 = vmatprep.subr.bf16.mxu0 %v1346
        %1662 = vmatpush1.bf16.msra.mxu0 %v1345
        %1663 = vmatprep.subr.bf16.mxu0 %v1354
        %1664 = vmatpush1.bf16.msra.mxu0 %v1353
        %1665 = vmatprep.subr.bf16.mxu0 %v1362
        %1666 = vmatpush1.bf16.msra.mxu0 %v1361
        %1667 = vmatprep.subr.bf16.mxu0 %v1370
        %1668 = vmatpush1.bf16.msra.mxu0 %v1369
        %1669 = vmatprep.subr.bf16.mxu0 %v1378
        %1670 = vmatpush1.bf16.msra.mxu0 %v1377
        %1671 = vmatprep.subr.bf16.mxu0 %v1386
        %1672 = vmatpush1.bf16.msra.mxu0 %v1385
        %1673 = vmatprep.subr.bf16.mxu0 %v1394
        %1674 = vmatpush1.bf16.msra.mxu0 %v1393
        %1675 = vmatprep.subr.bf16.mxu0 %v1402
        %1676 = vmatpush1.bf16.msra.mxu0 %v1401
        %1677 = vmatprep.subr.bf16.mxu0 %v1410
        %1678 = vmatpush1.bf16.msra.mxu0 %v1409
        %1679 = vmatprep.subr.bf16.mxu0 %v1418
        %1680 = vmatpush1.bf16.msra.mxu0 %v1417
        %1681 = vmatprep.subr.bf16.mxu0 %v1426
        %1682 = vmatpush1.bf16.msra.mxu0 %v1425
        %1683 = vmatprep.subr.bf16.mxu0 %v1434
        %1684 = vmatpush1.bf16.msra.mxu0 %v1433
        %1685 = vmatprep.subr.bf16.mxu0 %v1442
        %1686 = vmatpush1.bf16.msra.mxu0 %v1441
        %1687 = vmatprep.mubr.bf16.mxu0 %v762
        %1688 = vmatmul.mubr.bf16.gmra.mrb[0].mxu0 %v761
        %v1689 = vpop.f32.mrb[0].mxu0
        %v1690 = vadd.f32 %v912, %v1689
        %v1691 = vpop.f32.mrb[0].mxu0
        %v1692 = vadd.f32 %v916, %v1691
        %v1693 = vpop.f32.mrb[0].mxu0
        %v1694 = vpop.f32.mrb[0].mxu0
        %1695 = vdwg.mxu0
        %1696 = vmatprep.subr.bf16.mxu0 %v1324
        %1697 = vmatpush1.bf16.msra.mxu0 %v1323
        %1698 = vmatprep.subr.bf16.mxu0 %v1332
        %1699 = vmatpush1.bf16.msra.mxu0 %v1331
        %1700 = vmatprep.subr.bf16.mxu0 %v1340
        %1701 = vmatpush1.bf16.msra.mxu0 %v1339
        %1702 = vmatprep.subr.bf16.mxu0 %v1348
        %1703 = vmatpush1.bf16.msra.mxu0 %v1347
        %1704 = vmatprep.subr.bf16.mxu0 %v1356
        %1705 = vmatpush1.bf16.msra.mxu0 %v1355
        %1706 = vmatprep.subr.bf16.mxu0 %v1364
        %1707 = vmatpush1.bf16.msra.mxu0 %v1363
        %1708 = vmatprep.subr.bf16.mxu0 %v1372
        %1709 = vmatpush1.bf16.msra.mxu0 %v1371
        %1710 = vmatprep.subr.bf16.mxu0 %v1380
        %1711 = vmatpush1.bf16.msra.mxu0 %v1379
        %1712 = vmatprep.subr.bf16.mxu0 %v1388
        %1713 = vmatpush1.bf16.msra.mxu0 %v1387
        %1714 = vmatprep.subr.bf16.mxu0 %v1396
        %1715 = vmatpush1.bf16.msra.mxu0 %v1395
        %1716 = vmatprep.subr.bf16.mxu0 %v1404
        %1717 = vmatpush1.bf16.msra.mxu0 %v1403
        %1718 = vmatprep.subr.bf16.mxu0 %v1412
        %1719 = vmatpush1.bf16.msra.mxu0 %v1411
        %1720 = vmatprep.subr.bf16.mxu0 %v1420
        %1721 = vmatpush1.bf16.msra.mxu0 %v1419
        %1722 = vmatprep.subr.bf16.mxu0 %v1428
        %1723 = vmatpush1.bf16.msra.mxu0 %v1427
        %1724 = vmatprep.subr.bf16.mxu0 %v1436
        %1725 = vmatpush1.bf16.msra.mxu0 %v1435
        %1726 = vmatprep.subr.bf16.mxu0 %v1444
        %1727 = vmatpush1.bf16.msra.mxu0 %v1443
        %1728 = vmatprep.mubr.bf16.mxu0 %v762
        %1729 = vmatmul.mubr.bf16.gmra.mrb[0].mxu0 %v761
        %v1730 = vpop.f32.mrb[0].mxu0
        %v1731 = vadd.f32 %v920, %v1730
        %v1732 = vpop.f32.mrb[0].mxu0
        %v1733 = vadd.f32 %v924, %v1732
        %v1734 = vpop.f32.mrb[0].mxu0
        %v1735 = vpop.f32.mrb[0].mxu0
        %1736 = vdwg.mxu0
        %v1737 = vmax.f32 %v1608, 0.0
        %v1738 = vmax.f32 %v1610, 0.0
        %v1739 = vmax.f32 %v1649, 0.0
        %v1740 = vmax.f32 %v1651, 0.0
        %v1741 = vmax.f32 %v1690, 0.0
        %v1742 = vmax.f32 %v1692, 0.0
        %v1743 = vmax.f32 %v1731, 0.0
        %v1744 = vmax.f32 %v1733, 0.0
        %v1745 = vpack.c.bf16 %v1737, %v1737
        %v1746 = vpack.c.bf16 %v1738, %v1738
        %v1747 = vpack.c.bf16 %v1739, %v1739
        %v1748 = vpack.c.bf16 %v1740, %v1740
        %v1749 = vpack.c.bf16 %v1741, %v1741
        %v1750 = vpack.c.bf16 %v1742, %v1742
        %v1751 = vpack.c.bf16 %v1743, %v1743
        %v1752 = vpack.c.bf16 %v1744, %v1744
        %v1753 = vld [vmem:[#allocation11] sm:$0xff]
        %v1754 = vld [vmem:[#allocation11 + $0x8] sm:$0xff]
        %v1755 = vld [vmem:[#allocation11 + $0x10] sm:$0xff]
        %v1756 = vld [vmem:[#allocation11 + $0x18] sm:$0xff]
        %v1757 = vld [vmem:[#allocation11 + $0x20] sm:$0xff]
        %v1758 = vld [vmem:[#allocation11 + $0x28] sm:$0xff]
        %v1759 = vld [vmem:[#allocation11 + $0x30] sm:$0xff]
        %v1760 = vld [vmem:[#allocation11 + $0x38] sm:$0xff]
        %v1761 = vld [vmem:[#allocation11 + $0x40] sm:$0xff]
        %v1762 = vld [vmem:[#allocation11 + $0x48] sm:$0xff]
        %v1763 = vld [vmem:[#allocation11 + $0x50] sm:$0xff]
        %v1764 = vld [vmem:[#allocation11 + $0x58] sm:$0xff]
        %v1765 = vld [vmem:[#allocation11 + $0x60] sm:$0xff]
        %v1766 = vld [vmem:[#allocation11 + $0x68] sm:$0xff]
        %v1767 = vld [vmem:[#allocation11 + $0x70] sm:$0xff]
        %v1768 = vld [vmem:[#allocation11 + $0x78] sm:$0xff]
        %v1769 = vld [vmem:[#allocation11 + $0x80] sm:$0xff]
        %v1770 = vld [vmem:[#allocation11 + $0x88] sm:$0xff]
        %v1771 = vld [vmem:[#allocation11 + $0x90] sm:$0xff]
        %v1772 = vld [vmem:[#allocation11 + $0x98] sm:$0xff]
        %v1773 = vld [vmem:[#allocation11 + $0xa0] sm:$0xff]
        %v1774 = vld [vmem:[#allocation11 + $0xa8] sm:$0xff]
        %v1775 = vld [vmem:[#allocation11 + $0xb0] sm:$0xff]
        %v1776 = vld [vmem:[#allocation11 + $0xb8] sm:$0xff]
        %v1777 = vld [vmem:[#allocation11 + $0xc0] sm:$0xff]
        %v1778 = vld [vmem:[#allocation11 + $0xc8] sm:$0xff]
        %v1779 = vld [vmem:[#allocation11 + $0xd0] sm:$0xff]
        %v1780 = vld [vmem:[#allocation11 + $0xd8] sm:$0xff]
        %v1781 = vld [vmem:[#allocation11 + $0xe0] sm:$0xff]
        %v1782 = vld [vmem:[#allocation11 + $0xe8] sm:$0xff]
        %v1783 = vld [vmem:[#allocation11 + $0xf0] sm:$0xff]
        %v1784 = vld [vmem:[#allocation11 + $0xf8] sm:$0xff]
        %v1785 = vld [vmem:[#allocation11 + $0x100] sm:$0xff]
        %v1786 = vld [vmem:[#allocation11 + $0x108] sm:$0xff]
        %v1787 = vld [vmem:[#allocation11 + $0x110] sm:$0xff]
        %v1788 = vld [vmem:[#allocation11 + $0x118] sm:$0xff]
        %v1789 = vld [vmem:[#allocation11 + $0x120] sm:$0xff]
        %v1790 = vld [vmem:[#allocation11 + $0x128] sm:$0xff]
        %v1791 = vld [vmem:[#allocation11 + $0x130] sm:$0xff]
        %v1792 = vld [vmem:[#allocation11 + $0x138] sm:$0xff]
        %v1793 = vld [vmem:[#allocation11 + $0x140] sm:$0xff]
        %v1794 = vld [vmem:[#allocation11 + $0x148] sm:$0xff]
        %v1795 = vld [vmem:[#allocation11 + $0x150] sm:$0xff]
        %v1796 = vld [vmem:[#allocation11 + $0x158] sm:$0xff]
        %v1797 = vld [vmem:[#allocation11 + $0x160] sm:$0xff]
        %v1798 = vld [vmem:[#allocation11 + $0x168] sm:$0xff]
        %v1799 = vld [vmem:[#allocation11 + $0x170] sm:$0xff]
        %v1800 = vld [vmem:[#allocation11 + $0x178] sm:$0xff]
        %v1801 = vld [vmem:[#allocation11 + $0x180] sm:$0xff]
        %v1802 = vld [vmem:[#allocation11 + $0x188] sm:$0xff]
        %v1803 = vld [vmem:[#allocation11 + $0x190] sm:$0xff]
        %v1804 = vld [vmem:[#allocation11 + $0x198] sm:$0xff]
        %v1805 = vld [vmem:[#allocation11 + $0x1a0] sm:$0xff]
        %v1806 = vld [vmem:[#allocation11 + $0x1a8] sm:$0xff]
        %v1807 = vld [vmem:[#allocation11 + $0x1b0] sm:$0xff]
        %v1808 = vld [vmem:[#allocation11 + $0x1b8] sm:$0xff]
        %v1809 = vld [vmem:[#allocation11 + $0x1c0] sm:$0xff]
        %v1810 = vld [vmem:[#allocation11 + $0x1c8] sm:$0xff]
        %v1811 = vld [vmem:[#allocation11 + $0x1d0] sm:$0xff]
        %v1812 = vld [vmem:[#allocation11 + $0x1d8] sm:$0xff]
        %v1813 = vld [vmem:[#allocation11 + $0x1e0] sm:$0xff]
        %v1814 = vld [vmem:[#allocation11 + $0x1e8] sm:$0xff]
        %v1815 = vld [vmem:[#allocation11 + $0x1f0] sm:$0xff]
        %v1816 = vld [vmem:[#allocation11 + $0x1f8] sm:$0xff]
        %v1817 = vld [vmem:[%s10] sm:$0x3]
        %v1819 = vlaneseq
        %v1820 = vshrl.u32 %v1819, 7
        %v1821 = vsub.s32 0, %v1820
        %v1822 = vrot.slane %v1817, %v1821
        %v1823 = vlaneseq
        %v1824 = vshrl.u32 %v1823, 7
        %v1825 = vsub.s32 1, %v1824
        %v1826 = vrot.slane %v1817, %v1825
        %v1893 = vunpack.c.l.b16 %v1753
        %v1894 = vunpack.c.h.b16 %v1753
        %v1895 = vunpack.c.l.b16 %v1754
        %v1896 = vunpack.c.h.b16 %v1754
        %v1897 = vunpack.c.l.b16 %v1755
        %v1898 = vunpack.c.h.b16 %v1755
        %v1899 = vunpack.c.l.b16 %v1756
        %v1900 = vunpack.c.h.b16 %v1756
        %v1901 = vunpack.c.l.b16 %v1757
        %v1902 = vunpack.c.h.b16 %v1757
        %v1903 = vunpack.c.l.b16 %v1758
        %v1904 = vunpack.c.h.b16 %v1758
        %v1905 = vunpack.c.l.b16 %v1759
        %v1906 = vunpack.c.h.b16 %v1759
        %v1907 = vunpack.c.l.b16 %v1760
        %v1908 = vunpack.c.h.b16 %v1760
        %v1909 = vunpack.c.l.b16 %v1761
        %v1910 = vunpack.c.h.b16 %v1761
        %v1911 = vunpack.c.l.b16 %v1762
        %v1912 = vunpack.c.h.b16 %v1762
        %v1913 = vunpack.c.l.b16 %v1763
        %v1914 = vunpack.c.h.b16 %v1763
        %v1915 = vunpack.c.l.b16 %v1764
        %v1916 = vunpack.c.h.b16 %v1764
        %v1917 = vunpack.c.l.b16 %v1765
        %v1918 = vunpack.c.h.b16 %v1765
        %v1919 = vunpack.c.l.b16 %v1766
        %v1920 = vunpack.c.h.b16 %v1766
        %v1921 = vunpack.c.l.b16 %v1767
        %v1922 = vunpack.c.h.b16 %v1767
        %v1923 = vunpack.c.l.b16 %v1768
        %v1924 = vunpack.c.h.b16 %v1768
        %v1925 = vunpack.c.l.b16 %v1769
        %v1926 = vunpack.c.h.b16 %v1769
        %v1927 = vunpack.c.l.b16 %v1770
        %v1928 = vunpack.c.h.b16 %v1770
        %v1929 = vunpack.c.l.b16 %v1771
        %v1930 = vunpack.c.h.b16 %v1771
        %v1931 = vunpack.c.l.b16 %v1772
        %v1932 = vunpack.c.h.b16 %v1772
        %v1933 = vunpack.c.l.b16 %v1773
        %v1934 = vunpack.c.h.b16 %v1773
        %v1935 = vunpack.c.l.b16 %v1774
        %v1936 = vunpack.c.h.b16 %v1774
        %v1937 = vunpack.c.l.b16 %v1775
        %v1938 = vunpack.c.h.b16 %v1775
        %v1939 = vunpack.c.l.b16 %v1776
        %v1940 = vunpack.c.h.b16 %v1776
        %v1941 = vunpack.c.l.b16 %v1777
        %v1942 = vunpack.c.h.b16 %v1777
        %v1943 = vunpack.c.l.b16 %v1778
        %v1944 = vunpack.c.h.b16 %v1778
        %v1945 = vunpack.c.l.b16 %v1779
        %v1946 = vunpack.c.h.b16 %v1779
        %v1947 = vunpack.c.l.b16 %v1780
        %v1948 = vunpack.c.h.b16 %v1780
        %v1949 = vunpack.c.l.b16 %v1781
        %v1950 = vunpack.c.h.b16 %v1781
        %v1951 = vunpack.c.l.b16 %v1782
        %v1952 = vunpack.c.h.b16 %v1782
        %v1953 = vunpack.c.l.b16 %v1783
        %v1954 = vunpack.c.h.b16 %v1783
        %v1955 = vunpack.c.l.b16 %v1784
        %v1956 = vunpack.c.h.b16 %v1784
        %v1957 = vunpack.c.l.b16 %v1785
        %v1958 = vunpack.c.h.b16 %v1785
        %v1959 = vunpack.c.l.b16 %v1786
        %v1960 = vunpack.c.h.b16 %v1786
        %v1961 = vunpack.c.l.b16 %v1787
        %v1962 = vunpack.c.h.b16 %v1787
        %v1963 = vunpack.c.l.b16 %v1788
        %v1964 = vunpack.c.h.b16 %v1788
        %v1965 = vunpack.c.l.b16 %v1789
        %v1966 = vunpack.c.h.b16 %v1789
        %v1967 = vunpack.c.l.b16 %v1790
        %v1968 = vunpack.c.h.b16 %v1790
        %v1969 = vunpack.c.l.b16 %v1791
        %v1970 = vunpack.c.h.b16 %v1791
        %v1971 = vunpack.c.l.b16 %v1792
        %v1972 = vunpack.c.h.b16 %v1792
        %v1973 = vunpack.c.l.b16 %v1793
        %v1974 = vunpack.c.h.b16 %v1793
        %v1975 = vunpack.c.l.b16 %v1794
        %v1976 = vunpack.c.h.b16 %v1794
        %v1977 = vunpack.c.l.b16 %v1795
        %v1978 = vunpack.c.h.b16 %v1795
        %v1979 = vunpack.c.l.b16 %v1796
        %v1980 = vunpack.c.h.b16 %v1796
        %v1981 = vunpack.c.l.b16 %v1797
        %v1982 = vunpack.c.h.b16 %v1797
        %v1983 = vunpack.c.l.b16 %v1798
        %v1984 = vunpack.c.h.b16 %v1798
        %v1985 = vunpack.c.l.b16 %v1799
        %v1986 = vunpack.c.h.b16 %v1799
        %v1987 = vunpack.c.l.b16 %v1800
        %v1988 = vunpack.c.h.b16 %v1800
        %v1989 = vunpack.c.l.b16 %v1801
        %v1990 = vunpack.c.h.b16 %v1801
        %v1991 = vunpack.c.l.b16 %v1802
        %v1992 = vunpack.c.h.b16 %v1802
        %v1993 = vunpack.c.l.b16 %v1803
        %v1994 = vunpack.c.h.b16 %v1803
        %v1995 = vunpack.c.l.b16 %v1804
        %v1996 = vunpack.c.h.b16 %v1804
        %v1997 = vunpack.c.l.b16 %v1805
        %v1998 = vunpack.c.h.b16 %v1805
        %v1999 = vunpack.c.l.b16 %v1806
        %v2000 = vunpack.c.h.b16 %v1806
        %v2001 = vunpack.c.l.b16 %v1807
        %v2002 = vunpack.c.h.b16 %v1807
        %v2003 = vunpack.c.l.b16 %v1808
        %v2004 = vunpack.c.h.b16 %v1808
        %v2005 = vunpack.c.l.b16 %v1809
        %v2006 = vunpack.c.h.b16 %v1809
        %v2007 = vunpack.c.l.b16 %v1810
        %v2008 = vunpack.c.h.b16 %v1810
        %v2009 = vunpack.c.l.b16 %v1811
        %v2010 = vunpack.c.h.b16 %v1811
        %v2011 = vunpack.c.l.b16 %v1812
        %v2012 = vunpack.c.h.b16 %v1812
        %v2013 = vunpack.c.l.b16 %v1813
        %v2014 = vunpack.c.h.b16 %v1813
        %v2015 = vunpack.c.l.b16 %v1814
        %v2016 = vunpack.c.h.b16 %v1814
        %v2017 = vunpack.c.l.b16 %v1815
        %v2018 = vunpack.c.h.b16 %v1815
        %v2019 = vunpack.c.l.b16 %v1816
        %v2020 = vunpack.c.h.b16 %v1816
        %v2021 = vpack.c.b16 %v1895, %v1893
        %v2022 = vpack.c.b16 %v1896, %v1894
        %v2023 = vpack.c.b16 %v1899, %v1897
        %v2024 = vpack.c.b16 %v1900, %v1898
        %v2025 = vpack.c.b16 %v1903, %v1901
        %v2026 = vpack.c.b16 %v1904, %v1902
        %v2027 = vpack.c.b16 %v1907, %v1905
        %v2028 = vpack.c.b16 %v1908, %v1906
        %v2029 = vpack.c.b16 %v1911, %v1909
        %v2030 = vpack.c.b16 %v1912, %v1910
        %v2031 = vpack.c.b16 %v1915, %v1913
        %v2032 = vpack.c.b16 %v1916, %v1914
        %v2033 = vpack.c.b16 %v1919, %v1917
        %v2034 = vpack.c.b16 %v1920, %v1918
        %v2035 = vpack.c.b16 %v1923, %v1921
        %v2036 = vpack.c.b16 %v1924, %v1922
        %v2037 = vpack.c.b16 %v1927, %v1925
        %v2038 = vpack.c.b16 %v1928, %v1926
        %v2039 = vpack.c.b16 %v1931, %v1929
        %v2040 = vpack.c.b16 %v1932, %v1930
        %v2041 = vpack.c.b16 %v1935, %v1933
        %v2042 = vpack.c.b16 %v1936, %v1934
        %v2043 = vpack.c.b16 %v1939, %v1937
        %v2044 = vpack.c.b16 %v1940, %v1938
        %v2045 = vpack.c.b16 %v1943, %v1941
        %v2046 = vpack.c.b16 %v1944, %v1942
        %v2047 = vpack.c.b16 %v1947, %v1945
        %v2048 = vpack.c.b16 %v1948, %v1946
        %v2049 = vpack.c.b16 %v1951, %v1949
        %v2050 = vpack.c.b16 %v1952, %v1950
        %v2051 = vpack.c.b16 %v1955, %v1953
        %v2052 = vpack.c.b16 %v1956, %v1954
        %v2053 = vpack.c.b16 %v1959, %v1957
        %v2054 = vpack.c.b16 %v1960, %v1958
        %v2055 = vpack.c.b16 %v1963, %v1961
        %v2056 = vpack.c.b16 %v1964, %v1962
        %v2057 = vpack.c.b16 %v1967, %v1965
        %v2058 = vpack.c.b16 %v1968, %v1966
        %v2059 = vpack.c.b16 %v1971, %v1969
        %v2060 = vpack.c.b16 %v1972, %v1970
        %v2061 = vpack.c.b16 %v1975, %v1973
        %v2062 = vpack.c.b16 %v1976, %v1974
        %v2063 = vpack.c.b16 %v1979, %v1977
        %v2064 = vpack.c.b16 %v1980, %v1978
        %v2065 = vpack.c.b16 %v1983, %v1981
        %v2066 = vpack.c.b16 %v1984, %v1982
        %v2067 = vpack.c.b16 %v1987, %v1985
        %v2068 = vpack.c.b16 %v1988, %v1986
        %v2069 = vpack.c.b16 %v1991, %v1989
        %v2070 = vpack.c.b16 %v1992, %v1990
        %v2071 = vpack.c.b16 %v1995, %v1993
        %v2072 = vpack.c.b16 %v1996, %v1994
        %v2073 = vpack.c.b16 %v1999, %v1997
        %v2074 = vpack.c.b16 %v2000, %v1998
        %v2075 = vpack.c.b16 %v2003, %v2001
        %v2076 = vpack.c.b16 %v2004, %v2002
        %v2077 = vpack.c.b16 %v2007, %v2005
        %v2078 = vpack.c.b16 %v2008, %v2006
        %v2079 = vpack.c.b16 %v2011, %v2009
        %v2080 = vpack.c.b16 %v2012, %v2010
        %v2081 = vpack.c.b16 %v2015, %v2013
        %v2082 = vpack.c.b16 %v2016, %v2014
        %v2083 = vpack.c.b16 %v2019, %v2017
        %v2084 = vpack.c.b16 %v2020, %v2018
        %2149 = vmatprep.subr.bf16.mxu0 %v2022
        %2150 = vmatpush1.bf16.msra.mxu0 %v2021
        %2151 = vmatprep.subr.bf16.mxu0 %v2024
        %2152 = vmatpush1.bf16.msra.mxu0 %v2023
        %2153 = vmatprep.subr.bf16.mxu0 %v2026
        %2154 = vmatpush1.bf16.msra.mxu0 %v2025
        %2155 = vmatprep.subr.bf16.mxu0 %v2028
        %2156 = vmatpush1.bf16.msra.mxu0 %v2027
        %2157 = vmatprep.subr.bf16.mxu0 %v2030
        %2158 = vmatpush1.bf16.msra.mxu0 %v2029
        %2159 = vmatprep.subr.bf16.mxu0 %v2032
        %2160 = vmatpush1.bf16.msra.mxu0 %v2031
        %2161 = vmatprep.subr.bf16.mxu0 %v2034
        %2162 = vmatpush1.bf16.msra.mxu0 %v2033
        %2163 = vmatprep.subr.bf16.mxu0 %v2036
        %2164 = vmatpush1.bf16.msra.mxu0 %v2035
        %2165 = vmatprep.subr.bf16.mxu0 %v2038
        %2166 = vmatpush1.bf16.msra.mxu0 %v2037
        %2167 = vmatprep.subr.bf16.mxu0 %v2040
        %2168 = vmatpush1.bf16.msra.mxu0 %v2039
        %2169 = vmatprep.subr.bf16.mxu0 %v2042
        %2170 = vmatpush1.bf16.msra.mxu0 %v2041
        %2171 = vmatprep.subr.bf16.mxu0 %v2044
        %2172 = vmatpush1.bf16.msra.mxu0 %v2043
        %2173 = vmatprep.subr.bf16.mxu0 %v2046
        %2174 = vmatpush1.bf16.msra.mxu0 %v2045
        %2175 = vmatprep.subr.bf16.mxu0 %v2048
        %2176 = vmatpush1.bf16.msra.mxu0 %v2047
        %2177 = vmatprep.subr.bf16.mxu0 %v2050
        %2178 = vmatpush1.bf16.msra.mxu0 %v2049
        %2179 = vmatprep.subr.bf16.mxu0 %v2052
        %2180 = vmatpush1.bf16.msra.mxu0 %v2051
        %2181 = vmatprep.mubr.bf16.mxu0 %v1746
        %2182 = vmatmul.mubr.bf16.gmra.mrb[0].mxu0 %v1745
        %v2183 = vpop.f32.mrb[0].mxu0
        %v2184 = vadd.f32 %v1822, %v2183
        %v2185 = vpop.f32.mrb[0].mxu0
        %v2186 = vadd.f32 %v1826, %v2185
        %v2187 = vpop.f32.mrb[0].mxu0
        %v2188 = vpop.f32.mrb[0].mxu0
        %2189 = vdwg.mxu0
        %2190 = vmatprep.subr.bf16.mxu0 %v2054
        %2191 = vmatpush1.bf16.msra.mxu0 %v2053
        %2192 = vmatprep.subr.bf16.mxu0 %v2056
        %2193 = vmatpush1.bf16.msra.mxu0 %v2055
        %2194 = vmatprep.subr.bf16.mxu0 %v2058
        %2195 = vmatpush1.bf16.msra.mxu0 %v2057
        %2196 = vmatprep.subr.bf16.mxu0 %v2060
        %2197 = vmatpush1.bf16.msra.mxu0 %v2059
        %2198 = vmatprep.subr.bf16.mxu0 %v2062
        %2199 = vmatpush1.bf16.msra.mxu0 %v2061
        %2200 = vmatprep.subr.bf16.mxu0 %v2064
        %2201 = vmatpush1.bf16.msra.mxu0 %v2063
        %2202 = vmatprep.subr.bf16.mxu0 %v2066
        %2203 = vmatpush1.bf16.msra.mxu0 %v2065
        %2204 = vmatprep.subr.bf16.mxu0 %v2068
        %2205 = vmatpush1.bf16.msra.mxu0 %v2067
        %2206 = vmatprep.subr.bf16.mxu0 %v2070
        %2207 = vmatpush1.bf16.msra.mxu0 %v2069
        %2208 = vmatprep.subr.bf16.mxu0 %v2072
        %2209 = vmatpush1.bf16.msra.mxu0 %v2071
        %2210 = vmatprep.subr.bf16.mxu0 %v2074
        %2211 = vmatpush1.bf16.msra.mxu0 %v2073
        %2212 = vmatprep.subr.bf16.mxu0 %v2076
        %2213 = vmatpush1.bf16.msra.mxu0 %v2075
        %2214 = vmatprep.subr.bf16.mxu0 %v2078
        %2215 = vmatpush1.bf16.msra.mxu0 %v2077
        %2216 = vmatprep.subr.bf16.mxu0 %v2080
        %2217 = vmatpush1.bf16.msra.mxu0 %v2079
        %2218 = vmatprep.subr.bf16.mxu0 %v2082
        %2219 = vmatpush1.bf16.msra.mxu0 %v2081
        %2220 = vmatprep.subr.bf16.mxu0 %v2084
        %2221 = vmatpush1.bf16.msra.mxu0 %v2083
        %2222 = vmatprep.mubr.bf16.mxu0 %v1748
        %2223 = vmatmul.mubr.bf16.gmra.mrb[0].mxu0 %v1747
        %v2224 = vpop.f32.mrb[0].mxu0
        %v2225 = vadd.f32 %v2184, %v2224
        %v2226 = vpop.f32.mrb[0].mxu0
        %v2227 = vadd.f32 %v2186, %v2226
        %v2228 = vpop.f32.mrb[0].mxu0
        %v2229 = vpop.f32.mrb[0].mxu0
        %2230 = vdwg.mxu0
        %v2231 = vpack.c.bf16 %v2225, %v2225
        %v2232 = vpack.c.bf16 %v2227, %v2227
        %v2235 = vunpack.c.l.b16 %v2231
        %v2236 = vunpack.c.l.b16 %v2232
        %v2237 = vpack.c.b16 %v2236, %v2235
        %2239 = vst [vmem:[%s459] sm:$0xff] %v2237
        %s2240 = scalar_lea.vmem [#allocation11], 512
        %v2241 = vld [vmem:[%s2240] sm:$0xff]
        %v2242 = vld [vmem:[%s2240 + $0x8] sm:$0xff]
        %v2243 = vld [vmem:[%s2240 + $0x10] sm:$0xff]
        %v2244 = vld [vmem:[%s2240 + $0x18] sm:$0xff]
        %v2245 = vld [vmem:[%s2240 + $0x20] sm:$0xff]
        %v2246 = vld [vmem:[%s2240 + $0x28] sm:$0xff]
        %v2247 = vld [vmem:[%s2240 + $0x30] sm:$0xff]
        %v2248 = vld [vmem:[%s2240 + $0x38] sm:$0xff]
        %v2249 = vld [vmem:[%s2240 + $0x40] sm:$0xff]
        %v2250 = vld [vmem:[%s2240 + $0x48] sm:$0xff]
        %v2251 = vld [vmem:[%s2240 + $0x50] sm:$0xff]
        %v2252 = vld [vmem:[%s2240 + $0x58] sm:$0xff]
        %v2253 = vld [vmem:[%s2240 + $0x60] sm:$0xff]
        %v2254 = vld [vmem:[%s2240 + $0x68] sm:$0xff]
        %v2255 = vld [vmem:[%s2240 + $0x70] sm:$0xff]
        %v2256 = vld [vmem:[%s2240 + $0x78] sm:$0xff]
        %v2257 = vld [vmem:[%s2240 + $0x80] sm:$0xff]
        %v2258 = vld [vmem:[%s2240 + $0x88] sm:$0xff]
        %v2259 = vld [vmem:[%s2240 + $0x90] sm:$0xff]
        %v2260 = vld [vmem:[%s2240 + $0x98] sm:$0xff]
        %v2261 = vld [vmem:[%s2240 + $0xa0] sm:$0xff]
        %v2262 = vld [vmem:[%s2240 + $0xa8] sm:$0xff]
        %v2263 = vld [vmem:[%s2240 + $0xb0] sm:$0xff]
        %v2264 = vld [vmem:[%s2240 + $0xb8] sm:$0xff]
        %v2265 = vld [vmem:[%s2240 + $0xc0] sm:$0xff]
        %v2266 = vld [vmem:[%s2240 + $0xc8] sm:$0xff]
        %v2267 = vld [vmem:[%s2240 + $0xd0] sm:$0xff]
        %v2268 = vld [vmem:[%s2240 + $0xd8] sm:$0xff]
        %v2269 = vld [vmem:[%s2240 + $0xe0] sm:$0xff]
        %v2270 = vld [vmem:[%s2240 + $0xe8] sm:$0xff]
        %v2271 = vld [vmem:[%s2240 + $0xf0] sm:$0xff]
        %v2272 = vld [vmem:[%s2240 + $0xf8] sm:$0xff]
        %v2273 = vld [vmem:[%s2240 + $0x100] sm:$0xff]
        %v2274 = vld [vmem:[%s2240 + $0x108] sm:$0xff]
        %v2275 = vld [vmem:[%s2240 + $0x110] sm:$0xff]
        %v2276 = vld [vmem:[%s2240 + $0x118] sm:$0xff]
        %v2277 = vld [vmem:[%s2240 + $0x120] sm:$0xff]
        %v2278 = vld [vmem:[%s2240 + $0x128] sm:$0xff]
        %v2279 = vld [vmem:[%s2240 + $0x130] sm:$0xff]
        %v2280 = vld [vmem:[%s2240 + $0x138] sm:$0xff]
        %v2281 = vld [vmem:[%s2240 + $0x140] sm:$0xff]
        %v2282 = vld [vmem:[%s2240 + $0x148] sm:$0xff]
        %v2283 = vld [vmem:[%s2240 + $0x150] sm:$0xff]
        %v2284 = vld [vmem:[%s2240 + $0x158] sm:$0xff]
        %v2285 = vld [vmem:[%s2240 + $0x160] sm:$0xff]
        %v2286 = vld [vmem:[%s2240 + $0x168] sm:$0xff]
        %v2287 = vld [vmem:[%s2240 + $0x170] sm:$0xff]
        %v2288 = vld [vmem:[%s2240 + $0x178] sm:$0xff]
        %v2289 = vld [vmem:[%s2240 + $0x180] sm:$0xff]
        %v2290 = vld [vmem:[%s2240 + $0x188] sm:$0xff]
        %v2291 = vld [vmem:[%s2240 + $0x190] sm:$0xff]
        %v2292 = vld [vmem:[%s2240 + $0x198] sm:$0xff]
        %v2293 = vld [vmem:[%s2240 + $0x1a0] sm:$0xff]
        %v2294 = vld [vmem:[%s2240 + $0x1a8] sm:$0xff]
        %v2295 = vld [vmem:[%s2240 + $0x1b0] sm:$0xff]
        %v2296 = vld [vmem:[%s2240 + $0x1b8] sm:$0xff]
        %v2297 = vld [vmem:[%s2240 + $0x1c0] sm:$0xff]
        %v2298 = vld [vmem:[%s2240 + $0x1c8] sm:$0xff]
        %v2299 = vld [vmem:[%s2240 + $0x1d0] sm:$0xff]
        %v2300 = vld [vmem:[%s2240 + $0x1d8] sm:$0xff]
        %v2301 = vld [vmem:[%s2240 + $0x1e0] sm:$0xff]
        %v2302 = vld [vmem:[%s2240 + $0x1e8] sm:$0xff]
        %v2303 = vld [vmem:[%s2240 + $0x1f0] sm:$0xff]
        %v2304 = vld [vmem:[%s2240 + $0x1f8] sm:$0xff]
        %s2305 = scalar_lea.vmem %s10, 2
        %v2306 = vld [vmem:[%s2305] sm:$0x3]
        %v2308 = vlaneseq
        %v2309 = vshrl.u32 %v2308, 7
        %v2310 = vsub.s32 0, %v2309
        %v2311 = vrot.slane %v2306, %v2310
        %v2312 = vlaneseq
        %v2313 = vshrl.u32 %v2312, 7
        %v2314 = vsub.s32 1, %v2313
        %v2315 = vrot.slane %v2306, %v2314
        %v2382 = vunpack.c.l.b16 %v2241
        %v2383 = vunpack.c.h.b16 %v2241
        %v2384 = vunpack.c.l.b16 %v2242
        %v2385 = vunpack.c.h.b16 %v2242
        %v2386 = vunpack.c.l.b16 %v2243
        %v2387 = vunpack.c.h.b16 %v2243
        %v2388 = vunpack.c.l.b16 %v2244
        %v2389 = vunpack.c.h.b16 %v2244
        %v2390 = vunpack.c.l.b16 %v2245
        %v2391 = vunpack.c.h.b16 %v2245
        %v2392 = vunpack.c.l.b16 %v2246
        %v2393 = vunpack.c.h.b16 %v2246
        %v2394 = vunpack.c.l.b16 %v2247
        %v2395 = vunpack.c.h.b16 %v2247
        %v2396 = vunpack.c.l.b16 %v2248
        %v2397 = vunpack.c.h.b16 %v2248
        %v2398 = vunpack.c.l.b16 %v2249
        %v2399 = vunpack.c.h.b16 %v2249
        %v2400 = vunpack.c.l.b16 %v2250
        %v2401 = vunpack.c.h.b16 %v2250
        %v2402 = vunpack.c.l.b16 %v2251
        %v2403 = vunpack.c.h.b16 %v2251
        %v2404 = vunpack.c.l.b16 %v2252
        %v2405 = vunpack.c.h.b16 %v2252
        %v2406 = vunpack.c.l.b16 %v2253
        %v2407 = vunpack.c.h.b16 %v2253
        %v2408 = vunpack.c.l.b16 %v2254
        %v2409 = vunpack.c.h.b16 %v2254
        %v2410 = vunpack.c.l.b16 %v2255
        %v2411 = vunpack.c.h.b16 %v2255
        %v2412 = vunpack.c.l.b16 %v2256
        %v2413 = vunpack.c.h.b16 %v2256
        %v2414 = vunpack.c.l.b16 %v2257
        %v2415 = vunpack.c.h.b16 %v2257
        %v2416 = vunpack.c.l.b16 %v2258
        %v2417 = vunpack.c.h.b16 %v2258
        %v2418 = vunpack.c.l.b16 %v2259
        %v2419 = vunpack.c.h.b16 %v2259
        %v2420 = vunpack.c.l.b16 %v2260
        %v2421 = vunpack.c.h.b16 %v2260
        %v2422 = vunpack.c.l.b16 %v2261
        %v2423 = vunpack.c.h.b16 %v2261
        %v2424 = vunpack.c.l.b16 %v2262
        %v2425 = vunpack.c.h.b16 %v2262
        %v2426 = vunpack.c.l.b16 %v2263
        %v2427 = vunpack.c.h.b16 %v2263
        %v2428 = vunpack.c.l.b16 %v2264
        %v2429 = vunpack.c.h.b16 %v2264
        %v2430 = vunpack.c.l.b16 %v2265
        %v2431 = vunpack.c.h.b16 %v2265
        %v2432 = vunpack.c.l.b16 %v2266
        %v2433 = vunpack.c.h.b16 %v2266
        %v2434 = vunpack.c.l.b16 %v2267
        %v2435 = vunpack.c.h.b16 %v2267
        %v2436 = vunpack.c.l.b16 %v2268
        %v2437 = vunpack.c.h.b16 %v2268
        %v2438 = vunpack.c.l.b16 %v2269
        %v2439 = vunpack.c.h.b16 %v2269
        %v2440 = vunpack.c.l.b16 %v2270
        %v2441 = vunpack.c.h.b16 %v2270
        %v2442 = vunpack.c.l.b16 %v2271
        %v2443 = vunpack.c.h.b16 %v2271
        %v2444 = vunpack.c.l.b16 %v2272
        %v2445 = vunpack.c.h.b16 %v2272
        %v2446 = vunpack.c.l.b16 %v2273
        %v2447 = vunpack.c.h.b16 %v2273
        %v2448 = vunpack.c.l.b16 %v2274
        %v2449 = vunpack.c.h.b16 %v2274
        %v2450 = vunpack.c.l.b16 %v2275
        %v2451 = vunpack.c.h.b16 %v2275
        %v2452 = vunpack.c.l.b16 %v2276
        %v2453 = vunpack.c.h.b16 %v2276
        %v2454 = vunpack.c.l.b16 %v2277
        %v2455 = vunpack.c.h.b16 %v2277
        %v2456 = vunpack.c.l.b16 %v2278
        %v2457 = vunpack.c.h.b16 %v2278
        %v2458 = vunpack.c.l.b16 %v2279
        %v2459 = vunpack.c.h.b16 %v2279
        %v2460 = vunpack.c.l.b16 %v2280
        %v2461 = vunpack.c.h.b16 %v2280
        %v2462 = vunpack.c.l.b16 %v2281
        %v2463 = vunpack.c.h.b16 %v2281
        %v2464 = vunpack.c.l.b16 %v2282
        %v2465 = vunpack.c.h.b16 %v2282
        %v2466 = vunpack.c.l.b16 %v2283
        %v2467 = vunpack.c.h.b16 %v2283
        %v2468 = vunpack.c.l.b16 %v2284
        %v2469 = vunpack.c.h.b16 %v2284
        %v2470 = vunpack.c.l.b16 %v2285
        %v2471 = vunpack.c.h.b16 %v2285
        %v2472 = vunpack.c.l.b16 %v2286
        %v2473 = vunpack.c.h.b16 %v2286
        %v2474 = vunpack.c.l.b16 %v2287
        %v2475 = vunpack.c.h.b16 %v2287
        %v2476 = vunpack.c.l.b16 %v2288
        %v2477 = vunpack.c.h.b16 %v2288
        %v2478 = vunpack.c.l.b16 %v2289
        %v2479 = vunpack.c.h.b16 %v2289
        %v2480 = vunpack.c.l.b16 %v2290
        %v2481 = vunpack.c.h.b16 %v2290
        %v2482 = vunpack.c.l.b16 %v2291
        %v2483 = vunpack.c.h.b16 %v2291
        %v2484 = vunpack.c.l.b16 %v2292
        %v2485 = vunpack.c.h.b16 %v2292
        %v2486 = vunpack.c.l.b16 %v2293
        %v2487 = vunpack.c.h.b16 %v2293
        %v2488 = vunpack.c.l.b16 %v2294
        %v2489 = vunpack.c.h.b16 %v2294
        %v2490 = vunpack.c.l.b16 %v2295
        %v2491 = vunpack.c.h.b16 %v2295
        %v2492 = vunpack.c.l.b16 %v2296
        %v2493 = vunpack.c.h.b16 %v2296
        %v2494 = vunpack.c.l.b16 %v2297
        %v2495 = vunpack.c.h.b16 %v2297
        %v2496 = vunpack.c.l.b16 %v2298
        %v2497 = vunpack.c.h.b16 %v2298
        %v2498 = vunpack.c.l.b16 %v2299
        %v2499 = vunpack.c.h.b16 %v2299
        %v2500 = vunpack.c.l.b16 %v2300
        %v2501 = vunpack.c.h.b16 %v2300
        %v2502 = vunpack.c.l.b16 %v2301
        %v2503 = vunpack.c.h.b16 %v2301
        %v2504 = vunpack.c.l.b16 %v2302
        %v2505 = vunpack.c.h.b16 %v2302
        %v2506 = vunpack.c.l.b16 %v2303
        %v2507 = vunpack.c.h.b16 %v2303
        %v2508 = vunpack.c.l.b16 %v2304
        %v2509 = vunpack.c.h.b16 %v2304
        %v2510 = vpack.c.b16 %v2384, %v2382
        %v2511 = vpack.c.b16 %v2385, %v2383
        %v2512 = vpack.c.b16 %v2388, %v2386
        %v2513 = vpack.c.b16 %v2389, %v2387
        %v2514 = vpack.c.b16 %v2392, %v2390
        %v2515 = vpack.c.b16 %v2393, %v2391
        %v2516 = vpack.c.b16 %v2396, %v2394
        %v2517 = vpack.c.b16 %v2397, %v2395
        %v2518 = vpack.c.b16 %v2400, %v2398
        %v2519 = vpack.c.b16 %v2401, %v2399
        %v2520 = vpack.c.b16 %v2404, %v2402
        %v2521 = vpack.c.b16 %v2405, %v2403
        %v2522 = vpack.c.b16 %v2408, %v2406
        %v2523 = vpack.c.b16 %v2409, %v2407
        %v2524 = vpack.c.b16 %v2412, %v2410
        %v2525 = vpack.c.b16 %v2413, %v2411
        %v2526 = vpack.c.b16 %v2416, %v2414
        %v2527 = vpack.c.b16 %v2417, %v2415
        %v2528 = vpack.c.b16 %v2420, %v2418
        %v2529 = vpack.c.b16 %v2421, %v2419
        %v2530 = vpack.c.b16 %v2424, %v2422
        %v2531 = vpack.c.b16 %v2425, %v2423
        %v2532 = vpack.c.b16 %v2428, %v2426
        %v2533 = vpack.c.b16 %v2429, %v2427
        %v2534 = vpack.c.b16 %v2432, %v2430
        %v2535 = vpack.c.b16 %v2433, %v2431
        %v2536 = vpack.c.b16 %v2436, %v2434
        %v2537 = vpack.c.b16 %v2437, %v2435
        %v2538 = vpack.c.b16 %v2440, %v2438
        %v2539 = vpack.c.b16 %v2441, %v2439
        %v2540 = vpack.c.b16 %v2444, %v2442
        %v2541 = vpack.c.b16 %v2445, %v2443
        %v2542 = vpack.c.b16 %v2448, %v2446
        %v2543 = vpack.c.b16 %v2449, %v2447
        %v2544 = vpack.c.b16 %v2452, %v2450
        %v2545 = vpack.c.b16 %v2453, %v2451
        %v2546 = vpack.c.b16 %v2456, %v2454
        %v2547 = vpack.c.b16 %v2457, %v2455
        %v2548 = vpack.c.b16 %v2460, %v2458
        %v2549 = vpack.c.b16 %v2461, %v2459
        %v2550 = vpack.c.b16 %v2464, %v2462
        %v2551 = vpack.c.b16 %v2465, %v2463
        %v2552 = vpack.c.b16 %v2468, %v2466
        %v2553 = vpack.c.b16 %v2469, %v2467
        %v2554 = vpack.c.b16 %v2472, %v2470
        %v2555 = vpack.c.b16 %v2473, %v2471
        %v2556 = vpack.c.b16 %v2476, %v2474
        %v2557 = vpack.c.b16 %v2477, %v2475
        %v2558 = vpack.c.b16 %v2480, %v2478
        %v2559 = vpack.c.b16 %v2481, %v2479
        %v2560 = vpack.c.b16 %v2484, %v2482
        %v2561 = vpack.c.b16 %v2485, %v2483
        %v2562 = vpack.c.b16 %v2488, %v2486
        %v2563 = vpack.c.b16 %v2489, %v2487
        %v2564 = vpack.c.b16 %v2492, %v2490
        %v2565 = vpack.c.b16 %v2493, %v2491
        %v2566 = vpack.c.b16 %v2496, %v2494
        %v2567 = vpack.c.b16 %v2497, %v2495
        %v2568 = vpack.c.b16 %v2500, %v2498
        %v2569 = vpack.c.b16 %v2501, %v2499
        %v2570 = vpack.c.b16 %v2504, %v2502
        %v2571 = vpack.c.b16 %v2505, %v2503
        %v2572 = vpack.c.b16 %v2508, %v2506
        %v2573 = vpack.c.b16 %v2509, %v2507
        %2638 = vmatprep.subr.bf16.mxu0 %v2511
        %2639 = vmatpush1.bf16.msra.mxu0 %v2510
        %2640 = vmatprep.subr.bf16.mxu0 %v2513
        %2641 = vmatpush1.bf16.msra.mxu0 %v2512
        %2642 = vmatprep.subr.bf16.mxu0 %v2515
        %2643 = vmatpush1.bf16.msra.mxu0 %v2514
        %2644 = vmatprep.subr.bf16.mxu0 %v2517
        %2645 = vmatpush1.bf16.msra.mxu0 %v2516
        %2646 = vmatprep.subr.bf16.mxu0 %v2519
        %2647 = vmatpush1.bf16.msra.mxu0 %v2518
        %2648 = vmatprep.subr.bf16.mxu0 %v2521
        %2649 = vmatpush1.bf16.msra.mxu0 %v2520
        %2650 = vmatprep.subr.bf16.mxu0 %v2523
        %2651 = vmatpush1.bf16.msra.mxu0 %v2522
        %2652 = vmatprep.subr.bf16.mxu0 %v2525
        %2653 = vmatpush1.bf16.msra.mxu0 %v2524
        %2654 = vmatprep.subr.bf16.mxu0 %v2527
        %2655 = vmatpush1.bf16.msra.mxu0 %v2526
        %2656 = vmatprep.subr.bf16.mxu0 %v2529
        %2657 = vmatpush1.bf16.msra.mxu0 %v2528
        %2658 = vmatprep.subr.bf16.mxu0 %v2531
        %2659 = vmatpush1.bf16.msra.mxu0 %v2530
        %2660 = vmatprep.subr.bf16.mxu0 %v2533
        %2661 = vmatpush1.bf16.msra.mxu0 %v2532
        %2662 = vmatprep.subr.bf16.mxu0 %v2535
        %2663 = vmatpush1.bf16.msra.mxu0 %v2534
        %2664 = vmatprep.subr.bf16.mxu0 %v2537
        %2665 = vmatpush1.bf16.msra.mxu0 %v2536
        %2666 = vmatprep.subr.bf16.mxu0 %v2539
        %2667 = vmatpush1.bf16.msra.mxu0 %v2538
        %2668 = vmatprep.subr.bf16.mxu0 %v2541
        %2669 = vmatpush1.bf16.msra.mxu0 %v2540
        %2670 = vmatprep.mubr.bf16.mxu0 %v1747
        %2671 = vmatmul.mubr.bf16.gmra.mrb[0].mxu0 %v1746
        %v2672 = vpop.f32.mrb[0].mxu0
        %v2673 = vadd.f32 %v2311, %v2672
        %v2674 = vpop.f32.mrb[0].mxu0
        %v2675 = vadd.f32 %v2315, %v2674
        %v2676 = vpop.f32.mrb[0].mxu0
        %v2677 = vpop.f32.mrb[0].mxu0
        %2678 = vdwg.mxu0
        %2679 = vmatprep.subr.bf16.mxu0 %v2543
        %2680 = vmatpush1.bf16.msra.mxu0 %v2542
        %2681 = vmatprep.subr.bf16.mxu0 %v2545
        %2682 = vmatpush1.bf16.msra.mxu0 %v2544
        %2683 = vmatprep.subr.bf16.mxu0 %v2547
        %2684 = vmatpush1.bf16.msra.mxu0 %v2546
        %2685 = vmatprep.subr.bf16.mxu0 %v2549
        %2686 = vmatpush1.bf16.msra.mxu0 %v2548
        %2687 = vmatprep.subr.bf16.mxu0 %v2551
        %2688 = vmatpush1.bf16.msra.mxu0 %v2550
        %2689 = vmatprep.subr.bf16.mxu0 %v2553
        %2690 = vmatpush1.bf16.msra.mxu0 %v2552
        %2691 = vmatprep.subr.bf16.mxu0 %v2555
        %2692 = vmatpush1.bf16.msra.mxu0 %v2554
        %2693 = vmatprep.subr.bf16.mxu0 %v2557
        %2694 = vmatpush1.bf16.msra.mxu0 %v2556
        %2695 = vmatprep.subr.bf16.mxu0 %v2559
        %2696 = vmatpush1.bf16.msra.mxu0 %v2558
        %2697 = vmatprep.subr.bf16.mxu0 %v2561
        %2698 = vmatpush1.bf16.msra.mxu0 %v2560
        %2699 = vmatprep.subr.bf16.mxu0 %v2563
        %2700 = vmatpush1.bf16.msra.mxu0 %v2562
        %2701 = vmatprep.subr.bf16.mxu0 %v2565
        %2702 = vmatpush1.bf16.msra.mxu0 %v2564
        %2703 = vmatprep.subr.bf16.mxu0 %v2567
        %2704 = vmatpush1.bf16.msra.mxu0 %v2566
        %2705 = vmatprep.subr.bf16.mxu0 %v2569
        %2706 = vmatpush1.bf16.msra.mxu0 %v2568
        %2707 = vmatprep.subr.bf16.mxu0 %v2571
        %2708 = vmatpush1.bf16.msra.mxu0 %v2570
        %2709 = vmatprep.subr.bf16.mxu0 %v2573
        %2710 = vmatpush1.bf16.msra.mxu0 %v2572
        %2711 = vmatprep.mubr.bf16.mxu0 %v1749
        %2712 = vmatmul.mubr.bf16.gmra.mrb[0].mxu0 %v1748
        %v2713 = vpop.f32.mrb[0].mxu0
        %v2714 = vadd.f32 %v2673, %v2713
        %v2715 = vpop.f32.mrb[0].mxu0
        %v2716 = vadd.f32 %v2675, %v2715
        %v2717 = vpop.f32.mrb[0].mxu0
        %v2718 = vpop.f32.mrb[0].mxu0
        %2719 = vdwg.mxu0
        %v2720 = vpack.c.bf16 %v2714, %v2714
        %v2721 = vpack.c.bf16 %v2716, %v2716
        %v2724 = vunpack.c.l.b16 %v2720
        %v2725 = vunpack.c.l.b16 %v2721
        %v2726 = vpack.c.b16 %v2725, %v2724
        %2728 = vst [vmem:[%s459 + $0x8] sm:$0xff] %v2726
        %s2729 = scalar_lea.vmem [#allocation11], 1024
        %v2730 = vld [vmem:[%s2729] sm:$0xff]
        %v2731 = vld [vmem:[%s2729 + $0x8] sm:$0xff]
        %v2732 = vld [vmem:[%s2729 + $0x10] sm:$0xff]
        %v2733 = vld [vmem:[%s2729 + $0x18] sm:$0xff]
        %v2734 = vld [vmem:[%s2729 + $0x20] sm:$0xff]
        %v2735 = vld [vmem:[%s2729 + $0x28] sm:$0xff]
        %v2736 = vld [vmem:[%s2729 + $0x30] sm:$0xff]
        %v2737 = vld [vmem:[%s2729 + $0x38] sm:$0xff]
        %v2738 = vld [vmem:[%s2729 + $0x40] sm:$0xff]
        %v2739 = vld [vmem:[%s2729 + $0x48] sm:$0xff]
        %v2740 = vld [vmem:[%s2729 + $0x50] sm:$0xff]
        %v2741 = vld [vmem:[%s2729 + $0x58] sm:$0xff]
        %v2742 = vld [vmem:[%s2729 + $0x60] sm:$0xff]
        %v2743 = vld [vmem:[%s2729 + $0x68] sm:$0xff]
        %v2744 = vld [vmem:[%s2729 + $0x70] sm:$0xff]
        %v2745 = vld [vmem:[%s2729 + $0x78] sm:$0xff]
        %v2746 = vld [vmem:[%s2729 + $0x80] sm:$0xff]
        %v2747 = vld [vmem:[%s2729 + $0x88] sm:$0xff]
        %v2748 = vld [vmem:[%s2729 + $0x90] sm:$0xff]
        %v2749 = vld [vmem:[%s2729 + $0x98] sm:$0xff]
        %v2750 = vld [vmem:[%s2729 + $0xa0] sm:$0xff]
        %v2751 = vld [vmem:[%s2729 + $0xa8] sm:$0xff]
        %v2752 = vld [vmem:[%s2729 + $0xb0] sm:$0xff]
        %v2753 = vld [vmem:[%s2729 + $0xb8] sm:$0xff]
        %v2754 = vld [vmem:[%s2729 + $0xc0] sm:$0xff]
        %v2755 = vld [vmem:[%s2729 + $0xc8] sm:$0xff]
        %v2756 = vld [vmem:[%s2729 + $0xd0] sm:$0xff]
        %v2757 = vld [vmem:[%s2729 + $0xd8] sm:$0xff]
        %v2758 = vld [vmem:[%s2729 + $0xe0] sm:$0xff]
        %v2759 = vld [vmem:[%s2729 + $0xe8] sm:$0xff]
        %v2760 = vld [vmem:[%s2729 + $0xf0] sm:$0xff]
        %v2761 = vld [vmem:[%s2729 + $0xf8] sm:$0xff]
        %v2762 = vld [vmem:[%s2729 + $0x100] sm:$0xff]
        %v2763 = vld [vmem:[%s2729 + $0x108] sm:$0xff]
        %v2764 = vld [vmem:[%s2729 + $0x110] sm:$0xff]
        %v2765 = vld [vmem:[%s2729 + $0x118] sm:$0xff]
        %v2766 = vld [vmem:[%s2729 + $0x120] sm:$0xff]
        %v2767 = vld [vmem:[%s2729 + $0x128] sm:$0xff]
        %v2768 = vld [vmem:[%s2729 + $0x130] sm:$0xff]
        %v2769 = vld [vmem:[%s2729 + $0x138] sm:$0xff]
        %v2770 = vld [vmem:[%s2729 + $0x140] sm:$0xff]
        %v2771 = vld [vmem:[%s2729 + $0x148] sm:$0xff]
        %v2772 = vld [vmem:[%s2729 + $0x150] sm:$0xff]
        %v2773 = vld [vmem:[%s2729 + $0x158] sm:$0xff]
        %v2774 = vld [vmem:[%s2729 + $0x160] sm:$0xff]
        %v2775 = vld [vmem:[%s2729 + $0x168] sm:$0xff]
        %v2776 = vld [vmem:[%s2729 + $0x170] sm:$0xff]
        %v2777 = vld [vmem:[%s2729 + $0x178] sm:$0xff]
        %v2778 = vld [vmem:[%s2729 + $0x180] sm:$0xff]
        %v2779 = vld [vmem:[%s2729 + $0x188] sm:$0xff]
        %v2780 = vld [vmem:[%s2729 + $0x190] sm:$0xff]
        %v2781 = vld [vmem:[%s2729 + $0x198] sm:$0xff]
        %v2782 = vld [vmem:[%s2729 + $0x1a0] sm:$0xff]
        %v2783 = vld [vmem:[%s2729 + $0x1a8] sm:$0xff]
        %v2784 = vld [vmem:[%s2729 + $0x1b0] sm:$0xff]
        %v2785 = vld [vmem:[%s2729 + $0x1b8] sm:$0xff]
        %v2786 = vld [vmem:[%s2729 + $0x1c0] sm:$0xff]
        %v2787 = vld [vmem:[%s2729 + $0x1c8] sm:$0xff]
        %v2788 = vld [vmem:[%s2729 + $0x1d0] sm:$0xff]
        %v2789 = vld [vmem:[%s2729 + $0x1d8] sm:$0xff]
        %v2790 = vld [vmem:[%s2729 + $0x1e0] sm:$0xff]
        %v2791 = vld [vmem:[%s2729 + $0x1e8] sm:$0xff]
        %v2792 = vld [vmem:[%s2729 + $0x1f0] sm:$0xff]
        %v2793 = vld [vmem:[%s2729 + $0x1f8] sm:$0xff]
        %s2794 = scalar_lea.vmem %s10, 4
        %v2795 = vld [vmem:[%s2794] sm:$0x3]
        %v2797 = vlaneseq
        %v2798 = vshrl.u32 %v2797, 7
        %v2799 = vsub.s32 0, %v2798
        %v2800 = vrot.slane %v2795, %v2799
        %v2801 = vlaneseq
        %v2802 = vshrl.u32 %v2801, 7
        %v2803 = vsub.s32 1, %v2802
        %v2804 = vrot.slane %v2795, %v2803
        %v2871 = vunpack.c.l.b16 %v2730
        %v2872 = vunpack.c.h.b16 %v2730
        %v2873 = vunpack.c.l.b16 %v2731
        %v2874 = vunpack.c.h.b16 %v2731
        %v2875 = vunpack.c.l.b16 %v2732
        %v2876 = vunpack.c.h.b16 %v2732
        %v2877 = vunpack.c.l.b16 %v2733
        %v2878 = vunpack.c.h.b16 %v2733
        %v2879 = vunpack.c.l.b16 %v2734
        %v2880 = vunpack.c.h.b16 %v2734
        %v2881 = vunpack.c.l.b16 %v2735
        %v2882 = vunpack.c.h.b16 %v2735
        %v2883 = vunpack.c.l.b16 %v2736
        %v2884 = vunpack.c.h.b16 %v2736
        %v2885 = vunpack.c.l.b16 %v2737
        %v2886 = vunpack.c.h.b16 %v2737
        %v2887 = vunpack.c.l.b16 %v2738
        %v2888 = vunpack.c.h.b16 %v2738
        %v2889 = vunpack.c.l.b16 %v2739
        %v2890 = vunpack.c.h.b16 %v2739
        %v2891 = vunpack.c.l.b16 %v2740
        %v2892 = vunpack.c.h.b16 %v2740
        %v2893 = vunpack.c.l.b16 %v2741
        %v2894 = vunpack.c.h.b16 %v2741
        %v2895 = vunpack.c.l.b16 %v2742
        %v2896 = vunpack.c.h.b16 %v2742
        %v2897 = vunpack.c.l.b16 %v2743
        %v2898 = vunpack.c.h.b16 %v2743
        %v2899 = vunpack.c.l.b16 %v2744
        %v2900 = vunpack.c.h.b16 %v2744
        %v2901 = vunpack.c.l.b16 %v2745
        %v2902 = vunpack.c.h.b16 %v2745
        %v2903 = vunpack.c.l.b16 %v2746
        %v2904 = vunpack.c.h.b16 %v2746
        %v2905 = vunpack.c.l.b16 %v2747
        %v2906 = vunpack.c.h.b16 %v2747
        %v2907 = vunpack.c.l.b16 %v2748
        %v2908 = vunpack.c.h.b16 %v2748
        %v2909 = vunpack.c.l.b16 %v2749
        %v2910 = vunpack.c.h.b16 %v2749
        %v2911 = vunpack.c.l.b16 %v2750
        %v2912 = vunpack.c.h.b16 %v2750
        %v2913 = vunpack.c.l.b16 %v2751
        %v2914 = vunpack.c.h.b16 %v2751
        %v2915 = vunpack.c.l.b16 %v2752
        %v2916 = vunpack.c.h.b16 %v2752
        %v2917 = vunpack.c.l.b16 %v2753
        %v2918 = vunpack.c.h.b16 %v2753
        %v2919 = vunpack.c.l.b16 %v2754
        %v2920 = vunpack.c.h.b16 %v2754
        %v2921 = vunpack.c.l.b16 %v2755
        %v2922 = vunpack.c.h.b16 %v2755
        %v2923 = vunpack.c.l.b16 %v2756
        %v2924 = vunpack.c.h.b16 %v2756
        %v2925 = vunpack.c.l.b16 %v2757
        %v2926 = vunpack.c.h.b16 %v2757
        %v2927 = vunpack.c.l.b16 %v2758
        %v2928 = vunpack.c.h.b16 %v2758
        %v2929 = vunpack.c.l.b16 %v2759
        %v2930 = vunpack.c.h.b16 %v2759
        %v2931 = vunpack.c.l.b16 %v2760
        %v2932 = vunpack.c.h.b16 %v2760
        %v2933 = vunpack.c.l.b16 %v2761
        %v2934 = vunpack.c.h.b16 %v2761
        %v2935 = vunpack.c.l.b16 %v2762
        %v2936 = vunpack.c.h.b16 %v2762
        %v2937 = vunpack.c.l.b16 %v2763
        %v2938 = vunpack.c.h.b16 %v2763
        %v2939 = vunpack.c.l.b16 %v2764
        %v2940 = vunpack.c.h.b16 %v2764
        %v2941 = vunpack.c.l.b16 %v2765
        %v2942 = vunpack.c.h.b16 %v2765
        %v2943 = vunpack.c.l.b16 %v2766
        %v2944 = vunpack.c.h.b16 %v2766
        %v2945 = vunpack.c.l.b16 %v2767
        %v2946 = vunpack.c.h.b16 %v2767
        %v2947 = vunpack.c.l.b16 %v2768
        %v2948 = vunpack.c.h.b16 %v2768
        %v2949 = vunpack.c.l.b16 %v2769
        %v2950 = vunpack.c.h.b16 %v2769
        %v2951 = vunpack.c.l.b16 %v2770
        %v2952 = vunpack.c.h.b16 %v2770
        %v2953 = vunpack.c.l.b16 %v2771
        %v2954 = vunpack.c.h.b16 %v2771
        %v2955 = vunpack.c.l.b16 %v2772
        %v2956 = vunpack.c.h.b16 %v2772
        %v2957 = vunpack.c.l.b16 %v2773
        %v2958 = vunpack.c.h.b16 %v2773
        %v2959 = vunpack.c.l.b16 %v2774
        %v2960 = vunpack.c.h.b16 %v2774
        %v2961 = vunpack.c.l.b16 %v2775
        %v2962 = vunpack.c.h.b16 %v2775
        %v2963 = vunpack.c.l.b16 %v2776
        %v2964 = vunpack.c.h.b16 %v2776
        %v2965 = vunpack.c.l.b16 %v2777
        %v2966 = vunpack.c.h.b16 %v2777
        %v2967 = vunpack.c.l.b16 %v2778
        %v2968 = vunpack.c.h.b16 %v2778
        %v2969 = vunpack.c.l.b16 %v2779
        %v2970 = vunpack.c.h.b16 %v2779
        %v2971 = vunpack.c.l.b16 %v2780
        %v2972 = vunpack.c.h.b16 %v2780
        %v2973 = vunpack.c.l.b16 %v2781
        %v2974 = vunpack.c.h.b16 %v2781
        %v2975 = vunpack.c.l.b16 %v2782
        %v2976 = vunpack.c.h.b16 %v2782
        %v2977 = vunpack.c.l.b16 %v2783
        %v2978 = vunpack.c.h.b16 %v2783
        %v2979 = vunpack.c.l.b16 %v2784
        %v2980 = vunpack.c.h.b16 %v2784
        %v2981 = vunpack.c.l.b16 %v2785
        %v2982 = vunpack.c.h.b16 %v2785
        %v2983 = vunpack.c.l.b16 %v2786
        %v2984 = vunpack.c.h.b16 %v2786
        %v2985 = vunpack.c.l.b16 %v2787
        %v2986 = vunpack.c.h.b16 %v2787
        %v2987 = vunpack.c.l.b16 %v2788
        %v2988 = vunpack.c.h.b16 %v2788
        %v2989 = vunpack.c.l.b16 %v2789
        %v2990 = vunpack.c.h.b16 %v2789
        %v2991 = vunpack.c.l.b16 %v2790
        %v2992 = vunpack.c.h.b16 %v2790
        %v2993 = vunpack.c.l.b16 %v2791
        %v2994 = vunpack.c.h.b16 %v2791
        %v2995 = vunpack.c.l.b16 %v2792
        %v2996 = vunpack.c.h.b16 %v2792
        %v2997 = vunpack.c.l.b16 %v2793
        %v2998 = vunpack.c.h.b16 %v2793
        %v2999 = vpack.c.b16 %v2873, %v2871
        %v3000 = vpack.c.b16 %v2874, %v2872
        %v3001 = vpack.c.b16 %v2877, %v2875
        %v3002 = vpack.c.b16 %v2878, %v2876
        %v3003 = vpack.c.b16 %v2881, %v2879
        %v3004 = vpack.c.b16 %v2882, %v2880
        %v3005 = vpack.c.b16 %v2885, %v2883
        %v3006 = vpack.c.b16 %v2886, %v2884
        %v3007 = vpack.c.b16 %v2889, %v2887
        %v3008 = vpack.c.b16 %v2890, %v2888
        %v3009 = vpack.c.b16 %v2893, %v2891
        %v3010 = vpack.c.b16 %v2894, %v2892
        %v3011 = vpack.c.b16 %v2897, %v2895
        %v3012 = vpack.c.b16 %v2898, %v2896
        %v3013 = vpack.c.b16 %v2901, %v2899
        %v3014 = vpack.c.b16 %v2902, %v2900
        %v3015 = vpack.c.b16 %v2905, %v2903
        %v3016 = vpack.c.b16 %v2906, %v2904
        %v3017 = vpack.c.b16 %v2909, %v2907
        %v3018 = vpack.c.b16 %v2910, %v2908
        %v3019 = vpack.c.b16 %v2913, %v2911
        %v3020 = vpack.c.b16 %v2914, %v2912
        %v3021 = vpack.c.b16 %v2917, %v2915
        %v3022 = vpack.c.b16 %v2918, %v2916
        %v3023 = vpack.c.b16 %v2921, %v2919
        %v3024 = vpack.c.b16 %v2922, %v2920
        %v3025 = vpack.c.b16 %v2925, %v2923
        %v3026 = vpack.c.b16 %v2926, %v2924
        %v3027 = vpack.c.b16 %v2929, %v2927
        %v3028 = vpack.c.b16 %v2930, %v2928
        %v3029 = vpack.c.b16 %v2933, %v2931
        %v3030 = vpack.c.b16 %v2934, %v2932
        %v3031 = vpack.c.b16 %v2937, %v2935
        %v3032 = vpack.c.b16 %v2938, %v2936
        %v3033 = vpack.c.b16 %v2941, %v2939
        %v3034 = vpack.c.b16 %v2942, %v2940
        %v3035 = vpack.c.b16 %v2945, %v2943
        %v3036 = vpack.c.b16 %v2946, %v2944
        %v3037 = vpack.c.b16 %v2949, %v2947
        %v3038 = vpack.c.b16 %v2950, %v2948
        %v3039 = vpack.c.b16 %v2953, %v2951
        %v3040 = vpack.c.b16 %v2954, %v2952
        %v3041 = vpack.c.b16 %v2957, %v2955
        %v3042 = vpack.c.b16 %v2958, %v2956
        %v3043 = vpack.c.b16 %v2961, %v2959
        %v3044 = vpack.c.b16 %v2962, %v2960
        %v3045 = vpack.c.b16 %v2965, %v2963
        %v3046 = vpack.c.b16 %v2966, %v2964
        %v3047 = vpack.c.b16 %v2969, %v2967
        %v3048 = vpack.c.b16 %v2970, %v2968
        %v3049 = vpack.c.b16 %v2973, %v2971
        %v3050 = vpack.c.b16 %v2974, %v2972
        %v3051 = vpack.c.b16 %v2977, %v2975
        %v3052 = vpack.c.b16 %v2978, %v2976
        %v3053 = vpack.c.b16 %v2981, %v2979
        %v3054 = vpack.c.b16 %v2982, %v2980
        %v3055 = vpack.c.b16 %v2985, %v2983
        %v3056 = vpack.c.b16 %v2986, %v2984
        %v3057 = vpack.c.b16 %v2989, %v2987
        %v3058 = vpack.c.b16 %v2990, %v2988
        %v3059 = vpack.c.b16 %v2993, %v2991
        %v3060 = vpack.c.b16 %v2994, %v2992
        %v3061 = vpack.c.b16 %v2997, %v2995
        %v3062 = vpack.c.b16 %v2998, %v2996
        %3127 = vmatprep.subr.bf16.mxu0 %v3000
        %3128 = vmatpush1.bf16.msra.mxu0 %v2999
        %3129 = vmatprep.subr.bf16.mxu0 %v3002
        %3130 = vmatpush1.bf16.msra.mxu0 %v3001
        %3131 = vmatprep.subr.bf16.mxu0 %v3004
        %3132 = vmatpush1.bf16.msra.mxu0 %v3003
        %3133 = vmatprep.subr.bf16.mxu0 %v3006
        %3134 = vmatpush1.bf16.msra.mxu0 %v3005
        %3135 = vmatprep.subr.bf16.mxu0 %v3008
        %3136 = vmatpush1.bf16.msra.mxu0 %v3007
        %3137 = vmatprep.subr.bf16.mxu0 %v3010
        %3138 = vmatpush1.bf16.msra.mxu0 %v3009
        %3139 = vmatprep.subr.bf16.mxu0 %v3012
        %3140 = vmatpush1.bf16.msra.mxu0 %v3011
        %3141 = vmatprep.subr.bf16.mxu0 %v3014
        %3142 = vmatpush1.bf16.msra.mxu0 %v3013
        %3143 = vmatprep.subr.bf16.mxu0 %v3016
        %3144 = vmatpush1.bf16.msra.mxu0 %v3015
        %3145 = vmatprep.subr.bf16.mxu0 %v3018
        %3146 = vmatpush1.bf16.msra.mxu0 %v3017
        %3147 = vmatprep.subr.bf16.mxu0 %v3020
        %3148 = vmatpush1.bf16.msra.mxu0 %v3019
        %3149 = vmatprep.subr.bf16.mxu0 %v3022
        %3150 = vmatpush1.bf16.msra.mxu0 %v3021
        %3151 = vmatprep.subr.bf16.mxu0 %v3024
        %3152 = vmatpush1.bf16.msra.mxu0 %v3023
        %3153 = vmatprep.subr.bf16.mxu0 %v3026
        %3154 = vmatpush1.bf16.msra.mxu0 %v3025
        %3155 = vmatprep.subr.bf16.mxu0 %v3028
        %3156 = vmatpush1.bf16.msra.mxu0 %v3027
        %3157 = vmatprep.subr.bf16.mxu0 %v3030
        %3158 = vmatpush1.bf16.msra.mxu0 %v3029
        %3159 = vmatprep.mubr.bf16.mxu0 %v1749
        %3160 = vmatmul.mubr.bf16.gmra.mrb[0].mxu0 %v1748
        %v3161 = vpop.f32.mrb[0].mxu0
        %v3162 = vadd.f32 %v2800, %v3161
        %v3163 = vpop.f32.mrb[0].mxu0
        %v3164 = vadd.f32 %v2804, %v3163
        %v3165 = vpop.f32.mrb[0].mxu0
        %v3166 = vpop.f32.mrb[0].mxu0
        %3167 = vdwg.mxu0
        %3168 = vmatprep.subr.bf16.mxu0 %v3032
        %3169 = vmatpush1.bf16.msra.mxu0 %v3031
        %3170 = vmatprep.subr.bf16.mxu0 %v3034
        %3171 = vmatpush1.bf16.msra.mxu0 %v3033
        %3172 = vmatprep.subr.bf16.mxu0 %v3036
        %3173 = vmatpush1.bf16.msra.mxu0 %v3035
        %3174 = vmatprep.subr.bf16.mxu0 %v3038
        %3175 = vmatpush1.bf16.msra.mxu0 %v3037
        %3176 = vmatprep.subr.bf16.mxu0 %v3040
        %3177 = vmatpush1.bf16.msra.mxu0 %v3039
        %3178 = vmatprep.subr.bf16.mxu0 %v3042
        %3179 = vmatpush1.bf16.msra.mxu0 %v3041
        %3180 = vmatprep.subr.bf16.mxu0 %v3044
        %3181 = vmatpush1.bf16.msra.mxu0 %v3043
        %3182 = vmatprep.subr.bf16.mxu0 %v3046
        %3183 = vmatpush1.bf16.msra.mxu0 %v3045
        %3184 = vmatprep.subr.bf16.mxu0 %v3048
        %3185 = vmatpush1.bf16.msra.mxu0 %v3047
        %3186 = vmatprep.subr.bf16.mxu0 %v3050
        %3187 = vmatpush1.bf16.msra.mxu0 %v3049
        %3188 = vmatprep.subr.bf16.mxu0 %v3052
        %3189 = vmatpush1.bf16.msra.mxu0 %v3051
        %3190 = vmatprep.subr.bf16.mxu0 %v3054
        %3191 = vmatpush1.bf16.msra.mxu0 %v3053
        %3192 = vmatprep.subr.bf16.mxu0 %v3056
        %3193 = vmatpush1.bf16.msra.mxu0 %v3055
        %3194 = vmatprep.subr.bf16.mxu0 %v3058
        %3195 = vmatpush1.bf16.msra.mxu0 %v3057
        %3196 = vmatprep.subr.bf16.mxu0 %v3060
        %3197 = vmatpush1.bf16.msra.mxu0 %v3059
        %3198 = vmatprep.subr.bf16.mxu0 %v3062
        %3199 = vmatpush1.bf16.msra.mxu0 %v3061
        %3200 = vmatprep.mubr.bf16.mxu0 %v1751
        %3201 = vmatmul.mubr.bf16.gmra.mrb[0].mxu0 %v1750
        %v3202 = vpop.f32.mrb[0].mxu0
        %v3203 = vadd.f32 %v3162, %v3202
        %v3204 = vpop.f32.mrb[0].mxu0
        %v3205 = vadd.f32 %v3164, %v3204
        %v3206 = vpop.f32.mrb[0].mxu0
        %v3207 = vpop.f32.mrb[0].mxu0
        %3208 = vdwg.mxu0
        %v3209 = vpack.c.bf16 %v3203, %v3203
        %v3210 = vpack.c.bf16 %v3205, %v3205
        %v3213 = vunpack.c.l.b16 %v3209
        %v3214 = vunpack.c.l.b16 %v3210
        %v3215 = vpack.c.b16 %v3214, %v3213
        %3217 = vst [vmem:[%s459 + $0x10] sm:$0xff] %v3215
        %s3218 = scalar_lea.vmem [#allocation11], 1536
        %v3219 = vld [vmem:[%s3218] sm:$0xff]
        %v3220 = vld [vmem:[%s3218 + $0x8] sm:$0xff]
        %v3221 = vld [vmem:[%s3218 + $0x10] sm:$0xff]
        %v3222 = vld [vmem:[%s3218 + $0x18] sm:$0xff]
        %v3223 = vld [vmem:[%s3218 + $0x20] sm:$0xff]
        %v3224 = vld [vmem:[%s3218 + $0x28] sm:$0xff]
        %v3225 = vld [vmem:[%s3218 + $0x30] sm:$0xff]
        %v3226 = vld [vmem:[%s3218 + $0x38] sm:$0xff]
        %v3227 = vld [vmem:[%s3218 + $0x40] sm:$0xff]
        %v3228 = vld [vmem:[%s3218 + $0x48] sm:$0xff]
        %v3229 = vld [vmem:[%s3218 + $0x50] sm:$0xff]
        %v3230 = vld [vmem:[%s3218 + $0x58] sm:$0xff]
        %v3231 = vld [vmem:[%s3218 + $0x60] sm:$0xff]
        %v3232 = vld [vmem:[%s3218 + $0x68] sm:$0xff]
        %v3233 = vld [vmem:[%s3218 + $0x70] sm:$0xff]
        %v3234 = vld [vmem:[%s3218 + $0x78] sm:$0xff]
        %v3235 = vld [vmem:[%s3218 + $0x80] sm:$0xff]
        %v3236 = vld [vmem:[%s3218 + $0x88] sm:$0xff]
        %v3237 = vld [vmem:[%s3218 + $0x90] sm:$0xff]
        %v3238 = vld [vmem:[%s3218 + $0x98] sm:$0xff]
        %v3239 = vld [vmem:[%s3218 + $0xa0] sm:$0xff]
        %v3240 = vld [vmem:[%s3218 + $0xa8] sm:$0xff]
        %v3241 = vld [vmem:[%s3218 + $0xb0] sm:$0xff]
        %v3242 = vld [vmem:[%s3218 + $0xb8] sm:$0xff]
        %v3243 = vld [vmem:[%s3218 + $0xc0] sm:$0xff]
        %v3244 = vld [vmem:[%s3218 + $0xc8] sm:$0xff]
        %v3245 = vld [vmem:[%s3218 + $0xd0] sm:$0xff]
        %v3246 = vld [vmem:[%s3218 + $0xd8] sm:$0xff]
        %v3247 = vld [vmem:[%s3218 + $0xe0] sm:$0xff]
        %v3248 = vld [vmem:[%s3218 + $0xe8] sm:$0xff]
        %v3249 = vld [vmem:[%s3218 + $0xf0] sm:$0xff]
        %v3250 = vld [vmem:[%s3218 + $0xf8] sm:$0xff]
        %v3251 = vld [vmem:[%s3218 + $0x100] sm:$0xff]
        %v3252 = vld [vmem:[%s3218 + $0x108] sm:$0xff]
        %v3253 = vld [vmem:[%s3218 + $0x110] sm:$0xff]
        %v3254 = vld [vmem:[%s3218 + $0x118] sm:$0xff]
        %v3255 = vld [vmem:[%s3218 + $0x120] sm:$0xff]
        %v3256 = vld [vmem:[%s3218 + $0x128] sm:$0xff]
        %v3257 = vld [vmem:[%s3218 + $0x130] sm:$0xff]
        %v3258 = vld [vmem:[%s3218 + $0x138] sm:$0xff]
        %v3259 = vld [vmem:[%s3218 + $0x140] sm:$0xff]
        %v3260 = vld [vmem:[%s3218 + $0x148] sm:$0xff]
        %v3261 = vld [vmem:[%s3218 + $0x150] sm:$0xff]
        %v3262 = vld [vmem:[%s3218 + $0x158] sm:$0xff]
        %v3263 = vld [vmem:[%s3218 + $0x160] sm:$0xff]
        %v3264 = vld [vmem:[%s3218 + $0x168] sm:$0xff]
        %v3265 = vld [vmem:[%s3218 + $0x170] sm:$0xff]
        %v3266 = vld [vmem:[%s3218 + $0x178] sm:$0xff]
        %v3267 = vld [vmem:[%s3218 + $0x180] sm:$0xff]
        %v3268 = vld [vmem:[%s3218 + $0x188] sm:$0xff]
        %v3269 = vld [vmem:[%s3218 + $0x190] sm:$0xff]
        %v3270 = vld [vmem:[%s3218 + $0x198] sm:$0xff]
        %v3271 = vld [vmem:[%s3218 + $0x1a0] sm:$0xff]
        %v3272 = vld [vmem:[%s3218 + $0x1a8] sm:$0xff]
        %v3273 = vld [vmem:[%s3218 + $0x1b0] sm:$0xff]
        %v3274 = vld [vmem:[%s3218 + $0x1b8] sm:$0xff]
        %v3275 = vld [vmem:[%s3218 + $0x1c0] sm:$0xff]
        %v3276 = vld [vmem:[%s3218 + $0x1c8] sm:$0xff]
        %v3277 = vld [vmem:[%s3218 + $0x1d0] sm:$0xff]
        %v3278 = vld [vmem:[%s3218 + $0x1d8] sm:$0xff]
        %v3279 = vld [vmem:[%s3218 + $0x1e0] sm:$0xff]
        %v3280 = vld [vmem:[%s3218 + $0x1e8] sm:$0xff]
        %v3281 = vld [vmem:[%s3218 + $0x1f0] sm:$0xff]
        %v3282 = vld [vmem:[%s3218 + $0x1f8] sm:$0xff]
        %s3283 = scalar_lea.vmem %s10, 6
        %v3284 = vld [vmem:[%s3283] sm:$0x3]
        %v3286 = vlaneseq
        %v3287 = vshrl.u32 %v3286, 7
        %v3288 = vsub.s32 0, %v3287
        %v3289 = vrot.slane %v3284, %v3288
        %v3290 = vlaneseq
        %v3291 = vshrl.u32 %v3290, 7
        %v3292 = vsub.s32 1, %v3291
        %v3293 = vrot.slane %v3284, %v3292
        %v3360 = vunpack.c.l.b16 %v3219
        %v3361 = vunpack.c.h.b16 %v3219
        %v3362 = vunpack.c.l.b16 %v3220
        %v3363 = vunpack.c.h.b16 %v3220
        %v3364 = vunpack.c.l.b16 %v3221
        %v3365 = vunpack.c.h.b16 %v3221
        %v3366 = vunpack.c.l.b16 %v3222
        %v3367 = vunpack.c.h.b16 %v3222
        %v3368 = vunpack.c.l.b16 %v3223
        %v3369 = vunpack.c.h.b16 %v3223
        %v3370 = vunpack.c.l.b16 %v3224
        %v3371 = vunpack.c.h.b16 %v3224
        %v3372 = vunpack.c.l.b16 %v3225
        %v3373 = vunpack.c.h.b16 %v3225
        %v3374 = vunpack.c.l.b16 %v3226
        %v3375 = vunpack.c.h.b16 %v3226
        %v3376 = vunpack.c.l.b16 %v3227
        %v3377 = vunpack.c.h.b16 %v3227
        %v3378 = vunpack.c.l.b16 %v3228
        %v3379 = vunpack.c.h.b16 %v3228
        %v3380 = vunpack.c.l.b16 %v3229
        %v3381 = vunpack.c.h.b16 %v3229
        %v3382 = vunpack.c.l.b16 %v3230
        %v3383 = vunpack.c.h.b16 %v3230
        %v3384 = vunpack.c.l.b16 %v3231
        %v3385 = vunpack.c.h.b16 %v3231
        %v3386 = vunpack.c.l.b16 %v3232
        %v3387 = vunpack.c.h.b16 %v3232
        %v3388 = vunpack.c.l.b16 %v3233
        %v3389 = vunpack.c.h.b16 %v3233
        %v3390 = vunpack.c.l.b16 %v3234
        %v3391 = vunpack.c.h.b16 %v3234
        %v3392 = vunpack.c.l.b16 %v3235
        %v3393 = vunpack.c.h.b16 %v3235
        %v3394 = vunpack.c.l.b16 %v3236
        %v3395 = vunpack.c.h.b16 %v3236
        %v3396 = vunpack.c.l.b16 %v3237
        %v3397 = vunpack.c.h.b16 %v3237
        %v3398 = vunpack.c.l.b16 %v3238
        %v3399 = vunpack.c.h.b16 %v3238
        %v3400 = vunpack.c.l.b16 %v3239
        %v3401 = vunpack.c.h.b16 %v3239
        %v3402 = vunpack.c.l.b16 %v3240
        %v3403 = vunpack.c.h.b16 %v3240
        %v3404 = vunpack.c.l.b16 %v3241
        %v3405 = vunpack.c.h.b16 %v3241
        %v3406 = vunpack.c.l.b16 %v3242
        %v3407 = vunpack.c.h.b16 %v3242
        %v3408 = vunpack.c.l.b16 %v3243
        %v3409 = vunpack.c.h.b16 %v3243
        %v3410 = vunpack.c.l.b16 %v3244
        %v3411 = vunpack.c.h.b16 %v3244
        %v3412 = vunpack.c.l.b16 %v3245
        %v3413 = vunpack.c.h.b16 %v3245
        %v3414 = vunpack.c.l.b16 %v3246
        %v3415 = vunpack.c.h.b16 %v3246
        %v3416 = vunpack.c.l.b16 %v3247
        %v3417 = vunpack.c.h.b16 %v3247
        %v3418 = vunpack.c.l.b16 %v3248
        %v3419 = vunpack.c.h.b16 %v3248
        %v3420 = vunpack.c.l.b16 %v3249
        %v3421 = vunpack.c.h.b16 %v3249
        %v3422 = vunpack.c.l.b16 %v3250
        %v3423 = vunpack.c.h.b16 %v3250
        %v3424 = vunpack.c.l.b16 %v3251
        %v3425 = vunpack.c.h.b16 %v3251
        %v3426 = vunpack.c.l.b16 %v3252
        %v3427 = vunpack.c.h.b16 %v3252
        %v3428 = vunpack.c.l.b16 %v3253
        %v3429 = vunpack.c.h.b16 %v3253
        %v3430 = vunpack.c.l.b16 %v3254
        %v3431 = vunpack.c.h.b16 %v3254
        %v3432 = vunpack.c.l.b16 %v3255
        %v3433 = vunpack.c.h.b16 %v3255
        %v3434 = vunpack.c.l.b16 %v3256
        %v3435 = vunpack.c.h.b16 %v3256
        %v3436 = vunpack.c.l.b16 %v3257
        %v3437 = vunpack.c.h.b16 %v3257
        %v3438 = vunpack.c.l.b16 %v3258
        %v3439 = vunpack.c.h.b16 %v3258
        %v3440 = vunpack.c.l.b16 %v3259
        %v3441 = vunpack.c.h.b16 %v3259
        %v3442 = vunpack.c.l.b16 %v3260
        %v3443 = vunpack.c.h.b16 %v3260
        %v3444 = vunpack.c.l.b16 %v3261
        %v3445 = vunpack.c.h.b16 %v3261
        %v3446 = vunpack.c.l.b16 %v3262
        %v3447 = vunpack.c.h.b16 %v3262
        %v3448 = vunpack.c.l.b16 %v3263
        %v3449 = vunpack.c.h.b16 %v3263
        %v3450 = vunpack.c.l.b16 %v3264
        %v3451 = vunpack.c.h.b16 %v3264
        %v3452 = vunpack.c.l.b16 %v3265
        %v3453 = vunpack.c.h.b16 %v3265
        %v3454 = vunpack.c.l.b16 %v3266
        %v3455 = vunpack.c.h.b16 %v3266
        %v3456 = vunpack.c.l.b16 %v3267
        %v3457 = vunpack.c.h.b16 %v3267
        %v3458 = vunpack.c.l.b16 %v3268
        %v3459 = vunpack.c.h.b16 %v3268
        %v3460 = vunpack.c.l.b16 %v3269
        %v3461 = vunpack.c.h.b16 %v3269
        %v3462 = vunpack.c.l.b16 %v3270
        %v3463 = vunpack.c.h.b16 %v3270
        %v3464 = vunpack.c.l.b16 %v3271
        %v3465 = vunpack.c.h.b16 %v3271
        %v3466 = vunpack.c.l.b16 %v3272
        %v3467 = vunpack.c.h.b16 %v3272
        %v3468 = vunpack.c.l.b16 %v3273
        %v3469 = vunpack.c.h.b16 %v3273
        %v3470 = vunpack.c.l.b16 %v3274
        %v3471 = vunpack.c.h.b16 %v3274
        %v3472 = vunpack.c.l.b16 %v3275
        %v3473 = vunpack.c.h.b16 %v3275
        %v3474 = vunpack.c.l.b16 %v3276
        %v3475 = vunpack.c.h.b16 %v3276
        %v3476 = vunpack.c.l.b16 %v3277
        %v3477 = vunpack.c.h.b16 %v3277
        %v3478 = vunpack.c.l.b16 %v3278
        %v3479 = vunpack.c.h.b16 %v3278
        %v3480 = vunpack.c.l.b16 %v3279
        %v3481 = vunpack.c.h.b16 %v3279
        %v3482 = vunpack.c.l.b16 %v3280
        %v3483 = vunpack.c.h.b16 %v3280
        %v3484 = vunpack.c.l.b16 %v3281
        %v3485 = vunpack.c.h.b16 %v3281
        %v3486 = vunpack.c.l.b16 %v3282
        %v3487 = vunpack.c.h.b16 %v3282
        %v3488 = vpack.c.b16 %v3362, %v3360
        %v3489 = vpack.c.b16 %v3363, %v3361
        %v3490 = vpack.c.b16 %v3366, %v3364
        %v3491 = vpack.c.b16 %v3367, %v3365
        %v3492 = vpack.c.b16 %v3370, %v3368
        %v3493 = vpack.c.b16 %v3371, %v3369
        %v3494 = vpack.c.b16 %v3374, %v3372
        %v3495 = vpack.c.b16 %v3375, %v3373
        %v3496 = vpack.c.b16 %v3378, %v3376
        %v3497 = vpack.c.b16 %v3379, %v3377
        %v3498 = vpack.c.b16 %v3382, %v3380
        %v3499 = vpack.c.b16 %v3383, %v3381
        %v3500 = vpack.c.b16 %v3386, %v3384
        %v3501 = vpack.c.b16 %v3387, %v3385
        %v3502 = vpack.c.b16 %v3390, %v3388
        %v3503 = vpack.c.b16 %v3391, %v3389
        %v3504 = vpack.c.b16 %v3394, %v3392
        %v3505 = vpack.c.b16 %v3395, %v3393
        %v3506 = vpack.c.b16 %v3398, %v3396
        %v3507 = vpack.c.b16 %v3399, %v3397
        %v3508 = vpack.c.b16 %v3402, %v3400
        %v3509 = vpack.c.b16 %v3403, %v3401
        %v3510 = vpack.c.b16 %v3406, %v3404
        %v3511 = vpack.c.b16 %v3407, %v3405
        %v3512 = vpack.c.b16 %v3410, %v3408
        %v3513 = vpack.c.b16 %v3411, %v3409
        %v3514 = vpack.c.b16 %v3414, %v3412
        %v3515 = vpack.c.b16 %v3415, %v3413
        %v3516 = vpack.c.b16 %v3418, %v3416
        %v3517 = vpack.c.b16 %v3419, %v3417
        %v3518 = vpack.c.b16 %v3422, %v3420
        %v3519 = vpack.c.b16 %v3423, %v3421
        %v3520 = vpack.c.b16 %v3426, %v3424
        %v3521 = vpack.c.b16 %v3427, %v3425
        %v3522 = vpack.c.b16 %v3430, %v3428
        %v3523 = vpack.c.b16 %v3431, %v3429
        %v3524 = vpack.c.b16 %v3434, %v3432
        %v3525 = vpack.c.b16 %v3435, %v3433
        %v3526 = vpack.c.b16 %v3438, %v3436
        %v3527 = vpack.c.b16 %v3439, %v3437
        %v3528 = vpack.c.b16 %v3442, %v3440
        %v3529 = vpack.c.b16 %v3443, %v3441
        %v3530 = vpack.c.b16 %v3446, %v3444
        %v3531 = vpack.c.b16 %v3447, %v3445
        %v3532 = vpack.c.b16 %v3450, %v3448
        %v3533 = vpack.c.b16 %v3451, %v3449
        %v3534 = vpack.c.b16 %v3454, %v3452
        %v3535 = vpack.c.b16 %v3455, %v3453
        %v3536 = vpack.c.b16 %v3458, %v3456
        %v3537 = vpack.c.b16 %v3459, %v3457
        %v3538 = vpack.c.b16 %v3462, %v3460
        %v3539 = vpack.c.b16 %v3463, %v3461
        %v3540 = vpack.c.b16 %v3466, %v3464
        %v3541 = vpack.c.b16 %v3467, %v3465
        %v3542 = vpack.c.b16 %v3470, %v3468
        %v3543 = vpack.c.b16 %v3471, %v3469
        %v3544 = vpack.c.b16 %v3474, %v3472
        %v3545 = vpack.c.b16 %v3475, %v3473
        %v3546 = vpack.c.b16 %v3478, %v3476
        %v3547 = vpack.c.b16 %v3479, %v3477
        %v3548 = vpack.c.b16 %v3482, %v3480
        %v3549 = vpack.c.b16 %v3483, %v3481
        %v3550 = vpack.c.b16 %v3486, %v3484
        %v3551 = vpack.c.b16 %v3487, %v3485
        %3616 = vmatprep.subr.bf16.mxu0 %v3489
        %3617 = vmatpush1.bf16.msra.mxu0 %v3488
        %3618 = vmatprep.subr.bf16.mxu0 %v3491
        %3619 = vmatpush1.bf16.msra.mxu0 %v3490
        %3620 = vmatprep.subr.bf16.mxu0 %v3493
        %3621 = vmatpush1.bf16.msra.mxu0 %v3492
        %3622 = vmatprep.subr.bf16.mxu0 %v3495
        %3623 = vmatpush1.bf16.msra.mxu0 %v3494
        %3624 = vmatprep.subr.bf16.mxu0 %v3497
        %3625 = vmatpush1.bf16.msra.mxu0 %v3496
        %3626 = vmatprep.subr.bf16.mxu0 %v3499
        %3627 = vmatpush1.bf16.msra.mxu0 %v3498
        %3628 = vmatprep.subr.bf16.mxu0 %v3501
        %3629 = vmatpush1.bf16.msra.mxu0 %v3500
        %3630 = vmatprep.subr.bf16.mxu0 %v3503
        %3631 = vmatpush1.bf16.msra.mxu0 %v3502
        %3632 = vmatprep.subr.bf16.mxu0 %v3505
        %3633 = vmatpush1.bf16.msra.mxu0 %v3504
        %3634 = vmatprep.subr.bf16.mxu0 %v3507
        %3635 = vmatpush1.bf16.msra.mxu0 %v3506
        %3636 = vmatprep.subr.bf16.mxu0 %v3509
        %3637 = vmatpush1.bf16.msra.mxu0 %v3508
        %3638 = vmatprep.subr.bf16.mxu0 %v3511
        %3639 = vmatpush1.bf16.msra.mxu0 %v3510
        %3640 = vmatprep.subr.bf16.mxu0 %v3513
        %3641 = vmatpush1.bf16.msra.mxu0 %v3512
        %3642 = vmatprep.subr.bf16.mxu0 %v3515
        %3643 = vmatpush1.bf16.msra.mxu0 %v3514
        %3644 = vmatprep.subr.bf16.mxu0 %v3517
        %3645 = vmatpush1.bf16.msra.mxu0 %v3516
        %3646 = vmatprep.subr.bf16.mxu0 %v3519
        %3647 = vmatpush1.bf16.msra.mxu0 %v3518
        %3648 = vmatprep.mubr.bf16.mxu0 %v1750
        %3649 = vmatmul.mubr.bf16.gmra.mrb[0].mxu0 %v1749
        %v3650 = vpop.f32.mrb[0].mxu0
        %v3651 = vadd.f32 %v3289, %v3650
        %v3652 = vpop.f32.mrb[0].mxu0
        %v3653 = vadd.f32 %v3293, %v3652
        %v3654 = vpop.f32.mrb[0].mxu0
        %v3655 = vpop.f32.mrb[0].mxu0
        %3656 = vdwg.mxu0
        %3657 = vmatprep.subr.bf16.mxu0 %v3521
        %3658 = vmatpush1.bf16.msra.mxu0 %v3520
        %3659 = vmatprep.subr.bf16.mxu0 %v3523
        %3660 = vmatpush1.bf16.msra.mxu0 %v3522
        %3661 = vmatprep.subr.bf16.mxu0 %v3525
        %3662 = vmatpush1.bf16.msra.mxu0 %v3524
        %3663 = vmatprep.subr.bf16.mxu0 %v3527
        %3664 = vmatpush1.bf16.msra.mxu0 %v3526
        %3665 = vmatprep.subr.bf16.mxu0 %v3529
        %3666 = vmatpush1.bf16.msra.mxu0 %v3528
        %3667 = vmatprep.subr.bf16.mxu0 %v3531
        %3668 = vmatpush1.bf16.msra.mxu0 %v3530
        %3669 = vmatprep.subr.bf16.mxu0 %v3533
        %3670 = vmatpush1.bf16.msra.mxu0 %v3532
        %3671 = vmatprep.subr.bf16.mxu0 %v3535
        %3672 = vmatpush1.bf16.msra.mxu0 %v3534
        %3673 = vmatprep.subr.bf16.mxu0 %v3537
        %3674 = vmatpush1.bf16.msra.mxu0 %v3536
        %3675 = vmatprep.subr.bf16.mxu0 %v3539
        %3676 = vmatpush1.bf16.msra.mxu0 %v3538
        %3677 = vmatprep.subr.bf16.mxu0 %v3541
        %3678 = vmatpush1.bf16.msra.mxu0 %v3540
        %3679 = vmatprep.subr.bf16.mxu0 %v3543
        %3680 = vmatpush1.bf16.msra.mxu0 %v3542
        %3681 = vmatprep.subr.bf16.mxu0 %v3545
        %3682 = vmatpush1.bf16.msra.mxu0 %v3544
        %3683 = vmatprep.subr.bf16.mxu0 %v3547
        %3684 = vmatpush1.bf16.msra.mxu0 %v3546
        %3685 = vmatprep.subr.bf16.mxu0 %v3549
        %3686 = vmatpush1.bf16.msra.mxu0 %v3548
        %3687 = vmatprep.subr.bf16.mxu0 %v3551
        %3688 = vmatpush1.bf16.msra.mxu0 %v3550
        %3689 = vmatprep.mubr.bf16.mxu0 %v1752
        %3690 = vmatmul.mubr.bf16.gmra.mrb[0].mxu0 %v1751
        %v3691 = vpop.f32.mrb[0].mxu0
        %v3692 = vadd.f32 %v3651, %v3691
        %v3693 = vpop.f32.mrb[0].mxu0
        %v3694 = vadd.f32 %v3653, %v3693
        %v3695 = vpop.f32.mrb[0].mxu0
        %v3696 = vpop.f32.mrb[0].mxu0
        %3697 = vdwg.mxu0
        %v3698 = vpack.c.bf16 %v3692, %v3692
        %v3699 = vpack.c.bf16 %v3694, %v3694
        %v3702 = vunpack.c.l.b16 %v3698
        %v3703 = vunpack.c.l.b16 %v3699
        %v3704 = vpack.c.b16 %v3703, %v3702
        %3706 = vst [vmem:[%s459 + $0x18] sm:$0xff] %v3704
        %s3707 = sand.u32 %s273, 1
        %s3708 = scalar_lea.sflag [#allocation4], %s3707
        %s3709 = sand.u32 %s273, 1
        %s3710 = smul.addr %s3709, 32
        %s3711 = scalar_lea.vmem [#allocation13], %s3710
        // Predicated region
        $region89: #{tpu_custom_call.1} parent=63 // pred_check
          %p3712 = pneg %p283
        $region90: #{tpu_custom_call.1} parent=63 // pred_check_branch
          %3714 = sbr.rel (%p3712) target = $region92
        $region91: #{tpu_custom_call.1} parent=63 // pred_region
          %s3716 = ssub.s32 512, 512
          %3717 = vsyncadd %s3708, %s3716
          %s3718 = smul.addr %s29, 8
          %s3719 = smul.addr %s3718, 64
          %s3720 = scalar_lea.hbm %s11, %s3719
          %s3722 = sshll.u32 %s3711, 4
          %s3723 = int_to_ptr.vmem [resolvable:$true] %s3722
          %3725 = dma.vmem_to_hbm [thread:$0]  %s3723, 512, %s3720, %s3708
        $region92: #{tpu_custom_call.1} parent=63 // pred_fallthru
          _
      $region64: #{tpu_custom_call.1} parent=5 // pred_fallthru
        _
      %p3726 = scmp.le.s32.totalorder 2, %s24
      // Predicated region
      $region93: #{tpu_custom_call.1} parent=5 // pred_check
        %p3727 = pneg %p3726
      $region94: #{tpu_custom_call.1} parent=5 // pred_check_branch
        %3729 = sbr.rel (%p3727) target = $region96
      $region95: #{tpu_custom_call.1} parent=5 // pred_region
        %s3730 = ssub.s32 %s24, 2
        // Predicated region
        $region97: #{tpu_custom_call.1} parent=95 // pred_check
          %p3731 = pneg %p289
        $region98: #{tpu_custom_call.1} parent=95 // pred_check_branch
          %3733 = sbr.rel (%p3731) target = $region100
        $region99: #{tpu_custom_call.1} parent=95 // pred_region
          %s3734 = sand.u32 %s274, 1
          %s3735 = scalar_lea.sflag [#allocation4], %s3734
          %s3736 = sand.u32 %s274, 1
          %s3737 = smul.addr %s3736, 32
          %s3738 = scalar_lea.vmem [#allocation13], %s3737
          %3739 = dma.done %s3735, 512
        $region100: #{tpu_custom_call.1} parent=95 // pred_fallthru
          _
      $region96: #{tpu_custom_call.1} parent=5 // pred_fallthru
        _
    $region6: #{tpu_custom_call.1} parent=1 // loop_footer
      %s28 = sadd.s32 1, %s24
    $region7: #{tpu_custom_call.1} parent=1 // loop_footer_branch
      %23 = sbr.rel target = $region3
    $region8: #{tpu_custom_call.1} parent=1 // loop_exit
      _
    %3740 = vsyncpa [#allocation3], 1
    %s3741 = scalar_lea.sflag [#allocation3], 1
    %3742 = vsyncpa %s3741, 1
    %3743 = vsyncpa [#allocation6], 1
    %3744 = vsyncpa [#allocation9], 1
    %3745 = vsyncpa [#allocation12], 1
    %3746 = vsyncpa [#allocation4], 1
    %s3747 = scalar_lea.sflag [#allocation4], 1
    %3748 = vsyncpa %s3747, 1

// kernel: tpu_custom_call.1
$region0: #{tpu_custom_call.1}
  #allocation0 [shape = 'u32[]', space=smem, size = 0x4, offset = 0x4, fixed_abs, tag = 'smem constant byte address 0x4 - core index']
  #allocation1 [shape = 'u32[144,128]{1,0:T(1,128)}', space=vmem, size = 0x12000, scoped, tag = 'internal scratch']
  %s0 = inlined_call_operand.vmem [shape: f32[16,8], index: 0, kind: input, shape index: {}]
  %s1 = inlined_call_operand.hbm [shape: bf16[8,64], index: 1, kind: input, shape index: {}]
  %s2 = inlined_call_operand.hbm [shape: f32[1,64], index: 2, kind: input, shape index: {}]
  %s3 = inlined_call_operand.vmem [shape: bf16[64,128], index: 3, kind: input, shape index: {}]
  %s4 = inlined_call_operand.hbm [shape: f32[1,128], index: 4, kind: input, shape index: {}]
  %s5 = inlined_call_operand.hbm [shape: bf16[128,256], index: 5, kind: input, shape index: {}]
  %s6 = inlined_call_operand.vmem [shape: f32[1,256], index: 6, kind: input, shape index: {}]
  %s7 = inlined_call_operand.hbm [shape: bf16[256,1024], index: 7, kind: input, shape index: {}]
  %s8 = inlined_call_operand.vmem [shape: f32[1,1024], index: 8, kind: input, shape index: {}]
  %s9 = inlined_call_operand.hbm [shape: bf16[4,512,256], index: 9, kind: input, shape index: {}]
  %s10 = inlined_call_operand.vmem [shape: f32[4,1,256], index: 10, kind: input, shape index: {}]
  %s11 = inlined_call_operand.hbm [shape: bf16[16,1024], index: 11, kind: output, shape index: {}]
  %s12 = sld [smem:[#allocation0]]
  $region101: #{tpu_custom_call.1} parent=0
    _
  %s14 = ssub.s32 1, %s12
  %s15 = scalar_select 0, %s14, %s12
  $region1: #{tpu_custom_call.1} parent=0
    #allocation2 [shape = 'u8[2048]{0}', space=vmem, size = 0x800, scoped, tag = 'input window, operand 1, single buffered']
    #allocation3 [shape = 's32[2]{0}', space=sflag, size = 0x8, scoped, tag = 'scoped memory for tpu_custom_call.1']
    #allocation4 [shape = 's32[2]{0}', space=sflag, size = 0x8, scoped, tag = 'scoped memory for tpu_custom_call.1']
    #allocation5 [shape = 'u8[512]{0}', space=vmem, size = 0x400, scoped, tag = 'input window, operand 2, single buffered']
    #allocation6 [shape = 's32[1]{0}', space=sflag, size = 0x4, scoped, tag = 'scoped memory for tpu_custom_call.1']
    #allocation7 [shape = 'u8[512]{0}', space=vmem, size = 0x400, scoped, tag = 'input window, operand 4, single buffered']
    #allocation8 [shape = 'u8[65536]{0}', space=vmem, size = 0x10000, scoped, tag = 'input window, operand 5, single buffered']
    #allocation9 [shape = 's32[1]{0}', space=sflag, size = 0x4, scoped, tag = 'scoped memory for tpu_custom_call.1']
    #allocation10 [shape = 'u8[524288]{0}', space=vmem, size = 0x80000, scoped, tag = 'input window, operand 7, single buffered']
    #allocation11 [shape = 'u8[1048576]{0}', space=vmem, size = 0x100000, scoped, tag = 'input window, operand 9, single buffered']
    #allocation12 [shape = 's32[1]{0}', space=sflag, size = 0x4, scoped, tag = 'scoped memory for tpu_custom_call.1']
    #allocation13 [shape = 'u8[32768]{0}', space=vmem, size = 0x8000, scoped, tag = 'output window, operand 0']
    %16 = vsyncpa [#allocation3], 0
    %17 = vsyncpa [#allocation6], 0
    %18 = vsyncpa [#allocation9], 0
    %19 = vsyncpa [#allocation12], 0
    %20 = vsyncpa [#allocation4], 0
    %s21 = scalar_lea.sflag [#allocation4], 1
    %22 = vsyncpa %s21, 0
    loop: start=0, step=1, limit=4
    $region2: #{tpu_custom_call.1} parent=1 // loop_pre_header
      _
    $region3: #{tpu_custom_call.1} parent=1 // loop_header
      %s24 = sphi 0, %s28
      %p25 = scmp.ge.s32.totalorder %s24, 4
      %s34 = sphi 0, %s36
      %s37 = sphi 0, %s34
      %s38 = sphi 0, %s37
      %s54 = sphi 0, %s38
      %s58 = sphi 0, %s58
      %s60 = sphi 0, %s58
      %s61 = sphi 0, %s60
      %s75 = sphi 0, %s61
      %s79 = sphi 0, %s79
      %s81 = sphi 0, %s79
      %s82 = sphi 0, %s81
      %s96 = sphi 0, %s82
      %s100 = sphi 0, %s100
      %s102 = sphi 0, %s100
      %s103 = sphi 0, %s102
      %s117 = sphi 0, %s103
      %s121 = sphi 0, %s121
      %s123 = sphi 0, %s121
      %s124 = sphi 0, %s123
      %s138 = sphi 0, %s124
      %s142 = sphi 0, %s142
      %s144 = sphi 0, %s142
      %s145 = sphi 0, %s144
      %s159 = sphi 0, %s145
      %s163 = sphi 0, %s163
      %s165 = sphi 0, %s163
      %s166 = sphi 0, %s165
      %s180 = sphi 0, %s166
      %s184 = sphi 0, %s184
      %s186 = sphi 0, %s184
      %s187 = sphi 0, %s186
      %s201 = sphi 0, %s187
      %s205 = sphi 0, %s205
      %s207 = sphi 0, %s205
      %s208 = sphi 0, %s207
      %s222 = sphi 0, %s208
      %s226 = sphi 0, %s226
      %s228 = sphi 0, %s226
      %s229 = sphi 0, %s228
      %s243 = sphi 0, %s229
      %s247 = sphi 0, %s247
      %s249 = sphi 0, %s247
      %s250 = sphi 0, %s249
      %s264 = sphi 0, %s250
      %s270 = sphi 0, %s272
      %s273 = sphi 0, %s270
      %s274 = sphi 0, %s273
      %s290 = sphi 0, %s274
    $region4: #{tpu_custom_call.1} parent=1 // loop_header_branch
      %27 = sbr.rel (%p25) target = $region8
    $region5: #{tpu_custom_call.1} parent=1 // loop_body
      %s29 = ssub.s32 %s24, 1
      %s30 = ssub.s32 %s24, 2
      %s31 = sadd.s32 %s24, 1
      %s32 = ssub.s32 %s24, %s31
      %p33 = scmp.eq.s32.totalorder %s32, 0
      %s35 = sadd.s32 %s34, 1
      %s36 = scalar_select %p33, %s34, %s35
      %p39 = pneg %p33
      %p40 = scmp.eq.s32.totalorder %s24, 1
      %p41 = por %p39, %p40
      %p42 = scmp.ne.s32.totalorder %s34, %s37
      %p43 = scmp.eq.s32.totalorder %s24, 0
      %p44 = por %p42, %p43
      %p45 = scmp.ne.s32.totalorder %s34, %s37
      %p46 = scmp.eq.s32.totalorder %s29, 1
      %p47 = por %p45, %p46
      %p48 = scmp.ne.s32.totalorder %s37, %s38
      %p49 = scmp.eq.s32.totalorder %s29, 0
      %p50 = por %p48, %p49
      %p51 = scmp.ne.s32.totalorder %s37, %s38
      %p52 = scmp.eq.s32.totalorder %s30, 1
      %p53 = por %p51, %p52
      %p55 = scmp.ne.s32.totalorder %s38, %s54
      %p56 = scmp.eq.s32.totalorder %s30, 0
      %p57 = por %p55, %p56
      %s59 = sadd.s32 %s58, 1
      %p62 = scmp.eq.s32.totalorder %s24, 1
      %p63 = scmp.ne.s32.totalorder %s58, %s60
      %p64 = scmp.eq.s32.totalorder %s24, 0
      %p65 = por %p63, %p64
      %p66 = scmp.ne.s32.totalorder %s58, %s60
      %p67 = scmp.eq.s32.totalorder %s29, 1
      %p68 = por %p66, %p67
      %p69 = scmp.ne.s32.totalorder %s60, %s61
      %p70 = scmp.eq.s32.totalorder %s29, 0
      %p71 = por %p69, %p70
      %p72 = scmp.ne.s32.totalorder %s60, %s61
      %p73 = scmp.eq.s32.totalorder %s30, 1
      %p74 = por %p72, %p73
      %p76 = scmp.ne.s32.totalorder %s61, %s75
      %p77 = scmp.eq.s32.totalorder %s30, 0
      %p78 = por %p76, %p77
      %s80 = sadd.s32 %s79, 1
      %p83 = scmp.eq.s32.totalorder %s24, 1
      %p84 = scmp.ne.s32.totalorder %s79, %s81
      %p85 = scmp.eq.s32.totalorder %s24, 0
      %p86 = por %p84, %p85
      %p87 = scmp.ne.s32.totalorder %s79, %s81
      %p88 = scmp.eq.s32.totalorder %s29, 1
      %p89 = por %p87, %p88
      %p90 = scmp.ne.s32.totalorder %s81, %s82
      %p91 = scmp.eq.s32.totalorder %s29, 0
      %p92 = por %p90, %p91
      %p93 = scmp.ne.s32.totalorder %s81, %s82
      %p94 = scmp.eq.s32.totalorder %s30, 1
      %p95 = por %p93, %p94
      %p97 = scmp.ne.s32.totalorder %s82, %s96
      %p98 = scmp.eq.s32.totalorder %s30, 0
      %p99 = por %p97, %p98
      %s101 = sadd.s32 %s100, 1
      %p104 = scmp.eq.s32.totalorder %s24, 1
      %p105 = scmp.ne.s32.totalorder %s100, %s102
      %p106 = scmp.eq.s32.totalorder %s24, 0
      %p107 = por %p105, %p106
      %p108 = scmp.ne.s32.totalorder %s100, %s102
      %p109 = scmp.eq.s32.totalorder %s29, 1
      %p110 = por %p108, %p109
      %p111 = scmp.ne.s32.totalorder %s102, %s103
      %p112 = scmp.eq.s32.totalorder %s29, 0
      %p113 = por %p111, %p112
      %p114 = scmp.ne.s32.totalorder %s102, %s103
      %p115 = scmp.eq.s32.totalorder %s30, 1
      %p116 = por %p114, %p115
      %p118 = scmp.ne.s32.totalorder %s103, %s117
      %p119 = scmp.eq.s32.totalorder %s30, 0
      %p120 = por %p118, %p119
      %s122 = sadd.s32 %s121, 1
      %p125 = scmp.eq.s32.totalorder %s24, 1
      %p126 = scmp.ne.s32.totalorder %s121, %s123
      %p127 = scmp.eq.s32.totalorder %s24, 0
      %p128 = por %p126, %p127
      %p129 = scmp.ne.s32.totalorder %s121, %s123
      %p130 = scmp.eq.s32.totalorder %s29, 1
      %p131 = por %p129, %p130
      %p132 = scmp.ne.s32.totalorder %s123, %s124
      %p133 = scmp.eq.s32.totalorder %s29, 0
      %p134 = por %p132, %p133
      %p135 = scmp.ne.s32.totalorder %s123, %s124
      %p136 = scmp.eq.s32.totalorder %s30, 1
      %p137 = por %p135, %p136
      %p139 = scmp.ne.s32.totalorder %s124, %s138
      %p140 = scmp.eq.s32.totalorder %s30, 0
      %p141 = por %p139, %p140
      %s143 = sadd.s32 %s142, 1
      %p146 = scmp.eq.s32.totalorder %s24, 1
      %p147 = scmp.ne.s32.totalorder %s142, %s144
      %p148 = scmp.eq.s32.totalorder %s24, 0
      %p149 = por %p147, %p148
      %p150 = scmp.ne.s32.totalorder %s142, %s144
      %p151 = scmp.eq.s32.totalorder %s29, 1
      %p152 = por %p150, %p151
      %p153 = scmp.ne.s32.totalorder %s144, %s145
      %p154 = scmp.eq.s32.totalorder %s29, 0
      %p155 = por %p153, %p154
      %p156 = scmp.ne.s32.totalorder %s144, %s145
      %p157 = scmp.eq.s32.totalorder %s30, 1
      %p158 = por %p156, %p157
      %p160 = scmp.ne.s32.totalorder %s145, %s159
      %p161 = scmp.eq.s32.totalorder %s30, 0
      %p162 = por %p160, %p161
      %s164 = sadd.s32 %s163, 1
      %p167 = scmp.eq.s32.totalorder %s24, 1
      %p168 = scmp.ne.s32.totalorder %s163, %s165
      %p169 = scmp.eq.s32.totalorder %s24, 0
      %p170 = por %p168, %p169
      %p171 = scmp.ne.s32.totalorder %s163, %s165
      %p172 = scmp.eq.s32.totalorder %s29, 1
      %p173 = por %p171, %p172
      %p174 = scmp.ne.s32.totalorder %s165, %s166
      %p175 = scmp.eq.s32.totalorder %s29, 0
      %p176 = por %p174, %p175
      %p177 = scmp.ne.s32.totalorder %s165, %s166
      %p178 = scmp.eq.s32.totalorder %s30, 1
      %p179 = por %p177, %p178
      %p181 = scmp.ne.s32.totalorder %s166, %s180
      %p182 = scmp.eq.s32.totalorder %s30, 0
      %p183 = por %p181, %p182
      %s185 = sadd.s32 %s184, 1
      %p188 = scmp.eq.s32.totalorder %s24, 1
      %p189 = scmp.ne.s32.totalorder %s184, %s186
      %p190 = scmp.eq.s32.totalorder %s24, 0
      %p191 = por %p189, %p190
      %p192 = scmp.ne.s32.totalorder %s184, %s186
      %p193 = scmp.eq.s32.totalorder %s29, 1
      %p194 = por %p192, %p193
      %p195 = scmp.ne.s32.totalorder %s186, %s187
      %p196 = scmp.eq.s32.totalorder %s29, 0
      %p197 = por %p195, %p196
      %p198 = scmp.ne.s32.totalorder %s186, %s187
      %p199 = scmp.eq.s32.totalorder %s30, 1
      %p200 = por %p198, %p199
      %p202 = scmp.ne.s32.totalorder %s187, %s201
      %p203 = scmp.eq.s32.totalorder %s30, 0
      %p204 = por %p202, %p203
      %s206 = sadd.s32 %s205, 1
      %p209 = scmp.eq.s32.totalorder %s24, 1
      %p210 = scmp.ne.s32.totalorder %s205, %s207
      %p211 = scmp.eq.s32.totalorder %s24, 0
      %p212 = por %p210, %p211
      %p213 = scmp.ne.s32.totalorder %s205, %s207
      %p214 = scmp.eq.s32.totalorder %s29, 1
      %p215 = por %p213, %p214
      %p216 = scmp.ne.s32.totalorder %s207, %s208
      %p217 = scmp.eq.s32.totalorder %s29, 0
      %p218 = por %p216, %p217
      %p219 = scmp.ne.s32.totalorder %s207, %s208
      %p220 = scmp.eq.s32.totalorder %s30, 1
      %p221 = por %p219, %p220
      %p223 = scmp.ne.s32.totalorder %s208, %s222
      %p224 = scmp.eq.s32.totalorder %s30, 0
      %p225 = por %p223, %p224
      %s227 = sadd.s32 %s226, 1
      %p230 = scmp.eq.s32.totalorder %s24, 1
      %p231 = scmp.ne.s32.totalorder %s226, %s228
      %p232 = scmp.eq.s32.totalorder %s24, 0
      %p233 = por %p231, %p232
      %p234 = scmp.ne.s32.totalorder %s226, %s228
      %p235 = scmp.eq.s32.totalorder %s29, 1
      %p236 = por %p234, %p235
      %p237 = scmp.ne.s32.totalorder %s228, %s229
      %p238 = scmp.eq.s32.totalorder %s29, 0
      %p239 = por %p237, %p238
      %p240 = scmp.ne.s32.totalorder %s228, %s229
      %p241 = scmp.eq.s32.totalorder %s30, 1
      %p242 = por %p240, %p241
      %p244 = scmp.ne.s32.totalorder %s229, %s243
      %p245 = scmp.eq.s32.totalorder %s30, 0
      %p246 = por %p244, %p245
      %s248 = sadd.s32 %s247, 1
      %p251 = scmp.eq.s32.totalorder %s24, 1
      %p252 = scmp.ne.s32.totalorder %s247, %s249
      %p253 = scmp.eq.s32.totalorder %s24, 0
      %p254 = por %p252, %p253
      %p255 = scmp.ne.s32.totalorder %s247, %s249
      %p256 = scmp.eq.s32.totalorder %s29, 1
      %p257 = por %p255, %p256
      %p258 = scmp.ne.s32.totalorder %s249, %s250
      %p259 = scmp.eq.s32.totalorder %s29, 0
      %p260 = por %p258, %p259
      %p261 = scmp.ne.s32.totalorder %s249, %s250
      %p262 = scmp.eq.s32.totalorder %s30, 1
      %p263 = por %p261, %p262
      %p265 = scmp.ne.s32.totalorder %s250, %s264
      %p266 = scmp.eq.s32.totalorder %s30, 0
      %p267 = por %p265, %p266
      %s268 = ssub.s32 %s24, %s31
      %p269 = scmp.eq.s32.totalorder %s268, 0
      %s271 = sadd.s32 %s270, 1
      %s272 = scalar_select %p269, %s270, %s271
      %p275 = pneg %p269
      %p276 = scmp.eq.s32.totalorder %s24, 1
      %p277 = por %p275, %p276
      %p278 = scmp.ne.s32.totalorder %s270, %s273
      %p279 = scmp.eq.s32.totalorder %s24, 0
      %p280 = por %p278, %p279
      %p281 = scmp.ne.s32.totalorder %s270, %s273
      %p282 = scmp.eq.s32.totalorder %s29, 1
      %p283 = por %p281, %p282
      %p284 = scmp.ne.s32.totalorder %s273, %s274
      %p285 = scmp.eq.s32.totalorder %s29, 0
      %p286 = por %p284, %p285
      %p287 = scmp.ne.s32.totalorder %s273, %s274
      %p288 = scmp.eq.s32.totalorder %s30, 1
      %p289 = por %p287, %p288
      %p291 = scmp.ne.s32.totalorder %s274, %s290
      %p292 = scmp.eq.s32.totalorder %s30, 0
      %p293 = por %p291, %p292
      %p294 = scmp.le.s32.totalorder 1, %s24
      %p295 = scmp.lt.s32.totalorder %s24, 3
      %p296 = pnand %p294, %p295
      %p297 = pneg %p296
      // Predicated region
      $region9: #{tpu_custom_call.1} parent=5 // pred_check
        _
      $region10: #{tpu_custom_call.1} parent=5 // pred_check_branch
        %299 = sbr.rel (%p296) target = $region12
      $region11: #{tpu_custom_call.1} parent=5 // pred_region
        %s300 = ssub.s32 %s24, 1
        // Predicated region
        $region13: #{tpu_custom_call.1} parent=11 // pred_check
          %p301 = pneg %p71
        $region14: #{tpu_custom_call.1} parent=11 // pred_check_branch
          %303 = sbr.rel (%p301) target = $region16
        $region15: #{tpu_custom_call.1} parent=11 // pred_region
          %s305 = ssub.s32 64, 64
          %306 = vsyncadd [#allocation3], %s305
          %s308 = sshll.u32 [#allocation2], 4
          %s309 = int_to_ptr.vmem [resolvable:$true] %s308
          %311 = dma.hbm_to_vmem [thread:$0]  %s1, 64, %s309, [#allocation3]
        $region16: #{tpu_custom_call.1} parent=11 // pred_fallthru
          _
        // Predicated region
        $region17: #{tpu_custom_call.1} parent=11 // pred_check
          %p312 = pneg %p92
        $region18: #{tpu_custom_call.1} parent=11 // pred_check_branch
          %314 = sbr.rel (%p312) target = $region20
        $region19: #{tpu_custom_call.1} parent=11 // pred_region
          %s316 = ssub.s32 16, 16
          %317 = vsyncadd [#allocation6], %s316
          %s319 = sshll.u32 [#allocation5], 4
          %s320 = int_to_ptr.vmem [resolvable:$true] %s319
          %322 = dma.hbm_to_vmem [thread:$0]  %s2, 16, %s320, [#allocation6]
        $region20: #{tpu_custom_call.1} parent=11 // pred_fallthru
          _
        // Predicated region
        $region21: #{tpu_custom_call.1} parent=11 // pred_check
          %p323 = pneg %p113
        $region22: #{tpu_custom_call.1} parent=11 // pred_check_branch
          %325 = sbr.rel (%p323) target = $region24
        $region23: #{tpu_custom_call.1} parent=11 // pred_region
          _
        $region24: #{tpu_custom_call.1} parent=11 // pred_fallthru
          _
        // Predicated region
        $region25: #{tpu_custom_call.1} parent=11 // pred_check
          %p326 = pneg %p134
        $region26: #{tpu_custom_call.1} parent=11 // pred_check_branch
          %328 = sbr.rel (%p326) target = $region28
        $region27: #{tpu_custom_call.1} parent=11 // pred_region
          %s330 = ssub.s32 16, 16
          %331 = vsyncadd [#allocation6], %s330
          %s333 = sshll.u32 [#allocation7], 4
          %s334 = int_to_ptr.vmem [resolvable:$true] %s333
          %336 = dma.hbm_to_vmem [thread:$0]  %s4, 16, %s334, [#allocation6]
        $region28: #{tpu_custom_call.1} parent=11 // pred_fallthru
          _
        // Predicated region
        $region29: #{tpu_custom_call.1} parent=11 // pred_check
          %p337 = pneg %p155
        $region30: #{tpu_custom_call.1} parent=11 // pred_check_branch
          %339 = sbr.rel (%p337) target = $region32
        $region31: #{tpu_custom_call.1} parent=11 // pred_region
          %s341 = ssub.s32 2048, 2048
          %342 = vsyncadd [#allocation9], %s341
          %s343 = sshll.u32 [#allocation8], 4
          %s344 = int_to_ptr.vmem [resolvable:$true] %s343
          %349 = dma.hbm_to_vmem [thread:$0]  %s5, 2048, %s344, [#allocation9], 128, 128, 8
        $region32: #{tpu_custom_call.1} parent=11 // pred_fallthru
          _
        // Predicated region
        $region33: #{tpu_custom_call.1} parent=11 // pred_check
          %p350 = pneg %p176
        $region34: #{tpu_custom_call.1} parent=11 // pred_check_branch
          %352 = sbr.rel (%p350) target = $region36
        $region35: #{tpu_custom_call.1} parent=11 // pred_region
          _
        $region36: #{tpu_custom_call.1} parent=11 // pred_fallthru
          _
        // Predicated region
        $region37: #{tpu_custom_call.1} parent=11 // pred_check
          %p353 = pneg %p197
        $region38: #{tpu_custom_call.1} parent=11 // pred_check_branch
          %355 = sbr.rel (%p353) target = $region40
        $region39: #{tpu_custom_call.1} parent=11 // pred_region
          %s357 = ssub.s32 16384, 16384
          %358 = vsyncadd [#allocation9], %s357
          %s359 = sshll.u32 [#allocation10], 4
          %s360 = int_to_ptr.vmem [resolvable:$true] %s359
          %365 = dma.hbm_to_vmem [thread:$0]  %s7, 16384, %s360, [#allocation9], 512, 512, 32
        $region40: #{tpu_custom_call.1} parent=11 // pred_fallthru
          _
        // Predicated region
        $region41: #{tpu_custom_call.1} parent=11 // pred_check
          %p366 = pneg %p218
        $region42: #{tpu_custom_call.1} parent=11 // pred_check_branch
          %368 = sbr.rel (%p366) target = $region44
        $region43: #{tpu_custom_call.1} parent=11 // pred_region
          _
        $region44: #{tpu_custom_call.1} parent=11 // pred_fallthru
          _
        // Predicated region
        $region45: #{tpu_custom_call.1} parent=11 // pred_check
          %p369 = pneg %p239
        $region46: #{tpu_custom_call.1} parent=11 // pred_check_branch
          %371 = sbr.rel (%p369) target = $region48
        $region47: #{tpu_custom_call.1} parent=11 // pred_region
          %s373 = ssub.s32 32768, 32768
          %374 = vsyncadd [#allocation12], %s373
          %s375 = sshll.u32 [#allocation11], 4
          %s376 = int_to_ptr.vmem [resolvable:$true] %s375
          %381 = dma.hbm_to_vmem [thread:$0]  %s9, 32768, %s376, [#allocation12], 128, 128, 8
        $region48: #{tpu_custom_call.1} parent=11 // pred_fallthru
          _
        // Predicated region
        $region49: #{tpu_custom_call.1} parent=11 // pred_check
          %p382 = pneg %p260
        $region50: #{tpu_custom_call.1} parent=11 // pred_check_branch
          %384 = sbr.rel (%p382) target = $region52
        $region51: #{tpu_custom_call.1} parent=11 // pred_region
          _
        $region52: #{tpu_custom_call.1} parent=11 // pred_fallthru
          _
      $region12: #{tpu_custom_call.1} parent=5 // pred_fallthru
        _
      %p385 = scmp.lt.s32.totalorder %s24, 2
      // Predicated region
      $region53: #{tpu_custom_call.1} parent=5 // pred_check
        %p386 = pneg %p385
      $region54: #{tpu_custom_call.1} parent=5 // pred_check_branch
        %388 = sbr.rel (%p386) target = $region56
      $region55: #{tpu_custom_call.1} parent=5 // pred_region
        // Predicated region
        $region57: #{tpu_custom_call.1} parent=55 // pred_check
          %p389 = pneg %p44
        $region58: #{tpu_custom_call.1} parent=55 // pred_check_branch
          %391 = sbr.rel (%p389) target = $region60
        $region59: #{tpu_custom_call.1} parent=55 // pred_region
          %p392 = scmp.lt.s32.totalorder %s24, 1
          %s393 = scalar_select %p392, %s24, 1
          %s394 = smul.addr %s393, 8
          %s395 = scalar_lea.vmem %s0, %s394
        $region60: #{tpu_custom_call.1} parent=55 // pred_fallthru
          _
      $region56: #{tpu_custom_call.1} parent=5 // pred_fallthru
        _
      %p396 = scmp.le.s32.totalorder 1, %s24
      %p397 = scmp.lt.s32.totalorder %s24, 3
      %p398 = pnand %p396, %p397
      %p399 = pneg %p398
      // Predicated region
      $region61: #{tpu_custom_call.1} parent=5 // pred_check
        _
      $region62: #{tpu_custom_call.1} parent=5 // pred_check_branch
        %401 = sbr.rel (%p398) target = $region64
      $region63: #{tpu_custom_call.1} parent=5 // pred_region
        %s402 = ssub.s32 %s24, 1
        // Predicated region
        $region65: #{tpu_custom_call.1} parent=63 // pred_check
          %p403 = pneg %p71
        $region66: #{tpu_custom_call.1} parent=63 // pred_check_branch
          %405 = sbr.rel (%p403) target = $region68
        $region67: #{tpu_custom_call.1} parent=63 // pred_region
          %406 = dma.done [#allocation3], 64
        $region68: #{tpu_custom_call.1} parent=63 // pred_fallthru
          _
        // Predicated region
        $region69: #{tpu_custom_call.1} parent=63 // pred_check
          %p407 = pneg %p92
        $region70: #{tpu_custom_call.1} parent=63 // pred_check_branch
          %409 = sbr.rel (%p407) target = $region72
        $region71: #{tpu_custom_call.1} parent=63 // pred_region
          %410 = dma.done [#allocation6], 16
        $region72: #{tpu_custom_call.1} parent=63 // pred_fallthru
          _
        // Predicated region
        $region73: #{tpu_custom_call.1} parent=63 // pred_check
          %p411 = pneg %p134
        $region74: #{tpu_custom_call.1} parent=63 // pred_check_branch
          %413 = sbr.rel (%p411) target = $region76
        $region75: #{tpu_custom_call.1} parent=63 // pred_region
          %414 = dma.done [#allocation6], 16
        $region76: #{tpu_custom_call.1} parent=63 // pred_fallthru
          _
        // Predicated region
        $region77: #{tpu_custom_call.1} parent=63 // pred_check
          %p415 = pneg %p155
        $region78: #{tpu_custom_call.1} parent=63 // pred_check_branch
          %417 = sbr.rel (%p415) target = $region80
        $region79: #{tpu_custom_call.1} parent=63 // pred_region
          %418 = dma.done [#allocation9], 2048
        $region80: #{tpu_custom_call.1} parent=63 // pred_fallthru
          _
        // Predicated region
        $region81: #{tpu_custom_call.1} parent=63 // pred_check
          %p419 = pneg %p197
        $region82: #{tpu_custom_call.1} parent=63 // pred_check_branch
          %421 = sbr.rel (%p419) target = $region84
        $region83: #{tpu_custom_call.1} parent=63 // pred_region
          %422 = dma.done [#allocation9], 16384
        $region84: #{tpu_custom_call.1} parent=63 // pred_fallthru
          _
        // Predicated region
        $region85: #{tpu_custom_call.1} parent=63 // pred_check
          %p423 = pneg %p239
        $region86: #{tpu_custom_call.1} parent=63 // pred_check_branch
          %425 = sbr.rel (%p423) target = $region88
        $region87: #{tpu_custom_call.1} parent=63 // pred_region
          %426 = dma.done [#allocation12], 32768
        $region88: #{tpu_custom_call.1} parent=63 // pred_fallthru
          _
        %p427 = scmp.lt.s32.totalorder %s29, 1
        %s428 = scalar_select %p427, %s29, 1
        %s429 = smul.addr %s428, 8
        %s430 = scalar_lea.vmem %s0, %s429
        %p431 = pneg %p50
        %p432 = pneg %p47
        %p433 = pneg %p71
        %p434 = pneg %p68
        %p435 = pneg %p92
        %p436 = pneg %p89
        %p437 = pneg %p113
        %p438 = pneg %p110
        %p439 = pneg %p134
        %p440 = pneg %p131
        %p441 = pneg %p155
        %p442 = pneg %p152
        %p443 = pneg %p176
        %p444 = pneg %p173
        %p445 = pneg %p197
        %p446 = pneg %p194
        %p447 = pneg %p218
        %p448 = pneg %p215
        %p449 = pneg %p239
        %p450 = pneg %p236
        %p451 = pneg %p260
        %p452 = pneg %p257
        %p453 = pneg %p286
        %p454 = pneg %p283
        %s455 = sand.u32 %s273, 1
        %s456 = scalar_lea.sflag [#allocation4], %s455
        %s457 = sand.u32 %s273, 1
        %s458 = smul.addr %s457, 32
        %s459 = scalar_lea.vmem [#allocation13], %s458
        %p460 = scmp.lt.s32.totalorder %s29, 1
        %s461 = scalar_select %p460, %s29, 1
        %s462 = smul.addr %s461, 8
        %s463 = scalar_lea.vmem %s0, %s462
        %v465 = vld [vmem:[%s463] sm:$0xff]
        %v466 = vpack.c.bf16 %v465, %v465
        %v467 = vld [vmem:[#allocation2] sm:$0xf]
        %v468 = vld [vmem:[#allocation5] sm:$0x1]
        %v470 = vlaneseq
        %v471 = vshrl.u32 %v470, 7
        %v472 = vsub.s32 0, %v471
        %v473 = vrot.slane %v468, %v472
        %vm475 = vcmask 64512
        %v477 = vsel %vm475, %v466, 0
        %vm479 = vcmask 1043456
        %v481 = vsel %vm479, %v467, 0
        %483 = vmatprep.subr.bf16.mxu0 0
        %484 = vmatpush1.bf16.msra.mxu0 %v481
        %485 = vmatprep.subr.bf16.mxu0 0
        %486 = vmatpush1.bf16.msra.mxu0 0
        %487 = vmatprep.subr.bf16.mxu0 0
        %488 = vmatpush1.bf16.msra.mxu0 0
        %489 = vmatprep.subr.bf16.mxu0 0
        %490 = vmatpush1.bf16.msra.mxu0 0
        %491 = vmatprep.subr.bf16.mxu0 0
        %492 = vmatpush1.bf16.msra.mxu0 0
        %493 = vmatprep.subr.bf16.mxu0 0
        %494 = vmatpush1.bf16.msra.mxu0 0
        %495 = vmatprep.subr.bf16.mxu0 0
        %496 = vmatpush1.bf16.msra.mxu0 0
        %497 = vmatprep.subr.bf16.mxu0 0
        %498 = vmatpush1.bf16.msra.mxu0 0
        %499 = vmatprep.subr.bf16.mxu0 0
        %500 = vmatpush1.bf16.msra.mxu0 0
        %501 = vmatprep.subr.bf16.mxu0 0
        %502 = vmatpush1.bf16.msra.mxu0 0
        %503 = vmatprep.subr.bf16.mxu0 0
        %504 = vmatpush1.bf16.msra.mxu0 0
        %505 = vmatprep.subr.bf16.mxu0 0
        %506 = vmatpush1.bf16.msra.mxu0 0
        %507 = vmatprep.subr.bf16.mxu0 0
        %508 = vmatpush1.bf16.msra.mxu0 0
        %509 = vmatprep.subr.bf16.mxu0 0
        %510 = vmatpush1.bf16.msra.mxu0 0
        %511 = vmatprep.subr.bf16.mxu0 0
        %512 = vmatpush1.bf16.msra.mxu0 0
        %513 = vmatprep.subr.bf16.mxu0 0
        %514 = vmatpush1.bf16.msra.mxu0 0
        %515 = vmatprep.mubr.bf16.mxu0 0
        %516 = vmatmul.mubr.bf16.gmra.mrb[0].mxu0 %v477
        %v517 = vpop.f32.mrb[0].mxu0
        %v518 = vadd.f32 %v473, %v517
        %v519 = vpop.f32.mrb[0].mxu0
        %v520 = vpop.f32.mrb[0].mxu0
        %v521 = vpop.f32.mrb[0].mxu0
        %522 = vdwg.mxu0
        %v523 = vmax.f32 %v518, 0.0
        %v524 = vpack.c.bf16 %v523, %v523
        %v525 = vld [vmem:[%s3] sm:$0xf]
        %v526 = vld [vmem:[%s3 + $0x4] sm:$0xf]
        %v527 = vld [vmem:[%s3 + $0x8] sm:$0xf]
        %v528 = vld [vmem:[%s3 + $0xc] sm:$0xf]
        %v529 = vld [vmem:[%s3 + $0x10] sm:$0xf]
        %v530 = vld [vmem:[%s3 + $0x14] sm:$0xf]
        %v531 = vld [vmem:[%s3 + $0x18] sm:$0xf]
        %v532 = vld [vmem:[%s3 + $0x1c] sm:$0xf]
        %v533 = vld [vmem:[#allocation7] sm:$0x1]
        %v535 = vlaneseq
        %v536 = vshrl.u32 %v535, 7
        %v537 = vsub.s32 0, %v536
        %v538 = vrot.slane %v533, %v537
        %v548 = vunpack.c.l.b16 %v525
        %v549 = vunpack.c.l.b16 %v526
        %v550 = vunpack.c.l.b16 %v527
        %v551 = vunpack.c.l.b16 %v528
        %v552 = vunpack.c.l.b16 %v529
        %v553 = vunpack.c.l.b16 %v530
        %v554 = vunpack.c.l.b16 %v531
        %v555 = vunpack.c.l.b16 %v532
        %v556 = vpack.c.b16 %v549, %v548
        %v557 = vpack.c.b16 %v551, %v550
        %v558 = vpack.c.b16 %v553, %v552
        %v559 = vpack.c.b16 %v555, %v554
        %vm564 = vcmask 523264
        %v566 = vsel %vm564, %v524, 0
        %568 = vmatprep.subr.bf16.mxu0 0
        %569 = vmatpush1.bf16.msra.mxu0 %v556
        %570 = vmatprep.subr.bf16.mxu0 0
        %571 = vmatpush1.bf16.msra.mxu0 %v557
        %572 = vmatprep.subr.bf16.mxu0 0
        %573 = vmatpush1.bf16.msra.mxu0 %v558
        %574 = vmatprep.subr.bf16.mxu0 0
        %575 = vmatpush1.bf16.msra.mxu0 %v559
        %576 = vmatprep.subr.bf16.mxu0 0
        %577 = vmatpush1.bf16.msra.mxu0 0
        %578 = vmatprep.subr.bf16.mxu0 0
        %579 = vmatpush1.bf16.msra.mxu0 0
        %580 = vmatprep.subr.bf16.mxu0 0
        %581 = vmatpush1.bf16.msra.mxu0 0
        %582 = vmatprep.subr.bf16.mxu0 0
        %583 = vmatpush1.bf16.msra.mxu0 0
        %584 = vmatprep.subr.bf16.mxu0 0
        %585 = vmatpush1.bf16.msra.mxu0 0
        %586 = vmatprep.subr.bf16.mxu0 0
        %587 = vmatpush1.bf16.msra.mxu0 0
        %588 = vmatprep.subr.bf16.mxu0 0
        %589 = vmatpush1.bf16.msra.mxu0 0
        %590 = vmatprep.subr.bf16.mxu0 0
        %591 = vmatpush1.bf16.msra.mxu0 0
        %592 = vmatprep.subr.bf16.mxu0 0
        %593 = vmatpush1.bf16.msra.mxu0 0
        %594 = vmatprep.subr.bf16.mxu0 0
        %595 = vmatpush1.bf16.msra.mxu0 0
        %596 = vmatprep.subr.bf16.mxu0 0
        %597 = vmatpush1.bf16.msra.mxu0 0
        %598 = vmatprep.subr.bf16.mxu0 0
        %599 = vmatpush1.bf16.msra.mxu0 0
        %600 = vmatprep.mubr.bf16.mxu0 0
        %601 = vmatmul.mubr.bf16.gmra.mrb[0].mxu0 %v566
        %v602 = vpop.f32.mrb[0].mxu0
        %v603 = vadd.f32 %v538, %v602
        %v604 = vpop.f32.mrb[0].mxu0
        %v605 = vpop.f32.mrb[0].mxu0
        %v606 = vpop.f32.mrb[0].mxu0
        %607 = vdwg.mxu0
        %v608 = vmax.f32 %v603, 0.0
        %v609 = vpack.c.bf16 %v608, %v608
        %v610 = vld [vmem:[#allocation8] sm:$0xff]
        %v611 = vld [vmem:[#allocation8 + $0x8] sm:$0xff]
        %v612 = vld [vmem:[#allocation8 + $0x10] sm:$0xff]
        %v613 = vld [vmem:[#allocation8 + $0x18] sm:$0xff]
        %v614 = vld [vmem:[#allocation8 + $0x20] sm:$0xff]
        %v615 = vld [vmem:[#allocation8 + $0x28] sm:$0xff]
        %v616 = vld [vmem:[#allocation8 + $0x30] sm:$0xff]
        %v617 = vld [vmem:[#allocation8 + $0x38] sm:$0xff]
        %v618 = vld [vmem:[#allocation8 + $0x40] sm:$0xff]
        %v619 = vld [vmem:[#allocation8 + $0x48] sm:$0xff]
        %v620 = vld [vmem:[#allocation8 + $0x50] sm:$0xff]
        %v621 = vld [vmem:[#allocation8 + $0x58] sm:$0xff]
        %v622 = vld [vmem:[#allocation8 + $0x60] sm:$0xff]
        %v623 = vld [vmem:[#allocation8 + $0x68] sm:$0xff]
        %v624 = vld [vmem:[#allocation8 + $0x70] sm:$0xff]
        %v625 = vld [vmem:[#allocation8 + $0x78] sm:$0xff]
        %v626 = vld [vmem:[%s6] sm:$0x3]
        %v628 = vlaneseq
        %v629 = vshrl.u32 %v628, 7
        %v630 = vsub.s32 0, %v629
        %v631 = vrot.slane %v626, %v630
        %v632 = vlaneseq
        %v633 = vshrl.u32 %v632, 7
        %v634 = vsub.s32 1, %v633
        %v635 = vrot.slane %v626, %v634
        %v654 = vunpack.c.l.b16 %v610
        %v655 = vunpack.c.h.b16 %v610
        %v656 = vunpack.c.l.b16 %v611
        %v657 = vunpack.c.h.b16 %v611
        %v658 = vunpack.c.l.b16 %v612
        %v659 = vunpack.c.h.b16 %v612
        %v660 = vunpack.c.l.b16 %v613
        %v661 = vunpack.c.h.b16 %v613
        %v662 = vunpack.c.l.b16 %v614
        %v663 = vunpack.c.h.b16 %v614
        %v664 = vunpack.c.l.b16 %v615
        %v665 = vunpack.c.h.b16 %v615
        %v666 = vunpack.c.l.b16 %v616
        %v667 = vunpack.c.h.b16 %v616
        %v668 = vunpack.c.l.b16 %v617
        %v669 = vunpack.c.h.b16 %v617
        %v670 = vunpack.c.l.b16 %v618
        %v671 = vunpack.c.h.b16 %v618
        %v672 = vunpack.c.l.b16 %v619
        %v673 = vunpack.c.h.b16 %v619
        %v674 = vunpack.c.l.b16 %v620
        %v675 = vunpack.c.h.b16 %v620
        %v676 = vunpack.c.l.b16 %v621
        %v677 = vunpack.c.h.b16 %v621
        %v678 = vunpack.c.l.b16 %v622
        %v679 = vunpack.c.h.b16 %v622
        %v680 = vunpack.c.l.b16 %v623
        %v681 = vunpack.c.h.b16 %v623
        %v682 = vunpack.c.l.b16 %v624
        %v683 = vunpack.c.h.b16 %v624
        %v684 = vunpack.c.l.b16 %v625
        %v685 = vunpack.c.h.b16 %v625
        %v686 = vpack.c.b16 %v656, %v654
        %v687 = vpack.c.b16 %v657, %v655
        %v688 = vpack.c.b16 %v660, %v658
        %v689 = vpack.c.b16 %v661, %v659
        %v690 = vpack.c.b16 %v664, %v662
        %v691 = vpack.c.b16 %v665, %v663
        %v692 = vpack.c.b16 %v668, %v666
        %v693 = vpack.c.b16 %v669, %v667
        %v694 = vpack.c.b16 %v672, %v670
        %v695 = vpack.c.b16 %v673, %v671
        %v696 = vpack.c.b16 %v676, %v674
        %v697 = vpack.c.b16 %v677, %v675
        %v698 = vpack.c.b16 %v680, %v678
        %v699 = vpack.c.b16 %v681, %v679
        %v700 = vpack.c.b16 %v684, %v682
        %v701 = vpack.c.b16 %v685, %v683
        %718 = vmatprep.subr.bf16.mxu0 %v687
        %719 = vmatpush1.bf16.msra.mxu0 %v686
        %720 = vmatprep.subr.bf16.mxu0 %v689
        %721 = vmatpush1.bf16.msra.mxu0 %v688
        %722 = vmatprep.subr.bf16.mxu0 %v691
        %723 = vmatpush1.bf16.msra.mxu0 %v690
        %724 = vmatprep.subr.bf16.mxu0 %v693
        %725 = vmatpush1.bf16.msra.mxu0 %v692
        %726 = vmatprep.subr.bf16.mxu0 %v695
        %727 = vmatpush1.bf16.msra.mxu0 %v694
        %728 = vmatprep.subr.bf16.mxu0 %v697
        %729 = vmatpush1.bf16.msra.mxu0 %v696
        %730 = vmatprep.subr.bf16.mxu0 %v699
        %731 = vmatpush1.bf16.msra.mxu0 %v698
        %732 = vmatprep.subr.bf16.mxu0 %v701
        %733 = vmatpush1.bf16.msra.mxu0 %v700
        %734 = vmatprep.subr.bf16.mxu0 0
        %735 = vmatpush1.bf16.msra.mxu0 0
        %736 = vmatprep.subr.bf16.mxu0 0
        %737 = vmatpush1.bf16.msra.mxu0 0
        %738 = vmatprep.subr.bf16.mxu0 0
        %739 = vmatpush1.bf16.msra.mxu0 0
        %740 = vmatprep.subr.bf16.mxu0 0
        %741 = vmatpush1.bf16.msra.mxu0 0
        %742 = vmatprep.subr.bf16.mxu0 0
        %743 = vmatpush1.bf16.msra.mxu0 0
        %744 = vmatprep.subr.bf16.mxu0 0
        %745 = vmatpush1.bf16.msra.mxu0 0
        %746 = vmatprep.subr.bf16.mxu0 0
        %747 = vmatpush1.bf16.msra.mxu0 0
        %748 = vmatprep.subr.bf16.mxu0 0
        %749 = vmatpush1.bf16.msra.mxu0 0
        %750 = vmatprep.mubr.bf16.mxu0 0
        %751 = vmatmul.mubr.bf16.gmra.mrb[0].mxu0 %v609
        %v752 = vpop.f32.mrb[0].mxu0
        %v753 = vadd.f32 %v631, %v752
        %v754 = vpop.f32.mrb[0].mxu0
        %v755 = vadd.f32 %v635, %v754
        %v756 = vpop.f32.mrb[0].mxu0
        %v757 = vpop.f32.mrb[0].mxu0
        %758 = vdwg.mxu0
        %v759 = vmax.f32 %v753, 0.0
        %v760 = vmax.f32 %v755, 0.0
        %v761 = vpack.c.bf16 %v759, %v759
        %v762 = vpack.c.bf16 %v760, %v760
        %v763 = vld [vmem:[#allocation10] sm:$0xff]
        %v764 = vld [vmem:[#allocation10 + $0x8] sm:$0xff]
        %v765 = vld [vmem:[#allocation10 + $0x10] sm:$0xff]
        %v766 = vld [vmem:[#allocation10 + $0x18] sm:$0xff]
        %v767 = vld [vmem:[#allocation10 + $0x20] sm:$0xff]
        %v768 = vld [vmem:[#allocation10 + $0x28] sm:$0xff]
        %v769 = vld [vmem:[#allocation10 + $0x30] sm:$0xff]
        %v770 = vld [vmem:[#allocation10 + $0x38] sm:$0xff]
        %v771 = vld [vmem:[#allocation10 + $0x40] sm:$0xff]
        %v772 = vld [vmem:[#allocation10 + $0x48] sm:$0xff]
        %v773 = vld [vmem:[#allocation10 + $0x50] sm:$0xff]
        %v774 = vld [vmem:[#allocation10 + $0x58] sm:$0xff]
        %v775 = vld [vmem:[#allocation10 + $0x60] sm:$0xff]
        %v776 = vld [vmem:[#allocation10 + $0x68] sm:$0xff]
        %v777 = vld [vmem:[#allocation10 + $0x70] sm:$0xff]
        %v778 = vld [vmem:[#allocation10 + $0x78] sm:$0xff]
        %v779 = vld [vmem:[#allocation10 + $0x80] sm:$0xff]
        %v780 = vld [vmem:[#allocation10 + $0x88] sm:$0xff]
        %v781 = vld [vmem:[#allocation10 + $0x90] sm:$0xff]
        %v782 = vld [vmem:[#allocation10 + $0x98] sm:$0xff]
        %v783 = vld [vmem:[#allocation10 + $0xa0] sm:$0xff]
        %v784 = vld [vmem:[#allocation10 + $0xa8] sm:$0xff]
        %v785 = vld [vmem:[#allocation10 + $0xb0] sm:$0xff]
        %v786 = vld [vmem:[#allocation10 + $0xb8] sm:$0xff]
        %v787 = vld [vmem:[#allocation10 + $0xc0] sm:$0xff]
        %v788 = vld [vmem:[#allocation10 + $0xc8] sm:$0xff]
        %v789 = vld [vmem:[#allocation10 + $0xd0] sm:$0xff]
        %v790 = vld [vmem:[#allocation10 + $0xd8] sm:$0xff]
        %v791 = vld [vmem:[#allocation10 + $0xe0] sm:$0xff]
        %v792 = vld [vmem:[#allocation10 + $0xe8] sm:$0xff]
        %v793 = vld [vmem:[#allocation10 + $0xf0] sm:$0xff]
        %v794 = vld [vmem:[#allocation10 + $0xf8] sm:$0xff]
        %v795 = vld [vmem:[#allocation10 + $0x100] sm:$0xff]
        %v796 = vld [vmem:[#allocation10 + $0x108] sm:$0xff]
        %v797 = vld [vmem:[#allocation10 + $0x110] sm:$0xff]
        %v798 = vld [vmem:[#allocation10 + $0x118] sm:$0xff]
        %v799 = vld [vmem:[#allocation10 + $0x120] sm:$0xff]
        %v800 = vld [vmem:[#allocation10 + $0x128] sm:$0xff]
        %v801 = vld [vmem:[#allocation10 + $0x130] sm:$0xff]
        %v802 = vld [vmem:[#allocation10 + $0x138] sm:$0xff]
        %v803 = vld [vmem:[#allocation10 + $0x140] sm:$0xff]
        %v804 = vld [vmem:[#allocation10 + $0x148] sm:$0xff]
        %v805 = vld [vmem:[#allocation10 + $0x150] sm:$0xff]
        %v806 = vld [vmem:[#allocation10 + $0x158] sm:$0xff]
        %v807 = vld [vmem:[#allocation10 + $0x160] sm:$0xff]
        %v808 = vld [vmem:[#allocation10 + $0x168] sm:$0xff]
        %v809 = vld [vmem:[#allocation10 + $0x170] sm:$0xff]
        %v810 = vld [vmem:[#allocation10 + $0x178] sm:$0xff]
        %v811 = vld [vmem:[#allocation10 + $0x180] sm:$0xff]
        %v812 = vld [vmem:[#allocation10 + $0x188] sm:$0xff]
        %v813 = vld [vmem:[#allocation10 + $0x190] sm:$0xff]
        %v814 = vld [vmem:[#allocation10 + $0x198] sm:$0xff]
        %v815 = vld [vmem:[#allocation10 + $0x1a0] sm:$0xff]
        %v816 = vld [vmem:[#allocation10 + $0x1a8] sm:$0xff]
        %v817 = vld [vmem:[#allocation10 + $0x1b0] sm:$0xff]
        %v818 = vld [vmem:[#allocation10 + $0x1b8] sm:$0xff]
        %v819 = vld [vmem:[#allocation10 + $0x1c0] sm:$0xff]
        %v820 = vld [vmem:[#allocation10 + $0x1c8] sm:$0xff]
        %v821 = vld [vmem:[#allocation10 + $0x1d0] sm:$0xff]
        %v822 = vld [vmem:[#allocation10 + $0x1d8] sm:$0xff]
        %v823 = vld [vmem:[#allocation10 + $0x1e0] sm:$0xff]
        %v824 = vld [vmem:[#allocation10 + $0x1e8] sm:$0xff]
        %v825 = vld [vmem:[#allocation10 + $0x1f0] sm:$0xff]
        %v826 = vld [vmem:[#allocation10 + $0x1f8] sm:$0xff]
        %v827 = vld [vmem:[#allocation10 + $0x200] sm:$0xff]
        %v828 = vld [vmem:[#allocation10 + $0x208] sm:$0xff]
        %v829 = vld [vmem:[#allocation10 + $0x210] sm:$0xff]
        %v830 = vld [vmem:[#allocation10 + $0x218] sm:$0xff]
        %v831 = vld [vmem:[#allocation10 + $0x220] sm:$0xff]
        %v832 = vld [vmem:[#allocation10 + $0x228] sm:$0xff]
        %v833 = vld [vmem:[#allocation10 + $0x230] sm:$0xff]
        %v834 = vld [vmem:[#allocation10 + $0x238] sm:$0xff]
        %v835 = vld [vmem:[#allocation10 + $0x240] sm:$0xff]
        %v836 = vld [vmem:[#allocation10 + $0x248] sm:$0xff]
        %v837 = vld [vmem:[#allocation10 + $0x250] sm:$0xff]
        %v838 = vld [vmem:[#allocation10 + $0x258] sm:$0xff]
        %v839 = vld [vmem:[#allocation10 + $0x260] sm:$0xff]
        %v840 = vld [vmem:[#allocation10 + $0x268] sm:$0xff]
        %v841 = vld [vmem:[#allocation10 + $0x270] sm:$0xff]
        %v842 = vld [vmem:[#allocation10 + $0x278] sm:$0xff]
        %v843 = vld [vmem:[#allocation10 + $0x280] sm:$0xff]
        %v844 = vld [vmem:[#allocation10 + $0x288] sm:$0xff]
        %v845 = vld [vmem:[#allocation10 + $0x290] sm:$0xff]
        %v846 = vld [vmem:[#allocation10 + $0x298] sm:$0xff]
        %v847 = vld [vmem:[#allocation10 + $0x2a0] sm:$0xff]
        %v848 = vld [vmem:[#allocation10 + $0x2a8] sm:$0xff]
        %v849 = vld [vmem:[#allocation10 + $0x2b0] sm:$0xff]
        %v850 = vld [vmem:[#allocation10 + $0x2b8] sm:$0xff]
        %v851 = vld [vmem:[#allocation10 + $0x2c0] sm:$0xff]
        %v852 = vld [vmem:[#allocation10 + $0x2c8] sm:$0xff]
        %v853 = vld [vmem:[#allocation10 + $0x2d0] sm:$0xff]
        %v854 = vld [vmem:[#allocation10 + $0x2d8] sm:$0xff]
        %v855 = vld [vmem:[#allocation10 + $0x2e0] sm:$0xff]
        %v856 = vld [vmem:[#allocation10 + $0x2e8] sm:$0xff]
        %v857 = vld [vmem:[#allocation10 + $0x2f0] sm:$0xff]
        %v858 = vld [vmem:[#allocation10 + $0x2f8] sm:$0xff]
        %v859 = vld [vmem:[#allocation10 + $0x300] sm:$0xff]
        %v860 = vld [vmem:[#allocation10 + $0x308] sm:$0xff]
        %v861 = vld [vmem:[#allocation10 + $0x310] sm:$0xff]
        %v862 = vld [vmem:[#allocation10 + $0x318] sm:$0xff]
        %v863 = vld [vmem:[#allocation10 + $0x320] sm:$0xff]
        %v864 = vld [vmem:[#allocation10 + $0x328] sm:$0xff]
        %v865 = vld [vmem:[#allocation10 + $0x330] sm:$0xff]
        %v866 = vld [vmem:[#allocation10 + $0x338] sm:$0xff]
        %v867 = vld [vmem:[#allocation10 + $0x340] sm:$0xff]
        %v868 = vld [vmem:[#allocation10 + $0x348] sm:$0xff]
        %v869 = vld [vmem:[#allocation10 + $0x350] sm:$0xff]
        %v870 = vld [vmem:[#allocation10 + $0x358] sm:$0xff]
        %v871 = vld [vmem:[#allocation10 + $0x360] sm:$0xff]
        %v872 = vld [vmem:[#allocation10 + $0x368] sm:$0xff]
        %v873 = vld [vmem:[#allocation10 + $0x370] sm:$0xff]
        %v874 = vld [vmem:[#allocation10 + $0x378] sm:$0xff]
        %v875 = vld [vmem:[#allocation10 + $0x380] sm:$0xff]
        %v876 = vld [vmem:[#allocation10 + $0x388] sm:$0xff]
        %v877 = vld [vmem:[#allocation10 + $0x390] sm:$0xff]
        %v878 = vld [vmem:[#allocation10 + $0x398] sm:$0xff]
        %v879 = vld [vmem:[#allocation10 + $0x3a0] sm:$0xff]
        %v880 = vld [vmem:[#allocation10 + $0x3a8] sm:$0xff]
        %v881 = vld [vmem:[#allocation10 + $0x3b0] sm:$0xff]
        %v882 = vld [vmem:[#allocation10 + $0x3b8] sm:$0xff]
        %v883 = vld [vmem:[#allocation10 + $0x3c0] sm:$0xff]
        %v884 = vld [vmem:[#allocation10 + $0x3c8] sm:$0xff]
        %v885 = vld [vmem:[#allocation10 + $0x3d0] sm:$0xff]
        %v886 = vld [vmem:[#allocation10 + $0x3d8] sm:$0xff]
        %v887 = vld [vmem:[#allocation10 + $0x3e0] sm:$0xff]
        %v888 = vld [vmem:[#allocation10 + $0x3e8] sm:$0xff]
        %v889 = vld [vmem:[#allocation10 + $0x3f0] sm:$0xff]
        %v890 = vld [vmem:[#allocation10 + $0x3f8] sm:$0xff]
        %v891 = vld [vmem:[%s8] sm:$0xff]
        %v893 = vlaneseq
        %v894 = vshrl.u32 %v893, 7
        %v895 = vsub.s32 0, %v894
        %v896 = vrot.slane %v891, %v895
        %v897 = vlaneseq
        %v898 = vshrl.u32 %v897, 7
        %v899 = vsub.s32 1, %v898
        %v900 = vrot.slane %v891, %v899
        %v901 = vlaneseq
        %v902 = vshrl.u32 %v901, 7
        %v903 = vsub.s32 2, %v902
        %v904 = vrot.slane %v891, %v903
        %v905 = vlaneseq
        %v906 = vshrl.u32 %v905, 7
        %v907 = vsub.s32 3, %v906
        %v908 = vrot.slane %v891, %v907
        %v909 = vlaneseq
        %v910 = vshrl.u32 %v909, 7
        %v911 = vsub.s32 4, %v910
        %v912 = vrot.slane %v891, %v911
        %v913 = vlaneseq
        %v914 = vshrl.u32 %v913, 7
        %v915 = vsub.s32 5, %v914
        %v916 = vrot.slane %v891, %v915
        %v917 = vlaneseq
        %v918 = vshrl.u32 %v917, 7
        %v919 = vsub.s32 6, %v918
        %v920 = vrot.slane %v891, %v919
        %v921 = vlaneseq
        %v922 = vshrl.u32 %v921, 7
        %v923 = vsub.s32 7, %v922
        %v924 = vrot.slane %v891, %v923
        %v1061 = vunpack.c.l.b16 %v763
        %v1062 = vunpack.c.h.b16 %v763
        %v1063 = vunpack.c.l.b16 %v764
        %v1064 = vunpack.c.h.b16 %v764
        %v1065 = vunpack.c.l.b16 %v765
        %v1066 = vunpack.c.h.b16 %v765
        %v1067 = vunpack.c.l.b16 %v766
        %v1068 = vunpack.c.h.b16 %v766
        %v1069 = vunpack.c.l.b16 %v767
        %v1070 = vunpack.c.h.b16 %v767
        %v1071 = vunpack.c.l.b16 %v768
        %v1072 = vunpack.c.h.b16 %v768
        %v1073 = vunpack.c.l.b16 %v769
        %v1074 = vunpack.c.h.b16 %v769
        %v1075 = vunpack.c.l.b16 %v770
        %v1076 = vunpack.c.h.b16 %v770
        %v1077 = vunpack.c.l.b16 %v771
        %v1078 = vunpack.c.h.b16 %v771
        %v1079 = vunpack.c.l.b16 %v772
        %v1080 = vunpack.c.h.b16 %v772
        %v1081 = vunpack.c.l.b16 %v773
        %v1082 = vunpack.c.h.b16 %v773
        %v1083 = vunpack.c.l.b16 %v774
        %v1084 = vunpack.c.h.b16 %v774
        %v1085 = vunpack.c.l.b16 %v775
        %v1086 = vunpack.c.h.b16 %v775
        %v1087 = vunpack.c.l.b16 %v776
        %v1088 = vunpack.c.h.b16 %v776
        %v1089 = vunpack.c.l.b16 %v777
        %v1090 = vunpack.c.h.b16 %v777
        %v1091 = vunpack.c.l.b16 %v778
        %v1092 = vunpack.c.h.b16 %v778
        %v1093 = vunpack.c.l.b16 %v779
        %v1094 = vunpack.c.h.b16 %v779
        %v1095 = vunpack.c.l.b16 %v780
        %v1096 = vunpack.c.h.b16 %v780
        %v1097 = vunpack.c.l.b16 %v781
        %v1098 = vunpack.c.h.b16 %v781
        %v1099 = vunpack.c.l.b16 %v782
        %v1100 = vunpack.c.h.b16 %v782
        %v1101 = vunpack.c.l.b16 %v783
        %v1102 = vunpack.c.h.b16 %v783
        %v1103 = vunpack.c.l.b16 %v784
        %v1104 = vunpack.c.h.b16 %v784
        %v1105 = vunpack.c.l.b16 %v785
        %v1106 = vunpack.c.h.b16 %v785
        %v1107 = vunpack.c.l.b16 %v786
        %v1108 = vunpack.c.h.b16 %v786
        %v1109 = vunpack.c.l.b16 %v787
        %v1110 = vunpack.c.h.b16 %v787
        %v1111 = vunpack.c.l.b16 %v788
        %v1112 = vunpack.c.h.b16 %v788
        %v1113 = vunpack.c.l.b16 %v789
        %v1114 = vunpack.c.h.b16 %v789
        %v1115 = vunpack.c.l.b16 %v790
        %v1116 = vunpack.c.h.b16 %v790
        %v1117 = vunpack.c.l.b16 %v791
        %v1118 = vunpack.c.h.b16 %v791
        %v1119 = vunpack.c.l.b16 %v792
        %v1120 = vunpack.c.h.b16 %v792
        %v1121 = vunpack.c.l.b16 %v793
        %v1122 = vunpack.c.h.b16 %v793
        %v1123 = vunpack.c.l.b16 %v794
        %v1124 = vunpack.c.h.b16 %v794
        %v1125 = vunpack.c.l.b16 %v795
        %v1126 = vunpack.c.h.b16 %v795
        %v1127 = vunpack.c.l.b16 %v796
        %v1128 = vunpack.c.h.b16 %v796
        %v1129 = vunpack.c.l.b16 %v797
        %v1130 = vunpack.c.h.b16 %v797
        %v1131 = vunpack.c.l.b16 %v798
        %v1132 = vunpack.c.h.b16 %v798
        %v1133 = vunpack.c.l.b16 %v799
        %v1134 = vunpack.c.h.b16 %v799
        %v1135 = vunpack.c.l.b16 %v800
        %v1136 = vunpack.c.h.b16 %v800
        %v1137 = vunpack.c.l.b16 %v801
        %v1138 = vunpack.c.h.b16 %v801
        %v1139 = vunpack.c.l.b16 %v802
        %v1140 = vunpack.c.h.b16 %v802
        %v1141 = vunpack.c.l.b16 %v803
        %v1142 = vunpack.c.h.b16 %v803
        %v1143 = vunpack.c.l.b16 %v804
        %v1144 = vunpack.c.h.b16 %v804
        %v1145 = vunpack.c.l.b16 %v805
        %v1146 = vunpack.c.h.b16 %v805
        %v1147 = vunpack.c.l.b16 %v806
        %v1148 = vunpack.c.h.b16 %v806
        %v1149 = vunpack.c.l.b16 %v807
        %v1150 = vunpack.c.h.b16 %v807
        %v1151 = vunpack.c.l.b16 %v808
        %v1152 = vunpack.c.h.b16 %v808
        %v1153 = vunpack.c.l.b16 %v809
        %v1154 = vunpack.c.h.b16 %v809
        %v1155 = vunpack.c.l.b16 %v810
        %v1156 = vunpack.c.h.b16 %v810
        %v1157 = vunpack.c.l.b16 %v811
        %v1158 = vunpack.c.h.b16 %v811
        %v1159 = vunpack.c.l.b16 %v812
        %v1160 = vunpack.c.h.b16 %v812
        %v1161 = vunpack.c.l.b16 %v813
        %v1162 = vunpack.c.h.b16 %v813
        %v1163 = vunpack.c.l.b16 %v814
        %v1164 = vunpack.c.h.b16 %v814
        %v1165 = vunpack.c.l.b16 %v815
        %v1166 = vunpack.c.h.b16 %v815
        %v1167 = vunpack.c.l.b16 %v816
        %v1168 = vunpack.c.h.b16 %v816
        %v1169 = vunpack.c.l.b16 %v817
        %v1170 = vunpack.c.h.b16 %v817
        %v1171 = vunpack.c.l.b16 %v818
        %v1172 = vunpack.c.h.b16 %v818
        %v1173 = vunpack.c.l.b16 %v819
        %v1174 = vunpack.c.h.b16 %v819
        %v1175 = vunpack.c.l.b16 %v820
        %v1176 = vunpack.c.h.b16 %v820
        %v1177 = vunpack.c.l.b16 %v821
        %v1178 = vunpack.c.h.b16 %v821
        %v1179 = vunpack.c.l.b16 %v822
        %v1180 = vunpack.c.h.b16 %v822
        %v1181 = vunpack.c.l.b16 %v823
        %v1182 = vunpack.c.h.b16 %v823
        %v1183 = vunpack.c.l.b16 %v824
        %v1184 = vunpack.c.h.b16 %v824
        %v1185 = vunpack.c.l.b16 %v825
        %v1186 = vunpack.c.h.b16 %v825
        %v1187 = vunpack.c.l.b16 %v826
        %v1188 = vunpack.c.h.b16 %v826
        %v1189 = vunpack.c.l.b16 %v827
        %v1190 = vunpack.c.h.b16 %v827
        %v1191 = vunpack.c.l.b16 %v828
        %v1192 = vunpack.c.h.b16 %v828
        %v1193 = vunpack.c.l.b16 %v829
        %v1194 = vunpack.c.h.b16 %v829
        %v1195 = vunpack.c.l.b16 %v830
        %v1196 = vunpack.c.h.b16 %v830
        %v1197 = vunpack.c.l.b16 %v831
        %v1198 = vunpack.c.h.b16 %v831
        %v1199 = vunpack.c.l.b16 %v832
        %v1200 = vunpack.c.h.b16 %v832
        %v1201 = vunpack.c.l.b16 %v833
        %v1202 = vunpack.c.h.b16 %v833
        %v1203 = vunpack.c.l.b16 %v834
        %v1204 = vunpack.c.h.b16 %v834
        %v1205 = vunpack.c.l.b16 %v835
        %v1206 = vunpack.c.h.b16 %v835
        %v1207 = vunpack.c.l.b16 %v836
        %v1208 = vunpack.c.h.b16 %v836
        %v1209 = vunpack.c.l.b16 %v837
        %v1210 = vunpack.c.h.b16 %v837
        %v1211 = vunpack.c.l.b16 %v838
        %v1212 = vunpack.c.h.b16 %v838
        %v1213 = vunpack.c.l.b16 %v839
        %v1214 = vunpack.c.h.b16 %v839
        %v1215 = vunpack.c.l.b16 %v840
        %v1216 = vunpack.c.h.b16 %v840
        %v1217 = vunpack.c.l.b16 %v841
        %v1218 = vunpack.c.h.b16 %v841
        %v1219 = vunpack.c.l.b16 %v842
        %v1220 = vunpack.c.h.b16 %v842
        %v1221 = vunpack.c.l.b16 %v843
        %v1222 = vunpack.c.h.b16 %v843
        %v1223 = vunpack.c.l.b16 %v844
        %v1224 = vunpack.c.h.b16 %v844
        %v1225 = vunpack.c.l.b16 %v845
        %v1226 = vunpack.c.h.b16 %v845
        %v1227 = vunpack.c.l.b16 %v846
        %v1228 = vunpack.c.h.b16 %v846
        %v1229 = vunpack.c.l.b16 %v847
        %v1230 = vunpack.c.h.b16 %v847
        %v1231 = vunpack.c.l.b16 %v848
        %v1232 = vunpack.c.h.b16 %v848
        %v1233 = vunpack.c.l.b16 %v849
        %v1234 = vunpack.c.h.b16 %v849
        %v1235 = vunpack.c.l.b16 %v850
        %v1236 = vunpack.c.h.b16 %v850
        %v1237 = vunpack.c.l.b16 %v851
        %v1238 = vunpack.c.h.b16 %v851
        %v1239 = vunpack.c.l.b16 %v852
        %v1240 = vunpack.c.h.b16 %v852
        %v1241 = vunpack.c.l.b16 %v853
        %v1242 = vunpack.c.h.b16 %v853
        %v1243 = vunpack.c.l.b16 %v854
        %v1244 = vunpack.c.h.b16 %v854
        %v1245 = vunpack.c.l.b16 %v855
        %v1246 = vunpack.c.h.b16 %v855
        %v1247 = vunpack.c.l.b16 %v856
        %v1248 = vunpack.c.h.b16 %v856
        %v1249 = vunpack.c.l.b16 %v857
        %v1250 = vunpack.c.h.b16 %v857
        %v1251 = vunpack.c.l.b16 %v858
        %v1252 = vunpack.c.h.b16 %v858
        %v1253 = vunpack.c.l.b16 %v859
        %v1254 = vunpack.c.h.b16 %v859
        %v1255 = vunpack.c.l.b16 %v860
        %v1256 = vunpack.c.h.b16 %v860
        %v1257 = vunpack.c.l.b16 %v861
        %v1258 = vunpack.c.h.b16 %v861
        %v1259 = vunpack.c.l.b16 %v862
        %v1260 = vunpack.c.h.b16 %v862
        %v1261 = vunpack.c.l.b16 %v863
        %v1262 = vunpack.c.h.b16 %v863
        %v1263 = vunpack.c.l.b16 %v864
        %v1264 = vunpack.c.h.b16 %v864
        %v1265 = vunpack.c.l.b16 %v865
        %v1266 = vunpack.c.h.b16 %v865
        %v1267 = vunpack.c.l.b16 %v866
        %v1268 = vunpack.c.h.b16 %v866
        %v1269 = vunpack.c.l.b16 %v867
        %v1270 = vunpack.c.h.b16 %v867
        %v1271 = vunpack.c.l.b16 %v868
        %v1272 = vunpack.c.h.b16 %v868
        %v1273 = vunpack.c.l.b16 %v869
        %v1274 = vunpack.c.h.b16 %v869
        %v1275 = vunpack.c.l.b16 %v870
        %v1276 = vunpack.c.h.b16 %v870
        %v1277 = vunpack.c.l.b16 %v871
        %v1278 = vunpack.c.h.b16 %v871
        %v1279 = vunpack.c.l.b16 %v872
        %v1280 = vunpack.c.h.b16 %v872
        %v1281 = vunpack.c.l.b16 %v873
        %v1282 = vunpack.c.h.b16 %v873
        %v1283 = vunpack.c.l.b16 %v874
        %v1284 = vunpack.c.h.b16 %v874
        %v1285 = vunpack.c.l.b16 %v875
        %v1286 = vunpack.c.h.b16 %v875
        %v1287 = vunpack.c.l.b16 %v876
        %v1288 = vunpack.c.h.b16 %v876
        %v1289 = vunpack.c.l.b16 %v877
        %v1290 = vunpack.c.h.b16 %v877
        %v1291 = vunpack.c.l.b16 %v878
        %v1292 = vunpack.c.h.b16 %v878
        %v1293 = vunpack.c.l.b16 %v879
        %v1294 = vunpack.c.h.b16 %v879
        %v1295 = vunpack.c.l.b16 %v880
        %v1296 = vunpack.c.h.b16 %v880
        %v1297 = vunpack.c.l.b16 %v881
        %v1298 = vunpack.c.h.b16 %v881
        %v1299 = vunpack.c.l.b16 %v882
        %v1300 = vunpack.c.h.b16 %v882
        %v1301 = vunpack.c.l.b16 %v883
        %v1302 = vunpack.c.h.b16 %v883
        %v1303 = vunpack.c.l.b16 %v884
        %v1304 = vunpack.c.h.b16 %v884
        %v1305 = vunpack.c.l.b16 %v885
        %v1306 = vunpack.c.h.b16 %v885
        %v1307 = vunpack.c.l.b16 %v886
        %v1308 = vunpack.c.h.b16 %v886
        %v1309 = vunpack.c.l.b16 %v887
        %v1310 = vunpack.c.h.b16 %v887
        %v1311 = vunpack.c.l.b16 %v888
        %v1312 = vunpack.c.h.b16 %v888
        %v1313 = vunpack.c.l.b16 %v889
        %v1314 = vunpack.c.h.b16 %v889
        %v1315 = vunpack.c.l.b16 %v890
        %v1316 = vunpack.c.h.b16 %v890
        %v1317 = vpack.c.b16 %v1069, %v1061
        %v1318 = vpack.c.b16 %v1070, %v1062
        %v1319 = vpack.c.b16 %v1071, %v1063
        %v1320 = vpack.c.b16 %v1072, %v1064
        %v1321 = vpack.c.b16 %v1073, %v1065
        %v1322 = vpack.c.b16 %v1074, %v1066
        %v1323 = vpack.c.b16 %v1075, %v1067
        %v1324 = vpack.c.b16 %v1076, %v1068
        %v1325 = vpack.c.b16 %v1085, %v1077
        %v1326 = vpack.c.b16 %v1086, %v1078
        %v1327 = vpack.c.b16 %v1087, %v1079
        %v1328 = vpack.c.b16 %v1088, %v1080
        %v1329 = vpack.c.b16 %v1089, %v1081
        %v1330 = vpack.c.b16 %v1090, %v1082
        %v1331 = vpack.c.b16 %v1091, %v1083
        %v1332 = vpack.c.b16 %v1092, %v1084
        %v1333 = vpack.c.b16 %v1101, %v1093
        %v1334 = vpack.c.b16 %v1102, %v1094
        %v1335 = vpack.c.b16 %v1103, %v1095
        %v1336 = vpack.c.b16 %v1104, %v1096
        %v1337 = vpack.c.b16 %v1105, %v1097
        %v1338 = vpack.c.b16 %v1106, %v1098
        %v1339 = vpack.c.b16 %v1107, %v1099
        %v1340 = vpack.c.b16 %v1108, %v1100
        %v1341 = vpack.c.b16 %v1117, %v1109
        %v1342 = vpack.c.b16 %v1118, %v1110
        %v1343 = vpack.c.b16 %v1119, %v1111
        %v1344 = vpack.c.b16 %v1120, %v1112
        %v1345 = vpack.c.b16 %v1121, %v1113
        %v1346 = vpack.c.b16 %v1122, %v1114
        %v1347 = vpack.c.b16 %v1123, %v1115
        %v1348 = vpack.c.b16 %v1124, %v1116
        %v1349 = vpack.c.b16 %v1133, %v1125
        %v1350 = vpack.c.b16 %v1134, %v1126
        %v1351 = vpack.c.b16 %v1135, %v1127
        %v1352 = vpack.c.b16 %v1136, %v1128
        %v1353 = vpack.c.b16 %v1137, %v1129
        %v1354 = vpack.c.b16 %v1138, %v1130
        %v1355 = vpack.c.b16 %v1139, %v1131
        %v1356 = vpack.c.b16 %v1140, %v1132
        %v1357 = vpack.c.b16 %v1149, %v1141
        %v1358 = vpack.c.b16 %v1150, %v1142
        %v1359 = vpack.c.b16 %v1151, %v1143
        %v1360 = vpack.c.b16 %v1152, %v1144
        %v1361 = vpack.c.b16 %v1153, %v1145
        %v1362 = vpack.c.b16 %v1154, %v1146
        %v1363 = vpack.c.b16 %v1155, %v1147
        %v1364 = vpack.c.b16 %v1156, %v1148
        %v1365 = vpack.c.b16 %v1165, %v1157
        %v1366 = vpack.c.b16 %v1166, %v1158
        %v1367 = vpack.c.b16 %v1167, %v1159
        %v1368 = vpack.c.b16 %v1168, %v1160
        %v1369 = vpack.c.b16 %v1169, %v1161
        %v1370 = vpack.c.b16 %v1170, %v1162
        %v1371 = vpack.c.b16 %v1171, %v1163
        %v1372 = vpack.c.b16 %v1172, %v1164
        %v1373 = vpack.c.b16 %v1181, %v1173
        %v1374 = vpack.c.b16 %v1182, %v1174
        %v1375 = vpack.c.b16 %v1183, %v1175
        %v1376 = vpack.c.b16 %v1184, %v1176
        %v1377 = vpack.c.b16 %v1185, %v1177
        %v1378 = vpack.c.b16 %v1186, %v1178
        %v1379 = vpack.c.b16 %v1187, %v1179
        %v1380 = vpack.c.b16 %v1188, %v1180
        %v1381 = vpack.c.b16 %v1197, %v1189
        %v1382 = vpack.c.b16 %v1198, %v1190
        %v1383 = vpack.c.b16 %v1199, %v1191
        %v1384 = vpack.c.b16 %v1200, %v1192
        %v1385 = vpack.c.b16 %v1201, %v1193
        %v1386 = vpack.c.b16 %v1202, %v1194
        %v1387 = vpack.c.b16 %v1203, %v1195
        %v1388 = vpack.c.b16 %v1204, %v1196
        %v1389 = vpack.c.b16 %v1213, %v1205
        %v1390 = vpack.c.b16 %v1214, %v1206
        %v1391 = vpack.c.b16 %v1215, %v1207
        %v1392 = vpack.c.b16 %v1216, %v1208
        %v1393 = vpack.c.b16 %v1217, %v1209
        %v1394 = vpack.c.b16 %v1218, %v1210
        %v1395 = vpack.c.b16 %v1219, %v1211
        %v1396 = vpack.c.b16 %v1220, %v1212
        %v1397 = vpack.c.b16 %v1229, %v1221
        %v1398 = vpack.c.b16 %v1230, %v1222
        %v1399 = vpack.c.b16 %v1231, %v1223
        %v1400 = vpack.c.b16 %v1232, %v1224
        %v1401 = vpack.c.b16 %v1233, %v1225
        %v1402 = vpack.c.b16 %v1234, %v1226
        %v1403 = vpack.c.b16 %v1235, %v1227
        %v1404 = vpack.c.b16 %v1236, %v1228
        %v1405 = vpack.c.b16 %v1245, %v1237
        %v1406 = vpack.c.b16 %v1246, %v1238
        %v1407 = vpack.c.b16 %v1247, %v1239
        %v1408 = vpack.c.b16 %v1248, %v1240
        %v1409 = vpack.c.b16 %v1249, %v1241
        %v1410 = vpack.c.b16 %v1250, %v1242
        %v1411 = vpack.c.b16 %v1251, %v1243
        %v1412 = vpack.c.b16 %v1252, %v1244
        %v1413 = vpack.c.b16 %v1261, %v1253
        %v1414 = vpack.c.b16 %v1262, %v1254
        %v1415 = vpack.c.b16 %v1263, %v1255
        %v1416 = vpack.c.b16 %v1264, %v1256
        %v1417 = vpack.c.b16 %v1265, %v1257
        %v1418 = vpack.c.b16 %v1266, %v1258
        %v1419 = vpack.c.b16 %v1267, %v1259
        %v1420 = vpack.c.b16 %v1268, %v1260
        %v1421 = vpack.c.b16 %v1277, %v1269
        %v1422 = vpack.c.b16 %v1278, %v1270
        %v1423 = vpack.c.b16 %v1279, %v1271
        %v1424 = vpack.c.b16 %v1280, %v1272
        %v1425 = vpack.c.b16 %v1281, %v1273
        %v1426 = vpack.c.b16 %v1282, %v1274
        %v1427 = vpack.c.b16 %v1283, %v1275
        %v1428 = vpack.c.b16 %v1284, %v1276
        %v1429 = vpack.c.b16 %v1293, %v1285
        %v1430 = vpack.c.b16 %v1294, %v1286
        %v1431 = vpack.c.b16 %v1295, %v1287
        %v1432 = vpack.c.b16 %v1296, %v1288
        %v1433 = vpack.c.b16 %v1297, %v1289
        %v1434 = vpack.c.b16 %v1298, %v1290
        %v1435 = vpack.c.b16 %v1299, %v1291
        %v1436 = vpack.c.b16 %v1300, %v1292
        %v1437 = vpack.c.b16 %v1309, %v1301
        %v1438 = vpack.c.b16 %v1310, %v1302
        %v1439 = vpack.c.b16 %v1311, %v1303
        %v1440 = vpack.c.b16 %v1312, %v1304
        %v1441 = vpack.c.b16 %v1313, %v1305
        %v1442 = vpack.c.b16 %v1314, %v1306
        %v1443 = vpack.c.b16 %v1315, %v1307
        %v1444 = vpack.c.b16 %v1316, %v1308
        %1573 = vmatprep.subr.bf16.mxu0 %v1318
        %1574 = vmatpush1.bf16.msra.mxu0 %v1317
        %1575 = vmatprep.subr.bf16.mxu0 %v1326
        %1576 = vmatpush1.bf16.msra.mxu0 %v1325
        %1577 = vmatprep.subr.bf16.mxu0 %v1334
        %1578 = vmatpush1.bf16.msra.mxu0 %v1333
        %1579 = vmatprep.subr.bf16.mxu0 %v1342
        %1580 = vmatpush1.bf16.msra.mxu0 %v1341
        %1581 = vmatprep.subr.bf16.mxu0 %v1350
        %1582 = vmatpush1.bf16.msra.mxu0 %v1349
        %1583 = vmatprep.subr.bf16.mxu0 %v1358
        %1584 = vmatpush1.bf16.msra.mxu0 %v1357
        %1585 = vmatprep.subr.bf16.mxu0 %v1366
        %1586 = vmatpush1.bf16.msra.mxu0 %v1365
        %1587 = vmatprep.subr.bf16.mxu0 %v1374
        %1588 = vmatpush1.bf16.msra.mxu0 %v1373
        %1589 = vmatprep.subr.bf16.mxu0 %v1382
        %1590 = vmatpush1.bf16.msra.mxu0 %v1381
        %1591 = vmatprep.subr.bf16.mxu0 %v1390
        %1592 = vmatpush1.bf16.msra.mxu0 %v1389
        %1593 = vmatprep.subr.bf16.mxu0 %v1398
        %1594 = vmatpush1.bf16.msra.mxu0 %v1397
        %1595 = vmatprep.subr.bf16.mxu0 %v1406
        %1596 = vmatpush1.bf16.msra.mxu0 %v1405
        %1597 = vmatprep.subr.bf16.mxu0 %v1414
        %1598 = vmatpush1.bf16.msra.mxu0 %v1413
        %1599 = vmatprep.subr.bf16.mxu0 %v1422
        %1600 = vmatpush1.bf16.msra.mxu0 %v1421
        %1601 = vmatprep.subr.bf16.mxu0 %v1430
        %1602 = vmatpush1.bf16.msra.mxu0 %v1429
        %1603 = vmatprep.subr.bf16.mxu0 %v1438
        %1604 = vmatpush1.bf16.msra.mxu0 %v1437
        %1605 = vmatprep.mubr.bf16.mxu0 %v762
        %1606 = vmatmul.mubr.bf16.gmra.mrb[0].mxu0 %v761
        %v1607 = vpop.f32.mrb[0].mxu0
        %v1608 = vadd.f32 %v896, %v1607
        %v1609 = vpop.f32.mrb[0].mxu0
        %v1610 = vadd.f32 %v900, %v1609
        %v1611 = vpop.f32.mrb[0].mxu0
        %v1612 = vpop.f32.mrb[0].mxu0
        %1613 = vdwg.mxu0
        %1614 = vmatprep.subr.bf16.mxu0 %v1320
        %1615 = vmatpush1.bf16.msra.mxu0 %v1319
        %1616 = vmatprep.subr.bf16.mxu0 %v1328
        %1617 = vmatpush1.bf16.msra.mxu0 %v1327
        %1618 = vmatprep.subr.bf16.mxu0 %v1336
        %1619 = vmatpush1.bf16.msra.mxu0 %v1335
        %1620 = vmatprep.subr.bf16.mxu0 %v1344
        %1621 = vmatpush1.bf16.msra.mxu0 %v1343
        %1622 = vmatprep.subr.bf16.mxu0 %v1352
        %1623 = vmatpush1.bf16.msra.mxu0 %v1351
        %1624 = vmatprep.subr.bf16.mxu0 %v1360
        %1625 = vmatpush1.bf16.msra.mxu0 %v1359
        %1626 = vmatprep.subr.bf16.mxu0 %v1368
        %1627 = vmatpush1.bf16.msra.mxu0 %v1367
        %1628 = vmatprep.subr.bf16.mxu0 %v1376
        %1629 = vmatpush1.bf16.msra.mxu0 %v1375
        %1630 = vmatprep.subr.bf16.mxu0 %v1384
        %1631 = vmatpush1.bf16.msra.mxu0 %v1383
        %1632 = vmatprep.subr.bf16.mxu0 %v1392
        %1633 = vmatpush1.bf16.msra.mxu0 %v1391
        %1634 = vmatprep.subr.bf16.mxu0 %v1400
        %1635 = vmatpush1.bf16.msra.mxu0 %v1399
        %1636 = vmatprep.subr.bf16.mxu0 %v1408
        %1637 = vmatpush1.bf16.msra.mxu0 %v1407
        %1638 = vmatprep.subr.bf16.mxu0 %v1416
        %1639 = vmatpush1.bf16.msra.mxu0 %v1415
        %1640 = vmatprep.subr.bf16.mxu0 %v1424
        %1641 = vmatpush1.bf16.msra.mxu0 %v1423
        %1642 = vmatprep.subr.bf16.mxu0 %v1432
        %1643 = vmatpush1.bf16.msra.mxu0 %v1431
        %1644 = vmatprep.subr.bf16.mxu0 %v1440
        %1645 = vmatpush1.bf16.msra.mxu0 %v1439
        %1646 = vmatprep.mubr.bf16.mxu0 %v762
        %1647 = vmatmul.mubr.bf16.gmra.mrb[0].mxu0 %v761
        %v1648 = vpop.f32.mrb[0].mxu0
        %v1649 = vadd.f32 %v904, %v1648
        %v1650 = vpop.f32.mrb[0].mxu0
        %v1651 = vadd.f32 %v908, %v1650
        %v1652 = vpop.f32.mrb[0].mxu0
        %v1653 = vpop.f32.mrb[0].mxu0
        %1654 = vdwg.mxu0
        %1655 = vmatprep.subr.bf16.mxu0 %v1322
        %1656 = vmatpush1.bf16.msra.mxu0 %v1321
        %1657 = vmatprep.subr.bf16.mxu0 %v1330
        %1658 = vmatpush1.bf16.msra.mxu0 %v1329
        %1659 = vmatprep.subr.bf16.mxu0 %v1338
        %1660 = vmatpush1.bf16.msra.mxu0 %v1337
        %1661 = vmatprep.subr.bf16.mxu0 %v1346
        %1662 = vmatpush1.bf16.msra.mxu0 %v1345
        %1663 = vmatprep.subr.bf16.mxu0 %v1354
        %1664 = vmatpush1.bf16.msra.mxu0 %v1353
        %1665 = vmatprep.subr.bf16.mxu0 %v1362
        %1666 = vmatpush1.bf16.msra.mxu0 %v1361
        %1667 = vmatprep.subr.bf16.mxu0 %v1370
        %1668 = vmatpush1.bf16.msra.mxu0 %v1369
        %1669 = vmatprep.subr.bf16.mxu0 %v1378
        %1670 = vmatpush1.bf16.msra.mxu0 %v1377
        %1671 = vmatprep.subr.bf16.mxu0 %v1386
        %1672 = vmatpush1.bf16.msra.mxu0 %v1385
        %1673 = vmatprep.subr.bf16.mxu0 %v1394
        %1674 = vmatpush1.bf16.msra.mxu0 %v1393
        %1675 = vmatprep.subr.bf16.mxu0 %v1402
        %1676 = vmatpush1.bf16.msra.mxu0 %v1401
        %1677 = vmatprep.subr.bf16.mxu0 %v1410
        %1678 = vmatpush1.bf16.msra.mxu0 %v1409
        %1679 = vmatprep.subr.bf16.mxu0 %v1418
        %1680 = vmatpush1.bf16.msra.mxu0 %v1417
        %1681 = vmatprep.subr.bf16.mxu0 %v1426
        %1682 = vmatpush1.bf16.msra.mxu0 %v1425
        %1683 = vmatprep.subr.bf16.mxu0 %v1434
        %1684 = vmatpush1.bf16.msra.mxu0 %v1433
        %1685 = vmatprep.subr.bf16.mxu0 %v1442
        %1686 = vmatpush1.bf16.msra.mxu0 %v1441
        %1687 = vmatprep.mubr.bf16.mxu0 %v762
        %1688 = vmatmul.mubr.bf16.gmra.mrb[0].mxu0 %v761
        %v1689 = vpop.f32.mrb[0].mxu0
        %v1690 = vadd.f32 %v912, %v1689
        %v1691 = vpop.f32.mrb[0].mxu0
        %v1692 = vadd.f32 %v916, %v1691
        %v1693 = vpop.f32.mrb[0].mxu0
        %v1694 = vpop.f32.mrb[0].mxu0
        %1695 = vdwg.mxu0
        %1696 = vmatprep.subr.bf16.mxu0 %v1324
        %1697 = vmatpush1.bf16.msra.mxu0 %v1323
        %1698 = vmatprep.subr.bf16.mxu0 %v1332
        %1699 = vmatpush1.bf16.msra.mxu0 %v1331
        %1700 = vmatprep.subr.bf16.mxu0 %v1340
        %1701 = vmatpush1.bf16.msra.mxu0 %v1339
        %1702 = vmatprep.subr.bf16.mxu0 %v1348
        %1703 = vmatpush1.bf16.msra.mxu0 %v1347
        %1704 = vmatprep.subr.bf16.mxu0 %v1356
        %1705 = vmatpush1.bf16.msra.mxu0 %v1355
        %1706 = vmatprep.subr.bf16.mxu0 %v1364
        %1707 = vmatpush1.bf16.msra.mxu0 %v1363
        %1708 = vmatprep.subr.bf16.mxu0 %v1372
        %1709 = vmatpush1.bf16.msra.mxu0 %v1371
        %1710 = vmatprep.subr.bf16.mxu0 %v1380
        %1711 = vmatpush1.bf16.msra.mxu0 %v1379
        %1712 = vmatprep.subr.bf16.mxu0 %v1388
        %1713 = vmatpush1.bf16.msra.mxu0 %v1387
        %1714 = vmatprep.subr.bf16.mxu0 %v1396
        %1715 = vmatpush1.bf16.msra.mxu0 %v1395
        %1716 = vmatprep.subr.bf16.mxu0 %v1404
        %1717 = vmatpush1.bf16.msra.mxu0 %v1403
        %1718 = vmatprep.subr.bf16.mxu0 %v1412
        %1719 = vmatpush1.bf16.msra.mxu0 %v1411
        %1720 = vmatprep.subr.bf16.mxu0 %v1420
        %1721 = vmatpush1.bf16.msra.mxu0 %v1419
        %1722 = vmatprep.subr.bf16.mxu0 %v1428
        %1723 = vmatpush1.bf16.msra.mxu0 %v1427
        %1724 = vmatprep.subr.bf16.mxu0 %v1436
        %1725 = vmatpush1.bf16.msra.mxu0 %v1435
        %1726 = vmatprep.subr.bf16.mxu0 %v1444
        %1727 = vmatpush1.bf16.msra.mxu0 %v1443
        %1728 = vmatprep.mubr.bf16.mxu0 %v762
        %1729 = vmatmul.mubr.bf16.gmra.mrb[0].mxu0 %v761
        %v1730 = vpop.f32.mrb[0].mxu0
        %v1731 = vadd.f32 %v920, %v1730
        %v1732 = vpop.f32.mrb[0].mxu0
        %v1733 = vadd.f32 %v924, %v1732
        %v1734 = vpop.f32.mrb[0].mxu0
        %v1735 = vpop.f32.mrb[0].mxu0
        %1736 = vdwg.mxu0
        %v1737 = vmax.f32 %v1608, 0.0
        %v1738 = vmax.f32 %v1610, 0.0
        %v1739 = vmax.f32 %v1649, 0.0
        %v1740 = vmax.f32 %v1651, 0.0
        %v1741 = vmax.f32 %v1690, 0.0
        %v1742 = vmax.f32 %v1692, 0.0
        %v1743 = vmax.f32 %v1731, 0.0
        %v1744 = vmax.f32 %v1733, 0.0
        %v1745 = vpack.c.bf16 %v1737, %v1737
        %v1746 = vpack.c.bf16 %v1738, %v1738
        %v1747 = vpack.c.bf16 %v1739, %v1739
        %v1748 = vpack.c.bf16 %v1740, %v1740
        %v1749 = vpack.c.bf16 %v1741, %v1741
        %v1750 = vpack.c.bf16 %v1742, %v1742
        %v1751 = vpack.c.bf16 %v1743, %v1743
        %v1752 = vpack.c.bf16 %v1744, %v1744
        %v1753 = vld [vmem:[#allocation11] sm:$0xff]
        %v1754 = vld [vmem:[#allocation11 + $0x8] sm:$0xff]
        %v1755 = vld [vmem:[#allocation11 + $0x10] sm:$0xff]
        %v1756 = vld [vmem:[#allocation11 + $0x18] sm:$0xff]
        %v1757 = vld [vmem:[#allocation11 + $0x20] sm:$0xff]
        %v1758 = vld [vmem:[#allocation11 + $0x28] sm:$0xff]
        %v1759 = vld [vmem:[#allocation11 + $0x30] sm:$0xff]
        %v1760 = vld [vmem:[#allocation11 + $0x38] sm:$0xff]
        %v1761 = vld [vmem:[#allocation11 + $0x40] sm:$0xff]
        %v1762 = vld [vmem:[#allocation11 + $0x48] sm:$0xff]
        %v1763 = vld [vmem:[#allocation11 + $0x50] sm:$0xff]
        %v1764 = vld [vmem:[#allocation11 + $0x58] sm:$0xff]
        %v1765 = vld [vmem:[#allocation11 + $0x60] sm:$0xff]
        %v1766 = vld [vmem:[#allocation11 + $0x68] sm:$0xff]
        %v1767 = vld [vmem:[#allocation11 + $0x70] sm:$0xff]
        %v1768 = vld [vmem:[#allocation11 + $0x78] sm:$0xff]
        %v1769 = vld [vmem:[#allocation11 + $0x80] sm:$0xff]
        %v1770 = vld [vmem:[#allocation11 + $0x88] sm:$0xff]
        %v1771 = vld [vmem:[#allocation11 + $0x90] sm:$0xff]
        %v1772 = vld [vmem:[#allocation11 + $0x98] sm:$0xff]
        %v1773 = vld [vmem:[#allocation11 + $0xa0] sm:$0xff]
        %v1774 = vld [vmem:[#allocation11 + $0xa8] sm:$0xff]
        %v1775 = vld [vmem:[#allocation11 + $0xb0] sm:$0xff]
        %v1776 = vld [vmem:[#allocation11 + $0xb8] sm:$0xff]
        %v1777 = vld [vmem:[#allocation11 + $0xc0] sm:$0xff]
        %v1778 = vld [vmem:[#allocation11 + $0xc8] sm:$0xff]
        %v1779 = vld [vmem:[#allocation11 + $0xd0] sm:$0xff]
        %v1780 = vld [vmem:[#allocation11 + $0xd8] sm:$0xff]
        %v1781 = vld [vmem:[#allocation11 + $0xe0] sm:$0xff]
        %v1782 = vld [vmem:[#allocation11 + $0xe8] sm:$0xff]
        %v1783 = vld [vmem:[#allocation11 + $0xf0] sm:$0xff]
        %v1784 = vld [vmem:[#allocation11 + $0xf8] sm:$0xff]
        %v1785 = vld [vmem:[#allocation11 + $0x100] sm:$0xff]
        %v1786 = vld [vmem:[#allocation11 + $0x108] sm:$0xff]
        %v1787 = vld [vmem:[#allocation11 + $0x110] sm:$0xff]
        %v1788 = vld [vmem:[#allocation11 + $0x118] sm:$0xff]
        %v1789 = vld [vmem:[#allocation11 + $0x120] sm:$0xff]
        %v1790 = vld [vmem:[#allocation11 + $0x128] sm:$0xff]
        %v1791 = vld [vmem:[#allocation11 + $0x130] sm:$0xff]
        %v1792 = vld [vmem:[#allocation11 + $0x138] sm:$0xff]
        %v1793 = vld [vmem:[#allocation11 + $0x140] sm:$0xff]
        %v1794 = vld [vmem:[#allocation11 + $0x148] sm:$0xff]
        %v1795 = vld [vmem:[#allocation11 + $0x150] sm:$0xff]
        %v1796 = vld [vmem:[#allocation11 + $0x158] sm:$0xff]
        %v1797 = vld [vmem:[#allocation11 + $0x160] sm:$0xff]
        %v1798 = vld [vmem:[#allocation11 + $0x168] sm:$0xff]
        %v1799 = vld [vmem:[#allocation11 + $0x170] sm:$0xff]
        %v1800 = vld [vmem:[#allocation11 + $0x178] sm:$0xff]
        %v1801 = vld [vmem:[#allocation11 + $0x180] sm:$0xff]
        %v1802 = vld [vmem:[#allocation11 + $0x188] sm:$0xff]
        %v1803 = vld [vmem:[#allocation11 + $0x190] sm:$0xff]
        %v1804 = vld [vmem:[#allocation11 + $0x198] sm:$0xff]
        %v1805 = vld [vmem:[#allocation11 + $0x1a0] sm:$0xff]
        %v1806 = vld [vmem:[#allocation11 + $0x1a8] sm:$0xff]
        %v1807 = vld [vmem:[#allocation11 + $0x1b0] sm:$0xff]
        %v1808 = vld [vmem:[#allocation11 + $0x1b8] sm:$0xff]
        %v1809 = vld [vmem:[#allocation11 + $0x1c0] sm:$0xff]
        %v1810 = vld [vmem:[#allocation11 + $0x1c8] sm:$0xff]
        %v1811 = vld [vmem:[#allocation11 + $0x1d0] sm:$0xff]
        %v1812 = vld [vmem:[#allocation11 + $0x1d8] sm:$0xff]
        %v1813 = vld [vmem:[#allocation11 + $0x1e0] sm:$0xff]
        %v1814 = vld [vmem:[#allocation11 + $0x1e8] sm:$0xff]
        %v1815 = vld [vmem:[#allocation11 + $0x1f0] sm:$0xff]
        %v1816 = vld [vmem:[#allocation11 + $0x1f8] sm:$0xff]
        %v1817 = vld [vmem:[%s10] sm:$0x3]
        %v1819 = vlaneseq
        %v1820 = vshrl.u32 %v1819, 7
        %v1821 = vsub.s32 0, %v1820
        %v1822 = vrot.slane %v1817, %v1821
        %v1823 = vlaneseq
        %v1824 = vshrl.u32 %v1823, 7
        %v1825 = vsub.s32 1, %v1824
        %v1826 = vrot.slane %v1817, %v1825
        %v1893 = vunpack.c.l.b16 %v1753
        %v1894 = vunpack.c.h.b16 %v1753
        %v1895 = vunpack.c.l.b16 %v1754
        %v1896 = vunpack.c.h.b16 %v1754
        %v1897 = vunpack.c.l.b16 %v1755
        %v1898 = vunpack.c.h.b16 %v1755
        %v1899 = vunpack.c.l.b16 %v1756
        %v1900 = vunpack.c.h.b16 %v1756
        %v1901 = vunpack.c.l.b16 %v1757
        %v1902 = vunpack.c.h.b16 %v1757
        %v1903 = vunpack.c.l.b16 %v1758
        %v1904 = vunpack.c.h.b16 %v1758
        %v1905 = vunpack.c.l.b16 %v1759
        %v1906 = vunpack.c.h.b16 %v1759
        %v1907 = vunpack.c.l.b16 %v1760
        %v1908 = vunpack.c.h.b16 %v1760
        %v1909 = vunpack.c.l.b16 %v1761
        %v1910 = vunpack.c.h.b16 %v1761
        %v1911 = vunpack.c.l.b16 %v1762
        %v1912 = vunpack.c.h.b16 %v1762
        %v1913 = vunpack.c.l.b16 %v1763
        %v1914 = vunpack.c.h.b16 %v1763
        %v1915 = vunpack.c.l.b16 %v1764
        %v1916 = vunpack.c.h.b16 %v1764
        %v1917 = vunpack.c.l.b16 %v1765
        %v1918 = vunpack.c.h.b16 %v1765
        %v1919 = vunpack.c.l.b16 %v1766
        %v1920 = vunpack.c.h.b16 %v1766
        %v1921 = vunpack.c.l.b16 %v1767
        %v1922 = vunpack.c.h.b16 %v1767
        %v1923 = vunpack.c.l.b16 %v1768
        %v1924 = vunpack.c.h.b16 %v1768
        %v1925 = vunpack.c.l.b16 %v1769
        %v1926 = vunpack.c.h.b16 %v1769
        %v1927 = vunpack.c.l.b16 %v1770
        %v1928 = vunpack.c.h.b16 %v1770
        %v1929 = vunpack.c.l.b16 %v1771
        %v1930 = vunpack.c.h.b16 %v1771
        %v1931 = vunpack.c.l.b16 %v1772
        %v1932 = vunpack.c.h.b16 %v1772
        %v1933 = vunpack.c.l.b16 %v1773
        %v1934 = vunpack.c.h.b16 %v1773
        %v1935 = vunpack.c.l.b16 %v1774
        %v1936 = vunpack.c.h.b16 %v1774
        %v1937 = vunpack.c.l.b16 %v1775
        %v1938 = vunpack.c.h.b16 %v1775
        %v1939 = vunpack.c.l.b16 %v1776
        %v1940 = vunpack.c.h.b16 %v1776
        %v1941 = vunpack.c.l.b16 %v1777
        %v1942 = vunpack.c.h.b16 %v1777
        %v1943 = vunpack.c.l.b16 %v1778
        %v1944 = vunpack.c.h.b16 %v1778
        %v1945 = vunpack.c.l.b16 %v1779
        %v1946 = vunpack.c.h.b16 %v1779
        %v1947 = vunpack.c.l.b16 %v1780
        %v1948 = vunpack.c.h.b16 %v1780
        %v1949 = vunpack.c.l.b16 %v1781
        %v1950 = vunpack.c.h.b16 %v1781
        %v1951 = vunpack.c.l.b16 %v1782
        %v1952 = vunpack.c.h.b16 %v1782
        %v1953 = vunpack.c.l.b16 %v1783
        %v1954 = vunpack.c.h.b16 %v1783
        %v1955 = vunpack.c.l.b16 %v1784
        %v1956 = vunpack.c.h.b16 %v1784
        %v1957 = vunpack.c.l.b16 %v1785
        %v1958 = vunpack.c.h.b16 %v1785
        %v1959 = vunpack.c.l.b16 %v1786
        %v1960 = vunpack.c.h.b16 %v1786
        %v1961 = vunpack.c.l.b16 %v1787
        %v1962 = vunpack.c.h.b16 %v1787
        %v1963 = vunpack.c.l.b16 %v1788
        %v1964 = vunpack.c.h.b16 %v1788
        %v1965 = vunpack.c.l.b16 %v1789
        %v1966 = vunpack.c.h.b16 %v1789
        %v1967 = vunpack.c.l.b16 %v1790
        %v1968 = vunpack.c.h.b16 %v1790
        %v1969 = vunpack.c.l.b16 %v1791
        %v1970 = vunpack.c.h.b16 %v1791
        %v1971 = vunpack.c.l.b16 %v1792
        %v1972 = vunpack.c.h.b16 %v1792
        %v1973 = vunpack.c.l.b16 %v1793
        %v1974 = vunpack.c.h.b16 %v1793
        %v1975 = vunpack.c.l.b16 %v1794
        %v1976 = vunpack.c.h.b16 %v1794
        %v1977 = vunpack.c.l.b16 %v1795
        %v1978 = vunpack.c.h.b16 %v1795
        %v1979 = vunpack.c.l.b16 %v1796
        %v1980 = vunpack.c.h.b16 %v1796
        %v1981 = vunpack.c.l.b16 %v1797
        %v1982 = vunpack.c.h.b16 %v1797
        %v1983 = vunpack.c.l.b16 %v1798
        %v1984 = vunpack.c.h.b16 %v1798
        %v1985 = vunpack.c.l.b16 %v1799
        %v1986 = vunpack.c.h.b16 %v1799
        %v1987 = vunpack.c.l.b16 %v1800
        %v1988 = vunpack.c.h.b16 %v1800
        %v1989 = vunpack.c.l.b16 %v1801
        %v1990 = vunpack.c.h.b16 %v1801
        %v1991 = vunpack.c.l.b16 %v1802
        %v1992 = vunpack.c.h.b16 %v1802
        %v1993 = vunpack.c.l.b16 %v1803
        %v1994 = vunpack.c.h.b16 %v1803
        %v1995 = vunpack.c.l.b16 %v1804
        %v1996 = vunpack.c.h.b16 %v1804
        %v1997 = vunpack.c.l.b16 %v1805
        %v1998 = vunpack.c.h.b16 %v1805
        %v1999 = vunpack.c.l.b16 %v1806
        %v2000 = vunpack.c.h.b16 %v1806
        %v2001 = vunpack.c.l.b16 %v1807
        %v2002 = vunpack.c.h.b16 %v1807
        %v2003 = vunpack.c.l.b16 %v1808
        %v2004 = vunpack.c.h.b16 %v1808
        %v2005 = vunpack.c.l.b16 %v1809
        %v2006 = vunpack.c.h.b16 %v1809
        %v2007 = vunpack.c.l.b16 %v1810
        %v2008 = vunpack.c.h.b16 %v1810
        %v2009 = vunpack.c.l.b16 %v1811
        %v2010 = vunpack.c.h.b16 %v1811
        %v2011 = vunpack.c.l.b16 %v1812
        %v2012 = vunpack.c.h.b16 %v1812
        %v2013 = vunpack.c.l.b16 %v1813
        %v2014 = vunpack.c.h.b16 %v1813
        %v2015 = vunpack.c.l.b16 %v1814
        %v2016 = vunpack.c.h.b16 %v1814
        %v2017 = vunpack.c.l.b16 %v1815
        %v2018 = vunpack.c.h.b16 %v1815
        %v2019 = vunpack.c.l.b16 %v1816
        %v2020 = vunpack.c.h.b16 %v1816
        %v2021 = vpack.c.b16 %v1895, %v1893
        %v2022 = vpack.c.b16 %v1896, %v1894
        %v2023 = vpack.c.b16 %v1899, %v1897
        %v2024 = vpack.c.b16 %v1900, %v1898
        %v2025 = vpack.c.b16 %v1903, %v1901
        %v2026 = vpack.c.b16 %v1904, %v1902
        %v2027 = vpack.c.b16 %v1907, %v1905
        %v2028 = vpack.c.b16 %v1908, %v1906
        %v2029 = vpack.c.b16 %v1911, %v1909
        %v2030 = vpack.c.b16 %v1912, %v1910
        %v2031 = vpack.c.b16 %v1915, %v1913
        %v2032 = vpack.c.b16 %v1916, %v1914
        %v2033 = vpack.c.b16 %v1919, %v1917
        %v2034 = vpack.c.b16 %v1920, %v1918
        %v2035 = vpack.c.b16 %v1923, %v1921
        %v2036 = vpack.c.b16 %v1924, %v1922
        %v2037 = vpack.c.b16 %v1927, %v1925
        %v2038 = vpack.c.b16 %v1928, %v1926
        %v2039 = vpack.c.b16 %v1931, %v1929
        %v2040 = vpack.c.b16 %v1932, %v1930
        %v2041 = vpack.c.b16 %v1935, %v1933
        %v2042 = vpack.c.b16 %v1936, %v1934
        %v2043 = vpack.c.b16 %v1939, %v1937
        %v2044 = vpack.c.b16 %v1940, %v1938
        %v2045 = vpack.c.b16 %v1943, %v1941
        %v2046 = vpack.c.b16 %v1944, %v1942
        %v2047 = vpack.c.b16 %v1947, %v1945
        %v2048 = vpack.c.b16 %v1948, %v1946
        %v2049 = vpack.c.b16 %v1951, %v1949
        %v2050 = vpack.c.b16 %v1952, %v1950
        %v2051 = vpack.c.b16 %v1955, %v1953
        %v2052 = vpack.c.b16 %v1956, %v1954
        %v2053 = vpack.c.b16 %v1959, %v1957
        %v2054 = vpack.c.b16 %v1960, %v1958
        %v2055 = vpack.c.b16 %v1963, %v1961
        %v2056 = vpack.c.b16 %v1964, %v1962
        %v2057 = vpack.c.b16 %v1967, %v1965
        %v2058 = vpack.c.b16 %v1968, %v1966
        %v2059 = vpack.c.b16 %v1971, %v1969
        %v2060 = vpack.c.b16 %v1972, %v1970
        %v2061 = vpack.c.b16 %v1975, %v1973
        %v2062 = vpack.c.b16 %v1976, %v1974
        %v2063 = vpack.c.b16 %v1979, %v1977
        %v2064 = vpack.c.b16 %v1980, %v1978
        %v2065 = vpack.c.b16 %v1983, %v1981
        %v2066 = vpack.c.b16 %v1984, %v1982
        %v2067 = vpack.c.b16 %v1987, %v1985
        %v2068 = vpack.c.b16 %v1988, %v1986
        %v2069 = vpack.c.b16 %v1991, %v1989
        %v2070 = vpack.c.b16 %v1992, %v1990
        %v2071 = vpack.c.b16 %v1995, %v1993
        %v2072 = vpack.c.b16 %v1996, %v1994
        %v2073 = vpack.c.b16 %v1999, %v1997
        %v2074 = vpack.c.b16 %v2000, %v1998
        %v2075 = vpack.c.b16 %v2003, %v2001
        %v2076 = vpack.c.b16 %v2004, %v2002
        %v2077 = vpack.c.b16 %v2007, %v2005
        %v2078 = vpack.c.b16 %v2008, %v2006
        %v2079 = vpack.c.b16 %v2011, %v2009
        %v2080 = vpack.c.b16 %v2012, %v2010
        %v2081 = vpack.c.b16 %v2015, %v2013
        %v2082 = vpack.c.b16 %v2016, %v2014
        %v2083 = vpack.c.b16 %v2019, %v2017
        %v2084 = vpack.c.b16 %v2020, %v2018
        %2149 = vmatprep.subr.bf16.mxu0 %v2022
        %2150 = vmatpush1.bf16.msra.mxu0 %v2021
        %2151 = vmatprep.subr.bf16.mxu0 %v2024
        %2152 = vmatpush1.bf16.msra.mxu0 %v2023
        %2153 = vmatprep.subr.bf16.mxu0 %v2026
        %2154 = vmatpush1.bf16.msra.mxu0 %v2025
        %2155 = vmatprep.subr.bf16.mxu0 %v2028
        %2156 = vmatpush1.bf16.msra.mxu0 %v2027
        %2157 = vmatprep.subr.bf16.mxu0 %v2030
        %2158 = vmatpush1.bf16.msra.mxu0 %v2029
        %2159 = vmatprep.subr.bf16.mxu0 %v2032
        %2160 = vmatpush1.bf16.msra.mxu0 %v2031
        %2161 = vmatprep.subr.bf16.mxu0 %v2034
        %2162 = vmatpush1.bf16.msra.mxu0 %v2033
        %2163 = vmatprep.subr.bf16.mxu0 %v2036
        %2164 = vmatpush1.bf16.msra.mxu0 %v2035
        %2165 = vmatprep.subr.bf16.mxu0 %v2038
        %2166 = vmatpush1.bf16.msra.mxu0 %v2037
        %2167 = vmatprep.subr.bf16.mxu0 %v2040
        %2168 = vmatpush1.bf16.msra.mxu0 %v2039
        %2169 = vmatprep.subr.bf16.mxu0 %v2042
        %2170 = vmatpush1.bf16.msra.mxu0 %v2041
        %2171 = vmatprep.subr.bf16.mxu0 %v2044
        %2172 = vmatpush1.bf16.msra.mxu0 %v2043
        %2173 = vmatprep.subr.bf16.mxu0 %v2046
        %2174 = vmatpush1.bf16.msra.mxu0 %v2045
        %2175 = vmatprep.subr.bf16.mxu0 %v2048
        %2176 = vmatpush1.bf16.msra.mxu0 %v2047
        %2177 = vmatprep.subr.bf16.mxu0 %v2050
        %2178 = vmatpush1.bf16.msra.mxu0 %v2049
        %2179 = vmatprep.subr.bf16.mxu0 %v2052
        %2180 = vmatpush1.bf16.msra.mxu0 %v2051
        %2181 = vmatprep.mubr.bf16.mxu0 %v1746
        %2182 = vmatmul.mubr.bf16.gmra.mrb[0].mxu0 %v1745
        %v2183 = vpop.f32.mrb[0].mxu0
        %v2184 = vadd.f32 %v1822, %v2183
        %v2185 = vpop.f32.mrb[0].mxu0
        %v2186 = vadd.f32 %v1826, %v2185
        %v2187 = vpop.f32.mrb[0].mxu0
        %v2188 = vpop.f32.mrb[0].mxu0
        %2189 = vdwg.mxu0
        %2190 = vmatprep.subr.bf16.mxu0 %v2054
        %2191 = vmatpush1.bf16.msra.mxu0 %v2053
        %2192 = vmatprep.subr.bf16.mxu0 %v2056
        %2193 = vmatpush1.bf16.msra.mxu0 %v2055
        %2194 = vmatprep.subr.bf16.mxu0 %v2058
        %2195 = vmatpush1.bf16.msra.mxu0 %v2057
        %2196 = vmatprep.subr.bf16.mxu0 %v2060
        %2197 = vmatpush1.bf16.msra.mxu0 %v2059
        %2198 = vmatprep.subr.bf16.mxu0 %v2062
        %2199 = vmatpush1.bf16.msra.mxu0 %v2061
        %2200 = vmatprep.subr.bf16.mxu0 %v2064
        %2201 = vmatpush1.bf16.msra.mxu0 %v2063
        %2202 = vmatprep.subr.bf16.mxu0 %v2066
        %2203 = vmatpush1.bf16.msra.mxu0 %v2065
        %2204 = vmatprep.subr.bf16.mxu0 %v2068
        %2205 = vmatpush1.bf16.msra.mxu0 %v2067
        %2206 = vmatprep.subr.bf16.mxu0 %v2070
        %2207 = vmatpush1.bf16.msra.mxu0 %v2069
        %2208 = vmatprep.subr.bf16.mxu0 %v2072
        %2209 = vmatpush1.bf16.msra.mxu0 %v2071
        %2210 = vmatprep.subr.bf16.mxu0 %v2074
        %2211 = vmatpush1.bf16.msra.mxu0 %v2073
        %2212 = vmatprep.subr.bf16.mxu0 %v2076
        %2213 = vmatpush1.bf16.msra.mxu0 %v2075
        %2214 = vmatprep.subr.bf16.mxu0 %v2078
        %2215 = vmatpush1.bf16.msra.mxu0 %v2077
        %2216 = vmatprep.subr.bf16.mxu0 %v2080
        %2217 = vmatpush1.bf16.msra.mxu0 %v2079
        %2218 = vmatprep.subr.bf16.mxu0 %v2082
        %2219 = vmatpush1.bf16.msra.mxu0 %v2081
        %2220 = vmatprep.subr.bf16.mxu0 %v2084
        %2221 = vmatpush1.bf16.msra.mxu0 %v2083
        %2222 = vmatprep.mubr.bf16.mxu0 %v1748
        %2223 = vmatmul.mubr.bf16.gmra.mrb[0].mxu0 %v1747
        %v2224 = vpop.f32.mrb[0].mxu0
        %v2225 = vadd.f32 %v2184, %v2224
        %v2226 = vpop.f32.mrb[0].mxu0
        %v2227 = vadd.f32 %v2186, %v2226
        %v2228 = vpop.f32.mrb[0].mxu0
        %v2229 = vpop.f32.mrb[0].mxu0
        %2230 = vdwg.mxu0
        %v2231 = vpack.c.bf16 %v2225, %v2225
        %v2232 = vpack.c.bf16 %v2227, %v2227
        %v2235 = vunpack.c.l.b16 %v2231
        %v2236 = vunpack.c.l.b16 %v2232
        %v2237 = vpack.c.b16 %v2236, %v2235
        %2239 = vst [vmem:[%s459] sm:$0xff] %v2237
        %s2240 = scalar_lea.vmem [#allocation11], 512
        %v2241 = vld [vmem:[%s2240] sm:$0xff]
        %v2242 = vld [vmem:[%s2240 + $0x8] sm:$0xff]
        %v2243 = vld [vmem:[%s2240 + $0x10] sm:$0xff]
        %v2244 = vld [vmem:[%s2240 + $0x18] sm:$0xff]
        %v2245 = vld [vmem:[%s2240 + $0x20] sm:$0xff]
        %v2246 = vld [vmem:[%s2240 + $0x28] sm:$0xff]
        %v2247 = vld [vmem:[%s2240 + $0x30] sm:$0xff]
        %v2248 = vld [vmem:[%s2240 + $0x38] sm:$0xff]
        %v2249 = vld [vmem:[%s2240 + $0x40] sm:$0xff]
        %v2250 = vld [vmem:[%s2240 + $0x48] sm:$0xff]
        %v2251 = vld [vmem:[%s2240 + $0x50] sm:$0xff]
        %v2252 = vld [vmem:[%s2240 + $0x58] sm:$0xff]
        %v2253 = vld [vmem:[%s2240 + $0x60] sm:$0xff]
        %v2254 = vld [vmem:[%s2240 + $0x68] sm:$0xff]
        %v2255 = vld [vmem:[%s2240 + $0x70] sm:$0xff]
        %v2256 = vld [vmem:[%s2240 + $0x78] sm:$0xff]
        %v2257 = vld [vmem:[%s2240 + $0x80] sm:$0xff]
        %v2258 = vld [vmem:[%s2240 + $0x88] sm:$0xff]
        %v2259 = vld [vmem:[%s2240 + $0x90] sm:$0xff]
        %v2260 = vld [vmem:[%s2240 + $0x98] sm:$0xff]
        %v2261 = vld [vmem:[%s2240 + $0xa0] sm:$0xff]
        %v2262 = vld [vmem:[%s2240 + $0xa8] sm:$0xff]
        %v2263 = vld [vmem:[%s2240 + $0xb0] sm:$0xff]
        %v2264 = vld [vmem:[%s2240 + $0xb8] sm:$0xff]
        %v2265 = vld [vmem:[%s2240 + $0xc0] sm:$0xff]
        %v2266 = vld [vmem:[%s2240 + $0xc8] sm:$0xff]
        %v2267 = vld [vmem:[%s2240 + $0xd0] sm:$0xff]
        %v2268 = vld [vmem:[%s2240 + $0xd8] sm:$0xff]
        %v2269 = vld [vmem:[%s2240 + $0xe0] sm:$0xff]
        %v2270 = vld [vmem:[%s2240 + $0xe8] sm:$0xff]
        %v2271 = vld [vmem:[%s2240 + $0xf0] sm:$0xff]
        %v2272 = vld [vmem:[%s2240 + $0xf8] sm:$0xff]
        %v2273 = vld [vmem:[%s2240 + $0x100] sm:$0xff]
        %v2274 = vld [vmem:[%s2240 + $0x108] sm:$0xff]
        %v2275 = vld [vmem:[%s2240 + $0x110] sm:$0xff]
        %v2276 = vld [vmem:[%s2240 + $0x118] sm:$0xff]
        %v2277 = vld [vmem:[%s2240 + $0x120] sm:$0xff]
        %v2278 = vld [vmem:[%s2240 + $0x128] sm:$0xff]
        %v2279 = vld [vmem:[%s2240 + $0x130] sm:$0xff]
        %v2280 = vld [vmem:[%s2240 + $0x138] sm:$0xff]
        %v2281 = vld [vmem:[%s2240 + $0x140] sm:$0xff]
        %v2282 = vld [vmem:[%s2240 + $0x148] sm:$0xff]
        %v2283 = vld [vmem:[%s2240 + $0x150] sm:$0xff]
        %v2284 = vld [vmem:[%s2240 + $0x158] sm:$0xff]
        %v2285 = vld [vmem:[%s2240 + $0x160] sm:$0xff]
        %v2286 = vld [vmem:[%s2240 + $0x168] sm:$0xff]
        %v2287 = vld [vmem:[%s2240 + $0x170] sm:$0xff]
        %v2288 = vld [vmem:[%s2240 + $0x178] sm:$0xff]
        %v2289 = vld [vmem:[%s2240 + $0x180] sm:$0xff]
        %v2290 = vld [vmem:[%s2240 + $0x188] sm:$0xff]
        %v2291 = vld [vmem:[%s2240 + $0x190] sm:$0xff]
        %v2292 = vld [vmem:[%s2240 + $0x198] sm:$0xff]
        %v2293 = vld [vmem:[%s2240 + $0x1a0] sm:$0xff]
        %v2294 = vld [vmem:[%s2240 + $0x1a8] sm:$0xff]
        %v2295 = vld [vmem:[%s2240 + $0x1b0] sm:$0xff]
        %v2296 = vld [vmem:[%s2240 + $0x1b8] sm:$0xff]
        %v2297 = vld [vmem:[%s2240 + $0x1c0] sm:$0xff]
        %v2298 = vld [vmem:[%s2240 + $0x1c8] sm:$0xff]
        %v2299 = vld [vmem:[%s2240 + $0x1d0] sm:$0xff]
        %v2300 = vld [vmem:[%s2240 + $0x1d8] sm:$0xff]
        %v2301 = vld [vmem:[%s2240 + $0x1e0] sm:$0xff]
        %v2302 = vld [vmem:[%s2240 + $0x1e8] sm:$0xff]
        %v2303 = vld [vmem:[%s2240 + $0x1f0] sm:$0xff]
        %v2304 = vld [vmem:[%s2240 + $0x1f8] sm:$0xff]
        %s2305 = scalar_lea.vmem %s10, 2
        %v2306 = vld [vmem:[%s2305] sm:$0x3]
        %v2308 = vlaneseq
        %v2309 = vshrl.u32 %v2308, 7
        %v2310 = vsub.s32 0, %v2309
        %v2311 = vrot.slane %v2306, %v2310
        %v2312 = vlaneseq
        %v2313 = vshrl.u32 %v2312, 7
        %v2314 = vsub.s32 1, %v2313
        %v2315 = vrot.slane %v2306, %v2314
        %v2382 = vunpack.c.l.b16 %v2241
        %v2383 = vunpack.c.h.b16 %v2241
        %v2384 = vunpack.c.l.b16 %v2242
        %v2385 = vunpack.c.h.b16 %v2242
        %v2386 = vunpack.c.l.b16 %v2243
        %v2387 = vunpack.c.h.b16 %v2243
        %v2388 = vunpack.c.l.b16 %v2244
        %v2389 = vunpack.c.h.b16 %v2244
        %v2390 = vunpack.c.l.b16 %v2245
        %v2391 = vunpack.c.h.b16 %v2245
        %v2392 = vunpack.c.l.b16 %v2246
        %v2393 = vunpack.c.h.b16 %v2246
        %v2394 = vunpack.c.l.b16 %v2247
        %v2395 = vunpack.c.h.b16 %v2247
        %v2396 = vunpack.c.l.b16 %v2248
        %v2397 = vunpack.c.h.b16 %v2248
        %v2398 = vunpack.c.l.b16 %v2249
        %v2399 = vunpack.c.h.b16 %v2249
        %v2400 = vunpack.c.l.b16 %v2250
        %v2401 = vunpack.c.h.b16 %v2250
        %v2402 = vunpack.c.l.b16 %v2251
        %v2403 = vunpack.c.h.b16 %v2251
        %v2404 = vunpack.c.l.b16 %v2252
        %v2405 = vunpack.c.h.b16 %v2252
        %v2406 = vunpack.c.l.b16 %v2253
        %v2407 = vunpack.c.h.b16 %v2253
        %v2408 = vunpack.c.l.b16 %v2254
        %v2409 = vunpack.c.h.b16 %v2254
        %v2410 = vunpack.c.l.b16 %v2255
        %v2411 = vunpack.c.h.b16 %v2255
        %v2412 = vunpack.c.l.b16 %v2256
        %v2413 = vunpack.c.h.b16 %v2256
        %v2414 = vunpack.c.l.b16 %v2257
        %v2415 = vunpack.c.h.b16 %v2257
        %v2416 = vunpack.c.l.b16 %v2258
        %v2417 = vunpack.c.h.b16 %v2258
        %v2418 = vunpack.c.l.b16 %v2259
        %v2419 = vunpack.c.h.b16 %v2259
        %v2420 = vunpack.c.l.b16 %v2260
        %v2421 = vunpack.c.h.b16 %v2260
        %v2422 = vunpack.c.l.b16 %v2261
        %v2423 = vunpack.c.h.b16 %v2261
        %v2424 = vunpack.c.l.b16 %v2262
        %v2425 = vunpack.c.h.b16 %v2262
        %v2426 = vunpack.c.l.b16 %v2263
        %v2427 = vunpack.c.h.b16 %v2263
        %v2428 = vunpack.c.l.b16 %v2264
        %v2429 = vunpack.c.h.b16 %v2264
        %v2430 = vunpack.c.l.b16 %v2265
        %v2431 = vunpack.c.h.b16 %v2265
        %v2432 = vunpack.c.l.b16 %v2266
        %v2433 = vunpack.c.h.b16 %v2266
        %v2434 = vunpack.c.l.b16 %v2267
        %v2435 = vunpack.c.h.b16 %v2267
        %v2436 = vunpack.c.l.b16 %v2268
        %v2437 = vunpack.c.h.b16 %v2268
        %v2438 = vunpack.c.l.b16 %v2269
        %v2439 = vunpack.c.h.b16 %v2269
        %v2440 = vunpack.c.l.b16 %v2270
        %v2441 = vunpack.c.h.b16 %v2270
        %v2442 = vunpack.c.l.b16 %v2271
        %v2443 = vunpack.c.h.b16 %v2271
        %v2444 = vunpack.c.l.b16 %v2272
        %v2445 = vunpack.c.h.b16 %v2272
        %v2446 = vunpack.c.l.b16 %v2273
        %v2447 = vunpack.c.h.b16 %v2273
        %v2448 = vunpack.c.l.b16 %v2274
        %v2449 = vunpack.c.h.b16 %v2274
        %v2450 = vunpack.c.l.b16 %v2275
        %v2451 = vunpack.c.h.b16 %v2275
        %v2452 = vunpack.c.l.b16 %v2276
        %v2453 = vunpack.c.h.b16 %v2276
        %v2454 = vunpack.c.l.b16 %v2277
        %v2455 = vunpack.c.h.b16 %v2277
        %v2456 = vunpack.c.l.b16 %v2278
        %v2457 = vunpack.c.h.b16 %v2278
        %v2458 = vunpack.c.l.b16 %v2279
        %v2459 = vunpack.c.h.b16 %v2279
        %v2460 = vunpack.c.l.b16 %v2280
        %v2461 = vunpack.c.h.b16 %v2280
        %v2462 = vunpack.c.l.b16 %v2281
        %v2463 = vunpack.c.h.b16 %v2281
        %v2464 = vunpack.c.l.b16 %v2282
        %v2465 = vunpack.c.h.b16 %v2282
        %v2466 = vunpack.c.l.b16 %v2283
        %v2467 = vunpack.c.h.b16 %v2283
        %v2468 = vunpack.c.l.b16 %v2284
        %v2469 = vunpack.c.h.b16 %v2284
        %v2470 = vunpack.c.l.b16 %v2285
        %v2471 = vunpack.c.h.b16 %v2285
        %v2472 = vunpack.c.l.b16 %v2286
        %v2473 = vunpack.c.h.b16 %v2286
        %v2474 = vunpack.c.l.b16 %v2287
        %v2475 = vunpack.c.h.b16 %v2287
        %v2476 = vunpack.c.l.b16 %v2288
        %v2477 = vunpack.c.h.b16 %v2288
        %v2478 = vunpack.c.l.b16 %v2289
        %v2479 = vunpack.c.h.b16 %v2289
        %v2480 = vunpack.c.l.b16 %v2290
        %v2481 = vunpack.c.h.b16 %v2290
        %v2482 = vunpack.c.l.b16 %v2291
        %v2483 = vunpack.c.h.b16 %v2291
        %v2484 = vunpack.c.l.b16 %v2292
        %v2485 = vunpack.c.h.b16 %v2292
        %v2486 = vunpack.c.l.b16 %v2293
        %v2487 = vunpack.c.h.b16 %v2293
        %v2488 = vunpack.c.l.b16 %v2294
        %v2489 = vunpack.c.h.b16 %v2294
        %v2490 = vunpack.c.l.b16 %v2295
        %v2491 = vunpack.c.h.b16 %v2295
        %v2492 = vunpack.c.l.b16 %v2296
        %v2493 = vunpack.c.h.b16 %v2296
        %v2494 = vunpack.c.l.b16 %v2297
        %v2495 = vunpack.c.h.b16 %v2297
        %v2496 = vunpack.c.l.b16 %v2298
        %v2497 = vunpack.c.h.b16 %v2298
        %v2498 = vunpack.c.l.b16 %v2299
        %v2499 = vunpack.c.h.b16 %v2299
        %v2500 = vunpack.c.l.b16 %v2300
        %v2501 = vunpack.c.h.b16 %v2300
        %v2502 = vunpack.c.l.b16 %v2301
        %v2503 = vunpack.c.h.b16 %v2301
        %v2504 = vunpack.c.l.b16 %v2302
        %v2505 = vunpack.c.h.b16 %v2302
        %v2506 = vunpack.c.l.b16 %v2303
        %v2507 = vunpack.c.h.b16 %v2303
        %v2508 = vunpack.c.l.b16 %v2304
        %v2509 = vunpack.c.h.b16 %v2304
        %v2510 = vpack.c.b16 %v2384, %v2382
        %v2511 = vpack.c.b16 %v2385, %v2383
        %v2512 = vpack.c.b16 %v2388, %v2386
        %v2513 = vpack.c.b16 %v2389, %v2387
        %v2514 = vpack.c.b16 %v2392, %v2390
        %v2515 = vpack.c.b16 %v2393, %v2391
        %v2516 = vpack.c.b16 %v2396, %v2394
        %v2517 = vpack.c.b16 %v2397, %v2395
        %v2518 = vpack.c.b16 %v2400, %v2398
        %v2519 = vpack.c.b16 %v2401, %v2399
        %v2520 = vpack.c.b16 %v2404, %v2402
        %v2521 = vpack.c.b16 %v2405, %v2403
        %v2522 = vpack.c.b16 %v2408, %v2406
        %v2523 = vpack.c.b16 %v2409, %v2407
        %v2524 = vpack.c.b16 %v2412, %v2410
        %v2525 = vpack.c.b16 %v2413, %v2411
        %v2526 = vpack.c.b16 %v2416, %v2414
        %v2527 = vpack.c.b16 %v2417, %v2415
        %v2528 = vpack.c.b16 %v2420, %v2418
        %v2529 = vpack.c.b16 %v2421, %v2419
        %v2530 = vpack.c.b16 %v2424, %v2422
        %v2531 = vpack.c.b16 %v2425, %v2423
        %v2532 = vpack.c.b16 %v2428, %v2426
        %v2533 = vpack.c.b16 %v2429, %v2427
        %v2534 = vpack.c.b16 %v2432, %v2430
        %v2535 = vpack.c.b16 %v2433, %v2431
        %v2536 = vpack.c.b16 %v2436, %v2434
        %v2537 = vpack.c.b16 %v2437, %v2435
        %v2538 = vpack.c.b16 %v2440, %v2438
        %v2539 = vpack.c.b16 %v2441, %v2439
        %v2540 = vpack.c.b16 %v2444, %v2442
        %v2541 = vpack.c.b16 %v2445, %v2443
        %v2542 = vpack.c.b16 %v2448, %v2446
        %v2543 = vpack.c.b16 %v2449, %v2447
        %v2544 = vpack.c.b16 %v2452, %v2450
        %v2545 = vpack.c.b16 %v2453, %v2451
        %v2546 = vpack.c.b16 %v2456, %v2454
        %v2547 = vpack.c.b16 %v2457, %v2455
        %v2548 = vpack.c.b16 %v2460, %v2458
        %v2549 = vpack.c.b16 %v2461, %v2459
        %v2550 = vpack.c.b16 %v2464, %v2462
        %v2551 = vpack.c.b16 %v2465, %v2463
        %v2552 = vpack.c.b16 %v2468, %v2466
        %v2553 = vpack.c.b16 %v2469, %v2467
        %v2554 = vpack.c.b16 %v2472, %v2470
        %v2555 = vpack.c.b16 %v2473, %v2471
        %v2556 = vpack.c.b16 %v2476, %v2474
        %v2557 = vpack.c.b16 %v2477, %v2475
        %v2558 = vpack.c.b16 %v2480, %v2478
        %v2559 = vpack.c.b16 %v2481, %v2479
        %v2560 = vpack.c.b16 %v2484, %v2482
        %v2561 = vpack.c.b16 %v2485, %v2483
        %v2562 = vpack.c.b16 %v2488, %v2486
        %v2563 = vpack.c.b16 %v2489, %v2487
        %v2564 = vpack.c.b16 %v2492, %v2490
        %v2565 = vpack.c.b16 %v2493, %v2491
        %v2566 = vpack.c.b16 %v2496, %v2494
        %v2567 = vpack.c.b16 %v2497, %v2495
        %v2568 = vpack.c.b16 %v2500, %v2498
        %v2569 = vpack.c.b16 %v2501, %v2499
        %v2570 = vpack.c.b16 %v2504, %v2502
        %v2571 = vpack.c.b16 %v2505, %v2503
        %v2572 = vpack.c.b16 %v2508, %v2506
        %v2573 = vpack.c.b16 %v2509, %v2507
        %2638 = vmatprep.subr.bf16.mxu0 %v2511
        %2639 = vmatpush1.bf16.msra.mxu0 %v2510
        %2640 = vmatprep.subr.bf16.mxu0 %v2513
        %2641 = vmatpush1.bf16.msra.mxu0 %v2512
        %2642 = vmatprep.subr.bf16.mxu0 %v2515
        %2643 = vmatpush1.bf16.msra.mxu0 %v2514
        %2644 = vmatprep.subr.bf16.mxu0 %v2517
        %2645 = vmatpush1.bf16.msra.mxu0 %v2516
        %2646 = vmatprep.subr.bf16.mxu0 %v2519
        %2647 = vmatpush1.bf16.msra.mxu0 %v2518
        %2648 = vmatprep.subr.bf16.mxu0 %v2521
        %2649 = vmatpush1.bf16.msra.mxu0 %v2520
        %2650 = vmatprep.subr.bf16.mxu0 %v2523
        %2651 = vmatpush1.bf16.msra.mxu0 %v2522
        %2652 = vmatprep.subr.bf16.mxu0 %v2525
        %2653 = vmatpush1.bf16.msra.mxu0 %v2524
        %2654 = vmatprep.subr.bf16.mxu0 %v2527
        %2655 = vmatpush1.bf16.msra.mxu0 %v2526
        %2656 = vmatprep.subr.bf16.mxu0 %v2529
        %2657 = vmatpush1.bf16.msra.mxu0 %v2528
        %2658 = vmatprep.subr.bf16.mxu0 %v2531
        %2659 = vmatpush1.bf16.msra.mxu0 %v2530
        %2660 = vmatprep.subr.bf16.mxu0 %v2533
        %2661 = vmatpush1.bf16.msra.mxu0 %v2532
        %2662 = vmatprep.subr.bf16.mxu0 %v2535
        %2663 = vmatpush1.bf16.msra.mxu0 %v2534
        %2664 = vmatprep.subr.bf16.mxu0 %v2537
        %2665 = vmatpush1.bf16.msra.mxu0 %v2536
        %2666 = vmatprep.subr.bf16.mxu0 %v2539
        %2667 = vmatpush1.bf16.msra.mxu0 %v2538
        %2668 = vmatprep.subr.bf16.mxu0 %v2541
        %2669 = vmatpush1.bf16.msra.mxu0 %v2540
        %2670 = vmatprep.mubr.bf16.mxu0 %v1747
        %2671 = vmatmul.mubr.bf16.gmra.mrb[0].mxu0 %v1746
        %v2672 = vpop.f32.mrb[0].mxu0
        %v2673 = vadd.f32 %v2311, %v2672
        %v2674 = vpop.f32.mrb[0].mxu0
        %v2675 = vadd.f32 %v2315, %v2674
        %v2676 = vpop.f32.mrb[0].mxu0
        %v2677 = vpop.f32.mrb[0].mxu0
        %2678 = vdwg.mxu0
        %2679 = vmatprep.subr.bf16.mxu0 %v2543
        %2680 = vmatpush1.bf16.msra.mxu0 %v2542
        %2681 = vmatprep.subr.bf16.mxu0 %v2545
        %2682 = vmatpush1.bf16.msra.mxu0 %v2544
        %2683 = vmatprep.subr.bf16.mxu0 %v2547
        %2684 = vmatpush1.bf16.msra.mxu0 %v2546
        %2685 = vmatprep.subr.bf16.mxu0 %v2549
        %2686 = vmatpush1.bf16.msra.mxu0 %v2548
        %2687 = vmatprep.subr.bf16.mxu0 %v2551
        %2688 = vmatpush1.bf16.msra.mxu0 %v2550
        %2689 = vmatprep.subr.bf16.mxu0 %v2553
        %2690 = vmatpush1.bf16.msra.mxu0 %v2552
        %2691 = vmatprep.subr.bf16.mxu0 %v2555
        %2692 = vmatpush1.bf16.msra.mxu0 %v2554
        %2693 = vmatprep.subr.bf16.mxu0 %v2557
        %2694 = vmatpush1.bf16.msra.mxu0 %v2556
        %2695 = vmatprep.subr.bf16.mxu0 %v2559
        %2696 = vmatpush1.bf16.msra.mxu0 %v2558
        %2697 = vmatprep.subr.bf16.mxu0 %v2561
        %2698 = vmatpush1.bf16.msra.mxu0 %v2560
        %2699 = vmatprep.subr.bf16.mxu0 %v2563
        %2700 = vmatpush1.bf16.msra.mxu0 %v2562
        %2701 = vmatprep.subr.bf16.mxu0 %v2565
        %2702 = vmatpush1.bf16.msra.mxu0 %v2564
        %2703 = vmatprep.subr.bf16.mxu0 %v2567
        %2704 = vmatpush1.bf16.msra.mxu0 %v2566
        %2705 = vmatprep.subr.bf16.mxu0 %v2569
        %2706 = vmatpush1.bf16.msra.mxu0 %v2568
        %2707 = vmatprep.subr.bf16.mxu0 %v2571
        %2708 = vmatpush1.bf16.msra.mxu0 %v2570
        %2709 = vmatprep.subr.bf16.mxu0 %v2573
        %2710 = vmatpush1.bf16.msra.mxu0 %v2572
        %2711 = vmatprep.mubr.bf16.mxu0 %v1749
        %2712 = vmatmul.mubr.bf16.gmra.mrb[0].mxu0 %v1748
        %v2713 = vpop.f32.mrb[0].mxu0
        %v2714 = vadd.f32 %v2673, %v2713
        %v2715 = vpop.f32.mrb[0].mxu0
        %v2716 = vadd.f32 %v2675, %v2715
        %v2717 = vpop.f32.mrb[0].mxu0
        %v2718 = vpop.f32.mrb[0].mxu0
        %2719 = vdwg.mxu0
        %v2720 = vpack.c.bf16 %v2714, %v2714
        %v2721 = vpack.c.bf16 %v2716, %v2716
        %v2724 = vunpack.c.l.b16 %v2720
        %v2725 = vunpack.c.l.b16 %v2721
        %v2726 = vpack.c.b16 %v2725, %v2724
        %2728 = vst [vmem:[%s459 + $0x8] sm:$0xff] %v2726
        %s2729 = scalar_lea.vmem [#allocation11], 1024
        %v2730 = vld [vmem:[%s2729] sm:$0xff]
        %v2731 = vld [vmem:[%s2729 + $0x8] sm:$0xff]
        %v2732 = vld [vmem:[%s2729 + $0x10] sm:$0xff]
        %v2733 = vld [vmem:[%s2729 + $0x18] sm:$0xff]
        %v2734 = vld [vmem:[%s2729 + $0x20] sm:$0xff]
        %v2735 = vld [vmem:[%s2729 + $0x28] sm:$0xff]
        %v2736 = vld [vmem:[%s2729 + $0x30] sm:$0xff]
        %v2737 = vld [vmem:[%s2729 + $0x38] sm:$0xff]
        %v2738 = vld [vmem:[%s2729 + $0x40] sm:$0xff]
        %v2739 = vld [vmem:[%s2729 + $0x48] sm:$0xff]
        %v2740 = vld [vmem:[%s2729 + $0x50] sm:$0xff]
        %v2741 = vld [vmem:[%s2729 + $0x58] sm:$0xff]
        %v2742 = vld [vmem:[%s2729 + $0x60] sm:$0xff]
        %v2743 = vld [vmem:[%s2729 + $0x68] sm:$0xff]
        %v2744 = vld [vmem:[%s2729 + $0x70] sm:$0xff]
        %v2745 = vld [vmem:[%s2729 + $0x78] sm:$0xff]
        %v2746 = vld [vmem:[%s2729 + $0x80] sm:$0xff]
        %v2747 = vld [vmem:[%s2729 + $0x88] sm:$0xff]
        %v2748 = vld [vmem:[%s2729 + $0x90] sm:$0xff]
        %v2749 = vld [vmem:[%s2729 + $0x98] sm:$0xff]
        %v2750 = vld [vmem:[%s2729 + $0xa0] sm:$0xff]
        %v2751 = vld [vmem:[%s2729 + $0xa8] sm:$0xff]
        %v2752 = vld [vmem:[%s2729 + $0xb0] sm:$0xff]
        %v2753 = vld [vmem:[%s2729 + $0xb8] sm:$0xff]
        %v2754 = vld [vmem:[%s2729 + $0xc0] sm:$0xff]
        %v2755 = vld [vmem:[%s2729 + $0xc8] sm:$0xff]
        %v2756 = vld [vmem:[%s2729 + $0xd0] sm:$0xff]
        %v2757 = vld [vmem:[%s2729 + $0xd8] sm:$0xff]
        %v2758 = vld [vmem:[%s2729 + $0xe0] sm:$0xff]
        %v2759 = vld [vmem:[%s2729 + $0xe8] sm:$0xff]
        %v2760 = vld [vmem:[%s2729 + $0xf0] sm:$0xff]
        %v2761 = vld [vmem:[%s2729 + $0xf8] sm:$0xff]
        %v2762 = vld [vmem:[%s2729 + $0x100] sm:$0xff]
        %v2763 = vld [vmem:[%s2729 + $0x108] sm:$0xff]
        %v2764 = vld [vmem:[%s2729 + $0x110] sm:$0xff]
        %v2765 = vld [vmem:[%s2729 + $0x118] sm:$0xff]
        %v2766 = vld [vmem:[%s2729 + $0x120] sm:$0xff]
        %v2767 = vld [vmem:[%s2729 + $0x128] sm:$0xff]
        %v2768 = vld [vmem:[%s2729 + $0x130] sm:$0xff]
        %v2769 = vld [vmem:[%s2729 + $0x138] sm:$0xff]
        %v2770 = vld [vmem:[%s2729 + $0x140] sm:$0xff]
        %v2771 = vld [vmem:[%s2729 + $0x148] sm:$0xff]
        %v2772 = vld [vmem:[%s2729 + $0x150] sm:$0xff]
        %v2773 = vld [vmem:[%s2729 + $0x158] sm:$0xff]
        %v2774 = vld [vmem:[%s2729 + $0x160] sm:$0xff]
        %v2775 = vld [vmem:[%s2729 + $0x168] sm:$0xff]
        %v2776 = vld [vmem:[%s2729 + $0x170] sm:$0xff]
        %v2777 = vld [vmem:[%s2729 + $0x178] sm:$0xff]
        %v2778 = vld [vmem:[%s2729 + $0x180] sm:$0xff]
        %v2779 = vld [vmem:[%s2729 + $0x188] sm:$0xff]
        %v2780 = vld [vmem:[%s2729 + $0x190] sm:$0xff]
        %v2781 = vld [vmem:[%s2729 + $0x198] sm:$0xff]
        %v2782 = vld [vmem:[%s2729 + $0x1a0] sm:$0xff]
        %v2783 = vld [vmem:[%s2729 + $0x1a8] sm:$0xff]
        %v2784 = vld [vmem:[%s2729 + $0x1b0] sm:$0xff]
        %v2785 = vld [vmem:[%s2729 + $0x1b8] sm:$0xff]
        %v2786 = vld [vmem:[%s2729 + $0x1c0] sm:$0xff]
        %v2787 = vld [vmem:[%s2729 + $0x1c8] sm:$0xff]
        %v2788 = vld [vmem:[%s2729 + $0x1d0] sm:$0xff]
        %v2789 = vld [vmem:[%s2729 + $0x1d8] sm:$0xff]
        %v2790 = vld [vmem:[%s2729 + $0x1e0] sm:$0xff]
        %v2791 = vld [vmem:[%s2729 + $0x1e8] sm:$0xff]
        %v2792 = vld [vmem:[%s2729 + $0x1f0] sm:$0xff]
        %v2793 = vld [vmem:[%s2729 + $0x1f8] sm:$0xff]
        %s2794 = scalar_lea.vmem %s10, 4
        %v2795 = vld [vmem:[%s2794] sm:$0x3]
        %v2797 = vlaneseq
        %v2798 = vshrl.u32 %v2797, 7
        %v2799 = vsub.s32 0, %v2798
        %v2800 = vrot.slane %v2795, %v2799
        %v2801 = vlaneseq
        %v2802 = vshrl.u32 %v2801, 7
        %v2803 = vsub.s32 1, %v2802
        %v2804 = vrot.slane %v2795, %v2803
        %v2871 = vunpack.c.l.b16 %v2730
        %v2872 = vunpack.c.h.b16 %v2730
        %v2873 = vunpack.c.l.b16 %v2731
        %v2874 = vunpack.c.h.b16 %v2731
        %v2875 = vunpack.c.l.b16 %v2732
        %v2876 = vunpack.c.h.b16 %v2732
        %v2877 = vunpack.c.l.b16 %v2733
        %v2878 = vunpack.c.h.b16 %v2733
        %v2879 = vunpack.c.l.b16 %v2734
        %v2880 = vunpack.c.h.b16 %v2734
        %v2881 = vunpack.c.l.b16 %v2735
        %v2882 = vunpack.c.h.b16 %v2735
        %v2883 = vunpack.c.l.b16 %v2736
        %v2884 = vunpack.c.h.b16 %v2736
        %v2885 = vunpack.c.l.b16 %v2737
        %v2886 = vunpack.c.h.b16 %v2737
        %v2887 = vunpack.c.l.b16 %v2738
        %v2888 = vunpack.c.h.b16 %v2738
        %v2889 = vunpack.c.l.b16 %v2739
        %v2890 = vunpack.c.h.b16 %v2739
        %v2891 = vunpack.c.l.b16 %v2740
        %v2892 = vunpack.c.h.b16 %v2740
        %v2893 = vunpack.c.l.b16 %v2741
        %v2894 = vunpack.c.h.b16 %v2741
        %v2895 = vunpack.c.l.b16 %v2742
        %v2896 = vunpack.c.h.b16 %v2742
        %v2897 = vunpack.c.l.b16 %v2743
        %v2898 = vunpack.c.h.b16 %v2743
        %v2899 = vunpack.c.l.b16 %v2744
        %v2900 = vunpack.c.h.b16 %v2744
        %v2901 = vunpack.c.l.b16 %v2745
        %v2902 = vunpack.c.h.b16 %v2745
        %v2903 = vunpack.c.l.b16 %v2746
        %v2904 = vunpack.c.h.b16 %v2746
        %v2905 = vunpack.c.l.b16 %v2747
        %v2906 = vunpack.c.h.b16 %v2747
        %v2907 = vunpack.c.l.b16 %v2748
        %v2908 = vunpack.c.h.b16 %v2748
        %v2909 = vunpack.c.l.b16 %v2749
        %v2910 = vunpack.c.h.b16 %v2749
        %v2911 = vunpack.c.l.b16 %v2750
        %v2912 = vunpack.c.h.b16 %v2750
        %v2913 = vunpack.c.l.b16 %v2751
        %v2914 = vunpack.c.h.b16 %v2751
        %v2915 = vunpack.c.l.b16 %v2752
        %v2916 = vunpack.c.h.b16 %v2752
        %v2917 = vunpack.c.l.b16 %v2753
        %v2918 = vunpack.c.h.b16 %v2753
        %v2919 = vunpack.c.l.b16 %v2754
        %v2920 = vunpack.c.h.b16 %v2754
        %v2921 = vunpack.c.l.b16 %v2755
        %v2922 = vunpack.c.h.b16 %v2755
        %v2923 = vunpack.c.l.b16 %v2756
        %v2924 = vunpack.c.h.b16 %v2756
        %v2925 = vunpack.c.l.b16 %v2757
        %v2926 = vunpack.c.h.b16 %v2757
        %v2927 = vunpack.c.l.b16 %v2758
        %v2928 = vunpack.c.h.b16 %v2758
        %v2929 = vunpack.c.l.b16 %v2759
        %v2930 = vunpack.c.h.b16 %v2759
        %v2931 = vunpack.c.l.b16 %v2760
        %v2932 = vunpack.c.h.b16 %v2760
        %v2933 = vunpack.c.l.b16 %v2761
        %v2934 = vunpack.c.h.b16 %v2761
        %v2935 = vunpack.c.l.b16 %v2762
        %v2936 = vunpack.c.h.b16 %v2762
        %v2937 = vunpack.c.l.b16 %v2763
        %v2938 = vunpack.c.h.b16 %v2763
        %v2939 = vunpack.c.l.b16 %v2764
        %v2940 = vunpack.c.h.b16 %v2764
        %v2941 = vunpack.c.l.b16 %v2765
        %v2942 = vunpack.c.h.b16 %v2765
        %v2943 = vunpack.c.l.b16 %v2766
        %v2944 = vunpack.c.h.b16 %v2766
        %v2945 = vunpack.c.l.b16 %v2767
        %v2946 = vunpack.c.h.b16 %v2767
        %v2947 = vunpack.c.l.b16 %v2768
        %v2948 = vunpack.c.h.b16 %v2768
        %v2949 = vunpack.c.l.b16 %v2769
        %v2950 = vunpack.c.h.b16 %v2769
        %v2951 = vunpack.c.l.b16 %v2770
        %v2952 = vunpack.c.h.b16 %v2770
        %v2953 = vunpack.c.l.b16 %v2771
        %v2954 = vunpack.c.h.b16 %v2771
        %v2955 = vunpack.c.l.b16 %v2772
        %v2956 = vunpack.c.h.b16 %v2772
        %v2957 = vunpack.c.l.b16 %v2773
        %v2958 = vunpack.c.h.b16 %v2773
        %v2959 = vunpack.c.l.b16 %v2774
        %v2960 = vunpack.c.h.b16 %v2774
        %v2961 = vunpack.c.l.b16 %v2775
        %v2962 = vunpack.c.h.b16 %v2775
        %v2963 = vunpack.c.l.b16 %v2776
        %v2964 = vunpack.c.h.b16 %v2776
        %v2965 = vunpack.c.l.b16 %v2777
        %v2966 = vunpack.c.h.b16 %v2777
        %v2967 = vunpack.c.l.b16 %v2778
        %v2968 = vunpack.c.h.b16 %v2778
        %v2969 = vunpack.c.l.b16 %v2779
        %v2970 = vunpack.c.h.b16 %v2779
        %v2971 = vunpack.c.l.b16 %v2780
        %v2972 = vunpack.c.h.b16 %v2780
        %v2973 = vunpack.c.l.b16 %v2781
        %v2974 = vunpack.c.h.b16 %v2781
        %v2975 = vunpack.c.l.b16 %v2782
        %v2976 = vunpack.c.h.b16 %v2782
        %v2977 = vunpack.c.l.b16 %v2783
        %v2978 = vunpack.c.h.b16 %v2783
        %v2979 = vunpack.c.l.b16 %v2784
        %v2980 = vunpack.c.h.b16 %v2784
        %v2981 = vunpack.c.l.b16 %v2785
        %v2982 = vunpack.c.h.b16 %v2785
        %v2983 = vunpack.c.l.b16 %v2786
        %v2984 = vunpack.c.h.b16 %v2786
        %v2985 = vunpack.c.l.b16 %v2787
        %v2986 = vunpack.c.h.b16 %v2787
        %v2987 = vunpack.c.l.b16 %v2788
        %v2988 = vunpack.c.h.b16 %v2788
        %v2989 = vunpack.c.l.b16 %v2789
        %v2990 = vunpack.c.h.b16 %v2789
        %v2991 = vunpack.c.l.b16 %v2790
        %v2992 = vunpack.c.h.b16 %v2790
        %v2993 = vunpack.c.l.b16 %v2791
        %v2994 = vunpack.c.h.b16 %v2791
        %v2995 = vunpack.c.l.b16 %v2792
        %v2996 = vunpack.c.h.b16 %v2792
        %v2997 = vunpack.c.l.b16 %v2793
        %v2998 = vunpack.c.h.b16 %v2793
        %v2999 = vpack.c.b16 %v2873, %v2871
        %v3000 = vpack.c.b16 %v2874, %v2872
        %v3001 = vpack.c.b16 %v2877, %v2875
        %v3002 = vpack.c.b16 %v2878, %v2876
        %v3003 = vpack.c.b16 %v2881, %v2879
        %v3004 = vpack.c.b16 %v2882, %v2880
        %v3005 = vpack.c.b16 %v2885, %v2883
        %v3006 = vpack.c.b16 %v2886, %v2884
        %v3007 = vpack.c.b16 %v2889, %v2887
        %v3008 = vpack.c.b16 %v2890, %v2888
        %v3009 = vpack.c.b16 %v2893, %v2891
        %v3010 = vpack.c.b16 %v2894, %v2892
        %v3011 = vpack.c.b16 %v2897, %v2895
        %v3012 = vpack.c.b16 %v2898, %v2896
        %v3013 = vpack.c.b16 %v2901, %v2899
        %v3014 = vpack.c.b16 %v2902, %v2900
        %v3015 = vpack.c.b16 %v2905, %v2903
        %v3016 = vpack.c.b16 %v2906, %v2904
        %v3017 = vpack.c.b16 %v2909, %v2907
        %v3018 = vpack.c.b16 %v2910, %v2908
        %v3019 = vpack.c.b16 %v2913, %v2911
        %v3020 = vpack.c.b16 %v2914, %v2912
        %v3021 = vpack.c.b16 %v2917, %v2915
        %v3022 = vpack.c.b16 %v2918, %v2916
        %v3023 = vpack.c.b16 %v2921, %v2919
        %v3024 = vpack.c.b16 %v2922, %v2920
        %v3025 = vpack.c.b16 %v2925, %v2923
        %v3026 = vpack.c.b16 %v2926, %v2924
        %v3027 = vpack.c.b16 %v2929, %v2927
        %v3028 = vpack.c.b16 %v2930, %v2928
        %v3029 = vpack.c.b16 %v2933, %v2931
        %v3030 = vpack.c.b16 %v2934, %v2932
        %v3031 = vpack.c.b16 %v2937, %v2935
        %v3032 = vpack.c.b16 %v2938, %v2936
        %v3033 = vpack.c.b16 %v2941, %v2939
        %v3034 = vpack.c.b16 %v2942, %v2940
        %v3035 = vpack.c.b16 %v2945, %v2943
        %v3036 = vpack.c.b16 %v2946, %v2944
        %v3037 = vpack.c.b16 %v2949, %v2947
        %v3038 = vpack.c.b16 %v2950, %v2948
        %v3039 = vpack.c.b16 %v2953, %v2951
        %v3040 = vpack.c.b16 %v2954, %v2952
        %v3041 = vpack.c.b16 %v2957, %v2955
        %v3042 = vpack.c.b16 %v2958, %v2956
        %v3043 = vpack.c.b16 %v2961, %v2959
        %v3044 = vpack.c.b16 %v2962, %v2960
        %v3045 = vpack.c.b16 %v2965, %v2963
        %v3046 = vpack.c.b16 %v2966, %v2964
        %v3047 = vpack.c.b16 %v2969, %v2967
        %v3048 = vpack.c.b16 %v2970, %v2968
        %v3049 = vpack.c.b16 %v2973, %v2971
        %v3050 = vpack.c.b16 %v2974, %v2972
        %v3051 = vpack.c.b16 %v2977, %v2975
        %v3052 = vpack.c.b16 %v2978, %v2976
        %v3053 = vpack.c.b16 %v2981, %v2979
        %v3054 = vpack.c.b16 %v2982, %v2980
        %v3055 = vpack.c.b16 %v2985, %v2983
        %v3056 = vpack.c.b16 %v2986, %v2984
        %v3057 = vpack.c.b16 %v2989, %v2987
        %v3058 = vpack.c.b16 %v2990, %v2988
        %v3059 = vpack.c.b16 %v2993, %v2991
        %v3060 = vpack.c.b16 %v2994, %v2992
        %v3061 = vpack.c.b16 %v2997, %v2995
        %v3062 = vpack.c.b16 %v2998, %v2996
        %3127 = vmatprep.subr.bf16.mxu0 %v3000
        %3128 = vmatpush1.bf16.msra.mxu0 %v2999
        %3129 = vmatprep.subr.bf16.mxu0 %v3002
        %3130 = vmatpush1.bf16.msra.mxu0 %v3001
        %3131 = vmatprep.subr.bf16.mxu0 %v3004
        %3132 = vmatpush1.bf16.msra.mxu0 %v3003
        %3133 = vmatprep.subr.bf16.mxu0 %v3006
        %3134 = vmatpush1.bf16.msra.mxu0 %v3005
        %3135 = vmatprep.subr.bf16.mxu0 %v3008
        %3136 = vmatpush1.bf16.msra.mxu0 %v3007
        %3137 = vmatprep.subr.bf16.mxu0 %v3010
        %3138 = vmatpush1.bf16.msra.mxu0 %v3009
        %3139 = vmatprep.subr.bf16.mxu0 %v3012
        %3140 = vmatpush1.bf16.msra.mxu0 %v3011
        %3141 = vmatprep.subr.bf16.mxu0 %v3014
        %3142 = vmatpush1.bf16.msra.mxu0 %v3013
        %3143 = vmatprep.subr.bf16.mxu0 %v3016
        %3144 = vmatpush1.bf16.msra.mxu0 %v3015
        %3145 = vmatprep.subr.bf16.mxu0 %v3018
        %3146 = vmatpush1.bf16.msra.mxu0 %v3017
        %3147 = vmatprep.subr.bf16.mxu0 %v3020
        %3148 = vmatpush1.bf16.msra.mxu0 %v3019
        %3149 = vmatprep.subr.bf16.mxu0 %v3022
        %3150 = vmatpush1.bf16.msra.mxu0 %v3021
        %3151 = vmatprep.subr.bf16.mxu0 %v3024
        %3152 = vmatpush1.bf16.msra.mxu0 %v3023
        %3153 = vmatprep.subr.bf16.mxu0 %v3026
        %3154 = vmatpush1.bf16.msra.mxu0 %v3025
        %3155 = vmatprep.subr.bf16.mxu0 %v3028
        %3156 = vmatpush1.bf16.msra.mxu0 %v3027
        %3157 = vmatprep.subr.bf16.mxu0 %v3030
        %3158 = vmatpush1.bf16.msra.mxu0 %v3029
        %3159 = vmatprep.mubr.bf16.mxu0 %v1749
        %3160 = vmatmul.mubr.bf16.gmra.mrb[0].mxu0 %v1748
        %v3161 = vpop.f32.mrb[0].mxu0
        %v3162 = vadd.f32 %v2800, %v3161
        %v3163 = vpop.f32.mrb[0].mxu0
        %v3164 = vadd.f32 %v2804, %v3163
        %v3165 = vpop.f32.mrb[0].mxu0
        %v3166 = vpop.f32.mrb[0].mxu0
        %3167 = vdwg.mxu0
        %3168 = vmatprep.subr.bf16.mxu0 %v3032
        %3169 = vmatpush1.bf16.msra.mxu0 %v3031
        %3170 = vmatprep.subr.bf16.mxu0 %v3034
        %3171 = vmatpush1.bf16.msra.mxu0 %v3033
        %3172 = vmatprep.subr.bf16.mxu0 %v3036
        %3173 = vmatpush1.bf16.msra.mxu0 %v3035
        %3174 = vmatprep.subr.bf16.mxu0 %v3038
        %3175 = vmatpush1.bf16.msra.mxu0 %v3037
        %3176 = vmatprep.subr.bf16.mxu0 %v3040
        %3177 = vmatpush1.bf16.msra.mxu0 %v3039
        %3178 = vmatprep.subr.bf16.mxu0 %v3042
        %3179 = vmatpush1.bf16.msra.mxu0 %v3041
        %3180 = vmatprep.subr.bf16.mxu0 %v3044
        %3181 = vmatpush1.bf16.msra.mxu0 %v3043
        %3182 = vmatprep.subr.bf16.mxu0 %v3046
        %3183 = vmatpush1.bf16.msra.mxu0 %v3045
        %3184 = vmatprep.subr.bf16.mxu0 %v3048
        %3185 = vmatpush1.bf16.msra.mxu0 %v3047
        %3186 = vmatprep.subr.bf16.mxu0 %v3050
        %3187 = vmatpush1.bf16.msra.mxu0 %v3049
        %3188 = vmatprep.subr.bf16.mxu0 %v3052
        %3189 = vmatpush1.bf16.msra.mxu0 %v3051
        %3190 = vmatprep.subr.bf16.mxu0 %v3054
        %3191 = vmatpush1.bf16.msra.mxu0 %v3053
        %3192 = vmatprep.subr.bf16.mxu0 %v3056
        %3193 = vmatpush1.bf16.msra.mxu0 %v3055
        %3194 = vmatprep.subr.bf16.mxu0 %v3058
        %3195 = vmatpush1.bf16.msra.mxu0 %v3057
        %3196 = vmatprep.subr.bf16.mxu0 %v3060
        %3197 = vmatpush1.bf16.msra.mxu0 %v3059
        %3198 = vmatprep.subr.bf16.mxu0 %v3062
        %3199 = vmatpush1.bf16.msra.mxu0 %v3061
        %3200 = vmatprep.mubr.bf16.mxu0 %v1751
        %3201 = vmatmul.mubr.bf16.gmra.mrb[0].mxu0 %v1750
        %v3202 = vpop.f32.mrb[0].mxu0
        %v3203 = vadd.f32 %v3162, %v3202
        %v3204 = vpop.f32.mrb[0].mxu0
        %v3205 = vadd.f32 %v3164, %v3204
        %v3206 = vpop.f32.mrb[0].mxu0
        %v3207 = vpop.f32.mrb[0].mxu0
        %3208 = vdwg.mxu0
        %v3209 = vpack.c.bf16 %v3203, %v3203
        %v3210 = vpack.c.bf16 %v3205, %v3205
        %v3213 = vunpack.c.l.b16 %v3209
        %v3214 = vunpack.c.l.b16 %v3210
        %v3215 = vpack.c.b16 %v3214, %v3213
        %3217 = vst [vmem:[%s459 + $0x10] sm:$0xff] %v3215
        %s3218 = scalar_lea.vmem [#allocation11], 1536
        %v3219 = vld [vmem:[%s3218] sm:$0xff]
        %v3220 = vld [vmem:[%s3218 + $0x8] sm:$0xff]
        %v3221 = vld [vmem:[%s3218 + $0x10] sm:$0xff]
        %v3222 = vld [vmem:[%s3218 + $0x18] sm:$0xff]
        %v3223 = vld [vmem:[%s3218 + $0x20] sm:$0xff]
        %v3224 = vld [vmem:[%s3218 + $0x28] sm:$0xff]
        %v3225 = vld [vmem:[%s3218 + $0x30] sm:$0xff]
        %v3226 = vld [vmem:[%s3218 + $0x38] sm:$0xff]
        %v3227 = vld [vmem:[%s3218 + $0x40] sm:$0xff]
        %v3228 = vld [vmem:[%s3218 + $0x48] sm:$0xff]
        %v3229 = vld [vmem:[%s3218 + $0x50] sm:$0xff]
        %v3230 = vld [vmem:[%s3218 + $0x58] sm:$0xff]
        %v3231 = vld [vmem:[%s3218 + $0x60] sm:$0xff]
        %v3232 = vld [vmem:[%s3218 + $0x68] sm:$0xff]
        %v3233 = vld [vmem:[%s3218 + $0x70] sm:$0xff]
        %v3234 = vld [vmem:[%s3218 + $0x78] sm:$0xff]
        %v3235 = vld [vmem:[%s3218 + $0x80] sm:$0xff]
        %v3236 = vld [vmem:[%s3218 + $0x88] sm:$0xff]
        %v3237 = vld [vmem:[%s3218 + $0x90] sm:$0xff]
        %v3238 = vld [vmem:[%s3218 + $0x98] sm:$0xff]
        %v3239 = vld [vmem:[%s3218 + $0xa0] sm:$0xff]
        %v3240 = vld [vmem:[%s3218 + $0xa8] sm:$0xff]
        %v3241 = vld [vmem:[%s3218 + $0xb0] sm:$0xff]
        %v3242 = vld [vmem:[%s3218 + $0xb8] sm:$0xff]
        %v3243 = vld [vmem:[%s3218 + $0xc0] sm:$0xff]
        %v3244 = vld [vmem:[%s3218 + $0xc8] sm:$0xff]
        %v3245 = vld [vmem:[%s3218 + $0xd0] sm:$0xff]
        %v3246 = vld [vmem:[%s3218 + $0xd8] sm:$0xff]
        %v3247 = vld [vmem:[%s3218 + $0xe0] sm:$0xff]
        %v3248 = vld [vmem:[%s3218 + $0xe8] sm:$0xff]
        %v3249 = vld [vmem:[%s3218 + $0xf0] sm:$0xff]
        %v3250 = vld [vmem:[%s3218 + $0xf8] sm:$0xff]
        %v3251 = vld [vmem:[%s3218 + $0x100] sm:$0xff]
        %v3252 = vld [vmem:[%s3218 + $0x108] sm:$0xff]
        %v3253 = vld [vmem:[%s3218 + $0x110] sm:$0xff]
        %v3254 = vld [vmem:[%s3218 + $0x118] sm:$0xff]
        %v3255 = vld [vmem:[%s3218 + $0x120] sm:$0xff]
        %v3256 = vld [vmem:[%s3218 + $0x128] sm:$0xff]
        %v3257 = vld [vmem:[%s3218 + $0x130] sm:$0xff]
        %v3258 = vld [vmem:[%s3218 + $0x138] sm:$0xff]
        %v3259 = vld [vmem:[%s3218 + $0x140] sm:$0xff]
        %v3260 = vld [vmem:[%s3218 + $0x148] sm:$0xff]
        %v3261 = vld [vmem:[%s3218 + $0x150] sm:$0xff]
        %v3262 = vld [vmem:[%s3218 + $0x158] sm:$0xff]
        %v3263 = vld [vmem:[%s3218 + $0x160] sm:$0xff]
        %v3264 = vld [vmem:[%s3218 + $0x168] sm:$0xff]
        %v3265 = vld [vmem:[%s3218 + $0x170] sm:$0xff]
        %v3266 = vld [vmem:[%s3218 + $0x178] sm:$0xff]
        %v3267 = vld [vmem:[%s3218 + $0x180] sm:$0xff]
        %v3268 = vld [vmem:[%s3218 + $0x188] sm:$0xff]
        %v3269 = vld [vmem:[%s3218 + $0x190] sm:$0xff]
        %v3270 = vld [vmem:[%s3218 + $0x198] sm:$0xff]
        %v3271 = vld [vmem:[%s3218 + $0x1a0] sm:$0xff]
        %v3272 = vld [vmem:[%s3218 + $0x1a8] sm:$0xff]
        %v3273 = vld [vmem:[%s3218 + $0x1b0] sm:$0xff]
        %v3274 = vld [vmem:[%s3218 + $0x1b8] sm:$0xff]
        %v3275 = vld [vmem:[%s3218 + $0x1c0] sm:$0xff]
        %v3276 = vld [vmem:[%s3218 + $0x1c8] sm:$0xff]
        %v3277 = vld [vmem:[%s3218 + $0x1d0] sm:$0xff]
        %v3278 = vld [vmem:[%s3218 + $0x1d8] sm:$0xff]
        %v3279 = vld [vmem:[%s3218 + $0x1e0] sm:$0xff]
        %v3280 = vld [vmem:[%s3218 + $0x1e8] sm:$0xff]
        %v3281 = vld [vmem:[%s3218 + $0x1f0] sm:$0xff]
        %v3282 = vld [vmem:[%s3218 + $0x1f8] sm:$0xff]
        %s3283 = scalar_lea.vmem %s10, 6
        %v3284 = vld [vmem:[%s3283] sm:$0x3]
        %v3286 = vlaneseq
        %v3287 = vshrl.u32 %v3286, 7
        %v3288 = vsub.s32 0, %v3287
        %v3289 = vrot.slane %v3284, %v3288
        %v3290 = vlaneseq
        %v3291 = vshrl.u32 %v3290, 7
        %v3292 = vsub.s32 1, %v3291
        %v3293 = vrot.slane %v3284, %v3292
        %v3360 = vunpack.c.l.b16 %v3219
        %v3361 = vunpack.c.h.b16 %v3219
        %v3362 = vunpack.c.l.b16 %v3220
        %v3363 = vunpack.c.h.b16 %v3220
        %v3364 = vunpack.c.l.b16 %v3221
        %v3365 = vunpack.c.h.b16 %v3221
        %v3366 = vunpack.c.l.b16 %v3222
        %v3367 = vunpack.c.h.b16 %v3222
        %v3368 = vunpack.c.l.b16 %v3223
        %v3369 = vunpack.c.h.b16 %v3223
        %v3370 = vunpack.c.l.b16 %v3224
        %v3371 = vunpack.c.h.b16 %v3224
        %v3372 = vunpack.c.l.b16 %v3225
        %v3373 = vunpack.c.h.b16 %v3225
        %v3374 = vunpack.c.l.b16 %v3226
        %v3375 = vunpack.c.h.b16 %v3226
        %v3376 = vunpack.c.l.b16 %v3227
        %v3377 = vunpack.c.h.b16 %v3227
        %v3378 = vunpack.c.l.b16 %v3228
        %v3379 = vunpack.c.h.b16 %v3228
        %v3380 = vunpack.c.l.b16 %v3229
        %v3381 = vunpack.c.h.b16 %v3229
        %v3382 = vunpack.c.l.b16 %v3230
        %v3383 = vunpack.c.h.b16 %v3230
        %v3384 = vunpack.c.l.b16 %v3231
        %v3385 = vunpack.c.h.b16 %v3231
        %v3386 = vunpack.c.l.b16 %v3232
        %v3387 = vunpack.c.h.b16 %v3232
        %v3388 = vunpack.c.l.b16 %v3233
        %v3389 = vunpack.c.h.b16 %v3233
        %v3390 = vunpack.c.l.b16 %v3234
        %v3391 = vunpack.c.h.b16 %v3234
        %v3392 = vunpack.c.l.b16 %v3235
        %v3393 = vunpack.c.h.b16 %v3235
        %v3394 = vunpack.c.l.b16 %v3236
        %v3395 = vunpack.c.h.b16 %v3236
        %v3396 = vunpack.c.l.b16 %v3237
        %v3397 = vunpack.c.h.b16 %v3237
        %v3398 = vunpack.c.l.b16 %v3238
        %v3399 = vunpack.c.h.b16 %v3238
        %v3400 = vunpack.c.l.b16 %v3239
        %v3401 = vunpack.c.h.b16 %v3239
        %v3402 = vunpack.c.l.b16 %v3240
        %v3403 = vunpack.c.h.b16 %v3240
        %v3404 = vunpack.c.l.b16 %v3241
        %v3405 = vunpack.c.h.b16 %v3241
        %v3406 = vunpack.c.l.b16 %v3242
        %v3407 = vunpack.c.h.b16 %v3242
        %v3408 = vunpack.c.l.b16 %v3243
        %v3409 = vunpack.c.h.b16 %v3243
        %v3410 = vunpack.c.l.b16 %v3244
        %v3411 = vunpack.c.h.b16 %v3244
        %v3412 = vunpack.c.l.b16 %v3245
        %v3413 = vunpack.c.h.b16 %v3245
        %v3414 = vunpack.c.l.b16 %v3246
        %v3415 = vunpack.c.h.b16 %v3246
        %v3416 = vunpack.c.l.b16 %v3247
        %v3417 = vunpack.c.h.b16 %v3247
        %v3418 = vunpack.c.l.b16 %v3248
        %v3419 = vunpack.c.h.b16 %v3248
        %v3420 = vunpack.c.l.b16 %v3249
        %v3421 = vunpack.c.h.b16 %v3249
        %v3422 = vunpack.c.l.b16 %v3250
        %v3423 = vunpack.c.h.b16 %v3250
        %v3424 = vunpack.c.l.b16 %v3251
        %v3425 = vunpack.c.h.b16 %v3251
        %v3426 = vunpack.c.l.b16 %v3252
        %v3427 = vunpack.c.h.b16 %v3252
        %v3428 = vunpack.c.l.b16 %v3253
        %v3429 = vunpack.c.h.b16 %v3253
        %v3430 = vunpack.c.l.b16 %v3254
        %v3431 = vunpack.c.h.b16 %v3254
        %v3432 = vunpack.c.l.b16 %v3255
        %v3433 = vunpack.c.h.b16 %v3255
        %v3434 = vunpack.c.l.b16 %v3256
        %v3435 = vunpack.c.h.b16 %v3256
        %v3436 = vunpack.c.l.b16 %v3257
        %v3437 = vunpack.c.h.b16 %v3257
        %v3438 = vunpack.c.l.b16 %v3258
        %v3439 = vunpack.c.h.b16 %v3258
        %v3440 = vunpack.c.l.b16 %v3259
        %v3441 = vunpack.c.h.b16 %v3259
        %v3442 = vunpack.c.l.b16 %v3260
        %v3443 = vunpack.c.h.b16 %v3260
        %v3444 = vunpack.c.l.b16 %v3261
        %v3445 = vunpack.c.h.b16 %v3261
        %v3446 = vunpack.c.l.b16 %v3262
        %v3447 = vunpack.c.h.b16 %v3262
        %v3448 = vunpack.c.l.b16 %v3263
        %v3449 = vunpack.c.h.b16 %v3263
        %v3450 = vunpack.c.l.b16 %v3264
        %v3451 = vunpack.c.h.b16 %v3264
        %v3452 = vunpack.c.l.b16 %v3265
        %v3453 = vunpack.c.h.b16 %v3265
        %v3454 = vunpack.c.l.b16 %v3266
        %v3455 = vunpack.c.h.b16 %v3266
        %v3456 = vunpack.c.l.b16 %v3267
        %v3457 = vunpack.c.h.b16 %v3267
        %v3458 = vunpack.c.l.b16 %v3268
        %v3459 = vunpack.c.h.b16 %v3268
        %v3460 = vunpack.c.l.b16 %v3269
        %v3461 = vunpack.c.h.b16 %v3269
        %v3462 = vunpack.c.l.b16 %v3270
        %v3463 = vunpack.c.h.b16 %v3270
        %v3464 = vunpack.c.l.b16 %v3271
        %v3465 = vunpack.c.h.b16 %v3271
        %v3466 = vunpack.c.l.b16 %v3272
        %v3467 = vunpack.c.h.b16 %v3272
        %v3468 = vunpack.c.l.b16 %v3273
        %v3469 = vunpack.c.h.b16 %v3273
        %v3470 = vunpack.c.l.b16 %v3274
        %v3471 = vunpack.c.h.b16 %v3274
        %v3472 = vunpack.c.l.b16 %v3275
        %v3473 = vunpack.c.h.b16 %v3275
        %v3474 = vunpack.c.l.b16 %v3276
        %v3475 = vunpack.c.h.b16 %v3276
        %v3476 = vunpack.c.l.b16 %v3277
        %v3477 = vunpack.c.h.b16 %v3277
        %v3478 = vunpack.c.l.b16 %v3278
        %v3479 = vunpack.c.h.b16 %v3278
        %v3480 = vunpack.c.l.b16 %v3279
        %v3481 = vunpack.c.h.b16 %v3279
        %v3482 = vunpack.c.l.b16 %v3280
        %v3483 = vunpack.c.h.b16 %v3280
        %v3484 = vunpack.c.l.b16 %v3281
        %v3485 = vunpack.c.h.b16 %v3281
        %v3486 = vunpack.c.l.b16 %v3282
        %v3487 = vunpack.c.h.b16 %v3282
        %v3488 = vpack.c.b16 %v3362, %v3360
        %v3489 = vpack.c.b16 %v3363, %v3361
        %v3490 = vpack.c.b16 %v3366, %v3364
        %v3491 = vpack.c.b16 %v3367, %v3365
        %v3492 = vpack.c.b16 %v3370, %v3368
        %v3493 = vpack.c.b16 %v3371, %v3369
        %v3494 = vpack.c.b16 %v3374, %v3372
        %v3495 = vpack.c.b16 %v3375, %v3373
        %v3496 = vpack.c.b16 %v3378, %v3376
        %v3497 = vpack.c.b16 %v3379, %v3377
        %v3498 = vpack.c.b16 %v3382, %v3380
        %v3499 = vpack.c.b16 %v3383, %v3381
        %v3500 = vpack.c.b16 %v3386, %v3384
        %v3501 = vpack.c.b16 %v3387, %v3385
        %v3502 = vpack.c.b16 %v3390, %v3388
        %v3503 = vpack.c.b16 %v3391, %v3389
        %v3504 = vpack.c.b16 %v3394, %v3392
        %v3505 = vpack.c.b16 %v3395, %v3393
        %v3506 = vpack.c.b16 %v3398, %v3396
        %v3507 = vpack.c.b16 %v3399, %v3397
        %v3508 = vpack.c.b16 %v3402, %v3400
        %v3509 = vpack.c.b16 %v3403, %v3401
        %v3510 = vpack.c.b16 %v3406, %v3404
        %v3511 = vpack.c.b16 %v3407, %v3405
        %v3512 = vpack.c.b16 %v3410, %v3408
        %v3513 = vpack.c.b16 %v3411, %v3409
        %v3514 = vpack.c.b16 %v3414, %v3412
        %v3515 = vpack.c.b16 %v3415, %v3413
        %v3516 = vpack.c.b16 %v3418, %v3416
        %v3517 = vpack.c.b16 %v3419, %v3417
        %v3518 = vpack.c.b16 %v3422, %v3420
        %v3519 = vpack.c.b16 %v3423, %v3421
        %v3520 = vpack.c.b16 %v3426, %v3424
        %v3521 = vpack.c.b16 %v3427, %v3425
        %v3522 = vpack.c.b16 %v3430, %v3428
        %v3523 = vpack.c.b16 %v3431, %v3429
        %v3524 = vpack.c.b16 %v3434, %v3432
        %v3525 = vpack.c.b16 %v3435, %v3433
        %v3526 = vpack.c.b16 %v3438, %v3436
        %v3527 = vpack.c.b16 %v3439, %v3437
        %v3528 = vpack.c.b16 %v3442, %v3440
        %v3529 = vpack.c.b16 %v3443, %v3441
        %v3530 = vpack.c.b16 %v3446, %v3444
        %v3531 = vpack.c.b16 %v3447, %v3445
        %v3532 = vpack.c.b16 %v3450, %v3448
        %v3533 = vpack.c.b16 %v3451, %v3449
        %v3534 = vpack.c.b16 %v3454, %v3452
        %v3535 = vpack.c.b16 %v3455, %v3453
        %v3536 = vpack.c.b16 %v3458, %v3456
        %v3537 = vpack.c.b16 %v3459, %v3457
        %v3538 = vpack.c.b16 %v3462, %v3460
        %v3539 = vpack.c.b16 %v3463, %v3461
        %v3540 = vpack.c.b16 %v3466, %v3464
        %v3541 = vpack.c.b16 %v3467, %v3465
        %v3542 = vpack.c.b16 %v3470, %v3468
        %v3543 = vpack.c.b16 %v3471, %v3469
        %v3544 = vpack.c.b16 %v3474, %v3472
        %v3545 = vpack.c.b16 %v3475, %v3473
        %v3546 = vpack.c.b16 %v3478, %v3476
        %v3547 = vpack.c.b16 %v3479, %v3477
        %v3548 = vpack.c.b16 %v3482, %v3480
        %v3549 = vpack.c.b16 %v3483, %v3481
        %v3550 = vpack.c.b16 %v3486, %v3484
        %v3551 = vpack.c.b16 %v3487, %v3485
        %3616 = vmatprep.subr.bf16.mxu0 %v3489
        %3617 = vmatpush1.bf16.msra.mxu0 %v3488
        %3618 = vmatprep.subr.bf16.mxu0 %v3491
        %3619 = vmatpush1.bf16.msra.mxu0 %v3490
        %3620 = vmatprep.subr.bf16.mxu0 %v3493
        %3621 = vmatpush1.bf16.msra.mxu0 %v3492
        %3622 = vmatprep.subr.bf16.mxu0 %v3495
        %3623 = vmatpush1.bf16.msra.mxu0 %v3494
        %3624 = vmatprep.subr.bf16.mxu0 %v3497
        %3625 = vmatpush1.bf16.msra.mxu0 %v3496
        %3626 = vmatprep.subr.bf16.mxu0 %v3499
        %3627 = vmatpush1.bf16.msra.mxu0 %v3498
        %3628 = vmatprep.subr.bf16.mxu0 %v3501
        %3629 = vmatpush1.bf16.msra.mxu0 %v3500
        %3630 = vmatprep.subr.bf16.mxu0 %v3503
        %3631 = vmatpush1.bf16.msra.mxu0 %v3502
        %3632 = vmatprep.subr.bf16.mxu0 %v3505
        %3633 = vmatpush1.bf16.msra.mxu0 %v3504
        %3634 = vmatprep.subr.bf16.mxu0 %v3507
        %3635 = vmatpush1.bf16.msra.mxu0 %v3506
        %3636 = vmatprep.subr.bf16.mxu0 %v3509
        %3637 = vmatpush1.bf16.msra.mxu0 %v3508
        %3638 = vmatprep.subr.bf16.mxu0 %v3511
        %3639 = vmatpush1.bf16.msra.mxu0 %v3510
        %3640 = vmatprep.subr.bf16.mxu0 %v3513
        %3641 = vmatpush1.bf16.msra.mxu0 %v3512
        %3642 = vmatprep.subr.bf16.mxu0 %v3515
        %3643 = vmatpush1.bf16.msra.mxu0 %v3514
        %3644 = vmatprep.subr.bf16.mxu0 %v3517
        %3645 = vmatpush1.bf16.msra.mxu0 %v3516
        %3646 = vmatprep.subr.bf16.mxu0 %v3519
        %3647 = vmatpush1.bf16.msra.mxu0 %v3518
        %3648 = vmatprep.mubr.bf16.mxu0 %v1750
        %3649 = vmatmul.mubr.bf16.gmra.mrb[0].mxu0 %v1749
        %v3650 = vpop.f32.mrb[0].mxu0
        %v3651 = vadd.f32 %v3289, %v3650
        %v3652 = vpop.f32.mrb[0].mxu0
        %v3653 = vadd.f32 %v3293, %v3652
        %v3654 = vpop.f32.mrb[0].mxu0
        %v3655 = vpop.f32.mrb[0].mxu0
        %3656 = vdwg.mxu0
        %3657 = vmatprep.subr.bf16.mxu0 %v3521
        %3658 = vmatpush1.bf16.msra.mxu0 %v3520
        %3659 = vmatprep.subr.bf16.mxu0 %v3523
        %3660 = vmatpush1.bf16.msra.mxu0 %v3522
        %3661 = vmatprep.subr.bf16.mxu0 %v3525
        %3662 = vmatpush1.bf16.msra.mxu0 %v3524
        %3663 = vmatprep.subr.bf16.mxu0 %v3527
        %3664 = vmatpush1.bf16.msra.mxu0 %v3526
        %3665 = vmatprep.subr.bf16.mxu0 %v3529
        %3666 = vmatpush1.bf16.msra.mxu0 %v3528
        %3667 = vmatprep.subr.bf16.mxu0 %v3531
        %3668 = vmatpush1.bf16.msra.mxu0 %v3530
        %3669 = vmatprep.subr.bf16.mxu0 %v3533
        %3670 = vmatpush1.bf16.msra.mxu0 %v3532
        %3671 = vmatprep.subr.bf16.mxu0 %v3535
        %3672 = vmatpush1.bf16.msra.mxu0 %v3534
        %3673 = vmatprep.subr.bf16.mxu0 %v3537
        %3674 = vmatpush1.bf16.msra.mxu0 %v3536
        %3675 = vmatprep.subr.bf16.mxu0 %v3539
        %3676 = vmatpush1.bf16.msra.mxu0 %v3538
        %3677 = vmatprep.subr.bf16.mxu0 %v3541
        %3678 = vmatpush1.bf16.msra.mxu0 %v3540
        %3679 = vmatprep.subr.bf16.mxu0 %v3543
        %3680 = vmatpush1.bf16.msra.mxu0 %v3542
        %3681 = vmatprep.subr.bf16.mxu0 %v3545
        %3682 = vmatpush1.bf16.msra.mxu0 %v3544
        %3683 = vmatprep.subr.bf16.mxu0 %v3547
        %3684 = vmatpush1.bf16.msra.mxu0 %v3546
        %3685 = vmatprep.subr.bf16.mxu0 %v3549
        %3686 = vmatpush1.bf16.msra.mxu0 %v3548
        %3687 = vmatprep.subr.bf16.mxu0 %v3551
        %3688 = vmatpush1.bf16.msra.mxu0 %v3550
        %3689 = vmatprep.mubr.bf16.mxu0 %v1752
        %3690 = vmatmul.mubr.bf16.gmra.mrb[0].mxu0 %v1751
        %v3691 = vpop.f32.mrb[0].mxu0
        %v3692 = vadd.f32 %v3651, %v3691
        %v3693 = vpop.f32.mrb[0].mxu0
        %v3694 = vadd.f32 %v3653, %v3693
        %v3695 = vpop.f32.mrb[0].mxu0
        %v3696 = vpop.f32.mrb[0].mxu0
        %3697 = vdwg.mxu0
        %v3698 = vpack.c.bf16 %v3692, %v3692
        %v3699 = vpack.c.bf16 %v3694, %v3694
        %v3702 = vunpack.c.l.b16 %v3698
        %v3703 = vunpack.c.l.b16 %v3699
        %v3704 = vpack.c.b16 %v3703, %v3702
        %3706 = vst [vmem:[%s459 + $0x18] sm:$0xff] %v3704
        %s3707 = sand.u32 %s273, 1
        %s3708 = scalar_lea.sflag [#allocation4], %s3707
        %s3709 = sand.u32 %s273, 1
        %s3710 = smul.addr %s3709, 32
        %s3711 = scalar_lea.vmem [#allocation13], %s3710
        // Predicated region
        $region89: #{tpu_custom_call.1} parent=63 // pred_check
          %p3712 = pneg %p283
        $region90: #{tpu_custom_call.1} parent=63 // pred_check_branch
          %3714 = sbr.rel (%p3712) target = $region92
        $region91: #{tpu_custom_call.1} parent=63 // pred_region
          %s3716 = ssub.s32 512, 512
          %3717 = vsyncadd %s3708, %s3716
          %s3718 = smul.addr %s29, 8
          %s3719 = smul.addr %s3718, 64
          %s3720 = scalar_lea.hbm %s11, %s3719
          %s3722 = sshll.u32 %s3711, 4
          %s3723 = int_to_ptr.vmem [resolvable:$true] %s3722
          %3725 = dma.vmem_to_hbm [thread:$0]  %s3723, 512, %s3720, %s3708
        $region92: #{tpu_custom_call.1} parent=63 // pred_fallthru
          _
      $region64: #{tpu_custom_call.1} parent=5 // pred_fallthru
        _
      %p3726 = scmp.le.s32.totalorder 2, %s24
      // Predicated region
      $region93: #{tpu_custom_call.1} parent=5 // pred_check
        %p3727 = pneg %p3726
      $region94: #{tpu_custom_call.1} parent=5 // pred_check_branch
        %3729 = sbr.rel (%p3727) target = $region96
      $region95: #{tpu_custom_call.1} parent=5 // pred_region
        %s3730 = ssub.s32 %s24, 2
        // Predicated region
        $region97: #{tpu_custom_call.1} parent=95 // pred_check
          %p3731 = pneg %p289
        $region98: #{tpu_custom_call.1} parent=95 // pred_check_branch
          %3733 = sbr.rel (%p3731) target = $region100
        $region99: #{tpu_custom_call.1} parent=95 // pred_region
          %s3734 = sand.u32 %s274, 1
          %s3735 = scalar_lea.sflag [#allocation4], %s3734
          %s3736 = sand.u32 %s274, 1
          %s3737 = smul.addr %s3736, 32
          %s3738 = scalar_lea.vmem [#allocation13], %s3737
          %3739 = dma.done %s3735, 512
        $region100: #{tpu_custom_call.1} parent=95 // pred_fallthru
          _
      $region96: #{tpu_custom_call.1} parent=5 // pred_fallthru
        _
    $region6: #{tpu_custom_call.1} parent=1 // loop_footer
      %s28 = sadd.s32 1, %s24
    $region7: #{tpu_custom_call.1} parent=1 // loop_footer_branch
      %23 = sbr.rel target = $region3
    $region8: #{tpu_custom_call.1} parent=1 // loop_exit
      _
    %3740 = vsyncpa [#allocation3], 1
    %s3741 = scalar_lea.sflag [#allocation3], 1
    %3742 = vsyncpa %s3741, 1
    %3743 = vsyncpa [#allocation6], 1
    %3744 = vsyncpa [#allocation9], 1
    %3745 = vsyncpa [#allocation12], 1
    %3746 = vsyncpa [#allocation4], 1
    %s3747 = scalar_lea.sflag [#allocation4], 1
    %3748 = vsyncpa %s3747, 1

</llo_original>
